<compile_context>
chip_gen: v7x
topology: tpu7x:2x2x1
jax: 0.10.0
libtpu: 0.0.40
codegen_flags: <defaults>
</compile_context>

<pallas_src>
import functools

import jax
import jax.numpy as jnp
from jax import lax
from jax.experimental import pallas as pl
from jax.experimental.pallas import tpu as pltpu

LN_EPS = 1e-5
LEAKY_SLOPE = 0.01          # nn.LeakyReLU() default negative_slope


def _leaky(v):
    return jnp.where(v > 0, v, LEAKY_SLOPE * v)


def _conv1d_k3s2p1(x, w_ref, b_ref):
    """Conv1d(kernel=3, stride=2, pad=1), channels-last, as a few tap matmuls.

    x:     (B, L, Cin)  value
    w_ref: (3, Cin, Cout) ref (tap-major, pre-transposed in the wrapper)
    b_ref: (1, Cout) ref
    """
    _, L, _ = x.shape
    l_out = (L - 1) // 2 + 1
    cols = []
    for t in range(l_out):
        acc = b_ref[...]                              # (1, Cout), broadcasts
        for k in range(3):
            s = 2 * t + k - 1                         # input row feeding tap k
            if 0 <= s < L:                            # rows outside are zero pad
                acc = acc + jnp.dot(x[:, s, :], w_ref[k],
                                    preferred_element_type=jnp.float32)
        cols.append(acc[:, None, :])                  # (B, 1, Cout)
    return jnp.concatenate(cols, axis=1)              # (B, l_out, Cout)


def _gcn_net_cnn_kernel(x_ref, adj_ref, gw_ref, gb_ref, wr_ref, br_ref,
                        wc1_ref, bc1_ref, wc2_ref, bc2_ref, wp_ref, bp_ref,
                        out_ref, *, batch, seq):
    BS, N, H = x_ref.shape                 # BS = batch * seq
    n_layer = gw_ref.shape[0]

    z = x_ref[...]                         # (B*S, N, H) f32
    adj = adj_ref[...]                     # (B*S, N, N) f32

    # ---- GCN encoder -------------------------------------------------------
    for l in range(n_layer):
        z2 = z.reshape(BS * N, H)
        mean = jnp.mean(z2, axis=-1, keepdims=True)
        var = jnp.mean((z2 - mean) * (z2 - mean), axis=-1, keepdims=True)
        xn = (z2 - mean) * lax.rsqrt(var + LN_EPS)
        # gamma/beta already folded into gw/gb by the wrapper; one big matmul.
        h = jnp.dot(xn, gw_ref[l], preferred_element_type=jnp.float32) + gb_ref[l]
        agg = jnp.einsum('bnm,bmh->bnh', adj, h.reshape(BS, N, H),
                         preferred_element_type=jnp.float32)
        z = _leaky(agg) + z                # LeakyReLU + skip connection

    # ---- ReadOut: Linear(+bias) -> sum over nodes -> LeakyReLU -------------
    # bias is folded to after the node-sum: sum_n(x@W + b) == sum_n(x@W) + N*b
    rlin = jnp.dot(z.reshape(BS * N, H), wr_ref[...],
                   preferred_element_type=jnp.float32)
    rsum = jnp.sum(rlin.reshape(BS, N, H), axis=1) + float(N) * br_ref[...]
    r = _leaky(rsum).reshape(batch, seq, H)               # (B, S, H)

    # ---- permute + Conv1d x2 (channels-last formulation) -------------------
    c1 = _leaky(_conv1d_k3s2p1(r, wc1_ref, bc1_ref))      # (B, ceil(S/2), H)
    c2 = _leaky(_conv1d_k3s2p1(c1, wc2_ref, bc2_ref))     # (B, S2, H)

    # ---- Predictor + LogSoftmax (single matmul + single full-tile store) ---
    s2 = c2.shape[1]
    F = wp_ref.shape[1]
    p = jnp.dot(c2.reshape(batch * s2, H), wp_ref[...],
                preferred_element_type=jnp.float32) + bp_ref[...]   # (B*S2, F)
    p = _leaky(p)
    m = jnp.max(p, axis=-1, keepdims=True)
    lse = m + jnp.log(jnp.sum(jnp.exp(p - m), axis=-1, keepdims=True))
    out_ref[...] = (p - lse).reshape(batch, s2, F).astype(out_ref.dtype)


def fold_params(gcn_params, wr, br, wc1, bc1, wc2, bc2, wp, bp):
    """Fold the LN affine into the GCN linear and pre-transpose every weight so
    kernel matmuls contract on the weights' first axis (no in-kernel .T)."""
    gw = jnp.stack([(w * g[None, :]).T for (w, g, _) in gcn_params])      # (L,H,H)
    gb = jnp.stack([(w @ b).reshape(1, -1) for (w, _, b) in gcn_params])  # (L,1,H)
    return dict(
        gw=gw, gb=gb,
        wr=wr.T, br=br.reshape(1, -1),
        wc1=jnp.transpose(wc1, (2, 1, 0)), bc1=bc1.reshape(1, -1),        # (k,in,out)
        wc2=jnp.transpose(wc2, (2, 1, 0)), bc2=bc2.reshape(1, -1),
        wp=wp.T, bp=bp.reshape(1, -1),
    )


def gcn_net_cnn(x, adj, p):
    """x: (B, S, N, H), adj: (B, S, N, N) -> (B, S2, F) log-probabilities."""
    B, S, N, H = x.shape
    s1 = (S - 1) // 2 + 1
    s2 = (s1 - 1) // 2 + 1
    F = p["wp"].shape[1]

    kernel = functools.partial(_gcn_net_cnn_kernel, batch=B, seq=S)
    vmem = pl.BlockSpec(memory_space=pltpu.MemorySpace.VMEM)

    return pl.pallas_call(
        kernel,
        # Single step, everything VMEM-resident: no grid -> no per-step overhead.
        out_shape=jax.ShapeDtypeStruct((B, s2, F), jnp.float32),
        in_specs=[vmem] * 12,
        out_specs=vmem,
    )(x.reshape(B * S, N, H).astype(jnp.float32),
      adj.reshape(B * S, N, N).astype(jnp.float32),
      p["gw"], p["gb"], p["wr"], p["br"],
      p["wc1"], p["bc1"], p["wc2"], p["bc2"], p["wp"], p["bp"])


def reference_forward(x, adj, gcn_params, wr, br, wc1, bc1, wc2, bc2, wp, bp):
    """Pure-JAX mirror of the PyTorch GCNNetCNN.forward."""
    z = x
    for (w, g, b) in gcn_params:
        mean = jnp.mean(z, axis=-1, keepdims=True)
        var = jnp.mean((z - mean) ** 2, axis=-1, keepdims=True)
        xn = (z - mean) / jnp.sqrt(var + LN_EPS) * g + b
        h = jnp.einsum('bsnh,oh->bsno', xn, w)
        agg = jnp.einsum('bsnm,bsmh->bsnh', adj, h)
        z = _leaky(agg) + z
    r = jnp.einsum('bsnh,oh->bsno', z, wr) + br
    r = _leaky(jnp.sum(r, axis=-2))                        # (B, S, H)
    rc = jnp.transpose(r, (0, 2, 1))                       # (B, H, S)
    c1 = lax.conv_general_dilated(rc, wc1, window_strides=(2,), padding=[(1, 1)],
                                  dimension_numbers=('NCH', 'OIH', 'NCH'))
    c1 = _leaky(c1 + bc1[None, :, None])
    c2 = lax.conv_general_dilated(c1, wc2, window_strides=(2,), padding=[(1, 1)],
                                  dimension_numbers=('NCH', 'OIH', 'NCH'))
    c2 = _leaky(c2 + bc2[None, :, None])
    zc = jnp.transpose(c2, (0, 2, 1))                      # (B, S2, H)
    pz = _leaky(jnp.einsum('bsh,oh->bso', zc, wp) + bp)
    return jax.nn.log_softmax(pz, axis=-1)


if __name__ == "__main__":
    # batch=2, seq=8, nodes=16, hidden=128 (lane-dense), F=16, 2 GCN layers
    B, S, N, H, F, L = 2, 8, 16, 128, 16, 2
    s1 = (S - 1) // 2 + 1
    s2 = (s1 - 1) // 2 + 1

    key = jax.random.PRNGKey(0)
    ks = jax.random.split(key, 18)

    x = jax.random.normal(ks[0], (B, S, N, H), dtype=jnp.float32)
    adj_raw = jax.random.uniform(ks[1], (B, S, N, N), dtype=jnp.float32)
    adj = adj_raw / (jnp.sum(adj_raw, axis=-1, keepdims=True) + 1e-6)

    gcn_params = []
    for l in range(L):
        w = jax.random.normal(ks[2 + 3 * l], (H, H), jnp.float32) / jnp.sqrt(H)
        g = 1.0 + 0.1 * jax.random.normal(ks[3 + 3 * l], (H,), jnp.float32)
        b = 0.1 * jax.random.normal(ks[4 + 3 * l], (H,), jnp.float32)
        gcn_params.append((w, g, b))

    o = 2 + 3 * L
    wr = jax.random.normal(ks[o + 0], (H, H), jnp.float32) / jnp.sqrt(H)
    br = 0.1 * jax.random.normal(ks[o + 1], (H,), jnp.float32)
    wc1 = jax.random.normal(ks[o + 2], (H, H, 3), jnp.float32) / jnp.sqrt(3 * H)
    bc1 = 0.1 * jax.random.normal(ks[o + 3], (H,), jnp.float32)
    wc2 = jax.random.normal(ks[o + 4], (H, H, 3), jnp.float32) / jnp.sqrt(3 * H)
    bc2 = 0.1 * jax.random.normal(ks[o + 5], (H,), jnp.float32)
    wp = jax.random.normal(ks[o + 6], (F, H), jnp.float32) * jnp.sqrt(2.0 / (H + F))
    bp = 0.1 * jax.random.normal(ks[o + 7], (F,), jnp.float32)

    params = fold_params(gcn_params, wr, br, wc1, bc1, wc2, bc2, wp, bp)

    fwd = jax.jit(gcn_net_cnn)
    out = fwd(x, adj, params)
    jax.block_until_ready(out)

    ref = reference_forward(x, adj, gcn_params, wr, br, wc1, bc1, wc2, bc2, wp, bp)
    assert out.shape == ref.shape == (B, s2, F), (out.shape, ref.shape)
    assert jnp.allclose(out, ref, atol=2e-3, rtol=2e-3), (
        f"mismatch vs reference, max abs diff = {jnp.max(jnp.abs(out - ref))}")

    print("KERNEL_OK")
</pallas_src>

<mosaic_0001>
module attributes {stable_mosaic.version = 11 : i64} {
  func.func @_gcn_net_cnn_kernel(%arg0: memref<16x16x128xf32, #tpu.memory_space<vmem>>, %arg1: memref<16x16x16xf32, #tpu.memory_space<vmem>>, %arg2: memref<2x128x128xf32, #tpu.memory_space<vmem>>, %arg3: memref<2x1x128xf32, #tpu.memory_space<vmem>>, %arg4: memref<128x128xf32, #tpu.memory_space<vmem>>, %arg5: memref<1x128xf32, #tpu.memory_space<vmem>>, %arg6: memref<3x128x128xf32, #tpu.memory_space<vmem>>, %arg7: memref<1x128xf32, #tpu.memory_space<vmem>>, %arg8: memref<3x128x128xf32, #tpu.memory_space<vmem>>, %arg9: memref<1x128xf32, #tpu.memory_space<vmem>>, %arg10: memref<128x16xf32, #tpu.memory_space<vmem>>, %arg11: memref<1x16xf32, #tpu.memory_space<vmem>>, %arg12: memref<2x2x16xf32, #tpu.memory_space<vmem>>) attributes {dimension_semantics = [], scalar_prefetch = 0 : i64, scratch_operands = 0 : i64, tpu.core_type = #tpu.core_type<tc>} {
    %c0 = arith.constant 0 : index
    %c0_0 = arith.constant 0 : index
    %c0_1 = arith.constant 0 : index
    %0 = vector.load %arg0[%c0, %c0_0, %c0_1] : memref<16x16x128xf32, #tpu.memory_space<vmem>>, vector<16x16x128xf32>
    %c0_2 = arith.constant 0 : index
    %c0_3 = arith.constant 0 : index
    %c0_4 = arith.constant 0 : index
    %1 = vector.load %arg1[%c0_2, %c0_3, %c0_4] : memref<16x16x16xf32, #tpu.memory_space<vmem>>, vector<16x16x16xf32>
    %2 = vector.shape_cast %0 : vector<16x16x128xf32> to vector<256x128xf32>
    %cst = arith.constant dense<0.000000e+00> : vector<256xf32>
    %3 = vector.multi_reduction <add>, %2, %cst [1] : vector<256x128xf32> to vector<256xf32>
    %4 = vector.shape_cast %3 : vector<256xf32> to vector<256x1xf32>
    %cst_5 = arith.constant 1.280000e+02 : f32
    %5 = vector.broadcast %cst_5 : f32 to vector<256x1xf32>
    %6 = arith.divf %4, %5 : vector<256x1xf32>
    %7 = vector.broadcast %6 : vector<256x1xf32> to vector<256x128xf32>
    %8 = arith.subf %2, %7 : vector<256x128xf32>
    %9 = vector.broadcast %6 : vector<256x1xf32> to vector<256x128xf32>
    %10 = arith.subf %2, %9 : vector<256x128xf32>
    %11 = arith.mulf %8, %10 : vector<256x128xf32>
    %cst_6 = arith.constant dense<0.000000e+00> : vector<256xf32>
    %12 = vector.multi_reduction <add>, %11, %cst_6 [1] : vector<256x128xf32> to vector<256xf32>
    %13 = vector.shape_cast %12 : vector<256xf32> to vector<256x1xf32>
    %cst_7 = arith.constant 1.280000e+02 : f32
    %14 = vector.broadcast %cst_7 : f32 to vector<256x1xf32>
    %15 = arith.divf %13, %14 : vector<256x1xf32>
    %16 = vector.broadcast %6 : vector<256x1xf32> to vector<256x128xf32>
    %17 = arith.subf %2, %16 : vector<256x128xf32>
    %cst_8 = arith.constant 9.99999974E-6 : f32
    %18 = vector.broadcast %cst_8 : f32 to vector<256x1xf32>
    %19 = arith.addf %15, %18 : vector<256x1xf32>
    %20 = math.rsqrt %19 : vector<256x1xf32>
    %21 = vector.broadcast %20 : vector<256x1xf32> to vector<256x128xf32>
    %22 = arith.mulf %17, %21 : vector<256x128xf32>
    %c0_9 = arith.constant 0 : index
    %c0_10 = arith.constant 0 : index
    %c0_11 = arith.constant 0 : index
    %23 = vector.load %arg2[%c0_9, %c0_10, %c0_11] : memref<2x128x128xf32, #tpu.memory_space<vmem>>, vector<1x128x128xf32>
    %24 = vector.shape_cast %23 : vector<1x128x128xf32> to vector<128x128xf32>
    %cst_12 = arith.constant dense<0.000000e+00> : vector<256x128xf32>
    %25 = tpu.matmul %22, %24, %cst_12 {dimension_numbers = #tpu.dot_dimension_numbers<[1], [0], [0], [1], [0, 0, 1, 1], [], []>} : vector<256x128xf32>, vector<128x128xf32>, vector<256x128xf32> -> vector<256x128xf32>
    %c0_13 = arith.constant 0 : index
    %c0_14 = arith.constant 0 : index
    %c0_15 = arith.constant 0 : index
    %26 = vector.load %arg3[%c0_13, %c0_14, %c0_15] : memref<2x1x128xf32, #tpu.memory_space<vmem>>, vector<1x1x128xf32>
    %27 = vector.shape_cast %26 : vector<1x1x128xf32> to vector<1x128xf32>
    %28 = vector.broadcast %27 : vector<1x128xf32> to vector<256x128xf32>
    %29 = arith.addf %25, %28 : vector<256x128xf32>
    %30 = vector.shape_cast %29 : vector<256x128xf32> to vector<16x16x128xf32>
    "tpu.trace_start"() <{level = 10 : i32, message = "bnm,bmh->bnh"}> : () -> ()
    %cst_16 = arith.constant dense<0.000000e+00> : vector<16x16x128xf32>
    %31 = tpu.matmul %1, %30, %cst_16 {dimension_numbers = #tpu.dot_dimension_numbers<[2], [1], [1], [2], [0, 0, 0, 1, 1, 2], [0], [0]>} : vector<16x16x16xf32>, vector<16x16x128xf32>, vector<16x16x128xf32> -> vector<16x16x128xf32>
    %cst_17 = arith.constant 0.000000e+00 : f32
    "tpu.trace_stop"() : () -> ()
    %32 = vector.broadcast %cst_17 : f32 to vector<16x16x128xf32>
    %33 = arith.cmpf ogt, %31, %32 : vector<16x16x128xf32>
    %cst_18 = arith.constant 0.00999999977 : f32
    %34 = vector.broadcast %cst_18 : f32 to vector<16x16x128xf32>
    %35 = arith.mulf %34, %31 : vector<16x16x128xf32>
    %36 = arith.select %33, %31, %35 : vector<16x16x128xi1>, vector<16x16x128xf32>
    %37 = arith.addf %36, %0 : vector<16x16x128xf32>
    %38 = vector.shape_cast %37 : vector<16x16x128xf32> to vector<256x128xf32>
    %cst_19 = arith.constant dense<0.000000e+00> : vector<256xf32>
    %39 = vector.multi_reduction <add>, %38, %cst_19 [1] : vector<256x128xf32> to vector<256xf32>
    %40 = vector.shape_cast %39 : vector<256xf32> to vector<256x1xf32>
    %cst_20 = arith.constant 1.280000e+02 : f32
    %41 = vector.broadcast %cst_20 : f32 to vector<256x1xf32>
    %42 = arith.divf %40, %41 : vector<256x1xf32>
    %43 = vector.broadcast %42 : vector<256x1xf32> to vector<256x128xf32>
    %44 = arith.subf %38, %43 : vector<256x128xf32>
    %45 = vector.broadcast %42 : vector<256x1xf32> to vector<256x128xf32>
    %46 = arith.subf %38, %45 : vector<256x128xf32>
    %47 = arith.mulf %44, %46 : vector<256x128xf32>
    %cst_21 = arith.constant dense<0.000000e+00> : vector<256xf32>
    %48 = vector.multi_reduction <add>, %47, %cst_21 [1] : vector<256x128xf32> to vector<256xf32>
    %49 = vector.shape_cast %48 : vector<256xf32> to vector<256x1xf32>
    %cst_22 = arith.constant 1.280000e+02 : f32
    %50 = vector.broadcast %cst_22 : f32 to vector<256x1xf32>
    %51 = arith.divf %49, %50 : vector<256x1xf32>
    %52 = vector.broadcast %42 : vector<256x1xf32> to vector<256x128xf32>
    %53 = arith.subf %38, %52 : vector<256x128xf32>
    %cst_23 = arith.constant 9.99999974E-6 : f32
    %54 = vector.broadcast %cst_23 : f32 to vector<256x1xf32>
    %55 = arith.addf %51, %54 : vector<256x1xf32>
    %56 = math.rsqrt %55 : vector<256x1xf32>
    %57 = vector.broadcast %56 : vector<256x1xf32> to vector<256x128xf32>
    %58 = arith.mulf %53, %57 : vector<256x128xf32>
    %c1 = arith.constant 1 : index
    %c0_24 = arith.constant 0 : index
    %c0_25 = arith.constant 0 : index
    %59 = vector.load %arg2[%c1, %c0_24, %c0_25] : memref<2x128x128xf32, #tpu.memory_space<vmem>>, vector<1x128x128xf32>
    %60 = vector.shape_cast %59 : vector<1x128x128xf32> to vector<128x128xf32>
    %cst_26 = arith.constant dense<0.000000e+00> : vector<256x128xf32>
    %61 = tpu.matmul %58, %60, %cst_26 {dimension_numbers = #tpu.dot_dimension_numbers<[1], [0], [0], [1], [0, 0, 1, 1], [], []>} : vector<256x128xf32>, vector<128x128xf32>, vector<256x128xf32> -> vector<256x128xf32>
    %c1_27 = arith.constant 1 : index
    %c0_28 = arith.constant 0 : index
    %c0_29 = arith.constant 0 : index
    %62 = vector.load %arg3[%c1_27, %c0_28, %c0_29] : memref<2x1x128xf32, #tpu.memory_space<vmem>>, vector<1x1x128xf32>
    %63 = vector.shape_cast %62 : vector<1x1x128xf32> to vector<1x128xf32>
    %64 = vector.broadcast %63 : vector<1x128xf32> to vector<256x128xf32>
    %65 = arith.addf %61, %64 : vector<256x128xf32>
    %66 = vector.shape_cast %65 : vector<256x128xf32> to vector<16x16x128xf32>
    "tpu.trace_start"() <{level = 10 : i32, message = "bnm,bmh->bnh"}> : () -> ()
    %cst_30 = arith.constant dense<0.000000e+00> : vector<16x16x128xf32>
    %67 = tpu.matmul %1, %66, %cst_30 {dimension_numbers = #tpu.dot_dimension_numbers<[2], [1], [1], [2], [0, 0, 0, 1, 1, 2], [0], [0]>} : vector<16x16x16xf32>, vector<16x16x128xf32>, vector<16x16x128xf32> -> vector<16x16x128xf32>
    %cst_31 = arith.constant 0.000000e+00 : f32
    "tpu.trace_stop"() : () -> ()
    %68 = vector.broadcast %cst_31 : f32 to vector<16x16x128xf32>
    %69 = arith.cmpf ogt, %67, %68 : vector<16x16x128xf32>
    %cst_32 = arith.constant 0.00999999977 : f32
    %70 = vector.broadcast %cst_32 : f32 to vector<16x16x128xf32>
    %71 = arith.mulf %70, %67 : vector<16x16x128xf32>
    %72 = arith.select %69, %67, %71 : vector<16x16x128xi1>, vector<16x16x128xf32>
    %73 = arith.addf %72, %37 : vector<16x16x128xf32>
    %74 = vector.shape_cast %73 : vector<16x16x128xf32> to vector<256x128xf32>
    %c0_33 = arith.constant 0 : index
    %c0_34 = arith.constant 0 : index
    %75 = vector.load %arg4[%c0_33, %c0_34] : memref<128x128xf32, #tpu.memory_space<vmem>>, vector<128x128xf32>
    %cst_35 = arith.constant dense<0.000000e+00> : vector<256x128xf32>
    %76 = tpu.matmul %74, %75, %cst_35 {dimension_numbers = #tpu.dot_dimension_numbers<[1], [0], [0], [1], [0, 0, 1, 1], [], []>} : vector<256x128xf32>, vector<128x128xf32>, vector<256x128xf32> -> vector<256x128xf32>
    %77 = vector.shape_cast %76 : vector<256x128xf32> to vector<16x16x128xf32>
    %cst_36 = arith.constant dense<0.000000e+00> : vector<16x128xf32>
    %78 = vector.multi_reduction <add>, %77, %cst_36 [1] : vector<16x16x128xf32> to vector<16x128xf32>
    %c0_37 = arith.constant 0 : index
    %c0_38 = arith.constant 0 : index
    %79 = vector.load %arg5[%c0_37, %c0_38] : memref<1x128xf32, #tpu.memory_space<vmem>>, vector<1x128xf32>
    %cst_39 = arith.constant 1.600000e+01 : f32
    %80 = vector.broadcast %cst_39 : f32 to vector<1x128xf32>
    %81 = arith.mulf %80, %79 : vector<1x128xf32>
    %82 = vector.broadcast %81 : vector<1x128xf32> to vector<16x128xf32>
    %83 = arith.addf %78, %82 : vector<16x128xf32>
    %cst_40 = arith.constant 0.000000e+00 : f32
    %84 = vector.broadcast %cst_40 : f32 to vector<16x128xf32>
    %85 = arith.cmpf ogt, %83, %84 : vector<16x128xf32>
    %cst_41 = arith.constant 0.00999999977 : f32
    %86 = vector.broadcast %cst_41 : f32 to vector<16x128xf32>
    %87 = arith.mulf %86, %83 : vector<16x128xf32>
    %88 = arith.select %85, %83, %87 : vector<16x128xi1>, vector<16x128xf32>
    %89 = vector.shape_cast %88 : vector<16x128xf32> to vector<2x8x128xf32>
    %c0_42 = arith.constant 0 : index
    %c0_43 = arith.constant 0 : index
    %90 = vector.load %arg7[%c0_42, %c0_43] : memref<1x128xf32, #tpu.memory_space<vmem>>, vector<1x128xf32>
    %91 = vector.extract_strided_slice %89 {offsets = [0, 0, 0], sizes = [2, 1, 128], strides = [1, 1, 1]} : vector<2x8x128xf32> to vector<2x1x128xf32>
    %92 = vector.shape_cast %91 : vector<2x1x128xf32> to vector<2x128xf32>
    %c1_44 = arith.constant 1 : index
    %c0_45 = arith.constant 0 : index
    %c0_46 = arith.constant 0 : index
    %93 = vector.load %arg6[%c1_44, %c0_45, %c0_46] : memref<3x128x128xf32, #tpu.memory_space<vmem>>, vector<1x128x128xf32>
    %94 = vector.shape_cast %93 : vector<1x128x128xf32> to vector<128x128xf32>
    %cst_47 = arith.constant dense<0.000000e+00> : vector<2x128xf32>
    %95 = tpu.matmul %92, %94, %cst_47 {dimension_numbers = #tpu.dot_dimension_numbers<[1], [0], [0], [1], [0, 0, 1, 1], [], []>} : vector<2x128xf32>, vector<128x128xf32>, vector<2x128xf32> -> vector<2x128xf32>
    %96 = vector.broadcast %90 : vector<1x128xf32> to vector<2x128xf32>
    %97 = arith.addf %96, %95 : vector<2x128xf32>
    %98 = vector.extract_strided_slice %89 {offsets = [0, 1, 0], sizes = [2, 1, 128], strides = [1, 1, 1]} : vector<2x8x128xf32> to vector<2x1x128xf32>
    %99 = vector.shape_cast %98 : vector<2x1x128xf32> to vector<2x128xf32>
    %c2 = arith.constant 2 : index
    %c0_48 = arith.constant 0 : index
    %c0_49 = arith.constant 0 : index
    %100 = vector.load %arg6[%c2, %c0_48, %c0_49] : memref<3x128x128xf32, #tpu.memory_space<vmem>>, vector<1x128x128xf32>
    %101 = vector.shape_cast %100 : vector<1x128x128xf32> to vector<128x128xf32>
    %cst_50 = arith.constant dense<0.000000e+00> : vector<2x128xf32>
    %102 = tpu.matmul %99, %101, %cst_50 {dimension_numbers = #tpu.dot_dimension_numbers<[1], [0], [0], [1], [0, 0, 1, 1], [], []>} : vector<2x128xf32>, vector<128x128xf32>, vector<2x128xf32> -> vector<2x128xf32>
    %103 = arith.addf %97, %102 : vector<2x128xf32>
    %104 = vector.shape_cast %103 : vector<2x128xf32> to vector<2x1x128xf32>
    %c0_51 = arith.constant 0 : index
    %c0_52 = arith.constant 0 : index
    %105 = vector.load %arg7[%c0_51, %c0_52] : memref<1x128xf32, #tpu.memory_space<vmem>>, vector<1x128xf32>
    %106 = vector.extract_strided_slice %89 {offsets = [0, 1, 0], sizes = [2, 1, 128], strides = [1, 1, 1]} : vector<2x8x128xf32> to vector<2x1x128xf32>
    %107 = vector.shape_cast %106 : vector<2x1x128xf32> to vector<2x128xf32>
    %c0_53 = arith.constant 0 : index
    %c0_54 = arith.constant 0 : index
    %c0_55 = arith.constant 0 : index
    %108 = vector.load %arg6[%c0_53, %c0_54, %c0_55] : memref<3x128x128xf32, #tpu.memory_space<vmem>>, vector<1x128x128xf32>
    %109 = vector.shape_cast %108 : vector<1x128x128xf32> to vector<128x128xf32>
    %cst_56 = arith.constant dense<0.000000e+00> : vector<2x128xf32>
    %110 = tpu.matmul %107, %109, %cst_56 {dimension_numbers = #tpu.dot_dimension_numbers<[1], [0], [0], [1], [0, 0, 1, 1], [], []>} : vector<2x128xf32>, vector<128x128xf32>, vector<2x128xf32> -> vector<2x128xf32>
    %111 = vector.broadcast %105 : vector<1x128xf32> to vector<2x128xf32>
    %112 = arith.addf %111, %110 : vector<2x128xf32>
    %113 = vector.extract_strided_slice %89 {offsets = [0, 2, 0], sizes = [2, 1, 128], strides = [1, 1, 1]} : vector<2x8x128xf32> to vector<2x1x128xf32>
    %114 = vector.shape_cast %113 : vector<2x1x128xf32> to vector<2x128xf32>
    %c1_57 = arith.constant 1 : index
    %c0_58 = arith.constant 0 : index
    %c0_59 = arith.constant 0 : index
    %115 = vector.load %arg6[%c1_57, %c0_58, %c0_59] : memref<3x128x128xf32, #tpu.memory_space<vmem>>, vector<1x128x128xf32>
    %116 = vector.shape_cast %115 : vector<1x128x128xf32> to vector<128x128xf32>
    %cst_60 = arith.constant dense<0.000000e+00> : vector<2x128xf32>
    %117 = tpu.matmul %114, %116, %cst_60 {dimension_numbers = #tpu.dot_dimension_numbers<[1], [0], [0], [1], [0, 0, 1, 1], [], []>} : vector<2x128xf32>, vector<128x128xf32>, vector<2x128xf32> -> vector<2x128xf32>
    %118 = arith.addf %112, %117 : vector<2x128xf32>
    %119 = vector.extract_strided_slice %89 {offsets = [0, 3, 0], sizes = [2, 1, 128], strides = [1, 1, 1]} : vector<2x8x128xf32> to vector<2x1x128xf32>
    %120 = vector.shape_cast %119 : vector<2x1x128xf32> to vector<2x128xf32>
    %c2_61 = arith.constant 2 : index
    %c0_62 = arith.constant 0 : index
    %c0_63 = arith.constant 0 : index
    %121 = vector.load %arg6[%c2_61, %c0_62, %c0_63] : memref<3x128x128xf32, #tpu.memory_space<vmem>>, vector<1x128x128xf32>
    %122 = vector.shape_cast %121 : vector<1x128x128xf32> to vector<128x128xf32>
    %cst_64 = arith.constant dense<0.000000e+00> : vector<2x128xf32>
    %123 = tpu.matmul %120, %122, %cst_64 {dimension_numbers = #tpu.dot_dimension_numbers<[1], [0], [0], [1], [0, 0, 1, 1], [], []>} : vector<2x128xf32>, vector<128x128xf32>, vector<2x128xf32> -> vector<2x128xf32>
    %124 = arith.addf %118, %123 : vector<2x128xf32>
    %125 = vector.shape_cast %124 : vector<2x128xf32> to vector<2x1x128xf32>
    %c0_65 = arith.constant 0 : index
    %c0_66 = arith.constant 0 : index
    %126 = vector.load %arg7[%c0_65, %c0_66] : memref<1x128xf32, #tpu.memory_space<vmem>>, vector<1x128xf32>
    %127 = vector.extract_strided_slice %89 {offsets = [0, 3, 0], sizes = [2, 1, 128], strides = [1, 1, 1]} : vector<2x8x128xf32> to vector<2x1x128xf32>
    %128 = vector.shape_cast %127 : vector<2x1x128xf32> to vector<2x128xf32>
    %c0_67 = arith.constant 0 : index
    %c0_68 = arith.constant 0 : index
    %c0_69 = arith.constant 0 : index
    %129 = vector.load %arg6[%c0_67, %c0_68, %c0_69] : memref<3x128x128xf32, #tpu.memory_space<vmem>>, vector<1x128x128xf32>
    %130 = vector.shape_cast %129 : vector<1x128x128xf32> to vector<128x128xf32>
    %cst_70 = arith.constant dense<0.000000e+00> : vector<2x128xf32>
    %131 = tpu.matmul %128, %130, %cst_70 {dimension_numbers = #tpu.dot_dimension_numbers<[1], [0], [0], [1], [0, 0, 1, 1], [], []>} : vector<2x128xf32>, vector<128x128xf32>, vector<2x128xf32> -> vector<2x128xf32>
    %132 = vector.broadcast %126 : vector<1x128xf32> to vector<2x128xf32>
    %133 = arith.addf %132, %131 : vector<2x128xf32>
    %134 = vector.extract_strided_slice %89 {offsets = [0, 4, 0], sizes = [2, 1, 128], strides = [1, 1, 1]} : vector<2x8x128xf32> to vector<2x1x128xf32>
    %135 = vector.shape_cast %134 : vector<2x1x128xf32> to vector<2x128xf32>
    %c1_71 = arith.constant 1 : index
    %c0_72 = arith.constant 0 : index
    %c0_73 = arith.constant 0 : index
    %136 = vector.load %arg6[%c1_71, %c0_72, %c0_73] : memref<3x128x128xf32, #tpu.memory_space<vmem>>, vector<1x128x128xf32>
    %137 = vector.shape_cast %136 : vector<1x128x128xf32> to vector<128x128xf32>
    %cst_74 = arith.constant dense<0.000000e+00> : vector<2x128xf32>
    %138 = tpu.matmul %135, %137, %cst_74 {dimension_numbers = #tpu.dot_dimension_numbers<[1], [0], [0], [1], [0, 0, 1, 1], [], []>} : vector<2x128xf32>, vector<128x128xf32>, vector<2x128xf32> -> vector<2x128xf32>
    %139 = arith.addf %133, %138 : vector<2x128xf32>
    %140 = vector.extract_strided_slice %89 {offsets = [0, 5, 0], sizes = [2, 1, 128], strides = [1, 1, 1]} : vector<2x8x128xf32> to vector<2x1x128xf32>
    %141 = vector.shape_cast %140 : vector<2x1x128xf32> to vector<2x128xf32>
    %c2_75 = arith.constant 2 : index
    %c0_76 = arith.constant 0 : index
    %c0_77 = arith.constant 0 : index
    %142 = vector.load %arg6[%c2_75, %c0_76, %c0_77] : memref<3x128x128xf32, #tpu.memory_space<vmem>>, vector<1x128x128xf32>
    %143 = vector.shape_cast %142 : vector<1x128x128xf32> to vector<128x128xf32>
    %cst_78 = arith.constant dense<0.000000e+00> : vector<2x128xf32>
    %144 = tpu.matmul %141, %143, %cst_78 {dimension_numbers = #tpu.dot_dimension_numbers<[1], [0], [0], [1], [0, 0, 1, 1], [], []>} : vector<2x128xf32>, vector<128x128xf32>, vector<2x128xf32> -> vector<2x128xf32>
    %145 = arith.addf %139, %144 : vector<2x128xf32>
    %146 = vector.shape_cast %145 : vector<2x128xf32> to vector<2x1x128xf32>
    %c0_79 = arith.constant 0 : index
    %c0_80 = arith.constant 0 : index
    %147 = vector.load %arg7[%c0_79, %c0_80] : memref<1x128xf32, #tpu.memory_space<vmem>>, vector<1x128xf32>
    %148 = vector.extract_strided_slice %89 {offsets = [0, 5, 0], sizes = [2, 1, 128], strides = [1, 1, 1]} : vector<2x8x128xf32> to vector<2x1x128xf32>
    %149 = vector.shape_cast %148 : vector<2x1x128xf32> to vector<2x128xf32>
    %c0_81 = arith.constant 0 : index
    %c0_82 = arith.constant 0 : index
    %c0_83 = arith.constant 0 : index
    %150 = vector.load %arg6[%c0_81, %c0_82, %c0_83] : memref<3x128x128xf32, #tpu.memory_space<vmem>>, vector<1x128x128xf32>
    %151 = vector.shape_cast %150 : vector<1x128x128xf32> to vector<128x128xf32>
    %cst_84 = arith.constant dense<0.000000e+00> : vector<2x128xf32>
    %152 = tpu.matmul %149, %151, %cst_84 {dimension_numbers = #tpu.dot_dimension_numbers<[1], [0], [0], [1], [0, 0, 1, 1], [], []>} : vector<2x128xf32>, vector<128x128xf32>, vector<2x128xf32> -> vector<2x128xf32>
    %153 = vector.broadcast %147 : vector<1x128xf32> to vector<2x128xf32>
    %154 = arith.addf %153, %152 : vector<2x128xf32>
    %155 = vector.extract_strided_slice %89 {offsets = [0, 6, 0], sizes = [2, 1, 128], strides = [1, 1, 1]} : vector<2x8x128xf32> to vector<2x1x128xf32>
    %156 = vector.shape_cast %155 : vector<2x1x128xf32> to vector<2x128xf32>
    %c1_85 = arith.constant 1 : index
    %c0_86 = arith.constant 0 : index
    %c0_87 = arith.constant 0 : index
    %157 = vector.load %arg6[%c1_85, %c0_86, %c0_87] : memref<3x128x128xf32, #tpu.memory_space<vmem>>, vector<1x128x128xf32>
    %158 = vector.shape_cast %157 : vector<1x128x128xf32> to vector<128x128xf32>
    %cst_88 = arith.constant dense<0.000000e+00> : vector<2x128xf32>
    %159 = tpu.matmul %156, %158, %cst_88 {dimension_numbers = #tpu.dot_dimension_numbers<[1], [0], [0], [1], [0, 0, 1, 1], [], []>} : vector<2x128xf32>, vector<128x128xf32>, vector<2x128xf32> -> vector<2x128xf32>
    %160 = arith.addf %154, %159 : vector<2x128xf32>
    %161 = vector.extract_strided_slice %89 {offsets = [0, 7, 0], sizes = [2, 1, 128], strides = [1, 1, 1]} : vector<2x8x128xf32> to vector<2x1x128xf32>
    %162 = vector.shape_cast %161 : vector<2x1x128xf32> to vector<2x128xf32>
    %c2_89 = arith.constant 2 : index
    %c0_90 = arith.constant 0 : index
    %c0_91 = arith.constant 0 : index
    %163 = vector.load %arg6[%c2_89, %c0_90, %c0_91] : memref<3x128x128xf32, #tpu.memory_space<vmem>>, vector<1x128x128xf32>
    %164 = vector.shape_cast %163 : vector<1x128x128xf32> to vector<128x128xf32>
    %cst_92 = arith.constant dense<0.000000e+00> : vector<2x128xf32>
    %165 = tpu.matmul %162, %164, %cst_92 {dimension_numbers = #tpu.dot_dimension_numbers<[1], [0], [0], [1], [0, 0, 1, 1], [], []>} : vector<2x128xf32>, vector<128x128xf32>, vector<2x128xf32> -> vector<2x128xf32>
    %166 = arith.addf %160, %165 : vector<2x128xf32>
    %167 = vector.shape_cast %166 : vector<2x128xf32> to vector<2x1x128xf32>
    %168 = tpu.concatenate %104, %125, %146, %167 in 1 : vector<2x1x128xf32>, vector<2x1x128xf32>, vector<2x1x128xf32>, vector<2x1x128xf32> -> vector<2x4x128xf32>
    %cst_93 = arith.constant 0.000000e+00 : f32
    %169 = vector.broadcast %cst_93 : f32 to vector<2x4x128xf32>
    %170 = arith.cmpf ogt, %168, %169 : vector<2x4x128xf32>
    %cst_94 = arith.constant 0.00999999977 : f32
    %171 = vector.broadcast %cst_94 : f32 to vector<2x4x128xf32>
    %172 = arith.mulf %171, %168 : vector<2x4x128xf32>
    %173 = arith.select %170, %168, %172 : vector<2x4x128xi1>, vector<2x4x128xf32>
    %c0_95 = arith.constant 0 : index
    %c0_96 = arith.constant 0 : index
    %174 = vector.load %arg9[%c0_95, %c0_96] : memref<1x128xf32, #tpu.memory_space<vmem>>, vector<1x128xf32>
    %175 = vector.extract_strided_slice %173 {offsets = [0, 0, 0], sizes = [2, 1, 128], strides = [1, 1, 1]} : vector<2x4x128xf32> to vector<2x1x128xf32>
    %176 = vector.shape_cast %175 : vector<2x1x128xf32> to vector<2x128xf32>
    %c1_97 = arith.constant 1 : index
    %c0_98 = arith.constant 0 : index
    %c0_99 = arith.constant 0 : index
    %177 = vector.load %arg8[%c1_97, %c0_98, %c0_99] : memref<3x128x128xf32, #tpu.memory_space<vmem>>, vector<1x128x128xf32>
    %178 = vector.shape_cast %177 : vector<1x128x128xf32> to vector<128x128xf32>
    %cst_100 = arith.constant dense<0.000000e+00> : vector<2x128xf32>
    %179 = tpu.matmul %176, %178, %cst_100 {dimension_numbers = #tpu.dot_dimension_numbers<[1], [0], [0], [1], [0, 0, 1, 1], [], []>} : vector<2x128xf32>, vector<128x128xf32>, vector<2x128xf32> -> vector<2x128xf32>
    %180 = vector.broadcast %174 : vector<1x128xf32> to vector<2x128xf32>
    %181 = arith.addf %180, %179 : vector<2x128xf32>
    %182 = vector.extract_strided_slice %173 {offsets = [0, 1, 0], sizes = [2, 1, 128], strides = [1, 1, 1]} : vector<2x4x128xf32> to vector<2x1x128xf32>
    %183 = vector.shape_cast %182 : vector<2x1x128xf32> to vector<2x128xf32>
    %c2_101 = arith.constant 2 : index
    %c0_102 = arith.constant 0 : index
    %c0_103 = arith.constant 0 : index
    %184 = vector.load %arg8[%c2_101, %c0_102, %c0_103] : memref<3x128x128xf32, #tpu.memory_space<vmem>>, vector<1x128x128xf32>
    %185 = vector.shape_cast %184 : vector<1x128x128xf32> to vector<128x128xf32>
    %cst_104 = arith.constant dense<0.000000e+00> : vector<2x128xf32>
    %186 = tpu.matmul %183, %185, %cst_104 {dimension_numbers = #tpu.dot_dimension_numbers<[1], [0], [0], [1], [0, 0, 1, 1], [], []>} : vector<2x128xf32>, vector<128x128xf32>, vector<2x128xf32> -> vector<2x128xf32>
    %187 = arith.addf %181, %186 : vector<2x128xf32>
    %188 = vector.shape_cast %187 : vector<2x128xf32> to vector<2x1x128xf32>
    %c0_105 = arith.constant 0 : index
    %c0_106 = arith.constant 0 : index
    %189 = vector.load %arg9[%c0_105, %c0_106] : memref<1x128xf32, #tpu.memory_space<vmem>>, vector<1x128xf32>
    %190 = vector.extract_strided_slice %173 {offsets = [0, 1, 0], sizes = [2, 1, 128], strides = [1, 1, 1]} : vector<2x4x128xf32> to vector<2x1x128xf32>
    %191 = vector.shape_cast %190 : vector<2x1x128xf32> to vector<2x128xf32>
    %c0_107 = arith.constant 0 : index
    %c0_108 = arith.constant 0 : index
    %c0_109 = arith.constant 0 : index
    %192 = vector.load %arg8[%c0_107, %c0_108, %c0_109] : memref<3x128x128xf32, #tpu.memory_space<vmem>>, vector<1x128x128xf32>
    %193 = vector.shape_cast %192 : vector<1x128x128xf32> to vector<128x128xf32>
    %cst_110 = arith.constant dense<0.000000e+00> : vector<2x128xf32>
    %194 = tpu.matmul %191, %193, %cst_110 {dimension_numbers = #tpu.dot_dimension_numbers<[1], [0], [0], [1], [0, 0, 1, 1], [], []>} : vector<2x128xf32>, vector<128x128xf32>, vector<2x128xf32> -> vector<2x128xf32>
    %195 = vector.broadcast %189 : vector<1x128xf32> to vector<2x128xf32>
    %196 = arith.addf %195, %194 : vector<2x128xf32>
    %197 = vector.extract_strided_slice %173 {offsets = [0, 2, 0], sizes = [2, 1, 128], strides = [1, 1, 1]} : vector<2x4x128xf32> to vector<2x1x128xf32>
    %198 = vector.shape_cast %197 : vector<2x1x128xf32> to vector<2x128xf32>
    %c1_111 = arith.constant 1 : index
    %c0_112 = arith.constant 0 : index
    %c0_113 = arith.constant 0 : index
    %199 = vector.load %arg8[%c1_111, %c0_112, %c0_113] : memref<3x128x128xf32, #tpu.memory_space<vmem>>, vector<1x128x128xf32>
    %200 = vector.shape_cast %199 : vector<1x128x128xf32> to vector<128x128xf32>
    %cst_114 = arith.constant dense<0.000000e+00> : vector<2x128xf32>
    %201 = tpu.matmul %198, %200, %cst_114 {dimension_numbers = #tpu.dot_dimension_numbers<[1], [0], [0], [1], [0, 0, 1, 1], [], []>} : vector<2x128xf32>, vector<128x128xf32>, vector<2x128xf32> -> vector<2x128xf32>
    %202 = arith.addf %196, %201 : vector<2x128xf32>
    %203 = vector.extract_strided_slice %173 {offsets = [0, 3, 0], sizes = [2, 1, 128], strides = [1, 1, 1]} : vector<2x4x128xf32> to vector<2x1x128xf32>
    %204 = vector.shape_cast %203 : vector<2x1x128xf32> to vector<2x128xf32>
    %c2_115 = arith.constant 2 : index
    %c0_116 = arith.constant 0 : index
    %c0_117 = arith.constant 0 : index
    %205 = vector.load %arg8[%c2_115, %c0_116, %c0_117] : memref<3x128x128xf32, #tpu.memory_space<vmem>>, vector<1x128x128xf32>
    %206 = vector.shape_cast %205 : vector<1x128x128xf32> to vector<128x128xf32>
    %cst_118 = arith.constant dense<0.000000e+00> : vector<2x128xf32>
    %207 = tpu.matmul %204, %206, %cst_118 {dimension_numbers = #tpu.dot_dimension_numbers<[1], [0], [0], [1], [0, 0, 1, 1], [], []>} : vector<2x128xf32>, vector<128x128xf32>, vector<2x128xf32> -> vector<2x128xf32>
    %208 = arith.addf %202, %207 : vector<2x128xf32>
    %209 = vector.shape_cast %208 : vector<2x128xf32> to vector<2x1x128xf32>
    %210 = tpu.concatenate %188, %209 in 1 : vector<2x1x128xf32>, vector<2x1x128xf32> -> vector<2x2x128xf32>
    %cst_119 = arith.constant 0.000000e+00 : f32
    %211 = vector.broadcast %cst_119 : f32 to vector<2x2x128xf32>
    %212 = arith.cmpf ogt, %210, %211 : vector<2x2x128xf32>
    %cst_120 = arith.constant 0.00999999977 : f32
    %213 = vector.broadcast %cst_120 : f32 to vector<2x2x128xf32>
    %214 = arith.mulf %213, %210 : vector<2x2x128xf32>
    %215 = arith.select %212, %210, %214 : vector<2x2x128xi1>, vector<2x2x128xf32>
    %216 = vector.shape_cast %215 : vector<2x2x128xf32> to vector<4x128xf32>
    %c0_121 = arith.constant 0 : index
    %c0_122 = arith.constant 0 : index
    %217 = vector.load %arg10[%c0_121, %c0_122] : memref<128x16xf32, #tpu.memory_space<vmem>>, vector<128x16xf32>
    %cst_123 = arith.constant dense<0.000000e+00> : vector<4x16xf32>
    %218 = tpu.matmul %216, %217, %cst_123 {dimension_numbers = #tpu.dot_dimension_numbers<[1], [0], [0], [1], [0, 0, 1, 1], [], []>} : vector<4x128xf32>, vector<128x16xf32>, vector<4x16xf32> -> vector<4x16xf32>
    %c0_124 = arith.constant 0 : index
    %c0_125 = arith.constant 0 : index
    %219 = vector.load %arg11[%c0_124, %c0_125] : memref<1x16xf32, #tpu.memory_space<vmem>>, vector<1x16xf32>
    %220 = vector.broadcast %219 : vector<1x16xf32> to vector<4x16xf32>
    %221 = arith.addf %218, %220 : vector<4x16xf32>
    %cst_126 = arith.constant 0.000000e+00 : f32
    %222 = vector.broadcast %cst_126 : f32 to vector<4x16xf32>
    %223 = arith.cmpf ogt, %221, %222 : vector<4x16xf32>
    %cst_127 = arith.constant 0.00999999977 : f32
    %224 = vector.broadcast %cst_127 : f32 to vector<4x16xf32>
    %225 = arith.mulf %224, %221 : vector<4x16xf32>
    %226 = arith.select %223, %221, %225 : vector<4x16xi1>, vector<4x16xf32>
    %cst_128 = arith.constant dense<0xFF800000> : vector<4xf32>
    %227 = vector.multi_reduction <maximumf>, %226, %cst_128 [1] : vector<4x16xf32> to vector<4xf32>
    %228 = vector.shape_cast %227 : vector<4xf32> to vector<4x1xf32>
    %229 = vector.broadcast %228 : vector<4x1xf32> to vector<4x16xf32>
    %230 = arith.subf %226, %229 : vector<4x16xf32>
    %231 = math.exp %230 : vector<4x16xf32>
    %cst_129 = arith.constant dense<0.000000e+00> : vector<4xf32>
    %232 = vector.multi_reduction <add>, %231, %cst_129 [1] : vector<4x16xf32> to vector<4xf32>
    %233 = vector.shape_cast %232 : vector<4xf32> to vector<4x1xf32>
    %234 = math.log %233 : vector<4x1xf32>
    %235 = arith.addf %228, %234 : vector<4x1xf32>
    %236 = vector.broadcast %235 : vector<4x1xf32> to vector<4x16xf32>
    %237 = arith.subf %226, %236 : vector<4x16xf32>
    %238 = vector.shape_cast %237 : vector<4x16xf32> to vector<2x2x16xf32>
    %c0_130 = arith.constant 0 : index
    %c0_131 = arith.constant 0 : index
    %c0_132 = arith.constant 0 : index
    %239 = vector.load %arg12[%c0_130, %c0_131, %c0_132] : memref<2x2x16xf32, #tpu.memory_space<vmem>>, vector<2x2x16xf32>
    tpu.vector_store %arg12[%c0_130, %c0_131, %c0_132], %238 {strides = array<i32>} : memref<2x2x16xf32, #tpu.memory_space<vmem>>, vector<2x2x16xf32>,
    return
  }
}

</mosaic_0001>

<llo_original>
// kernel: gcn_net_cnn.1
$region0: #{gcn_net_cnn.1}
  #allocation0 [shape = 'u32[]', space=smem, size = 0x4, offset = 0x4, fixed_abs, tag = 'smem constant byte address 0x4 - core index']
  #allocation1 [shape = 'u32[144,128]{1,0:T(1,128)}', space=vmem, size = 0x12000, scoped, tag = 'internal scratch']
  %s0 = inlined_call_operand.hbm [shape: f32[16,16,128], index: 0, kind: input, shape index: {}]
  %s1 = inlined_call_operand.hbm [shape: f32[16,16,16], index: 1, kind: input, shape index: {}]
  %s2 = inlined_call_operand.hbm [shape: f32[2,128,128], index: 2, kind: input, shape index: {}]
  %s3 = inlined_call_operand.vmem [shape: f32[2,1,128], index: 3, kind: input, shape index: {}]
  %s4 = inlined_call_operand.vmem [shape: f32[128,128], index: 4, kind: input, shape index: {}]
  %s5 = inlined_call_operand.vmem [shape: f32[1,128], index: 5, kind: input, shape index: {}]
  %s6 = inlined_call_operand.hbm [shape: f32[3,128,128], index: 6, kind: input, shape index: {}]
  %s7 = inlined_call_operand.vmem [shape: f32[1,128], index: 7, kind: input, shape index: {}]
  %s8 = inlined_call_operand.hbm [shape: f32[3,128,128], index: 8, kind: input, shape index: {}]
  %s9 = inlined_call_operand.vmem [shape: f32[1,128], index: 9, kind: input, shape index: {}]
  %s10 = inlined_call_operand.vmem [shape: f32[128,16], index: 10, kind: input, shape index: {}]
  %s11 = inlined_call_operand.vmem [shape: f32[1,16], index: 11, kind: input, shape index: {}]
  %s12 = inlined_call_operand.hbm [shape: f32[2,2,16], index: 12, kind: output, shape index: {}]
  %s13 = sld [smem:[#allocation0]]
  $region78: #{gcn_net_cnn.1} parent=0
    _
  %s15 = ssub.s32 1, %s13
  %s16 = scalar_select 0, %s15, %s13
  $region1: #{gcn_net_cnn.1} parent=0
    #allocation2 [shape = 'u8[131072]{0}', space=vmem, size = 0x20000, scoped, tag = 'input window, operand 0, single buffered']
    #allocation3 [shape = 's32[1]{0}', space=sflag, size = 0x4, scoped, tag = 'scoped memory for gcn_net_cnn.1']
    #allocation4 [shape = 's32[1]{0}', space=sflag, size = 0x4, scoped, tag = 'scoped memory for gcn_net_cnn.1']
    #allocation5 [shape = 'u8[131072]{0}', space=vmem, size = 0x20000, scoped, tag = 'input window, operand 1, single buffered']
    #allocation6 [shape = 's32[1]{0}', space=sflag, size = 0x4, scoped, tag = 'scoped memory for gcn_net_cnn.1']
    #allocation7 [shape = 'u8[131072]{0}', space=vmem, size = 0x20000, scoped, tag = 'input window, operand 2, single buffered']
    #allocation8 [shape = 'u8[196608]{0}', space=vmem, size = 0x30000, scoped, tag = 'input window, operand 6, single buffered']
    #allocation9 [shape = 's32[1]{0}', space=sflag, size = 0x4, scoped, tag = 'scoped memory for gcn_net_cnn.1']
    #allocation10 [shape = 'u8[196608]{0}', space=vmem, size = 0x30000, scoped, tag = 'input window, operand 8, single buffered']
    #allocation11 [shape = 'u8[2048]{0}', space=vmem, size = 0x800, scoped, tag = 'output window, operand 0, single buffered']
    %17 = vsyncpa [#allocation3], 0
    %18 = vsyncpa [#allocation6], 0
    %19 = vsyncpa [#allocation9], 0
    %20 = vsyncpa [#allocation4], 0
    // Predicated region
    $region2: #{gcn_net_cnn.1} parent=1 // pred_check
      _
    $region3: #{gcn_net_cnn.1} parent=1 // pred_check_branch
      %22 = sbr.rel (0) target = $region5
    $region4: #{gcn_net_cnn.1} parent=1 // pred_region
      %s24 = ssub.s32 4096, 4096
      %25 = vsyncadd [#allocation3], %s24
      %s26 = sshll.u32 [#allocation2], 4
      %s27 = int_to_ptr.vmem [resolvable:$true] %s26
      %32 = dma.hbm_to_vmem [thread:$0]  %s0, 4096, %s27, [#allocation3], 128, 128, 8
    $region5: #{gcn_net_cnn.1} parent=1 // pred_fallthru
      _
    // Predicated region
    $region6: #{gcn_net_cnn.1} parent=1 // pred_check
      _
    $region7: #{gcn_net_cnn.1} parent=1 // pred_check_branch
      %34 = sbr.rel (0) target = $region9
    $region8: #{gcn_net_cnn.1} parent=1 // pred_region
      %s36 = ssub.s32 4096, 4096
      %37 = vsyncadd [#allocation6], %s36
      %s38 = sshll.u32 [#allocation5], 4
      %s39 = int_to_ptr.vmem [resolvable:$true] %s38
      %44 = dma.hbm_to_vmem [thread:$0]  %s1, 4096, %s39, [#allocation6], 128, 128, 8
    $region9: #{gcn_net_cnn.1} parent=1 // pred_fallthru
      _
    // Predicated region
    $region10: #{gcn_net_cnn.1} parent=1 // pred_check
      _
    $region11: #{gcn_net_cnn.1} parent=1 // pred_check_branch
      %46 = sbr.rel (0) target = $region13
    $region12: #{gcn_net_cnn.1} parent=1 // pred_region
      %s48 = ssub.s32 4096, 4096
      %49 = vsyncadd [#allocation6], %s48
      %s50 = sshll.u32 [#allocation7], 4
      %s51 = int_to_ptr.vmem [resolvable:$true] %s50
      %56 = dma.hbm_to_vmem [thread:$0]  %s2, 4096, %s51, [#allocation6], 128, 128, 8
    $region13: #{gcn_net_cnn.1} parent=1 // pred_fallthru
      _
    // Predicated region
    $region14: #{gcn_net_cnn.1} parent=1 // pred_check
      _
    $region15: #{gcn_net_cnn.1} parent=1 // pred_check_branch
      %58 = sbr.rel (0) target = $region17
    $region16: #{gcn_net_cnn.1} parent=1 // pred_region
      _
    $region17: #{gcn_net_cnn.1} parent=1 // pred_fallthru
      _
    // Predicated region
    $region18: #{gcn_net_cnn.1} parent=1 // pred_check
      _
    $region19: #{gcn_net_cnn.1} parent=1 // pred_check_branch
      %60 = sbr.rel (0) target = $region21
    $region20: #{gcn_net_cnn.1} parent=1 // pred_region
      _
    $region21: #{gcn_net_cnn.1} parent=1 // pred_fallthru
      _
    // Predicated region
    $region22: #{gcn_net_cnn.1} parent=1 // pred_check
      _
    $region23: #{gcn_net_cnn.1} parent=1 // pred_check_branch
      %62 = sbr.rel (0) target = $region25
    $region24: #{gcn_net_cnn.1} parent=1 // pred_region
      _
    $region25: #{gcn_net_cnn.1} parent=1 // pred_fallthru
      _
    // Predicated region
    $region26: #{gcn_net_cnn.1} parent=1 // pred_check
      _
    $region27: #{gcn_net_cnn.1} parent=1 // pred_check_branch
      %64 = sbr.rel (0) target = $region29
    $region28: #{gcn_net_cnn.1} parent=1 // pred_region
      %s66 = ssub.s32 6144, 6144
      %67 = vsyncadd [#allocation9], %s66
      %s68 = sshll.u32 [#allocation8], 4
      %s69 = int_to_ptr.vmem [resolvable:$true] %s68
      %74 = dma.hbm_to_vmem [thread:$0]  %s6, 6144, %s69, [#allocation9], 128, 128, 8
    $region29: #{gcn_net_cnn.1} parent=1 // pred_fallthru
      _
    // Predicated region
    $region30: #{gcn_net_cnn.1} parent=1 // pred_check
      _
    $region31: #{gcn_net_cnn.1} parent=1 // pred_check_branch
      %76 = sbr.rel (0) target = $region33
    $region32: #{gcn_net_cnn.1} parent=1 // pred_region
      _
    $region33: #{gcn_net_cnn.1} parent=1 // pred_fallthru
      _
    // Predicated region
    $region34: #{gcn_net_cnn.1} parent=1 // pred_check
      _
    $region35: #{gcn_net_cnn.1} parent=1 // pred_check_branch
      %78 = sbr.rel (0) target = $region37
    $region36: #{gcn_net_cnn.1} parent=1 // pred_region
      %s80 = ssub.s32 6144, 6144
      %81 = vsyncadd [#allocation9], %s80
      %s82 = sshll.u32 [#allocation10], 4
      %s83 = int_to_ptr.vmem [resolvable:$true] %s82
      %88 = dma.hbm_to_vmem [thread:$0]  %s8, 6144, %s83, [#allocation9], 128, 128, 8
    $region37: #{gcn_net_cnn.1} parent=1 // pred_fallthru
      _
    // Predicated region
    $region38: #{gcn_net_cnn.1} parent=1 // pred_check
      _
    $region39: #{gcn_net_cnn.1} parent=1 // pred_check_branch
      %90 = sbr.rel (0) target = $region41
    $region40: #{gcn_net_cnn.1} parent=1 // pred_region
      _
    $region41: #{gcn_net_cnn.1} parent=1 // pred_fallthru
      _
    // Predicated region
    $region42: #{gcn_net_cnn.1} parent=1 // pred_check
      _
    $region43: #{gcn_net_cnn.1} parent=1 // pred_check_branch
      %92 = sbr.rel (0) target = $region45
    $region44: #{gcn_net_cnn.1} parent=1 // pred_region
      _
    $region45: #{gcn_net_cnn.1} parent=1 // pred_fallthru
      _
    // Predicated region
    $region46: #{gcn_net_cnn.1} parent=1 // pred_check
      _
    $region47: #{gcn_net_cnn.1} parent=1 // pred_check_branch
      %94 = sbr.rel (0) target = $region49
    $region48: #{gcn_net_cnn.1} parent=1 // pred_region
      _
    $region49: #{gcn_net_cnn.1} parent=1 // pred_fallthru
      _
    // Predicated region
    $region50: #{gcn_net_cnn.1} parent=1 // pred_check
      _
    $region51: #{gcn_net_cnn.1} parent=1 // pred_check_branch
      %96 = sbr.rel (0) target = $region53
    $region52: #{gcn_net_cnn.1} parent=1 // pred_region
      %97 = dma.done [#allocation3], 4096
    $region53: #{gcn_net_cnn.1} parent=1 // pred_fallthru
      _
    // Predicated region
    $region54: #{gcn_net_cnn.1} parent=1 // pred_check
      _
    $region55: #{gcn_net_cnn.1} parent=1 // pred_check_branch
      %99 = sbr.rel (0) target = $region57
    $region56: #{gcn_net_cnn.1} parent=1 // pred_region
      %100 = dma.done [#allocation6], 4096
    $region57: #{gcn_net_cnn.1} parent=1 // pred_fallthru
      _
    // Predicated region
    $region58: #{gcn_net_cnn.1} parent=1 // pred_check
      _
    $region59: #{gcn_net_cnn.1} parent=1 // pred_check_branch
      %102 = sbr.rel (0) target = $region61
    $region60: #{gcn_net_cnn.1} parent=1 // pred_region
      %103 = dma.done [#allocation6], 4096
    $region61: #{gcn_net_cnn.1} parent=1 // pred_fallthru
      _
    // Predicated region
    $region62: #{gcn_net_cnn.1} parent=1 // pred_check
      _
    $region63: #{gcn_net_cnn.1} parent=1 // pred_check_branch
      %105 = sbr.rel (0) target = $region65
    $region64: #{gcn_net_cnn.1} parent=1 // pred_region
      %106 = dma.done [#allocation9], 6144
    $region65: #{gcn_net_cnn.1} parent=1 // pred_fallthru
      _
    // Predicated region
    $region66: #{gcn_net_cnn.1} parent=1 // pred_check
      _
    $region67: #{gcn_net_cnn.1} parent=1 // pred_check_branch
      %108 = sbr.rel (0) target = $region69
    $region68: #{gcn_net_cnn.1} parent=1 // pred_region
      %109 = dma.done [#allocation9], 6144
    $region69: #{gcn_net_cnn.1} parent=1 // pred_fallthru
      _
    %v110 = vld [vmem:[#allocation2] sm:$0xff]
    %v111 = vld [vmem:[#allocation2 + $0x8] sm:$0xff]
    %v112 = vld [vmem:[#allocation2 + $0x10] sm:$0xff]
    %v113 = vld [vmem:[#allocation2 + $0x18] sm:$0xff]
    %v114 = vld [vmem:[#allocation2 + $0x20] sm:$0xff]
    %v115 = vld [vmem:[#allocation2 + $0x28] sm:$0xff]
    %v116 = vld [vmem:[#allocation2 + $0x30] sm:$0xff]
    %v117 = vld [vmem:[#allocation2 + $0x38] sm:$0xff]
    %v118 = vld [vmem:[#allocation2 + $0x40] sm:$0xff]
    %v119 = vld [vmem:[#allocation2 + $0x48] sm:$0xff]
    %v120 = vld [vmem:[#allocation2 + $0x50] sm:$0xff]
    %v121 = vld [vmem:[#allocation2 + $0x58] sm:$0xff]
    %v122 = vld [vmem:[#allocation2 + $0x60] sm:$0xff]
    %v123 = vld [vmem:[#allocation2 + $0x68] sm:$0xff]
    %v124 = vld [vmem:[#allocation2 + $0x70] sm:$0xff]
    %v125 = vld [vmem:[#allocation2 + $0x78] sm:$0xff]
    %v126 = vld [vmem:[#allocation2 + $0x80] sm:$0xff]
    %v127 = vld [vmem:[#allocation2 + $0x88] sm:$0xff]
    %v128 = vld [vmem:[#allocation2 + $0x90] sm:$0xff]
    %v129 = vld [vmem:[#allocation2 + $0x98] sm:$0xff]
    %v130 = vld [vmem:[#allocation2 + $0xa0] sm:$0xff]
    %v131 = vld [vmem:[#allocation2 + $0xa8] sm:$0xff]
    %v132 = vld [vmem:[#allocation2 + $0xb0] sm:$0xff]
    %v133 = vld [vmem:[#allocation2 + $0xb8] sm:$0xff]
    %v134 = vld [vmem:[#allocation2 + $0xc0] sm:$0xff]
    %v135 = vld [vmem:[#allocation2 + $0xc8] sm:$0xff]
    %v136 = vld [vmem:[#allocation2 + $0xd0] sm:$0xff]
    %v137 = vld [vmem:[#allocation2 + $0xd8] sm:$0xff]
    %v138 = vld [vmem:[#allocation2 + $0xe0] sm:$0xff]
    %v139 = vld [vmem:[#allocation2 + $0xe8] sm:$0xff]
    %v140 = vld [vmem:[#allocation2 + $0xf0] sm:$0xff]
    %v141 = vld [vmem:[#allocation2 + $0xf8] sm:$0xff]
    %v142 = vld [vmem:[#allocation5] sm:$0xff]
    %v143 = vld [vmem:[#allocation5 + $0x8] sm:$0xff]
    %v144 = vld [vmem:[#allocation5 + $0x10] sm:$0xff]
    %v145 = vld [vmem:[#allocation5 + $0x18] sm:$0xff]
    %v146 = vld [vmem:[#allocation5 + $0x20] sm:$0xff]
    %v147 = vld [vmem:[#allocation5 + $0x28] sm:$0xff]
    %v148 = vld [vmem:[#allocation5 + $0x30] sm:$0xff]
    %v149 = vld [vmem:[#allocation5 + $0x38] sm:$0xff]
    %v150 = vld [vmem:[#allocation5 + $0x40] sm:$0xff]
    %v151 = vld [vmem:[#allocation5 + $0x48] sm:$0xff]
    %v152 = vld [vmem:[#allocation5 + $0x50] sm:$0xff]
    %v153 = vld [vmem:[#allocation5 + $0x58] sm:$0xff]
    %v154 = vld [vmem:[#allocation5 + $0x60] sm:$0xff]
    %v155 = vld [vmem:[#allocation5 + $0x68] sm:$0xff]
    %v156 = vld [vmem:[#allocation5 + $0x70] sm:$0xff]
    %v157 = vld [vmem:[#allocation5 + $0x78] sm:$0xff]
    %v158 = vld [vmem:[#allocation5 + $0x80] sm:$0xff]
    %v159 = vld [vmem:[#allocation5 + $0x88] sm:$0xff]
    %v160 = vld [vmem:[#allocation5 + $0x90] sm:$0xff]
    %v161 = vld [vmem:[#allocation5 + $0x98] sm:$0xff]
    %v162 = vld [vmem:[#allocation5 + $0xa0] sm:$0xff]
    %v163 = vld [vmem:[#allocation5 + $0xa8] sm:$0xff]
    %v164 = vld [vmem:[#allocation5 + $0xb0] sm:$0xff]
    %v165 = vld [vmem:[#allocation5 + $0xb8] sm:$0xff]
    %v166 = vld [vmem:[#allocation5 + $0xc0] sm:$0xff]
    %v167 = vld [vmem:[#allocation5 + $0xc8] sm:$0xff]
    %v168 = vld [vmem:[#allocation5 + $0xd0] sm:$0xff]
    %v169 = vld [vmem:[#allocation5 + $0xd8] sm:$0xff]
    %v170 = vld [vmem:[#allocation5 + $0xe0] sm:$0xff]
    %v171 = vld [vmem:[#allocation5 + $0xe8] sm:$0xff]
    %v172 = vld [vmem:[#allocation5 + $0xf0] sm:$0xff]
    %v173 = vld [vmem:[#allocation5 + $0xf8] sm:$0xff]
    %174 = vadd.xlane.f32.xlu0 %v110
    %v175 = vpop.xlane.xlu0 %174
    %176 = vadd.xlane.f32.xlu0 %v111
    %v177 = vpop.xlane.xlu0 %176
    %178 = vadd.xlane.f32.xlu0 %v112
    %v179 = vpop.xlane.xlu0 %178
    %180 = vadd.xlane.f32.xlu0 %v113
    %v181 = vpop.xlane.xlu0 %180
    %182 = vadd.xlane.f32.xlu0 %v114
    %v183 = vpop.xlane.xlu0 %182
    %184 = vadd.xlane.f32.xlu0 %v115
    %v185 = vpop.xlane.xlu0 %184
    %186 = vadd.xlane.f32.xlu0 %v116
    %v187 = vpop.xlane.xlu0 %186
    %188 = vadd.xlane.f32.xlu0 %v117
    %v189 = vpop.xlane.xlu0 %188
    %190 = vadd.xlane.f32.xlu0 %v118
    %v191 = vpop.xlane.xlu0 %190
    %192 = vadd.xlane.f32.xlu0 %v119
    %v193 = vpop.xlane.xlu0 %192
    %194 = vadd.xlane.f32.xlu0 %v120
    %v195 = vpop.xlane.xlu0 %194
    %196 = vadd.xlane.f32.xlu0 %v121
    %v197 = vpop.xlane.xlu0 %196
    %198 = vadd.xlane.f32.xlu0 %v122
    %v199 = vpop.xlane.xlu0 %198
    %200 = vadd.xlane.f32.xlu0 %v123
    %v201 = vpop.xlane.xlu0 %200
    %202 = vadd.xlane.f32.xlu0 %v124
    %v203 = vpop.xlane.xlu0 %202
    %204 = vadd.xlane.f32.xlu0 %v125
    %v205 = vpop.xlane.xlu0 %204
    %206 = vadd.xlane.f32.xlu0 %v126
    %v207 = vpop.xlane.xlu0 %206
    %208 = vadd.xlane.f32.xlu0 %v127
    %v209 = vpop.xlane.xlu0 %208
    %210 = vadd.xlane.f32.xlu0 %v128
    %v211 = vpop.xlane.xlu0 %210
    %212 = vadd.xlane.f32.xlu0 %v129
    %v213 = vpop.xlane.xlu0 %212
    %214 = vadd.xlane.f32.xlu0 %v130
    %v215 = vpop.xlane.xlu0 %214
    %216 = vadd.xlane.f32.xlu0 %v131
    %v217 = vpop.xlane.xlu0 %216
    %218 = vadd.xlane.f32.xlu0 %v132
    %v219 = vpop.xlane.xlu0 %218
    %220 = vadd.xlane.f32.xlu0 %v133
    %v221 = vpop.xlane.xlu0 %220
    %222 = vadd.xlane.f32.xlu0 %v134
    %v223 = vpop.xlane.xlu0 %222
    %224 = vadd.xlane.f32.xlu0 %v135
    %v225 = vpop.xlane.xlu0 %224
    %226 = vadd.xlane.f32.xlu0 %v136
    %v227 = vpop.xlane.xlu0 %226
    %228 = vadd.xlane.f32.xlu0 %v137
    %v229 = vpop.xlane.xlu0 %228
    %230 = vadd.xlane.f32.xlu0 %v138
    %v231 = vpop.xlane.xlu0 %230
    %232 = vadd.xlane.f32.xlu0 %v139
    %v233 = vpop.xlane.xlu0 %232
    %234 = vadd.xlane.f32.xlu0 %v140
    %v235 = vpop.xlane.xlu0 %234
    %236 = vadd.xlane.f32.xlu0 %v141
    %v237 = vpop.xlane.xlu0 %236
    %v238 = vrcp.pop 128.0
    %v239 = vmul.f32 %v175, %v238
    %v240 = vmul.f32 %v177, %v238
    %v241 = vmul.f32 %v179, %v238
    %v242 = vmul.f32 %v181, %v238
    %v243 = vmul.f32 %v183, %v238
    %v244 = vmul.f32 %v185, %v238
    %v245 = vmul.f32 %v187, %v238
    %v246 = vmul.f32 %v189, %v238
    %v247 = vmul.f32 %v191, %v238
    %v248 = vmul.f32 %v193, %v238
    %v249 = vmul.f32 %v195, %v238
    %v250 = vmul.f32 %v197, %v238
    %v251 = vmul.f32 %v199, %v238
    %v252 = vmul.f32 %v201, %v238
    %v253 = vmul.f32 %v203, %v238
    %v254 = vmul.f32 %v205, %v238
    %v255 = vmul.f32 %v207, %v238
    %v256 = vmul.f32 %v209, %v238
    %v257 = vmul.f32 %v211, %v238
    %v258 = vmul.f32 %v213, %v238
    %v259 = vmul.f32 %v215, %v238
    %v260 = vmul.f32 %v217, %v238
    %v261 = vmul.f32 %v219, %v238
    %v262 = vmul.f32 %v221, %v238
    %v263 = vmul.f32 %v223, %v238
    %v264 = vmul.f32 %v225, %v238
    %v265 = vmul.f32 %v227, %v238
    %v266 = vmul.f32 %v229, %v238
    %v267 = vmul.f32 %v231, %v238
    %v268 = vmul.f32 %v233, %v238
    %v269 = vmul.f32 %v235, %v238
    %v270 = vmul.f32 %v237, %v238
    %v271 = vsub.f32 %v110, %v239
    %v272 = vsub.f32 %v111, %v240
    %v273 = vsub.f32 %v112, %v241
    %v274 = vsub.f32 %v113, %v242
    %v275 = vsub.f32 %v114, %v243
    %v276 = vsub.f32 %v115, %v244
    %v277 = vsub.f32 %v116, %v245
    %v278 = vsub.f32 %v117, %v246
    %v279 = vsub.f32 %v118, %v247
    %v280 = vsub.f32 %v119, %v248
    %v281 = vsub.f32 %v120, %v249
    %v282 = vsub.f32 %v121, %v250
    %v283 = vsub.f32 %v122, %v251
    %v284 = vsub.f32 %v123, %v252
    %v285 = vsub.f32 %v124, %v253
    %v286 = vsub.f32 %v125, %v254
    %v287 = vsub.f32 %v126, %v255
    %v288 = vsub.f32 %v127, %v256
    %v289 = vsub.f32 %v128, %v257
    %v290 = vsub.f32 %v129, %v258
    %v291 = vsub.f32 %v130, %v259
    %v292 = vsub.f32 %v131, %v260
    %v293 = vsub.f32 %v132, %v261
    %v294 = vsub.f32 %v133, %v262
    %v295 = vsub.f32 %v134, %v263
    %v296 = vsub.f32 %v135, %v264
    %v297 = vsub.f32 %v136, %v265
    %v298 = vsub.f32 %v137, %v266
    %v299 = vsub.f32 %v138, %v267
    %v300 = vsub.f32 %v139, %v268
    %v301 = vsub.f32 %v140, %v269
    %v302 = vsub.f32 %v141, %v270
    %v303 = vmul.f32 %v271, %v271
    %v304 = vmul.f32 %v272, %v272
    %v305 = vmul.f32 %v273, %v273
    %v306 = vmul.f32 %v274, %v274
    %v307 = vmul.f32 %v275, %v275
    %v308 = vmul.f32 %v276, %v276
    %v309 = vmul.f32 %v277, %v277
    %v310 = vmul.f32 %v278, %v278
    %v311 = vmul.f32 %v279, %v279
    %v312 = vmul.f32 %v280, %v280
    %v313 = vmul.f32 %v281, %v281
    %v314 = vmul.f32 %v282, %v282
    %v315 = vmul.f32 %v283, %v283
    %v316 = vmul.f32 %v284, %v284
    %v317 = vmul.f32 %v285, %v285
    %v318 = vmul.f32 %v286, %v286
    %v319 = vmul.f32 %v287, %v287
    %v320 = vmul.f32 %v288, %v288
    %v321 = vmul.f32 %v289, %v289
    %v322 = vmul.f32 %v290, %v290
    %v323 = vmul.f32 %v291, %v291
    %v324 = vmul.f32 %v292, %v292
    %v325 = vmul.f32 %v293, %v293
    %v326 = vmul.f32 %v294, %v294
    %v327 = vmul.f32 %v295, %v295
    %v328 = vmul.f32 %v296, %v296
    %v329 = vmul.f32 %v297, %v297
    %v330 = vmul.f32 %v298, %v298
    %v331 = vmul.f32 %v299, %v299
    %v332 = vmul.f32 %v300, %v300
    %v333 = vmul.f32 %v301, %v301
    %v334 = vmul.f32 %v302, %v302
    %335 = vadd.xlane.f32.xlu0 %v303
    %v336 = vpop.xlane.xlu0 %335
    %337 = vadd.xlane.f32.xlu0 %v304
    %v338 = vpop.xlane.xlu0 %337
    %339 = vadd.xlane.f32.xlu0 %v305
    %v340 = vpop.xlane.xlu0 %339
    %341 = vadd.xlane.f32.xlu0 %v306
    %v342 = vpop.xlane.xlu0 %341
    %343 = vadd.xlane.f32.xlu0 %v307
    %v344 = vpop.xlane.xlu0 %343
    %345 = vadd.xlane.f32.xlu0 %v308
    %v346 = vpop.xlane.xlu0 %345
    %347 = vadd.xlane.f32.xlu0 %v309
    %v348 = vpop.xlane.xlu0 %347
    %349 = vadd.xlane.f32.xlu0 %v310
    %v350 = vpop.xlane.xlu0 %349
    %351 = vadd.xlane.f32.xlu0 %v311
    %v352 = vpop.xlane.xlu0 %351
    %353 = vadd.xlane.f32.xlu0 %v312
    %v354 = vpop.xlane.xlu0 %353
    %355 = vadd.xlane.f32.xlu0 %v313
    %v356 = vpop.xlane.xlu0 %355
    %357 = vadd.xlane.f32.xlu0 %v314
    %v358 = vpop.xlane.xlu0 %357
    %359 = vadd.xlane.f32.xlu0 %v315
    %v360 = vpop.xlane.xlu0 %359
    %361 = vadd.xlane.f32.xlu0 %v316
    %v362 = vpop.xlane.xlu0 %361
    %363 = vadd.xlane.f32.xlu0 %v317
    %v364 = vpop.xlane.xlu0 %363
    %365 = vadd.xlane.f32.xlu0 %v318
    %v366 = vpop.xlane.xlu0 %365
    %367 = vadd.xlane.f32.xlu0 %v319
    %v368 = vpop.xlane.xlu0 %367
    %369 = vadd.xlane.f32.xlu0 %v320
    %v370 = vpop.xlane.xlu0 %369
    %371 = vadd.xlane.f32.xlu0 %v321
    %v372 = vpop.xlane.xlu0 %371
    %373 = vadd.xlane.f32.xlu0 %v322
    %v374 = vpop.xlane.xlu0 %373
    %375 = vadd.xlane.f32.xlu0 %v323
    %v376 = vpop.xlane.xlu0 %375
    %377 = vadd.xlane.f32.xlu0 %v324
    %v378 = vpop.xlane.xlu0 %377
    %379 = vadd.xlane.f32.xlu0 %v325
    %v380 = vpop.xlane.xlu0 %379
    %381 = vadd.xlane.f32.xlu0 %v326
    %v382 = vpop.xlane.xlu0 %381
    %383 = vadd.xlane.f32.xlu0 %v327
    %v384 = vpop.xlane.xlu0 %383
    %385 = vadd.xlane.f32.xlu0 %v328
    %v386 = vpop.xlane.xlu0 %385
    %387 = vadd.xlane.f32.xlu0 %v329
    %v388 = vpop.xlane.xlu0 %387
    %389 = vadd.xlane.f32.xlu0 %v330
    %v390 = vpop.xlane.xlu0 %389
    %391 = vadd.xlane.f32.xlu0 %v331
    %v392 = vpop.xlane.xlu0 %391
    %393 = vadd.xlane.f32.xlu0 %v332
    %v394 = vpop.xlane.xlu0 %393
    %395 = vadd.xlane.f32.xlu0 %v333
    %v396 = vpop.xlane.xlu0 %395
    %397 = vadd.xlane.f32.xlu0 %v334
    %v398 = vpop.xlane.xlu0 %397
    %v399 = vmul.f32 %v336, %v238
    %v400 = vmul.f32 %v338, %v238
    %v401 = vmul.f32 %v340, %v238
    %v402 = vmul.f32 %v342, %v238
    %v403 = vmul.f32 %v344, %v238
    %v404 = vmul.f32 %v346, %v238
    %v405 = vmul.f32 %v348, %v238
    %v406 = vmul.f32 %v350, %v238
    %v407 = vmul.f32 %v352, %v238
    %v408 = vmul.f32 %v354, %v238
    %v409 = vmul.f32 %v356, %v238
    %v410 = vmul.f32 %v358, %v238
    %v411 = vmul.f32 %v360, %v238
    %v412 = vmul.f32 %v362, %v238
    %v413 = vmul.f32 %v364, %v238
    %v414 = vmul.f32 %v366, %v238
    %v415 = vmul.f32 %v368, %v238
    %v416 = vmul.f32 %v370, %v238
    %v417 = vmul.f32 %v372, %v238
    %v418 = vmul.f32 %v374, %v238
    %v419 = vmul.f32 %v376, %v238
    %v420 = vmul.f32 %v378, %v238
    %v421 = vmul.f32 %v380, %v238
    %v422 = vmul.f32 %v382, %v238
    %v423 = vmul.f32 %v384, %v238
    %v424 = vmul.f32 %v386, %v238
    %v425 = vmul.f32 %v388, %v238
    %v426 = vmul.f32 %v390, %v238
    %v427 = vmul.f32 %v392, %v238
    %v428 = vmul.f32 %v394, %v238
    %v429 = vmul.f32 %v396, %v238
    %v430 = vmul.f32 %v398, %v238
    %v431 = vadd.f32 %v399, 1e-05
    %v432 = vadd.f32 %v400, 1e-05
    %v433 = vadd.f32 %v401, 1e-05
    %v434 = vadd.f32 %v402, 1e-05
    %v435 = vadd.f32 %v403, 1e-05
    %v436 = vadd.f32 %v404, 1e-05
    %v437 = vadd.f32 %v405, 1e-05
    %v438 = vadd.f32 %v406, 1e-05
    %v439 = vadd.f32 %v407, 1e-05
    %v440 = vadd.f32 %v408, 1e-05
    %v441 = vadd.f32 %v409, 1e-05
    %v442 = vadd.f32 %v410, 1e-05
    %v443 = vadd.f32 %v411, 1e-05
    %v444 = vadd.f32 %v412, 1e-05
    %v445 = vadd.f32 %v413, 1e-05
    %v446 = vadd.f32 %v414, 1e-05
    %v447 = vadd.f32 %v415, 1e-05
    %v448 = vadd.f32 %v416, 1e-05
    %v449 = vadd.f32 %v417, 1e-05
    %v450 = vadd.f32 %v418, 1e-05
    %v451 = vadd.f32 %v419, 1e-05
    %v452 = vadd.f32 %v420, 1e-05
    %v453 = vadd.f32 %v421, 1e-05
    %v454 = vadd.f32 %v422, 1e-05
    %v455 = vadd.f32 %v423, 1e-05
    %v456 = vadd.f32 %v424, 1e-05
    %v457 = vadd.f32 %v425, 1e-05
    %v458 = vadd.f32 %v426, 1e-05
    %v459 = vadd.f32 %v427, 1e-05
    %v460 = vadd.f32 %v428, 1e-05
    %v461 = vadd.f32 %v429, 1e-05
    %v462 = vadd.f32 %v430, 1e-05
    %v463 = vrsqrt.pop %v431
    %v464 = vrsqrt.pop %v432
    %v465 = vrsqrt.pop %v433
    %v466 = vrsqrt.pop %v434
    %v467 = vrsqrt.pop %v435
    %v468 = vrsqrt.pop %v436
    %v469 = vrsqrt.pop %v437
    %v470 = vrsqrt.pop %v438
    %v471 = vrsqrt.pop %v439
    %v472 = vrsqrt.pop %v440
    %v473 = vrsqrt.pop %v441
    %v474 = vrsqrt.pop %v442
    %v475 = vrsqrt.pop %v443
    %v476 = vrsqrt.pop %v444
    %v477 = vrsqrt.pop %v445
    %v478 = vrsqrt.pop %v446
    %v479 = vrsqrt.pop %v447
    %v480 = vrsqrt.pop %v448
    %v481 = vrsqrt.pop %v449
    %v482 = vrsqrt.pop %v450
    %v483 = vrsqrt.pop %v451
    %v484 = vrsqrt.pop %v452
    %v485 = vrsqrt.pop %v453
    %v486 = vrsqrt.pop %v454
    %v487 = vrsqrt.pop %v455
    %v488 = vrsqrt.pop %v456
    %v489 = vrsqrt.pop %v457
    %v490 = vrsqrt.pop %v458
    %v491 = vrsqrt.pop %v459
    %v492 = vrsqrt.pop %v460
    %v493 = vrsqrt.pop %v461
    %v494 = vrsqrt.pop %v462
    %v495 = vmul.f32 %v271, %v463
    %v496 = vmul.f32 %v272, %v464
    %v497 = vmul.f32 %v273, %v465
    %v498 = vmul.f32 %v274, %v466
    %v499 = vmul.f32 %v275, %v467
    %v500 = vmul.f32 %v276, %v468
    %v501 = vmul.f32 %v277, %v469
    %v502 = vmul.f32 %v278, %v470
    %v503 = vmul.f32 %v279, %v471
    %v504 = vmul.f32 %v280, %v472
    %v505 = vmul.f32 %v281, %v473
    %v506 = vmul.f32 %v282, %v474
    %v507 = vmul.f32 %v283, %v475
    %v508 = vmul.f32 %v284, %v476
    %v509 = vmul.f32 %v285, %v477
    %v510 = vmul.f32 %v286, %v478
    %v511 = vmul.f32 %v287, %v479
    %v512 = vmul.f32 %v288, %v480
    %v513 = vmul.f32 %v289, %v481
    %v514 = vmul.f32 %v290, %v482
    %v515 = vmul.f32 %v291, %v483
    %v516 = vmul.f32 %v292, %v484
    %v517 = vmul.f32 %v293, %v485
    %v518 = vmul.f32 %v294, %v486
    %v519 = vmul.f32 %v295, %v487
    %v520 = vmul.f32 %v296, %v488
    %v521 = vmul.f32 %v297, %v489
    %v522 = vmul.f32 %v298, %v490
    %v523 = vmul.f32 %v299, %v491
    %v524 = vmul.f32 %v300, %v492
    %v525 = vmul.f32 %v301, %v493
    %v526 = vmul.f32 %v302, %v494
    %v527 = vld [vmem:[#allocation7] sm:$0xff]
    %v528 = vld [vmem:[#allocation7 + $0x8] sm:$0xff]
    %v529 = vld [vmem:[#allocation7 + $0x10] sm:$0xff]
    %v530 = vld [vmem:[#allocation7 + $0x18] sm:$0xff]
    %v531 = vld [vmem:[#allocation7 + $0x20] sm:$0xff]
    %v532 = vld [vmem:[#allocation7 + $0x28] sm:$0xff]
    %v533 = vld [vmem:[#allocation7 + $0x30] sm:$0xff]
    %v534 = vld [vmem:[#allocation7 + $0x38] sm:$0xff]
    %v535 = vld [vmem:[#allocation7 + $0x40] sm:$0xff]
    %v536 = vld [vmem:[#allocation7 + $0x48] sm:$0xff]
    %v537 = vld [vmem:[#allocation7 + $0x50] sm:$0xff]
    %v538 = vld [vmem:[#allocation7 + $0x58] sm:$0xff]
    %v539 = vld [vmem:[#allocation7 + $0x60] sm:$0xff]
    %v540 = vld [vmem:[#allocation7 + $0x68] sm:$0xff]
    %v541 = vld [vmem:[#allocation7 + $0x70] sm:$0xff]
    %v542 = vld [vmem:[#allocation7 + $0x78] sm:$0xff]
    %v543 = vld [vmem:[%s3] sm:$0x1]
    %v545 = vlaneseq
    %v546 = vshrl.u32 %v545, 7
    %v547 = vsub.s32 0, %v546
    %v548 = vrot.slane %v543, %v547
    %550 = vmatprep.subr.mxu0 0.0
    %551 = vmatpush1.msra.mxu0 %v527
    %552 = vmatprep.subr.mxu0 0.0
    %553 = vmatpush1.msra.mxu0 %v528
    %554 = vmatprep.subr.mxu0 0.0
    %555 = vmatpush1.msra.mxu0 %v529
    %556 = vmatprep.subr.mxu0 0.0
    %557 = vmatpush1.msra.mxu0 %v530
    %558 = vmatprep.subr.mxu0 0.0
    %559 = vmatpush1.msra.mxu0 %v531
    %560 = vmatprep.subr.mxu0 0.0
    %561 = vmatpush1.msra.mxu0 %v532
    %562 = vmatprep.subr.mxu0 0.0
    %563 = vmatpush1.msra.mxu0 %v533
    %564 = vmatprep.subr.mxu0 0.0
    %565 = vmatpush1.msra.mxu0 %v534
    %566 = vmatprep.subr.mxu0 0.0
    %567 = vmatpush1.msra.mxu0 %v535
    %568 = vmatprep.subr.mxu0 0.0
    %569 = vmatpush1.msra.mxu0 %v536
    %570 = vmatprep.subr.mxu0 0.0
    %571 = vmatpush1.msra.mxu0 %v537
    %572 = vmatprep.subr.mxu0 0.0
    %573 = vmatpush1.msra.mxu0 %v538
    %574 = vmatprep.subr.mxu0 0.0
    %575 = vmatpush1.msra.mxu0 %v539
    %576 = vmatprep.subr.mxu0 0.0
    %577 = vmatpush1.msra.mxu0 %v540
    %578 = vmatprep.subr.mxu0 0.0
    %579 = vmatpush1.msra.mxu0 %v541
    %580 = vmatprep.subr.mxu0 0.0
    %581 = vmatpush1.msra.mxu0 %v542
    %582 = vmatprep.subr.mxu0 0.0
    %583 = vmatpush1.msra.mxu0 0.0
    %584 = vmatprep.subr.mxu0 0.0
    %585 = vmatpush1.msra.mxu0 0.0
    %586 = vmatprep.subr.mxu0 0.0
    %587 = vmatpush1.msra.mxu0 0.0
    %588 = vmatprep.subr.mxu0 0.0
    %589 = vmatpush1.msra.mxu0 0.0
    %590 = vmatprep.subr.mxu0 0.0
    %591 = vmatpush1.msra.mxu0 0.0
    %592 = vmatprep.subr.mxu0 0.0
    %593 = vmatpush1.msra.mxu0 0.0
    %594 = vmatprep.subr.mxu0 0.0
    %595 = vmatpush1.msra.mxu0 0.0
    %596 = vmatprep.subr.mxu0 0.0
    %597 = vmatpush1.msra.mxu0 0.0
    %598 = vmatprep.subr.mxu0 0.0
    %599 = vmatpush1.msra.mxu0 0.0
    %600 = vmatprep.subr.mxu0 0.0
    %601 = vmatpush1.msra.mxu0 0.0
    %602 = vmatprep.subr.mxu0 0.0
    %603 = vmatpush1.msra.mxu0 0.0
    %604 = vmatprep.subr.mxu0 0.0
    %605 = vmatpush1.msra.mxu0 0.0
    %606 = vmatprep.subr.mxu0 0.0
    %607 = vmatpush1.msra.mxu0 0.0
    %608 = vmatprep.subr.mxu0 0.0
    %609 = vmatpush1.msra.mxu0 0.0
    %610 = vmatprep.subr.mxu0 0.0
    %611 = vmatpush1.msra.mxu0 0.0
    %612 = vmatprep.subr.mxu0 0.0
    %613 = vmatpush1.msra.mxu0 0.0
    %614 = vmatprep.mubr.f32.mxu0 0.0
    %615 = vmatmul.mubr.f32.gmra.mrb[0].mxu0 %v495
    %v616 = vpop.f32.mrb[0].mxu0
    %v617 = vadd.f32 %v548, %v616
    %v618 = vpop.f32.mrb[0].mxu0
    %619 = vmatprep.mubr.f32.mxu0 0.0
    %620 = vmatmul.mubr.f32.gmra.mrb[0].mxu0 %v496
    %v621 = vpop.f32.mrb[0].mxu0
    %v622 = vadd.f32 %v548, %v621
    %v623 = vpop.f32.mrb[0].mxu0
    %624 = vmatprep.mubr.f32.mxu0 0.0
    %625 = vmatmul.mubr.f32.gmra.mrb[0].mxu0 %v497
    %v626 = vpop.f32.mrb[0].mxu0
    %v627 = vadd.f32 %v548, %v626
    %v628 = vpop.f32.mrb[0].mxu0
    %629 = vmatprep.mubr.f32.mxu0 0.0
    %630 = vmatmul.mubr.f32.gmra.mrb[0].mxu0 %v498
    %v631 = vpop.f32.mrb[0].mxu0
    %v632 = vadd.f32 %v548, %v631
    %v633 = vpop.f32.mrb[0].mxu0
    %634 = vmatprep.mubr.f32.mxu0 0.0
    %635 = vmatmul.mubr.f32.gmra.mrb[0].mxu0 %v499
    %v636 = vpop.f32.mrb[0].mxu0
    %v637 = vadd.f32 %v548, %v636
    %v638 = vpop.f32.mrb[0].mxu0
    %639 = vmatprep.mubr.f32.mxu0 0.0
    %640 = vmatmul.mubr.f32.gmra.mrb[0].mxu0 %v500
    %v641 = vpop.f32.mrb[0].mxu0
    %v642 = vadd.f32 %v548, %v641
    %v643 = vpop.f32.mrb[0].mxu0
    %644 = vmatprep.mubr.f32.mxu0 0.0
    %645 = vmatmul.mubr.f32.gmra.mrb[0].mxu0 %v501
    %v646 = vpop.f32.mrb[0].mxu0
    %v647 = vadd.f32 %v548, %v646
    %v648 = vpop.f32.mrb[0].mxu0
    %649 = vmatprep.mubr.f32.mxu0 0.0
    %650 = vmatmul.mubr.f32.gmra.mrb[0].mxu0 %v502
    %v651 = vpop.f32.mrb[0].mxu0
    %v652 = vadd.f32 %v548, %v651
    %v653 = vpop.f32.mrb[0].mxu0
    %654 = vmatprep.mubr.f32.mxu0 0.0
    %655 = vmatmul.mubr.f32.gmra.mrb[0].mxu0 %v503
    %v656 = vpop.f32.mrb[0].mxu0
    %v657 = vadd.f32 %v548, %v656
    %v658 = vpop.f32.mrb[0].mxu0
    %659 = vmatprep.mubr.f32.mxu0 0.0
    %660 = vmatmul.mubr.f32.gmra.mrb[0].mxu0 %v504
    %v661 = vpop.f32.mrb[0].mxu0
    %v662 = vadd.f32 %v548, %v661
    %v663 = vpop.f32.mrb[0].mxu0
    %664 = vmatprep.mubr.f32.mxu0 0.0
    %665 = vmatmul.mubr.f32.gmra.mrb[0].mxu0 %v505
    %v666 = vpop.f32.mrb[0].mxu0
    %v667 = vadd.f32 %v548, %v666
    %v668 = vpop.f32.mrb[0].mxu0
    %669 = vmatprep.mubr.f32.mxu0 0.0
    %670 = vmatmul.mubr.f32.gmra.mrb[0].mxu0 %v506
    %v671 = vpop.f32.mrb[0].mxu0
    %v672 = vadd.f32 %v548, %v671
    %v673 = vpop.f32.mrb[0].mxu0
    %674 = vmatprep.mubr.f32.mxu0 0.0
    %675 = vmatmul.mubr.f32.gmra.mrb[0].mxu0 %v507
    %v676 = vpop.f32.mrb[0].mxu0
    %v677 = vadd.f32 %v548, %v676
    %v678 = vpop.f32.mrb[0].mxu0
    %679 = vmatprep.mubr.f32.mxu0 0.0
    %680 = vmatmul.mubr.f32.gmra.mrb[0].mxu0 %v508
    %v681 = vpop.f32.mrb[0].mxu0
    %v682 = vadd.f32 %v548, %v681
    %v683 = vpop.f32.mrb[0].mxu0
    %684 = vmatprep.mubr.f32.mxu0 0.0
    %685 = vmatmul.mubr.f32.gmra.mrb[0].mxu0 %v509
    %v686 = vpop.f32.mrb[0].mxu0
    %v687 = vadd.f32 %v548, %v686
    %v688 = vpop.f32.mrb[0].mxu0
    %689 = vmatprep.mubr.f32.mxu0 0.0
    %690 = vmatmul.mubr.f32.gmra.mrb[0].mxu0 %v510
    %v691 = vpop.f32.mrb[0].mxu0
    %v692 = vadd.f32 %v548, %v691
    %v693 = vpop.f32.mrb[0].mxu0
    %694 = vmatprep.mubr.f32.mxu0 0.0
    %695 = vmatmul.mubr.f32.gmra.mrb[0].mxu0 %v511
    %v696 = vpop.f32.mrb[0].mxu0
    %v697 = vadd.f32 %v548, %v696
    %v698 = vpop.f32.mrb[0].mxu0
    %699 = vmatprep.mubr.f32.mxu0 0.0
    %700 = vmatmul.mubr.f32.gmra.mrb[0].mxu0 %v512
    %v701 = vpop.f32.mrb[0].mxu0
    %v702 = vadd.f32 %v548, %v701
    %v703 = vpop.f32.mrb[0].mxu0
    %704 = vmatprep.mubr.f32.mxu0 0.0
    %705 = vmatmul.mubr.f32.gmra.mrb[0].mxu0 %v513
    %v706 = vpop.f32.mrb[0].mxu0
    %v707 = vadd.f32 %v548, %v706
    %v708 = vpop.f32.mrb[0].mxu0
    %709 = vmatprep.mubr.f32.mxu0 0.0
    %710 = vmatmul.mubr.f32.gmra.mrb[0].mxu0 %v514
    %v711 = vpop.f32.mrb[0].mxu0
    %v712 = vadd.f32 %v548, %v711
    %v713 = vpop.f32.mrb[0].mxu0
    %714 = vmatprep.mubr.f32.mxu0 0.0
    %715 = vmatmul.mubr.f32.gmra.mrb[0].mxu0 %v515
    %v716 = vpop.f32.mrb[0].mxu0
    %v717 = vadd.f32 %v548, %v716
    %v718 = vpop.f32.mrb[0].mxu0
    %719 = vmatprep.mubr.f32.mxu0 0.0
    %720 = vmatmul.mubr.f32.gmra.mrb[0].mxu0 %v516
    %v721 = vpop.f32.mrb[0].mxu0
    %v722 = vadd.f32 %v548, %v721
    %v723 = vpop.f32.mrb[0].mxu0
    %724 = vmatprep.mubr.f32.mxu0 0.0
    %725 = vmatmul.mubr.f32.gmra.mrb[0].mxu0 %v517
    %v726 = vpop.f32.mrb[0].mxu0
    %v727 = vadd.f32 %v548, %v726
    %v728 = vpop.f32.mrb[0].mxu0
    %729 = vmatprep.mubr.f32.mxu0 0.0
    %730 = vmatmul.mubr.f32.gmra.mrb[0].mxu0 %v518
    %v731 = vpop.f32.mrb[0].mxu0
    %v732 = vadd.f32 %v548, %v731
    %v733 = vpop.f32.mrb[0].mxu0
    %734 = vmatprep.mubr.f32.mxu0 0.0
    %735 = vmatmul.mubr.f32.gmra.mrb[0].mxu0 %v519
    %v736 = vpop.f32.mrb[0].mxu0
    %v737 = vadd.f32 %v548, %v736
    %v738 = vpop.f32.mrb[0].mxu0
    %739 = vmatprep.mubr.f32.mxu0 0.0
    %740 = vmatmul.mubr.f32.gmra.mrb[0].mxu0 %v520
    %v741 = vpop.f32.mrb[0].mxu0
    %v742 = vadd.f32 %v548, %v741
    %v743 = vpop.f32.mrb[0].mxu0
    %744 = vmatprep.mubr.f32.mxu0 0.0
    %745 = vmatmul.mubr.f32.gmra.mrb[0].mxu0 %v521
    %v746 = vpop.f32.mrb[0].mxu0
    %v747 = vadd.f32 %v548, %v746
    %v748 = vpop.f32.mrb[0].mxu0
    %749 = vmatprep.mubr.f32.mxu0 0.0
    %750 = vmatmul.mubr.f32.gmra.mrb[0].mxu0 %v522
    %v751 = vpop.f32.mrb[0].mxu0
    %v752 = vadd.f32 %v548, %v751
    %v753 = vpop.f32.mrb[0].mxu0
    %754 = vmatprep.mubr.f32.mxu0 0.0
    %755 = vmatmul.mubr.f32.gmra.mrb[0].mxu0 %v523
    %v756 = vpop.f32.mrb[0].mxu0
    %v757 = vadd.f32 %v548, %v756
    %v758 = vpop.f32.mrb[0].mxu0
    %759 = vmatprep.mubr.f32.mxu0 0.0
    %760 = vmatmul.mubr.f32.gmra.mrb[0].mxu0 %v524
    %v761 = vpop.f32.mrb[0].mxu0
    %v762 = vadd.f32 %v548, %v761
    %v763 = vpop.f32.mrb[0].mxu0
    %764 = vmatprep.mubr.f32.mxu0 0.0
    %765 = vmatmul.mubr.f32.gmra.mrb[0].mxu0 %v525
    %v766 = vpop.f32.mrb[0].mxu0
    %v767 = vadd.f32 %v548, %v766
    %v768 = vpop.f32.mrb[0].mxu0
    %769 = vmatprep.mubr.f32.mxu0 0.0
    %770 = vmatmul.mubr.f32.gmra.mrb[0].mxu0 %v526
    %v771 = vpop.f32.mrb[0].mxu0
    %v772 = vadd.f32 %v548, %v771
    %v773 = vpop.f32.mrb[0].mxu0
    %774 = vdwg.mxu0
    %vm775 = vcmask 130048
    %v777 = vsel %vm775, %v142, 0
    %v780 = vsel %vm775, %v143, 0
    %782 = vmatprep.subr.mxu0 0.0
    %783 = vmatpush1.msra.mxu0 %v617
    %784 = vmatprep.subr.mxu0 0.0
    %785 = vmatpush1.msra.mxu0 %v622
    %786 = vmatprep.subr.mxu0 0.0
    %787 = vmatpush1.msra.mxu0 0.0
    %788 = vmatprep.subr.mxu0 0.0
    %789 = vmatpush1.msra.mxu0 0.0
    %790 = vmatprep.subr.mxu0 0.0
    %791 = vmatpush1.msra.mxu0 0.0
    %792 = vmatprep.subr.mxu0 0.0
    %793 = vmatpush1.msra.mxu0 0.0
    %794 = vmatprep.subr.mxu0 0.0
    %795 = vmatpush1.msra.mxu0 0.0
    %796 = vmatprep.subr.mxu0 0.0
    %797 = vmatpush1.msra.mxu0 0.0
    %798 = vmatprep.subr.mxu0 0.0
    %799 = vmatpush1.msra.mxu0 0.0
    %800 = vmatprep.subr.mxu0 0.0
    %801 = vmatpush1.msra.mxu0 0.0
    %802 = vmatprep.subr.mxu0 0.0
    %803 = vmatpush1.msra.mxu0 0.0
    %804 = vmatprep.subr.mxu0 0.0
    %805 = vmatpush1.msra.mxu0 0.0
    %806 = vmatprep.subr.mxu0 0.0
    %807 = vmatpush1.msra.mxu0 0.0
    %808 = vmatprep.subr.mxu0 0.0
    %809 = vmatpush1.msra.mxu0 0.0
    %810 = vmatprep.subr.mxu0 0.0
    %811 = vmatpush1.msra.mxu0 0.0
    %812 = vmatprep.subr.mxu0 0.0
    %813 = vmatpush1.msra.mxu0 0.0
    %814 = vmatprep.subr.mxu0 0.0
    %815 = vmatpush1.msra.mxu0 0.0
    %816 = vmatprep.subr.mxu0 0.0
    %817 = vmatpush1.msra.mxu0 0.0
    %818 = vmatprep.subr.mxu0 0.0
    %819 = vmatpush1.msra.mxu0 0.0
    %820 = vmatprep.subr.mxu0 0.0
    %821 = vmatpush1.msra.mxu0 0.0
    %822 = vmatprep.subr.mxu0 0.0
    %823 = vmatpush1.msra.mxu0 0.0
    %824 = vmatprep.subr.mxu0 0.0
    %825 = vmatpush1.msra.mxu0 0.0
    %826 = vmatprep.subr.mxu0 0.0
    %827 = vmatpush1.msra.mxu0 0.0
    %828 = vmatprep.subr.mxu0 0.0
    %829 = vmatpush1.msra.mxu0 0.0
    %830 = vmatprep.subr.mxu0 0.0
    %831 = vmatpush1.msra.mxu0 0.0
    %832 = vmatprep.subr.mxu0 0.0
    %833 = vmatpush1.msra.mxu0 0.0
    %834 = vmatprep.subr.mxu0 0.0
    %835 = vmatpush1.msra.mxu0 0.0
    %836 = vmatprep.subr.mxu0 0.0
    %837 = vmatpush1.msra.mxu0 0.0
    %838 = vmatprep.subr.mxu0 0.0
    %839 = vmatpush1.msra.mxu0 0.0
    %840 = vmatprep.subr.mxu0 0.0
    %841 = vmatpush1.msra.mxu0 0.0
    %842 = vmatprep.subr.mxu0 0.0
    %843 = vmatpush1.msra.mxu0 0.0
    %844 = vmatprep.subr.mxu0 0.0
    %845 = vmatpush1.msra.mxu0 0.0
    %846 = vmatprep.mubr.f32.mxu0 0.0
    %847 = vmatmul.mubr.f32.gmra.mrb[0].mxu0 %v777
    %v848 = vpop.f32.mrb[0].mxu0
    %v849 = vadd.f32 0.0, %v848
    %v850 = vpop.f32.mrb[0].mxu0
    %851 = vmatprep.mubr.f32.mxu0 0.0
    %852 = vmatmul.mubr.f32.gmra.mrb[0].mxu0 %v780
    %v853 = vpop.f32.mrb[0].mxu0
    %v854 = vadd.f32 0.0, %v853
    %v855 = vpop.f32.mrb[0].mxu0
    %856 = vdwg.mxu0
    %v858 = vsel %vm775, %v144, 0
    %v861 = vsel %vm775, %v145, 0
    %863 = vmatprep.subr.mxu0 0.0
    %864 = vmatpush1.msra.mxu0 %v627
    %865 = vmatprep.subr.mxu0 0.0
    %866 = vmatpush1.msra.mxu0 %v632
    %867 = vmatprep.subr.mxu0 0.0
    %868 = vmatpush1.msra.mxu0 0.0
    %869 = vmatprep.subr.mxu0 0.0
    %870 = vmatpush1.msra.mxu0 0.0
    %871 = vmatprep.subr.mxu0 0.0
    %872 = vmatpush1.msra.mxu0 0.0
    %873 = vmatprep.subr.mxu0 0.0
    %874 = vmatpush1.msra.mxu0 0.0
    %875 = vmatprep.subr.mxu0 0.0
    %876 = vmatpush1.msra.mxu0 0.0
    %877 = vmatprep.subr.mxu0 0.0
    %878 = vmatpush1.msra.mxu0 0.0
    %879 = vmatprep.subr.mxu0 0.0
    %880 = vmatpush1.msra.mxu0 0.0
    %881 = vmatprep.subr.mxu0 0.0
    %882 = vmatpush1.msra.mxu0 0.0
    %883 = vmatprep.subr.mxu0 0.0
    %884 = vmatpush1.msra.mxu0 0.0
    %885 = vmatprep.subr.mxu0 0.0
    %886 = vmatpush1.msra.mxu0 0.0
    %887 = vmatprep.subr.mxu0 0.0
    %888 = vmatpush1.msra.mxu0 0.0
    %889 = vmatprep.subr.mxu0 0.0
    %890 = vmatpush1.msra.mxu0 0.0
    %891 = vmatprep.subr.mxu0 0.0
    %892 = vmatpush1.msra.mxu0 0.0
    %893 = vmatprep.subr.mxu0 0.0
    %894 = vmatpush1.msra.mxu0 0.0
    %895 = vmatprep.subr.mxu0 0.0
    %896 = vmatpush1.msra.mxu0 0.0
    %897 = vmatprep.subr.mxu0 0.0
    %898 = vmatpush1.msra.mxu0 0.0
    %899 = vmatprep.subr.mxu0 0.0
    %900 = vmatpush1.msra.mxu0 0.0
    %901 = vmatprep.subr.mxu0 0.0
    %902 = vmatpush1.msra.mxu0 0.0
    %903 = vmatprep.subr.mxu0 0.0
    %904 = vmatpush1.msra.mxu0 0.0
    %905 = vmatprep.subr.mxu0 0.0
    %906 = vmatpush1.msra.mxu0 0.0
    %907 = vmatprep.subr.mxu0 0.0
    %908 = vmatpush1.msra.mxu0 0.0
    %909 = vmatprep.subr.mxu0 0.0
    %910 = vmatpush1.msra.mxu0 0.0
    %911 = vmatprep.subr.mxu0 0.0
    %912 = vmatpush1.msra.mxu0 0.0
    %913 = vmatprep.subr.mxu0 0.0
    %914 = vmatpush1.msra.mxu0 0.0
    %915 = vmatprep.subr.mxu0 0.0
    %916 = vmatpush1.msra.mxu0 0.0
    %917 = vmatprep.subr.mxu0 0.0
    %918 = vmatpush1.msra.mxu0 0.0
    %919 = vmatprep.subr.mxu0 0.0
    %920 = vmatpush1.msra.mxu0 0.0
    %921 = vmatprep.subr.mxu0 0.0
    %922 = vmatpush1.msra.mxu0 0.0
    %923 = vmatprep.subr.mxu0 0.0
    %924 = vmatpush1.msra.mxu0 0.0
    %925 = vmatprep.subr.mxu0 0.0
    %926 = vmatpush1.msra.mxu0 0.0
    %927 = vmatprep.mubr.f32.mxu0 0.0
    %928 = vmatmul.mubr.f32.gmra.mrb[0].mxu0 %v858
    %v929 = vpop.f32.mrb[0].mxu0
    %v930 = vadd.f32 0.0, %v929
    %v931 = vpop.f32.mrb[0].mxu0
    %932 = vmatprep.mubr.f32.mxu0 0.0
    %933 = vmatmul.mubr.f32.gmra.mrb[0].mxu0 %v861
    %v934 = vpop.f32.mrb[0].mxu0
    %v935 = vadd.f32 0.0, %v934
    %v936 = vpop.f32.mrb[0].mxu0
    %937 = vdwg.mxu0
    %v939 = vsel %vm775, %v146, 0
    %v942 = vsel %vm775, %v147, 0
    %944 = vmatprep.subr.mxu0 0.0
    %945 = vmatpush1.msra.mxu0 %v637
    %946 = vmatprep.subr.mxu0 0.0
    %947 = vmatpush1.msra.mxu0 %v642
    %948 = vmatprep.subr.mxu0 0.0
    %949 = vmatpush1.msra.mxu0 0.0
    %950 = vmatprep.subr.mxu0 0.0
    %951 = vmatpush1.msra.mxu0 0.0
    %952 = vmatprep.subr.mxu0 0.0
    %953 = vmatpush1.msra.mxu0 0.0
    %954 = vmatprep.subr.mxu0 0.0
    %955 = vmatpush1.msra.mxu0 0.0
    %956 = vmatprep.subr.mxu0 0.0
    %957 = vmatpush1.msra.mxu0 0.0
    %958 = vmatprep.subr.mxu0 0.0
    %959 = vmatpush1.msra.mxu0 0.0
    %960 = vmatprep.subr.mxu0 0.0
    %961 = vmatpush1.msra.mxu0 0.0
    %962 = vmatprep.subr.mxu0 0.0
    %963 = vmatpush1.msra.mxu0 0.0
    %964 = vmatprep.subr.mxu0 0.0
    %965 = vmatpush1.msra.mxu0 0.0
    %966 = vmatprep.subr.mxu0 0.0
    %967 = vmatpush1.msra.mxu0 0.0
    %968 = vmatprep.subr.mxu0 0.0
    %969 = vmatpush1.msra.mxu0 0.0
    %970 = vmatprep.subr.mxu0 0.0
    %971 = vmatpush1.msra.mxu0 0.0
    %972 = vmatprep.subr.mxu0 0.0
    %973 = vmatpush1.msra.mxu0 0.0
    %974 = vmatprep.subr.mxu0 0.0
    %975 = vmatpush1.msra.mxu0 0.0
    %976 = vmatprep.subr.mxu0 0.0
    %977 = vmatpush1.msra.mxu0 0.0
    %978 = vmatprep.subr.mxu0 0.0
    %979 = vmatpush1.msra.mxu0 0.0
    %980 = vmatprep.subr.mxu0 0.0
    %981 = vmatpush1.msra.mxu0 0.0
    %982 = vmatprep.subr.mxu0 0.0
    %983 = vmatpush1.msra.mxu0 0.0
    %984 = vmatprep.subr.mxu0 0.0
    %985 = vmatpush1.msra.mxu0 0.0
    %986 = vmatprep.subr.mxu0 0.0
    %987 = vmatpush1.msra.mxu0 0.0
    %988 = vmatprep.subr.mxu0 0.0
    %989 = vmatpush1.msra.mxu0 0.0
    %990 = vmatprep.subr.mxu0 0.0
    %991 = vmatpush1.msra.mxu0 0.0
    %992 = vmatprep.subr.mxu0 0.0
    %993 = vmatpush1.msra.mxu0 0.0
    %994 = vmatprep.subr.mxu0 0.0
    %995 = vmatpush1.msra.mxu0 0.0
    %996 = vmatprep.subr.mxu0 0.0
    %997 = vmatpush1.msra.mxu0 0.0
    %998 = vmatprep.subr.mxu0 0.0
    %999 = vmatpush1.msra.mxu0 0.0
    %1000 = vmatprep.subr.mxu0 0.0
    %1001 = vmatpush1.msra.mxu0 0.0
    %1002 = vmatprep.subr.mxu0 0.0
    %1003 = vmatpush1.msra.mxu0 0.0
    %1004 = vmatprep.subr.mxu0 0.0
    %1005 = vmatpush1.msra.mxu0 0.0
    %1006 = vmatprep.subr.mxu0 0.0
    %1007 = vmatpush1.msra.mxu0 0.0
    %1008 = vmatprep.mubr.f32.mxu0 0.0
    %1009 = vmatmul.mubr.f32.gmra.mrb[0].mxu0 %v939
    %v1010 = vpop.f32.mrb[0].mxu0
    %v1011 = vadd.f32 0.0, %v1010
    %v1012 = vpop.f32.mrb[0].mxu0
    %1013 = vmatprep.mubr.f32.mxu0 0.0
    %1014 = vmatmul.mubr.f32.gmra.mrb[0].mxu0 %v942
    %v1015 = vpop.f32.mrb[0].mxu0
    %v1016 = vadd.f32 0.0, %v1015
    %v1017 = vpop.f32.mrb[0].mxu0
    %1018 = vdwg.mxu0
    %v1020 = vsel %vm775, %v148, 0
    %v1023 = vsel %vm775, %v149, 0
    %1025 = vmatprep.subr.mxu0 0.0
    %1026 = vmatpush1.msra.mxu0 %v647
    %1027 = vmatprep.subr.mxu0 0.0
    %1028 = vmatpush1.msra.mxu0 %v652
    %1029 = vmatprep.subr.mxu0 0.0
    %1030 = vmatpush1.msra.mxu0 0.0
    %1031 = vmatprep.subr.mxu0 0.0
    %1032 = vmatpush1.msra.mxu0 0.0
    %1033 = vmatprep.subr.mxu0 0.0
    %1034 = vmatpush1.msra.mxu0 0.0
    %1035 = vmatprep.subr.mxu0 0.0
    %1036 = vmatpush1.msra.mxu0 0.0
    %1037 = vmatprep.subr.mxu0 0.0
    %1038 = vmatpush1.msra.mxu0 0.0
    %1039 = vmatprep.subr.mxu0 0.0
    %1040 = vmatpush1.msra.mxu0 0.0
    %1041 = vmatprep.subr.mxu0 0.0
    %1042 = vmatpush1.msra.mxu0 0.0
    %1043 = vmatprep.subr.mxu0 0.0
    %1044 = vmatpush1.msra.mxu0 0.0
    %1045 = vmatprep.subr.mxu0 0.0
    %1046 = vmatpush1.msra.mxu0 0.0
    %1047 = vmatprep.subr.mxu0 0.0
    %1048 = vmatpush1.msra.mxu0 0.0
    %1049 = vmatprep.subr.mxu0 0.0
    %1050 = vmatpush1.msra.mxu0 0.0
    %1051 = vmatprep.subr.mxu0 0.0
    %1052 = vmatpush1.msra.mxu0 0.0
    %1053 = vmatprep.subr.mxu0 0.0
    %1054 = vmatpush1.msra.mxu0 0.0
    %1055 = vmatprep.subr.mxu0 0.0
    %1056 = vmatpush1.msra.mxu0 0.0
    %1057 = vmatprep.subr.mxu0 0.0
    %1058 = vmatpush1.msra.mxu0 0.0
    %1059 = vmatprep.subr.mxu0 0.0
    %1060 = vmatpush1.msra.mxu0 0.0
    %1061 = vmatprep.subr.mxu0 0.0
    %1062 = vmatpush1.msra.mxu0 0.0
    %1063 = vmatprep.subr.mxu0 0.0
    %1064 = vmatpush1.msra.mxu0 0.0
    %1065 = vmatprep.subr.mxu0 0.0
    %1066 = vmatpush1.msra.mxu0 0.0
    %1067 = vmatprep.subr.mxu0 0.0
    %1068 = vmatpush1.msra.mxu0 0.0
    %1069 = vmatprep.subr.mxu0 0.0
    %1070 = vmatpush1.msra.mxu0 0.0
    %1071 = vmatprep.subr.mxu0 0.0
    %1072 = vmatpush1.msra.mxu0 0.0
    %1073 = vmatprep.subr.mxu0 0.0
    %1074 = vmatpush1.msra.mxu0 0.0
    %1075 = vmatprep.subr.mxu0 0.0
    %1076 = vmatpush1.msra.mxu0 0.0
    %1077 = vmatprep.subr.mxu0 0.0
    %1078 = vmatpush1.msra.mxu0 0.0
    %1079 = vmatprep.subr.mxu0 0.0
    %1080 = vmatpush1.msra.mxu0 0.0
    %1081 = vmatprep.subr.mxu0 0.0
    %1082 = vmatpush1.msra.mxu0 0.0
    %1083 = vmatprep.subr.mxu0 0.0
    %1084 = vmatpush1.msra.mxu0 0.0
    %1085 = vmatprep.subr.mxu0 0.0
    %1086 = vmatpush1.msra.mxu0 0.0
    %1087 = vmatprep.subr.mxu0 0.0
    %1088 = vmatpush1.msra.mxu0 0.0
    %1089 = vmatprep.mubr.f32.mxu0 0.0
    %1090 = vmatmul.mubr.f32.gmra.mrb[0].mxu0 %v1020
    %v1091 = vpop.f32.mrb[0].mxu0
    %v1092 = vadd.f32 0.0, %v1091
    %v1093 = vpop.f32.mrb[0].mxu0
    %1094 = vmatprep.mubr.f32.mxu0 0.0
    %1095 = vmatmul.mubr.f32.gmra.mrb[0].mxu0 %v1023
    %v1096 = vpop.f32.mrb[0].mxu0
    %v1097 = vadd.f32 0.0, %v1096
    %v1098 = vpop.f32.mrb[0].mxu0
    %1099 = vdwg.mxu0
    %v1101 = vsel %vm775, %v150, 0
    %v1104 = vsel %vm775, %v151, 0
    %1106 = vmatprep.subr.mxu0 0.0
    %1107 = vmatpush1.msra.mxu0 %v657
    %1108 = vmatprep.subr.mxu0 0.0
    %1109 = vmatpush1.msra.mxu0 %v662
    %1110 = vmatprep.subr.mxu0 0.0
    %1111 = vmatpush1.msra.mxu0 0.0
    %1112 = vmatprep.subr.mxu0 0.0
    %1113 = vmatpush1.msra.mxu0 0.0
    %1114 = vmatprep.subr.mxu0 0.0
    %1115 = vmatpush1.msra.mxu0 0.0
    %1116 = vmatprep.subr.mxu0 0.0
    %1117 = vmatpush1.msra.mxu0 0.0
    %1118 = vmatprep.subr.mxu0 0.0
    %1119 = vmatpush1.msra.mxu0 0.0
    %1120 = vmatprep.subr.mxu0 0.0
    %1121 = vmatpush1.msra.mxu0 0.0
    %1122 = vmatprep.subr.mxu0 0.0
    %1123 = vmatpush1.msra.mxu0 0.0
    %1124 = vmatprep.subr.mxu0 0.0
    %1125 = vmatpush1.msra.mxu0 0.0
    %1126 = vmatprep.subr.mxu0 0.0
    %1127 = vmatpush1.msra.mxu0 0.0
    %1128 = vmatprep.subr.mxu0 0.0
    %1129 = vmatpush1.msra.mxu0 0.0
    %1130 = vmatprep.subr.mxu0 0.0
    %1131 = vmatpush1.msra.mxu0 0.0
    %1132 = vmatprep.subr.mxu0 0.0
    %1133 = vmatpush1.msra.mxu0 0.0
    %1134 = vmatprep.subr.mxu0 0.0
    %1135 = vmatpush1.msra.mxu0 0.0
    %1136 = vmatprep.subr.mxu0 0.0
    %1137 = vmatpush1.msra.mxu0 0.0
    %1138 = vmatprep.subr.mxu0 0.0
    %1139 = vmatpush1.msra.mxu0 0.0
    %1140 = vmatprep.subr.mxu0 0.0
    %1141 = vmatpush1.msra.mxu0 0.0
    %1142 = vmatprep.subr.mxu0 0.0
    %1143 = vmatpush1.msra.mxu0 0.0
    %1144 = vmatprep.subr.mxu0 0.0
    %1145 = vmatpush1.msra.mxu0 0.0
    %1146 = vmatprep.subr.mxu0 0.0
    %1147 = vmatpush1.msra.mxu0 0.0
    %1148 = vmatprep.subr.mxu0 0.0
    %1149 = vmatpush1.msra.mxu0 0.0
    %1150 = vmatprep.subr.mxu0 0.0
    %1151 = vmatpush1.msra.mxu0 0.0
    %1152 = vmatprep.subr.mxu0 0.0
    %1153 = vmatpush1.msra.mxu0 0.0
    %1154 = vmatprep.subr.mxu0 0.0
    %1155 = vmatpush1.msra.mxu0 0.0
    %1156 = vmatprep.subr.mxu0 0.0
    %1157 = vmatpush1.msra.mxu0 0.0
    %1158 = vmatprep.subr.mxu0 0.0
    %1159 = vmatpush1.msra.mxu0 0.0
    %1160 = vmatprep.subr.mxu0 0.0
    %1161 = vmatpush1.msra.mxu0 0.0
    %1162 = vmatprep.subr.mxu0 0.0
    %1163 = vmatpush1.msra.mxu0 0.0
    %1164 = vmatprep.subr.mxu0 0.0
    %1165 = vmatpush1.msra.mxu0 0.0
    %1166 = vmatprep.subr.mxu0 0.0
    %1167 = vmatpush1.msra.mxu0 0.0
    %1168 = vmatprep.subr.mxu0 0.0
    %1169 = vmatpush1.msra.mxu0 0.0
    %1170 = vmatprep.mubr.f32.mxu0 0.0
    %1171 = vmatmul.mubr.f32.gmra.mrb[0].mxu0 %v1101
    %v1172 = vpop.f32.mrb[0].mxu0
    %v1173 = vadd.f32 0.0, %v1172
    %v1174 = vpop.f32.mrb[0].mxu0
    %1175 = vmatprep.mubr.f32.mxu0 0.0
    %1176 = vmatmul.mubr.f32.gmra.mrb[0].mxu0 %v1104
    %v1177 = vpop.f32.mrb[0].mxu0
    %v1178 = vadd.f32 0.0, %v1177
    %v1179 = vpop.f32.mrb[0].mxu0
    %1180 = vdwg.mxu0
    %v1182 = vsel %vm775, %v152, 0
    %v1185 = vsel %vm775, %v153, 0
    %1187 = vmatprep.subr.mxu0 0.0
    %1188 = vmatpush1.msra.mxu0 %v667
    %1189 = vmatprep.subr.mxu0 0.0
    %1190 = vmatpush1.msra.mxu0 %v672
    %1191 = vmatprep.subr.mxu0 0.0
    %1192 = vmatpush1.msra.mxu0 0.0
    %1193 = vmatprep.subr.mxu0 0.0
    %1194 = vmatpush1.msra.mxu0 0.0
    %1195 = vmatprep.subr.mxu0 0.0
    %1196 = vmatpush1.msra.mxu0 0.0
    %1197 = vmatprep.subr.mxu0 0.0
    %1198 = vmatpush1.msra.mxu0 0.0
    %1199 = vmatprep.subr.mxu0 0.0
    %1200 = vmatpush1.msra.mxu0 0.0
    %1201 = vmatprep.subr.mxu0 0.0
    %1202 = vmatpush1.msra.mxu0 0.0
    %1203 = vmatprep.subr.mxu0 0.0
    %1204 = vmatpush1.msra.mxu0 0.0
    %1205 = vmatprep.subr.mxu0 0.0
    %1206 = vmatpush1.msra.mxu0 0.0
    %1207 = vmatprep.subr.mxu0 0.0
    %1208 = vmatpush1.msra.mxu0 0.0
    %1209 = vmatprep.subr.mxu0 0.0
    %1210 = vmatpush1.msra.mxu0 0.0
    %1211 = vmatprep.subr.mxu0 0.0
    %1212 = vmatpush1.msra.mxu0 0.0
    %1213 = vmatprep.subr.mxu0 0.0
    %1214 = vmatpush1.msra.mxu0 0.0
    %1215 = vmatprep.subr.mxu0 0.0
    %1216 = vmatpush1.msra.mxu0 0.0
    %1217 = vmatprep.subr.mxu0 0.0
    %1218 = vmatpush1.msra.mxu0 0.0
    %1219 = vmatprep.subr.mxu0 0.0
    %1220 = vmatpush1.msra.mxu0 0.0
    %1221 = vmatprep.subr.mxu0 0.0
    %1222 = vmatpush1.msra.mxu0 0.0
    %1223 = vmatprep.subr.mxu0 0.0
    %1224 = vmatpush1.msra.mxu0 0.0
    %1225 = vmatprep.subr.mxu0 0.0
    %1226 = vmatpush1.msra.mxu0 0.0
    %1227 = vmatprep.subr.mxu0 0.0
    %1228 = vmatpush1.msra.mxu0 0.0
    %1229 = vmatprep.subr.mxu0 0.0
    %1230 = vmatpush1.msra.mxu0 0.0
    %1231 = vmatprep.subr.mxu0 0.0
    %1232 = vmatpush1.msra.mxu0 0.0
    %1233 = vmatprep.subr.mxu0 0.0
    %1234 = vmatpush1.msra.mxu0 0.0
    %1235 = vmatprep.subr.mxu0 0.0
    %1236 = vmatpush1.msra.mxu0 0.0
    %1237 = vmatprep.subr.mxu0 0.0
    %1238 = vmatpush1.msra.mxu0 0.0
    %1239 = vmatprep.subr.mxu0 0.0
    %1240 = vmatpush1.msra.mxu0 0.0
    %1241 = vmatprep.subr.mxu0 0.0
    %1242 = vmatpush1.msra.mxu0 0.0
    %1243 = vmatprep.subr.mxu0 0.0
    %1244 = vmatpush1.msra.mxu0 0.0
    %1245 = vmatprep.subr.mxu0 0.0
    %1246 = vmatpush1.msra.mxu0 0.0
    %1247 = vmatprep.subr.mxu0 0.0
    %1248 = vmatpush1.msra.mxu0 0.0
    %1249 = vmatprep.subr.mxu0 0.0
    %1250 = vmatpush1.msra.mxu0 0.0
    %1251 = vmatprep.mubr.f32.mxu0 0.0
    %1252 = vmatmul.mubr.f32.gmra.mrb[0].mxu0 %v1182
    %v1253 = vpop.f32.mrb[0].mxu0
    %v1254 = vadd.f32 0.0, %v1253
    %v1255 = vpop.f32.mrb[0].mxu0
    %1256 = vmatprep.mubr.f32.mxu0 0.0
    %1257 = vmatmul.mubr.f32.gmra.mrb[0].mxu0 %v1185
    %v1258 = vpop.f32.mrb[0].mxu0
    %v1259 = vadd.f32 0.0, %v1258
    %v1260 = vpop.f32.mrb[0].mxu0
    %1261 = vdwg.mxu0
    %v1263 = vsel %vm775, %v154, 0
    %v1266 = vsel %vm775, %v155, 0
    %1268 = vmatprep.subr.mxu0 0.0
    %1269 = vmatpush1.msra.mxu0 %v677
    %1270 = vmatprep.subr.mxu0 0.0
    %1271 = vmatpush1.msra.mxu0 %v682
    %1272 = vmatprep.subr.mxu0 0.0
    %1273 = vmatpush1.msra.mxu0 0.0
    %1274 = vmatprep.subr.mxu0 0.0
    %1275 = vmatpush1.msra.mxu0 0.0
    %1276 = vmatprep.subr.mxu0 0.0
    %1277 = vmatpush1.msra.mxu0 0.0
    %1278 = vmatprep.subr.mxu0 0.0
    %1279 = vmatpush1.msra.mxu0 0.0
    %1280 = vmatprep.subr.mxu0 0.0
    %1281 = vmatpush1.msra.mxu0 0.0
    %1282 = vmatprep.subr.mxu0 0.0
    %1283 = vmatpush1.msra.mxu0 0.0
    %1284 = vmatprep.subr.mxu0 0.0
    %1285 = vmatpush1.msra.mxu0 0.0
    %1286 = vmatprep.subr.mxu0 0.0
    %1287 = vmatpush1.msra.mxu0 0.0
    %1288 = vmatprep.subr.mxu0 0.0
    %1289 = vmatpush1.msra.mxu0 0.0
    %1290 = vmatprep.subr.mxu0 0.0
    %1291 = vmatpush1.msra.mxu0 0.0
    %1292 = vmatprep.subr.mxu0 0.0
    %1293 = vmatpush1.msra.mxu0 0.0
    %1294 = vmatprep.subr.mxu0 0.0
    %1295 = vmatpush1.msra.mxu0 0.0
    %1296 = vmatprep.subr.mxu0 0.0
    %1297 = vmatpush1.msra.mxu0 0.0
    %1298 = vmatprep.subr.mxu0 0.0
    %1299 = vmatpush1.msra.mxu0 0.0
    %1300 = vmatprep.subr.mxu0 0.0
    %1301 = vmatpush1.msra.mxu0 0.0
    %1302 = vmatprep.subr.mxu0 0.0
    %1303 = vmatpush1.msra.mxu0 0.0
    %1304 = vmatprep.subr.mxu0 0.0
    %1305 = vmatpush1.msra.mxu0 0.0
    %1306 = vmatprep.subr.mxu0 0.0
    %1307 = vmatpush1.msra.mxu0 0.0
    %1308 = vmatprep.subr.mxu0 0.0
    %1309 = vmatpush1.msra.mxu0 0.0
    %1310 = vmatprep.subr.mxu0 0.0
    %1311 = vmatpush1.msra.mxu0 0.0
    %1312 = vmatprep.subr.mxu0 0.0
    %1313 = vmatpush1.msra.mxu0 0.0
    %1314 = vmatprep.subr.mxu0 0.0
    %1315 = vmatpush1.msra.mxu0 0.0
    %1316 = vmatprep.subr.mxu0 0.0
    %1317 = vmatpush1.msra.mxu0 0.0
    %1318 = vmatprep.subr.mxu0 0.0
    %1319 = vmatpush1.msra.mxu0 0.0
    %1320 = vmatprep.subr.mxu0 0.0
    %1321 = vmatpush1.msra.mxu0 0.0
    %1322 = vmatprep.subr.mxu0 0.0
    %1323 = vmatpush1.msra.mxu0 0.0
    %1324 = vmatprep.subr.mxu0 0.0
    %1325 = vmatpush1.msra.mxu0 0.0
    %1326 = vmatprep.subr.mxu0 0.0
    %1327 = vmatpush1.msra.mxu0 0.0
    %1328 = vmatprep.subr.mxu0 0.0
    %1329 = vmatpush1.msra.mxu0 0.0
    %1330 = vmatprep.subr.mxu0 0.0
    %1331 = vmatpush1.msra.mxu0 0.0
    %1332 = vmatprep.mubr.f32.mxu0 0.0
    %1333 = vmatmul.mubr.f32.gmra.mrb[0].mxu0 %v1263
    %v1334 = vpop.f32.mrb[0].mxu0
    %v1335 = vadd.f32 0.0, %v1334
    %v1336 = vpop.f32.mrb[0].mxu0
    %1337 = vmatprep.mubr.f32.mxu0 0.0
    %1338 = vmatmul.mubr.f32.gmra.mrb[0].mxu0 %v1266
    %v1339 = vpop.f32.mrb[0].mxu0
    %v1340 = vadd.f32 0.0, %v1339
    %v1341 = vpop.f32.mrb[0].mxu0
    %1342 = vdwg.mxu0
    %v1344 = vsel %vm775, %v156, 0
    %v1347 = vsel %vm775, %v157, 0
    %1349 = vmatprep.subr.mxu0 0.0
    %1350 = vmatpush1.msra.mxu0 %v687
    %1351 = vmatprep.subr.mxu0 0.0
    %1352 = vmatpush1.msra.mxu0 %v692
    %1353 = vmatprep.subr.mxu0 0.0
    %1354 = vmatpush1.msra.mxu0 0.0
    %1355 = vmatprep.subr.mxu0 0.0
    %1356 = vmatpush1.msra.mxu0 0.0
    %1357 = vmatprep.subr.mxu0 0.0
    %1358 = vmatpush1.msra.mxu0 0.0
    %1359 = vmatprep.subr.mxu0 0.0
    %1360 = vmatpush1.msra.mxu0 0.0
    %1361 = vmatprep.subr.mxu0 0.0
    %1362 = vmatpush1.msra.mxu0 0.0
    %1363 = vmatprep.subr.mxu0 0.0
    %1364 = vmatpush1.msra.mxu0 0.0
    %1365 = vmatprep.subr.mxu0 0.0
    %1366 = vmatpush1.msra.mxu0 0.0
    %1367 = vmatprep.subr.mxu0 0.0
    %1368 = vmatpush1.msra.mxu0 0.0
    %1369 = vmatprep.subr.mxu0 0.0
    %1370 = vmatpush1.msra.mxu0 0.0
    %1371 = vmatprep.subr.mxu0 0.0
    %1372 = vmatpush1.msra.mxu0 0.0
    %1373 = vmatprep.subr.mxu0 0.0
    %1374 = vmatpush1.msra.mxu0 0.0
    %1375 = vmatprep.subr.mxu0 0.0
    %1376 = vmatpush1.msra.mxu0 0.0
    %1377 = vmatprep.subr.mxu0 0.0
    %1378 = vmatpush1.msra.mxu0 0.0
    %1379 = vmatprep.subr.mxu0 0.0
    %1380 = vmatpush1.msra.mxu0 0.0
    %1381 = vmatprep.subr.mxu0 0.0
    %1382 = vmatpush1.msra.mxu0 0.0
    %1383 = vmatprep.subr.mxu0 0.0
    %1384 = vmatpush1.msra.mxu0 0.0
    %1385 = vmatprep.subr.mxu0 0.0
    %1386 = vmatpush1.msra.mxu0 0.0
    %1387 = vmatprep.subr.mxu0 0.0
    %1388 = vmatpush1.msra.mxu0 0.0
    %1389 = vmatprep.subr.mxu0 0.0
    %1390 = vmatpush1.msra.mxu0 0.0
    %1391 = vmatprep.subr.mxu0 0.0
    %1392 = vmatpush1.msra.mxu0 0.0
    %1393 = vmatprep.subr.mxu0 0.0
    %1394 = vmatpush1.msra.mxu0 0.0
    %1395 = vmatprep.subr.mxu0 0.0
    %1396 = vmatpush1.msra.mxu0 0.0
    %1397 = vmatprep.subr.mxu0 0.0
    %1398 = vmatpush1.msra.mxu0 0.0
    %1399 = vmatprep.subr.mxu0 0.0
    %1400 = vmatpush1.msra.mxu0 0.0
    %1401 = vmatprep.subr.mxu0 0.0
    %1402 = vmatpush1.msra.mxu0 0.0
    %1403 = vmatprep.subr.mxu0 0.0
    %1404 = vmatpush1.msra.mxu0 0.0
    %1405 = vmatprep.subr.mxu0 0.0
    %1406 = vmatpush1.msra.mxu0 0.0
    %1407 = vmatprep.subr.mxu0 0.0
    %1408 = vmatpush1.msra.mxu0 0.0
    %1409 = vmatprep.subr.mxu0 0.0
    %1410 = vmatpush1.msra.mxu0 0.0
    %1411 = vmatprep.subr.mxu0 0.0
    %1412 = vmatpush1.msra.mxu0 0.0
    %1413 = vmatprep.mubr.f32.mxu0 0.0
    %1414 = vmatmul.mubr.f32.gmra.mrb[0].mxu0 %v1344
    %v1415 = vpop.f32.mrb[0].mxu0
    %v1416 = vadd.f32 0.0, %v1415
    %v1417 = vpop.f32.mrb[0].mxu0
    %1418 = vmatprep.mubr.f32.mxu0 0.0
    %1419 = vmatmul.mubr.f32.gmra.mrb[0].mxu0 %v1347
    %v1420 = vpop.f32.mrb[0].mxu0
    %v1421 = vadd.f32 0.0, %v1420
    %v1422 = vpop.f32.mrb[0].mxu0
    %1423 = vdwg.mxu0
    %v1425 = vsel %vm775, %v158, 0
    %v1428 = vsel %vm775, %v159, 0
    %1430 = vmatprep.subr.mxu0 0.0
    %1431 = vmatpush1.msra.mxu0 %v697
    %1432 = vmatprep.subr.mxu0 0.0
    %1433 = vmatpush1.msra.mxu0 %v702
    %1434 = vmatprep.subr.mxu0 0.0
    %1435 = vmatpush1.msra.mxu0 0.0
    %1436 = vmatprep.subr.mxu0 0.0
    %1437 = vmatpush1.msra.mxu0 0.0
    %1438 = vmatprep.subr.mxu0 0.0
    %1439 = vmatpush1.msra.mxu0 0.0
    %1440 = vmatprep.subr.mxu0 0.0
    %1441 = vmatpush1.msra.mxu0 0.0
    %1442 = vmatprep.subr.mxu0 0.0
    %1443 = vmatpush1.msra.mxu0 0.0
    %1444 = vmatprep.subr.mxu0 0.0
    %1445 = vmatpush1.msra.mxu0 0.0
    %1446 = vmatprep.subr.mxu0 0.0
    %1447 = vmatpush1.msra.mxu0 0.0
    %1448 = vmatprep.subr.mxu0 0.0
    %1449 = vmatpush1.msra.mxu0 0.0
    %1450 = vmatprep.subr.mxu0 0.0
    %1451 = vmatpush1.msra.mxu0 0.0
    %1452 = vmatprep.subr.mxu0 0.0
    %1453 = vmatpush1.msra.mxu0 0.0
    %1454 = vmatprep.subr.mxu0 0.0
    %1455 = vmatpush1.msra.mxu0 0.0
    %1456 = vmatprep.subr.mxu0 0.0
    %1457 = vmatpush1.msra.mxu0 0.0
    %1458 = vmatprep.subr.mxu0 0.0
    %1459 = vmatpush1.msra.mxu0 0.0
    %1460 = vmatprep.subr.mxu0 0.0
    %1461 = vmatpush1.msra.mxu0 0.0
    %1462 = vmatprep.subr.mxu0 0.0
    %1463 = vmatpush1.msra.mxu0 0.0
    %1464 = vmatprep.subr.mxu0 0.0
    %1465 = vmatpush1.msra.mxu0 0.0
    %1466 = vmatprep.subr.mxu0 0.0
    %1467 = vmatpush1.msra.mxu0 0.0
    %1468 = vmatprep.subr.mxu0 0.0
    %1469 = vmatpush1.msra.mxu0 0.0
    %1470 = vmatprep.subr.mxu0 0.0
    %1471 = vmatpush1.msra.mxu0 0.0
    %1472 = vmatprep.subr.mxu0 0.0
    %1473 = vmatpush1.msra.mxu0 0.0
    %1474 = vmatprep.subr.mxu0 0.0
    %1475 = vmatpush1.msra.mxu0 0.0
    %1476 = vmatprep.subr.mxu0 0.0
    %1477 = vmatpush1.msra.mxu0 0.0
    %1478 = vmatprep.subr.mxu0 0.0
    %1479 = vmatpush1.msra.mxu0 0.0
    %1480 = vmatprep.subr.mxu0 0.0
    %1481 = vmatpush1.msra.mxu0 0.0
    %1482 = vmatprep.subr.mxu0 0.0
    %1483 = vmatpush1.msra.mxu0 0.0
    %1484 = vmatprep.subr.mxu0 0.0
    %1485 = vmatpush1.msra.mxu0 0.0
    %1486 = vmatprep.subr.mxu0 0.0
    %1487 = vmatpush1.msra.mxu0 0.0
    %1488 = vmatprep.subr.mxu0 0.0
    %1489 = vmatpush1.msra.mxu0 0.0
    %1490 = vmatprep.subr.mxu0 0.0
    %1491 = vmatpush1.msra.mxu0 0.0
    %1492 = vmatprep.subr.mxu0 0.0
    %1493 = vmatpush1.msra.mxu0 0.0
    %1494 = vmatprep.mubr.f32.mxu0 0.0
    %1495 = vmatmul.mubr.f32.gmra.mrb[0].mxu0 %v1425
    %v1496 = vpop.f32.mrb[0].mxu0
    %v1497 = vadd.f32 0.0, %v1496
    %v1498 = vpop.f32.mrb[0].mxu0
    %1499 = vmatprep.mubr.f32.mxu0 0.0
    %1500 = vmatmul.mubr.f32.gmra.mrb[0].mxu0 %v1428
    %v1501 = vpop.f32.mrb[0].mxu0
    %v1502 = vadd.f32 0.0, %v1501
    %v1503 = vpop.f32.mrb[0].mxu0
    %1504 = vdwg.mxu0
    %v1506 = vsel %vm775, %v160, 0
    %v1509 = vsel %vm775, %v161, 0
    %1511 = vmatprep.subr.mxu0 0.0
    %1512 = vmatpush1.msra.mxu0 %v707
    %1513 = vmatprep.subr.mxu0 0.0
    %1514 = vmatpush1.msra.mxu0 %v712
    %1515 = vmatprep.subr.mxu0 0.0
    %1516 = vmatpush1.msra.mxu0 0.0
    %1517 = vmatprep.subr.mxu0 0.0
    %1518 = vmatpush1.msra.mxu0 0.0
    %1519 = vmatprep.subr.mxu0 0.0
    %1520 = vmatpush1.msra.mxu0 0.0
    %1521 = vmatprep.subr.mxu0 0.0
    %1522 = vmatpush1.msra.mxu0 0.0
    %1523 = vmatprep.subr.mxu0 0.0
    %1524 = vmatpush1.msra.mxu0 0.0
    %1525 = vmatprep.subr.mxu0 0.0
    %1526 = vmatpush1.msra.mxu0 0.0
    %1527 = vmatprep.subr.mxu0 0.0
    %1528 = vmatpush1.msra.mxu0 0.0
    %1529 = vmatprep.subr.mxu0 0.0
    %1530 = vmatpush1.msra.mxu0 0.0
    %1531 = vmatprep.subr.mxu0 0.0
    %1532 = vmatpush1.msra.mxu0 0.0
    %1533 = vmatprep.subr.mxu0 0.0
    %1534 = vmatpush1.msra.mxu0 0.0
    %1535 = vmatprep.subr.mxu0 0.0
    %1536 = vmatpush1.msra.mxu0 0.0
    %1537 = vmatprep.subr.mxu0 0.0
    %1538 = vmatpush1.msra.mxu0 0.0
    %1539 = vmatprep.subr.mxu0 0.0
    %1540 = vmatpush1.msra.mxu0 0.0
    %1541 = vmatprep.subr.mxu0 0.0
    %1542 = vmatpush1.msra.mxu0 0.0
    %1543 = vmatprep.subr.mxu0 0.0
    %1544 = vmatpush1.msra.mxu0 0.0
    %1545 = vmatprep.subr.mxu0 0.0
    %1546 = vmatpush1.msra.mxu0 0.0
    %1547 = vmatprep.subr.mxu0 0.0
    %1548 = vmatpush1.msra.mxu0 0.0
    %1549 = vmatprep.subr.mxu0 0.0
    %1550 = vmatpush1.msra.mxu0 0.0
    %1551 = vmatprep.subr.mxu0 0.0
    %1552 = vmatpush1.msra.mxu0 0.0
    %1553 = vmatprep.subr.mxu0 0.0
    %1554 = vmatpush1.msra.mxu0 0.0
    %1555 = vmatprep.subr.mxu0 0.0
    %1556 = vmatpush1.msra.mxu0 0.0
    %1557 = vmatprep.subr.mxu0 0.0
    %1558 = vmatpush1.msra.mxu0 0.0
    %1559 = vmatprep.subr.mxu0 0.0
    %1560 = vmatpush1.msra.mxu0 0.0
    %1561 = vmatprep.subr.mxu0 0.0
    %1562 = vmatpush1.msra.mxu0 0.0
    %1563 = vmatprep.subr.mxu0 0.0
    %1564 = vmatpush1.msra.mxu0 0.0
    %1565 = vmatprep.subr.mxu0 0.0
    %1566 = vmatpush1.msra.mxu0 0.0
    %1567 = vmatprep.subr.mxu0 0.0
    %1568 = vmatpush1.msra.mxu0 0.0
    %1569 = vmatprep.subr.mxu0 0.0
    %1570 = vmatpush1.msra.mxu0 0.0
    %1571 = vmatprep.subr.mxu0 0.0
    %1572 = vmatpush1.msra.mxu0 0.0
    %1573 = vmatprep.subr.mxu0 0.0
    %1574 = vmatpush1.msra.mxu0 0.0
    %1575 = vmatprep.mubr.f32.mxu0 0.0
    %1576 = vmatmul.mubr.f32.gmra.mrb[0].mxu0 %v1506
    %v1577 = vpop.f32.mrb[0].mxu0
    %v1578 = vadd.f32 0.0, %v1577
    %v1579 = vpop.f32.mrb[0].mxu0
    %1580 = vmatprep.mubr.f32.mxu0 0.0
    %1581 = vmatmul.mubr.f32.gmra.mrb[0].mxu0 %v1509
    %v1582 = vpop.f32.mrb[0].mxu0
    %v1583 = vadd.f32 0.0, %v1582
    %v1584 = vpop.f32.mrb[0].mxu0
    %1585 = vdwg.mxu0
    %v1587 = vsel %vm775, %v162, 0
    %v1590 = vsel %vm775, %v163, 0
    %1592 = vmatprep.subr.mxu0 0.0
    %1593 = vmatpush1.msra.mxu0 %v717
    %1594 = vmatprep.subr.mxu0 0.0
    %1595 = vmatpush1.msra.mxu0 %v722
    %1596 = vmatprep.subr.mxu0 0.0
    %1597 = vmatpush1.msra.mxu0 0.0
    %1598 = vmatprep.subr.mxu0 0.0
    %1599 = vmatpush1.msra.mxu0 0.0
    %1600 = vmatprep.subr.mxu0 0.0
    %1601 = vmatpush1.msra.mxu0 0.0
    %1602 = vmatprep.subr.mxu0 0.0
    %1603 = vmatpush1.msra.mxu0 0.0
    %1604 = vmatprep.subr.mxu0 0.0
    %1605 = vmatpush1.msra.mxu0 0.0
    %1606 = vmatprep.subr.mxu0 0.0
    %1607 = vmatpush1.msra.mxu0 0.0
    %1608 = vmatprep.subr.mxu0 0.0
    %1609 = vmatpush1.msra.mxu0 0.0
    %1610 = vmatprep.subr.mxu0 0.0
    %1611 = vmatpush1.msra.mxu0 0.0
    %1612 = vmatprep.subr.mxu0 0.0
    %1613 = vmatpush1.msra.mxu0 0.0
    %1614 = vmatprep.subr.mxu0 0.0
    %1615 = vmatpush1.msra.mxu0 0.0
    %1616 = vmatprep.subr.mxu0 0.0
    %1617 = vmatpush1.msra.mxu0 0.0
    %1618 = vmatprep.subr.mxu0 0.0
    %1619 = vmatpush1.msra.mxu0 0.0
    %1620 = vmatprep.subr.mxu0 0.0
    %1621 = vmatpush1.msra.mxu0 0.0
    %1622 = vmatprep.subr.mxu0 0.0
    %1623 = vmatpush1.msra.mxu0 0.0
    %1624 = vmatprep.subr.mxu0 0.0
    %1625 = vmatpush1.msra.mxu0 0.0
    %1626 = vmatprep.subr.mxu0 0.0
    %1627 = vmatpush1.msra.mxu0 0.0
    %1628 = vmatprep.subr.mxu0 0.0
    %1629 = vmatpush1.msra.mxu0 0.0
    %1630 = vmatprep.subr.mxu0 0.0
    %1631 = vmatpush1.msra.mxu0 0.0
    %1632 = vmatprep.subr.mxu0 0.0
    %1633 = vmatpush1.msra.mxu0 0.0
    %1634 = vmatprep.subr.mxu0 0.0
    %1635 = vmatpush1.msra.mxu0 0.0
    %1636 = vmatprep.subr.mxu0 0.0
    %1637 = vmatpush1.msra.mxu0 0.0
    %1638 = vmatprep.subr.mxu0 0.0
    %1639 = vmatpush1.msra.mxu0 0.0
    %1640 = vmatprep.subr.mxu0 0.0
    %1641 = vmatpush1.msra.mxu0 0.0
    %1642 = vmatprep.subr.mxu0 0.0
    %1643 = vmatpush1.msra.mxu0 0.0
    %1644 = vmatprep.subr.mxu0 0.0
    %1645 = vmatpush1.msra.mxu0 0.0
    %1646 = vmatprep.subr.mxu0 0.0
    %1647 = vmatpush1.msra.mxu0 0.0
    %1648 = vmatprep.subr.mxu0 0.0
    %1649 = vmatpush1.msra.mxu0 0.0
    %1650 = vmatprep.subr.mxu0 0.0
    %1651 = vmatpush1.msra.mxu0 0.0
    %1652 = vmatprep.subr.mxu0 0.0
    %1653 = vmatpush1.msra.mxu0 0.0
    %1654 = vmatprep.subr.mxu0 0.0
    %1655 = vmatpush1.msra.mxu0 0.0
    %1656 = vmatprep.mubr.f32.mxu0 0.0
    %1657 = vmatmul.mubr.f32.gmra.mrb[0].mxu0 %v1587
    %v1658 = vpop.f32.mrb[0].mxu0
    %v1659 = vadd.f32 0.0, %v1658
    %v1660 = vpop.f32.mrb[0].mxu0
    %1661 = vmatprep.mubr.f32.mxu0 0.0
    %1662 = vmatmul.mubr.f32.gmra.mrb[0].mxu0 %v1590
    %v1663 = vpop.f32.mrb[0].mxu0
    %v1664 = vadd.f32 0.0, %v1663
    %v1665 = vpop.f32.mrb[0].mxu0
    %1666 = vdwg.mxu0
    %v1668 = vsel %vm775, %v164, 0
    %v1671 = vsel %vm775, %v165, 0
    %1673 = vmatprep.subr.mxu0 0.0
    %1674 = vmatpush1.msra.mxu0 %v727
    %1675 = vmatprep.subr.mxu0 0.0
    %1676 = vmatpush1.msra.mxu0 %v732
    %1677 = vmatprep.subr.mxu0 0.0
    %1678 = vmatpush1.msra.mxu0 0.0
    %1679 = vmatprep.subr.mxu0 0.0
    %1680 = vmatpush1.msra.mxu0 0.0
    %1681 = vmatprep.subr.mxu0 0.0
    %1682 = vmatpush1.msra.mxu0 0.0
    %1683 = vmatprep.subr.mxu0 0.0
    %1684 = vmatpush1.msra.mxu0 0.0
    %1685 = vmatprep.subr.mxu0 0.0
    %1686 = vmatpush1.msra.mxu0 0.0
    %1687 = vmatprep.subr.mxu0 0.0
    %1688 = vmatpush1.msra.mxu0 0.0
    %1689 = vmatprep.subr.mxu0 0.0
    %1690 = vmatpush1.msra.mxu0 0.0
    %1691 = vmatprep.subr.mxu0 0.0
    %1692 = vmatpush1.msra.mxu0 0.0
    %1693 = vmatprep.subr.mxu0 0.0
    %1694 = vmatpush1.msra.mxu0 0.0
    %1695 = vmatprep.subr.mxu0 0.0
    %1696 = vmatpush1.msra.mxu0 0.0
    %1697 = vmatprep.subr.mxu0 0.0
    %1698 = vmatpush1.msra.mxu0 0.0
    %1699 = vmatprep.subr.mxu0 0.0
    %1700 = vmatpush1.msra.mxu0 0.0
    %1701 = vmatprep.subr.mxu0 0.0
    %1702 = vmatpush1.msra.mxu0 0.0
    %1703 = vmatprep.subr.mxu0 0.0
    %1704 = vmatpush1.msra.mxu0 0.0
    %1705 = vmatprep.subr.mxu0 0.0
    %1706 = vmatpush1.msra.mxu0 0.0
    %1707 = vmatprep.subr.mxu0 0.0
    %1708 = vmatpush1.msra.mxu0 0.0
    %1709 = vmatprep.subr.mxu0 0.0
    %1710 = vmatpush1.msra.mxu0 0.0
    %1711 = vmatprep.subr.mxu0 0.0
    %1712 = vmatpush1.msra.mxu0 0.0
    %1713 = vmatprep.subr.mxu0 0.0
    %1714 = vmatpush1.msra.mxu0 0.0
    %1715 = vmatprep.subr.mxu0 0.0
    %1716 = vmatpush1.msra.mxu0 0.0
    %1717 = vmatprep.subr.mxu0 0.0
    %1718 = vmatpush1.msra.mxu0 0.0
    %1719 = vmatprep.subr.mxu0 0.0
    %1720 = vmatpush1.msra.mxu0 0.0
    %1721 = vmatprep.subr.mxu0 0.0
    %1722 = vmatpush1.msra.mxu0 0.0
    %1723 = vmatprep.subr.mxu0 0.0
    %1724 = vmatpush1.msra.mxu0 0.0
    %1725 = vmatprep.subr.mxu0 0.0
    %1726 = vmatpush1.msra.mxu0 0.0
    %1727 = vmatprep.subr.mxu0 0.0
    %1728 = vmatpush1.msra.mxu0 0.0
    %1729 = vmatprep.subr.mxu0 0.0
    %1730 = vmatpush1.msra.mxu0 0.0
    %1731 = vmatprep.subr.mxu0 0.0
    %1732 = vmatpush1.msra.mxu0 0.0
    %1733 = vmatprep.subr.mxu0 0.0
    %1734 = vmatpush1.msra.mxu0 0.0
    %1735 = vmatprep.subr.mxu0 0.0
    %1736 = vmatpush1.msra.mxu0 0.0
    %1737 = vmatprep.mubr.f32.mxu0 0.0
    %1738 = vmatmul.mubr.f32.gmra.mrb[0].mxu0 %v1668
    %v1739 = vpop.f32.mrb[0].mxu0
    %v1740 = vadd.f32 0.0, %v1739
    %v1741 = vpop.f32.mrb[0].mxu0
    %1742 = vmatprep.mubr.f32.mxu0 0.0
    %1743 = vmatmul.mubr.f32.gmra.mrb[0].mxu0 %v1671
    %v1744 = vpop.f32.mrb[0].mxu0
    %v1745 = vadd.f32 0.0, %v1744
    %v1746 = vpop.f32.mrb[0].mxu0
    %1747 = vdwg.mxu0
    %v1749 = vsel %vm775, %v166, 0
    %v1752 = vsel %vm775, %v167, 0
    %1754 = vmatprep.subr.mxu0 0.0
    %1755 = vmatpush1.msra.mxu0 %v737
    %1756 = vmatprep.subr.mxu0 0.0
    %1757 = vmatpush1.msra.mxu0 %v742
    %1758 = vmatprep.subr.mxu0 0.0
    %1759 = vmatpush1.msra.mxu0 0.0
    %1760 = vmatprep.subr.mxu0 0.0
    %1761 = vmatpush1.msra.mxu0 0.0
    %1762 = vmatprep.subr.mxu0 0.0
    %1763 = vmatpush1.msra.mxu0 0.0
    %1764 = vmatprep.subr.mxu0 0.0
    %1765 = vmatpush1.msra.mxu0 0.0
    %1766 = vmatprep.subr.mxu0 0.0
    %1767 = vmatpush1.msra.mxu0 0.0
    %1768 = vmatprep.subr.mxu0 0.0
    %1769 = vmatpush1.msra.mxu0 0.0
    %1770 = vmatprep.subr.mxu0 0.0
    %1771 = vmatpush1.msra.mxu0 0.0
    %1772 = vmatprep.subr.mxu0 0.0
    %1773 = vmatpush1.msra.mxu0 0.0
    %1774 = vmatprep.subr.mxu0 0.0
    %1775 = vmatpush1.msra.mxu0 0.0
    %1776 = vmatprep.subr.mxu0 0.0
    %1777 = vmatpush1.msra.mxu0 0.0
    %1778 = vmatprep.subr.mxu0 0.0
    %1779 = vmatpush1.msra.mxu0 0.0
    %1780 = vmatprep.subr.mxu0 0.0
    %1781 = vmatpush1.msra.mxu0 0.0
    %1782 = vmatprep.subr.mxu0 0.0
    %1783 = vmatpush1.msra.mxu0 0.0
    %1784 = vmatprep.subr.mxu0 0.0
    %1785 = vmatpush1.msra.mxu0 0.0
    %1786 = vmatprep.subr.mxu0 0.0
    %1787 = vmatpush1.msra.mxu0 0.0
    %1788 = vmatprep.subr.mxu0 0.0
    %1789 = vmatpush1.msra.mxu0 0.0
    %1790 = vmatprep.subr.mxu0 0.0
    %1791 = vmatpush1.msra.mxu0 0.0
    %1792 = vmatprep.subr.mxu0 0.0
    %1793 = vmatpush1.msra.mxu0 0.0
    %1794 = vmatprep.subr.mxu0 0.0
    %1795 = vmatpush1.msra.mxu0 0.0
    %1796 = vmatprep.subr.mxu0 0.0
    %1797 = vmatpush1.msra.mxu0 0.0
    %1798 = vmatprep.subr.mxu0 0.0
    %1799 = vmatpush1.msra.mxu0 0.0
    %1800 = vmatprep.subr.mxu0 0.0
    %1801 = vmatpush1.msra.mxu0 0.0
    %1802 = vmatprep.subr.mxu0 0.0
    %1803 = vmatpush1.msra.mxu0 0.0
    %1804 = vmatprep.subr.mxu0 0.0
    %1805 = vmatpush1.msra.mxu0 0.0
    %1806 = vmatprep.subr.mxu0 0.0
    %1807 = vmatpush1.msra.mxu0 0.0
    %1808 = vmatprep.subr.mxu0 0.0
    %1809 = vmatpush1.msra.mxu0 0.0
    %1810 = vmatprep.subr.mxu0 0.0
    %1811 = vmatpush1.msra.mxu0 0.0
    %1812 = vmatprep.subr.mxu0 0.0
    %1813 = vmatpush1.msra.mxu0 0.0
    %1814 = vmatprep.subr.mxu0 0.0
    %1815 = vmatpush1.msra.mxu0 0.0
    %1816 = vmatprep.subr.mxu0 0.0
    %1817 = vmatpush1.msra.mxu0 0.0
    %1818 = vmatprep.mubr.f32.mxu0 0.0
    %1819 = vmatmul.mubr.f32.gmra.mrb[0].mxu0 %v1749
    %v1820 = vpop.f32.mrb[0].mxu0
    %v1821 = vadd.f32 0.0, %v1820
    %v1822 = vpop.f32.mrb[0].mxu0
    %1823 = vmatprep.mubr.f32.mxu0 0.0
    %1824 = vmatmul.mubr.f32.gmra.mrb[0].mxu0 %v1752
    %v1825 = vpop.f32.mrb[0].mxu0
    %v1826 = vadd.f32 0.0, %v1825
    %v1827 = vpop.f32.mrb[0].mxu0
    %1828 = vdwg.mxu0
    %v1830 = vsel %vm775, %v168, 0
    %v1833 = vsel %vm775, %v169, 0
    %1835 = vmatprep.subr.mxu0 0.0
    %1836 = vmatpush1.msra.mxu0 %v747
    %1837 = vmatprep.subr.mxu0 0.0
    %1838 = vmatpush1.msra.mxu0 %v752
    %1839 = vmatprep.subr.mxu0 0.0
    %1840 = vmatpush1.msra.mxu0 0.0
    %1841 = vmatprep.subr.mxu0 0.0
    %1842 = vmatpush1.msra.mxu0 0.0
    %1843 = vmatprep.subr.mxu0 0.0
    %1844 = vmatpush1.msra.mxu0 0.0
    %1845 = vmatprep.subr.mxu0 0.0
    %1846 = vmatpush1.msra.mxu0 0.0
    %1847 = vmatprep.subr.mxu0 0.0
    %1848 = vmatpush1.msra.mxu0 0.0
    %1849 = vmatprep.subr.mxu0 0.0
    %1850 = vmatpush1.msra.mxu0 0.0
    %1851 = vmatprep.subr.mxu0 0.0
    %1852 = vmatpush1.msra.mxu0 0.0
    %1853 = vmatprep.subr.mxu0 0.0
    %1854 = vmatpush1.msra.mxu0 0.0
    %1855 = vmatprep.subr.mxu0 0.0
    %1856 = vmatpush1.msra.mxu0 0.0
    %1857 = vmatprep.subr.mxu0 0.0
    %1858 = vmatpush1.msra.mxu0 0.0
    %1859 = vmatprep.subr.mxu0 0.0
    %1860 = vmatpush1.msra.mxu0 0.0
    %1861 = vmatprep.subr.mxu0 0.0
    %1862 = vmatpush1.msra.mxu0 0.0
    %1863 = vmatprep.subr.mxu0 0.0
    %1864 = vmatpush1.msra.mxu0 0.0
    %1865 = vmatprep.subr.mxu0 0.0
    %1866 = vmatpush1.msra.mxu0 0.0
    %1867 = vmatprep.subr.mxu0 0.0
    %1868 = vmatpush1.msra.mxu0 0.0
    %1869 = vmatprep.subr.mxu0 0.0
    %1870 = vmatpush1.msra.mxu0 0.0
    %1871 = vmatprep.subr.mxu0 0.0
    %1872 = vmatpush1.msra.mxu0 0.0
    %1873 = vmatprep.subr.mxu0 0.0
    %1874 = vmatpush1.msra.mxu0 0.0
    %1875 = vmatprep.subr.mxu0 0.0
    %1876 = vmatpush1.msra.mxu0 0.0
    %1877 = vmatprep.subr.mxu0 0.0
    %1878 = vmatpush1.msra.mxu0 0.0
    %1879 = vmatprep.subr.mxu0 0.0
    %1880 = vmatpush1.msra.mxu0 0.0
    %1881 = vmatprep.subr.mxu0 0.0
    %1882 = vmatpush1.msra.mxu0 0.0
    %1883 = vmatprep.subr.mxu0 0.0
    %1884 = vmatpush1.msra.mxu0 0.0
    %1885 = vmatprep.subr.mxu0 0.0
    %1886 = vmatpush1.msra.mxu0 0.0
    %1887 = vmatprep.subr.mxu0 0.0
    %1888 = vmatpush1.msra.mxu0 0.0
    %1889 = vmatprep.subr.mxu0 0.0
    %1890 = vmatpush1.msra.mxu0 0.0
    %1891 = vmatprep.subr.mxu0 0.0
    %1892 = vmatpush1.msra.mxu0 0.0
    %1893 = vmatprep.subr.mxu0 0.0
    %1894 = vmatpush1.msra.mxu0 0.0
    %1895 = vmatprep.subr.mxu0 0.0
    %1896 = vmatpush1.msra.mxu0 0.0
    %1897 = vmatprep.subr.mxu0 0.0
    %1898 = vmatpush1.msra.mxu0 0.0
    %1899 = vmatprep.mubr.f32.mxu0 0.0
    %1900 = vmatmul.mubr.f32.gmra.mrb[0].mxu0 %v1830
    %v1901 = vpop.f32.mrb[0].mxu0
    %v1902 = vadd.f32 0.0, %v1901
    %v1903 = vpop.f32.mrb[0].mxu0
    %1904 = vmatprep.mubr.f32.mxu0 0.0
    %1905 = vmatmul.mubr.f32.gmra.mrb[0].mxu0 %v1833
    %v1906 = vpop.f32.mrb[0].mxu0
    %v1907 = vadd.f32 0.0, %v1906
    %v1908 = vpop.f32.mrb[0].mxu0
    %1909 = vdwg.mxu0
    %v1911 = vsel %vm775, %v170, 0
    %v1914 = vsel %vm775, %v171, 0
    %1916 = vmatprep.subr.mxu0 0.0
    %1917 = vmatpush1.msra.mxu0 %v757
    %1918 = vmatprep.subr.mxu0 0.0
    %1919 = vmatpush1.msra.mxu0 %v762
    %1920 = vmatprep.subr.mxu0 0.0
    %1921 = vmatpush1.msra.mxu0 0.0
    %1922 = vmatprep.subr.mxu0 0.0
    %1923 = vmatpush1.msra.mxu0 0.0
    %1924 = vmatprep.subr.mxu0 0.0
    %1925 = vmatpush1.msra.mxu0 0.0
    %1926 = vmatprep.subr.mxu0 0.0
    %1927 = vmatpush1.msra.mxu0 0.0
    %1928 = vmatprep.subr.mxu0 0.0
    %1929 = vmatpush1.msra.mxu0 0.0
    %1930 = vmatprep.subr.mxu0 0.0
    %1931 = vmatpush1.msra.mxu0 0.0
    %1932 = vmatprep.subr.mxu0 0.0
    %1933 = vmatpush1.msra.mxu0 0.0
    %1934 = vmatprep.subr.mxu0 0.0
    %1935 = vmatpush1.msra.mxu0 0.0
    %1936 = vmatprep.subr.mxu0 0.0
    %1937 = vmatpush1.msra.mxu0 0.0
    %1938 = vmatprep.subr.mxu0 0.0
    %1939 = vmatpush1.msra.mxu0 0.0
    %1940 = vmatprep.subr.mxu0 0.0
    %1941 = vmatpush1.msra.mxu0 0.0
    %1942 = vmatprep.subr.mxu0 0.0
    %1943 = vmatpush1.msra.mxu0 0.0
    %1944 = vmatprep.subr.mxu0 0.0
    %1945 = vmatpush1.msra.mxu0 0.0
    %1946 = vmatprep.subr.mxu0 0.0
    %1947 = vmatpush1.msra.mxu0 0.0
    %1948 = vmatprep.subr.mxu0 0.0
    %1949 = vmatpush1.msra.mxu0 0.0
    %1950 = vmatprep.subr.mxu0 0.0
    %1951 = vmatpush1.msra.mxu0 0.0
    %1952 = vmatprep.subr.mxu0 0.0
    %1953 = vmatpush1.msra.mxu0 0.0
    %1954 = vmatprep.subr.mxu0 0.0
    %1955 = vmatpush1.msra.mxu0 0.0
    %1956 = vmatprep.subr.mxu0 0.0
    %1957 = vmatpush1.msra.mxu0 0.0
    %1958 = vmatprep.subr.mxu0 0.0
    %1959 = vmatpush1.msra.mxu0 0.0
    %1960 = vmatprep.subr.mxu0 0.0
    %1961 = vmatpush1.msra.mxu0 0.0
    %1962 = vmatprep.subr.mxu0 0.0
    %1963 = vmatpush1.msra.mxu0 0.0
    %1964 = vmatprep.subr.mxu0 0.0
    %1965 = vmatpush1.msra.mxu0 0.0
    %1966 = vmatprep.subr.mxu0 0.0
    %1967 = vmatpush1.msra.mxu0 0.0
    %1968 = vmatprep.subr.mxu0 0.0
    %1969 = vmatpush1.msra.mxu0 0.0
    %1970 = vmatprep.subr.mxu0 0.0
    %1971 = vmatpush1.msra.mxu0 0.0
    %1972 = vmatprep.subr.mxu0 0.0
    %1973 = vmatpush1.msra.mxu0 0.0
    %1974 = vmatprep.subr.mxu0 0.0
    %1975 = vmatpush1.msra.mxu0 0.0
    %1976 = vmatprep.subr.mxu0 0.0
    %1977 = vmatpush1.msra.mxu0 0.0
    %1978 = vmatprep.subr.mxu0 0.0
    %1979 = vmatpush1.msra.mxu0 0.0
    %1980 = vmatprep.mubr.f32.mxu0 0.0
    %1981 = vmatmul.mubr.f32.gmra.mrb[0].mxu0 %v1911
    %v1982 = vpop.f32.mrb[0].mxu0
    %v1983 = vadd.f32 0.0, %v1982
    %v1984 = vpop.f32.mrb[0].mxu0
    %1985 = vmatprep.mubr.f32.mxu0 0.0
    %1986 = vmatmul.mubr.f32.gmra.mrb[0].mxu0 %v1914
    %v1987 = vpop.f32.mrb[0].mxu0
    %v1988 = vadd.f32 0.0, %v1987
    %v1989 = vpop.f32.mrb[0].mxu0
    %1990 = vdwg.mxu0
    %v1992 = vsel %vm775, %v172, 0
    %v1995 = vsel %vm775, %v173, 0
    %1997 = vmatprep.subr.mxu0 0.0
    %1998 = vmatpush1.msra.mxu0 %v767
    %1999 = vmatprep.subr.mxu0 0.0
    %2000 = vmatpush1.msra.mxu0 %v772
    %2001 = vmatprep.subr.mxu0 0.0
    %2002 = vmatpush1.msra.mxu0 0.0
    %2003 = vmatprep.subr.mxu0 0.0
    %2004 = vmatpush1.msra.mxu0 0.0
    %2005 = vmatprep.subr.mxu0 0.0
    %2006 = vmatpush1.msra.mxu0 0.0
    %2007 = vmatprep.subr.mxu0 0.0
    %2008 = vmatpush1.msra.mxu0 0.0
    %2009 = vmatprep.subr.mxu0 0.0
    %2010 = vmatpush1.msra.mxu0 0.0
    %2011 = vmatprep.subr.mxu0 0.0
    %2012 = vmatpush1.msra.mxu0 0.0
    %2013 = vmatprep.subr.mxu0 0.0
    %2014 = vmatpush1.msra.mxu0 0.0
    %2015 = vmatprep.subr.mxu0 0.0
    %2016 = vmatpush1.msra.mxu0 0.0
    %2017 = vmatprep.subr.mxu0 0.0
    %2018 = vmatpush1.msra.mxu0 0.0
    %2019 = vmatprep.subr.mxu0 0.0
    %2020 = vmatpush1.msra.mxu0 0.0
    %2021 = vmatprep.subr.mxu0 0.0
    %2022 = vmatpush1.msra.mxu0 0.0
    %2023 = vmatprep.subr.mxu0 0.0
    %2024 = vmatpush1.msra.mxu0 0.0
    %2025 = vmatprep.subr.mxu0 0.0
    %2026 = vmatpush1.msra.mxu0 0.0
    %2027 = vmatprep.subr.mxu0 0.0
    %2028 = vmatpush1.msra.mxu0 0.0
    %2029 = vmatprep.subr.mxu0 0.0
    %2030 = vmatpush1.msra.mxu0 0.0
    %2031 = vmatprep.subr.mxu0 0.0
    %2032 = vmatpush1.msra.mxu0 0.0
    %2033 = vmatprep.subr.mxu0 0.0
    %2034 = vmatpush1.msra.mxu0 0.0
    %2035 = vmatprep.subr.mxu0 0.0
    %2036 = vmatpush1.msra.mxu0 0.0
    %2037 = vmatprep.subr.mxu0 0.0
    %2038 = vmatpush1.msra.mxu0 0.0
    %2039 = vmatprep.subr.mxu0 0.0
    %2040 = vmatpush1.msra.mxu0 0.0
    %2041 = vmatprep.subr.mxu0 0.0
    %2042 = vmatpush1.msra.mxu0 0.0
    %2043 = vmatprep.subr.mxu0 0.0
    %2044 = vmatpush1.msra.mxu0 0.0
    %2045 = vmatprep.subr.mxu0 0.0
    %2046 = vmatpush1.msra.mxu0 0.0
    %2047 = vmatprep.subr.mxu0 0.0
    %2048 = vmatpush1.msra.mxu0 0.0
    %2049 = vmatprep.subr.mxu0 0.0
    %2050 = vmatpush1.msra.mxu0 0.0
    %2051 = vmatprep.subr.mxu0 0.0
    %2052 = vmatpush1.msra.mxu0 0.0
    %2053 = vmatprep.subr.mxu0 0.0
    %2054 = vmatpush1.msra.mxu0 0.0
    %2055 = vmatprep.subr.mxu0 0.0
    %2056 = vmatpush1.msra.mxu0 0.0
    %2057 = vmatprep.subr.mxu0 0.0
    %2058 = vmatpush1.msra.mxu0 0.0
    %2059 = vmatprep.subr.mxu0 0.0
    %2060 = vmatpush1.msra.mxu0 0.0
    %2061 = vmatprep.mubr.f32.mxu0 0.0
    %2062 = vmatmul.mubr.f32.gmra.mrb[0].mxu0 %v1992
    %v2063 = vpop.f32.mrb[0].mxu0
    %v2064 = vadd.f32 0.0, %v2063
    %v2065 = vpop.f32.mrb[0].mxu0
    %2066 = vmatprep.mubr.f32.mxu0 0.0
    %2067 = vmatmul.mubr.f32.gmra.mrb[0].mxu0 %v1995
    %v2068 = vpop.f32.mrb[0].mxu0
    %v2069 = vadd.f32 0.0, %v2068
    %v2070 = vpop.f32.mrb[0].mxu0
    %2071 = vdwg.mxu0
    %vm2072 = vcmp.gt.f32.partialorder %v849, 0.0
    %vm2073 = vcmp.gt.f32.partialorder %v854, 0.0
    %vm2074 = vcmp.gt.f32.partialorder %v930, 0.0
    %vm2075 = vcmp.gt.f32.partialorder %v935, 0.0
    %vm2076 = vcmp.gt.f32.partialorder %v1011, 0.0
    %vm2077 = vcmp.gt.f32.partialorder %v1016, 0.0
    %vm2078 = vcmp.gt.f32.partialorder %v1092, 0.0
    %vm2079 = vcmp.gt.f32.partialorder %v1097, 0.0
    %vm2080 = vcmp.gt.f32.partialorder %v1173, 0.0
    %vm2081 = vcmp.gt.f32.partialorder %v1178, 0.0
    %vm2082 = vcmp.gt.f32.partialorder %v1254, 0.0
    %vm2083 = vcmp.gt.f32.partialorder %v1259, 0.0
    %vm2084 = vcmp.gt.f32.partialorder %v1335, 0.0
    %vm2085 = vcmp.gt.f32.partialorder %v1340, 0.0
    %vm2086 = vcmp.gt.f32.partialorder %v1416, 0.0
    %vm2087 = vcmp.gt.f32.partialorder %v1421, 0.0
    %vm2088 = vcmp.gt.f32.partialorder %v1497, 0.0
    %vm2089 = vcmp.gt.f32.partialorder %v1502, 0.0
    %vm2090 = vcmp.gt.f32.partialorder %v1578, 0.0
    %vm2091 = vcmp.gt.f32.partialorder %v1583, 0.0
    %vm2092 = vcmp.gt.f32.partialorder %v1659, 0.0
    %vm2093 = vcmp.gt.f32.partialorder %v1664, 0.0
    %vm2094 = vcmp.gt.f32.partialorder %v1740, 0.0
    %vm2095 = vcmp.gt.f32.partialorder %v1745, 0.0
    %vm2096 = vcmp.gt.f32.partialorder %v1821, 0.0
    %vm2097 = vcmp.gt.f32.partialorder %v1826, 0.0
    %vm2098 = vcmp.gt.f32.partialorder %v1902, 0.0
    %vm2099 = vcmp.gt.f32.partialorder %v1907, 0.0
    %vm2100 = vcmp.gt.f32.partialorder %v1983, 0.0
    %vm2101 = vcmp.gt.f32.partialorder %v1988, 0.0
    %vm2102 = vcmp.gt.f32.partialorder %v2064, 0.0
    %vm2103 = vcmp.gt.f32.partialorder %v2069, 0.0
    %v2104 = vmul.f32 %v849, 0.01
    %v2105 = vmul.f32 %v854, 0.01
    %v2106 = vmul.f32 %v930, 0.01
    %v2107 = vmul.f32 %v935, 0.01
    %v2108 = vmul.f32 %v1011, 0.01
    %v2109 = vmul.f32 %v1016, 0.01
    %v2110 = vmul.f32 %v1092, 0.01
    %v2111 = vmul.f32 %v1097, 0.01
    %v2112 = vmul.f32 %v1173, 0.01
    %v2113 = vmul.f32 %v1178, 0.01
    %v2114 = vmul.f32 %v1254, 0.01
    %v2115 = vmul.f32 %v1259, 0.01
    %v2116 = vmul.f32 %v1335, 0.01
    %v2117 = vmul.f32 %v1340, 0.01
    %v2118 = vmul.f32 %v1416, 0.01
    %v2119 = vmul.f32 %v1421, 0.01
    %v2120 = vmul.f32 %v1497, 0.01
    %v2121 = vmul.f32 %v1502, 0.01
    %v2122 = vmul.f32 %v1578, 0.01
    %v2123 = vmul.f32 %v1583, 0.01
    %v2124 = vmul.f32 %v1659, 0.01
    %v2125 = vmul.f32 %v1664, 0.01
    %v2126 = vmul.f32 %v1740, 0.01
    %v2127 = vmul.f32 %v1745, 0.01
    %v2128 = vmul.f32 %v1821, 0.01
    %v2129 = vmul.f32 %v1826, 0.01
    %v2130 = vmul.f32 %v1902, 0.01
    %v2131 = vmul.f32 %v1907, 0.01
    %v2132 = vmul.f32 %v1983, 0.01
    %v2133 = vmul.f32 %v1988, 0.01
    %v2134 = vmul.f32 %v2064, 0.01
    %v2135 = vmul.f32 %v2069, 0.01
    %v2136 = vsel %vm2072, %v849, %v2104
    %v2137 = vsel %vm2073, %v854, %v2105
    %v2138 = vsel %vm2074, %v930, %v2106
    %v2139 = vsel %vm2075, %v935, %v2107
    %v2140 = vsel %vm2076, %v1011, %v2108
    %v2141 = vsel %vm2077, %v1016, %v2109
    %v2142 = vsel %vm2078, %v1092, %v2110
    %v2143 = vsel %vm2079, %v1097, %v2111
    %v2144 = vsel %vm2080, %v1173, %v2112
    %v2145 = vsel %vm2081, %v1178, %v2113
    %v2146 = vsel %vm2082, %v1254, %v2114
    %v2147 = vsel %vm2083, %v1259, %v2115
    %v2148 = vsel %vm2084, %v1335, %v2116
    %v2149 = vsel %vm2085, %v1340, %v2117
    %v2150 = vsel %vm2086, %v1416, %v2118
    %v2151 = vsel %vm2087, %v1421, %v2119
    %v2152 = vsel %vm2088, %v1497, %v2120
    %v2153 = vsel %vm2089, %v1502, %v2121
    %v2154 = vsel %vm2090, %v1578, %v2122
    %v2155 = vsel %vm2091, %v1583, %v2123
    %v2156 = vsel %vm2092, %v1659, %v2124
    %v2157 = vsel %vm2093, %v1664, %v2125
    %v2158 = vsel %vm2094, %v1740, %v2126
    %v2159 = vsel %vm2095, %v1745, %v2127
    %v2160 = vsel %vm2096, %v1821, %v2128
    %v2161 = vsel %vm2097, %v1826, %v2129
    %v2162 = vsel %vm2098, %v1902, %v2130
    %v2163 = vsel %vm2099, %v1907, %v2131
    %v2164 = vsel %vm2100, %v1983, %v2132
    %v2165 = vsel %vm2101, %v1988, %v2133
    %v2166 = vsel %vm2102, %v2064, %v2134
    %v2167 = vsel %vm2103, %v2069, %v2135
    %v2168 = vadd.f32 %v2136, %v110
    %v2169 = vadd.f32 %v2137, %v111
    %v2170 = vadd.f32 %v2138, %v112
    %v2171 = vadd.f32 %v2139, %v113
    %v2172 = vadd.f32 %v2140, %v114
    %v2173 = vadd.f32 %v2141, %v115
    %v2174 = vadd.f32 %v2142, %v116
    %v2175 = vadd.f32 %v2143, %v117
    %v2176 = vadd.f32 %v2144, %v118
    %v2177 = vadd.f32 %v2145, %v119
    %v2178 = vadd.f32 %v2146, %v120
    %v2179 = vadd.f32 %v2147, %v121
    %v2180 = vadd.f32 %v2148, %v122
    %v2181 = vadd.f32 %v2149, %v123
    %v2182 = vadd.f32 %v2150, %v124
    %v2183 = vadd.f32 %v2151, %v125
    %v2184 = vadd.f32 %v2152, %v126
    %v2185 = vadd.f32 %v2153, %v127
    %v2186 = vadd.f32 %v2154, %v128
    %v2187 = vadd.f32 %v2155, %v129
    %v2188 = vadd.f32 %v2156, %v130
    %v2189 = vadd.f32 %v2157, %v131
    %v2190 = vadd.f32 %v2158, %v132
    %v2191 = vadd.f32 %v2159, %v133
    %v2192 = vadd.f32 %v2160, %v134
    %v2193 = vadd.f32 %v2161, %v135
    %v2194 = vadd.f32 %v2162, %v136
    %v2195 = vadd.f32 %v2163, %v137
    %v2196 = vadd.f32 %v2164, %v138
    %v2197 = vadd.f32 %v2165, %v139
    %v2198 = vadd.f32 %v2166, %v140
    %v2199 = vadd.f32 %v2167, %v141
    %2200 = vadd.xlane.f32.xlu0 %v2168
    %v2201 = vpop.xlane.xlu0 %2200
    %2202 = vadd.xlane.f32.xlu0 %v2169
    %v2203 = vpop.xlane.xlu0 %2202
    %2204 = vadd.xlane.f32.xlu0 %v2170
    %v2205 = vpop.xlane.xlu0 %2204
    %2206 = vadd.xlane.f32.xlu0 %v2171
    %v2207 = vpop.xlane.xlu0 %2206
    %2208 = vadd.xlane.f32.xlu0 %v2172
    %v2209 = vpop.xlane.xlu0 %2208
    %2210 = vadd.xlane.f32.xlu0 %v2173
    %v2211 = vpop.xlane.xlu0 %2210
    %2212 = vadd.xlane.f32.xlu0 %v2174
    %v2213 = vpop.xlane.xlu0 %2212
    %2214 = vadd.xlane.f32.xlu0 %v2175
    %v2215 = vpop.xlane.xlu0 %2214
    %2216 = vadd.xlane.f32.xlu0 %v2176
    %v2217 = vpop.xlane.xlu0 %2216
    %2218 = vadd.xlane.f32.xlu0 %v2177
    %v2219 = vpop.xlane.xlu0 %2218
    %2220 = vadd.xlane.f32.xlu0 %v2178
    %v2221 = vpop.xlane.xlu0 %2220
    %2222 = vadd.xlane.f32.xlu0 %v2179
    %v2223 = vpop.xlane.xlu0 %2222
    %2224 = vadd.xlane.f32.xlu0 %v2180
    %v2225 = vpop.xlane.xlu0 %2224
    %2226 = vadd.xlane.f32.xlu0 %v2181
    %v2227 = vpop.xlane.xlu0 %2226
    %2228 = vadd.xlane.f32.xlu0 %v2182
    %v2229 = vpop.xlane.xlu0 %2228
    %2230 = vadd.xlane.f32.xlu0 %v2183
    %v2231 = vpop.xlane.xlu0 %2230
    %2232 = vadd.xlane.f32.xlu0 %v2184
    %v2233 = vpop.xlane.xlu0 %2232
    %2234 = vadd.xlane.f32.xlu0 %v2185
    %v2235 = vpop.xlane.xlu0 %2234
    %2236 = vadd.xlane.f32.xlu0 %v2186
    %v2237 = vpop.xlane.xlu0 %2236
    %2238 = vadd.xlane.f32.xlu0 %v2187
    %v2239 = vpop.xlane.xlu0 %2238
    %2240 = vadd.xlane.f32.xlu0 %v2188
    %v2241 = vpop.xlane.xlu0 %2240
    %2242 = vadd.xlane.f32.xlu0 %v2189
    %v2243 = vpop.xlane.xlu0 %2242
    %2244 = vadd.xlane.f32.xlu0 %v2190
    %v2245 = vpop.xlane.xlu0 %2244
    %2246 = vadd.xlane.f32.xlu0 %v2191
    %v2247 = vpop.xlane.xlu0 %2246
    %2248 = vadd.xlane.f32.xlu0 %v2192
    %v2249 = vpop.xlane.xlu0 %2248
    %2250 = vadd.xlane.f32.xlu0 %v2193
    %v2251 = vpop.xlane.xlu0 %2250
    %2252 = vadd.xlane.f32.xlu0 %v2194
    %v2253 = vpop.xlane.xlu0 %2252
    %2254 = vadd.xlane.f32.xlu0 %v2195
    %v2255 = vpop.xlane.xlu0 %2254
    %2256 = vadd.xlane.f32.xlu0 %v2196
    %v2257 = vpop.xlane.xlu0 %2256
    %2258 = vadd.xlane.f32.xlu0 %v2197
    %v2259 = vpop.xlane.xlu0 %2258
    %2260 = vadd.xlane.f32.xlu0 %v2198
    %v2261 = vpop.xlane.xlu0 %2260
    %2262 = vadd.xlane.f32.xlu0 %v2199
    %v2263 = vpop.xlane.xlu0 %2262
    %v2264 = vmul.f32 %v2201, %v238
    %v2265 = vmul.f32 %v2203, %v238
    %v2266 = vmul.f32 %v2205, %v238
    %v2267 = vmul.f32 %v2207, %v238
    %v2268 = vmul.f32 %v2209, %v238
    %v2269 = vmul.f32 %v2211, %v238
    %v2270 = vmul.f32 %v2213, %v238
    %v2271 = vmul.f32 %v2215, %v238
    %v2272 = vmul.f32 %v2217, %v238
    %v2273 = vmul.f32 %v2219, %v238
    %v2274 = vmul.f32 %v2221, %v238
    %v2275 = vmul.f32 %v2223, %v238
    %v2276 = vmul.f32 %v2225, %v238
    %v2277 = vmul.f32 %v2227, %v238
    %v2278 = vmul.f32 %v2229, %v238
    %v2279 = vmul.f32 %v2231, %v238
    %v2280 = vmul.f32 %v2233, %v238
    %v2281 = vmul.f32 %v2235, %v238
    %v2282 = vmul.f32 %v2237, %v238
    %v2283 = vmul.f32 %v2239, %v238
    %v2284 = vmul.f32 %v2241, %v238
    %v2285 = vmul.f32 %v2243, %v238
    %v2286 = vmul.f32 %v2245, %v238
    %v2287 = vmul.f32 %v2247, %v238
    %v2288 = vmul.f32 %v2249, %v238
    %v2289 = vmul.f32 %v2251, %v238
    %v2290 = vmul.f32 %v2253, %v238
    %v2291 = vmul.f32 %v2255, %v238
    %v2292 = vmul.f32 %v2257, %v238
    %v2293 = vmul.f32 %v2259, %v238
    %v2294 = vmul.f32 %v2261, %v238
    %v2295 = vmul.f32 %v2263, %v238
    %v2296 = vsub.f32 %v2168, %v2264
    %v2297 = vsub.f32 %v2169, %v2265
    %v2298 = vsub.f32 %v2170, %v2266
    %v2299 = vsub.f32 %v2171, %v2267
    %v2300 = vsub.f32 %v2172, %v2268
    %v2301 = vsub.f32 %v2173, %v2269
    %v2302 = vsub.f32 %v2174, %v2270
    %v2303 = vsub.f32 %v2175, %v2271
    %v2304 = vsub.f32 %v2176, %v2272
    %v2305 = vsub.f32 %v2177, %v2273
    %v2306 = vsub.f32 %v2178, %v2274
    %v2307 = vsub.f32 %v2179, %v2275
    %v2308 = vsub.f32 %v2180, %v2276
    %v2309 = vsub.f32 %v2181, %v2277
    %v2310 = vsub.f32 %v2182, %v2278
    %v2311 = vsub.f32 %v2183, %v2279
    %v2312 = vsub.f32 %v2184, %v2280
    %v2313 = vsub.f32 %v2185, %v2281
    %v2314 = vsub.f32 %v2186, %v2282
    %v2315 = vsub.f32 %v2187, %v2283
    %v2316 = vsub.f32 %v2188, %v2284
    %v2317 = vsub.f32 %v2189, %v2285
    %v2318 = vsub.f32 %v2190, %v2286
    %v2319 = vsub.f32 %v2191, %v2287
    %v2320 = vsub.f32 %v2192, %v2288
    %v2321 = vsub.f32 %v2193, %v2289
    %v2322 = vsub.f32 %v2194, %v2290
    %v2323 = vsub.f32 %v2195, %v2291
    %v2324 = vsub.f32 %v2196, %v2292
    %v2325 = vsub.f32 %v2197, %v2293
    %v2326 = vsub.f32 %v2198, %v2294
    %v2327 = vsub.f32 %v2199, %v2295
    %v2328 = vmul.f32 %v2296, %v2296
    %v2329 = vmul.f32 %v2297, %v2297
    %v2330 = vmul.f32 %v2298, %v2298
    %v2331 = vmul.f32 %v2299, %v2299
    %v2332 = vmul.f32 %v2300, %v2300
    %v2333 = vmul.f32 %v2301, %v2301
    %v2334 = vmul.f32 %v2302, %v2302
    %v2335 = vmul.f32 %v2303, %v2303
    %v2336 = vmul.f32 %v2304, %v2304
    %v2337 = vmul.f32 %v2305, %v2305
    %v2338 = vmul.f32 %v2306, %v2306
    %v2339 = vmul.f32 %v2307, %v2307
    %v2340 = vmul.f32 %v2308, %v2308
    %v2341 = vmul.f32 %v2309, %v2309
    %v2342 = vmul.f32 %v2310, %v2310
    %v2343 = vmul.f32 %v2311, %v2311
    %v2344 = vmul.f32 %v2312, %v2312
    %v2345 = vmul.f32 %v2313, %v2313
    %v2346 = vmul.f32 %v2314, %v2314
    %v2347 = vmul.f32 %v2315, %v2315
    %v2348 = vmul.f32 %v2316, %v2316
    %v2349 = vmul.f32 %v2317, %v2317
    %v2350 = vmul.f32 %v2318, %v2318
    %v2351 = vmul.f32 %v2319, %v2319
    %v2352 = vmul.f32 %v2320, %v2320
    %v2353 = vmul.f32 %v2321, %v2321
    %v2354 = vmul.f32 %v2322, %v2322
    %v2355 = vmul.f32 %v2323, %v2323
    %v2356 = vmul.f32 %v2324, %v2324
    %v2357 = vmul.f32 %v2325, %v2325
    %v2358 = vmul.f32 %v2326, %v2326
    %v2359 = vmul.f32 %v2327, %v2327
    %2360 = vadd.xlane.f32.xlu0 %v2328
    %v2361 = vpop.xlane.xlu0 %2360
    %2362 = vadd.xlane.f32.xlu0 %v2329
    %v2363 = vpop.xlane.xlu0 %2362
    %2364 = vadd.xlane.f32.xlu0 %v2330
    %v2365 = vpop.xlane.xlu0 %2364
    %2366 = vadd.xlane.f32.xlu0 %v2331
    %v2367 = vpop.xlane.xlu0 %2366
    %2368 = vadd.xlane.f32.xlu0 %v2332
    %v2369 = vpop.xlane.xlu0 %2368
    %2370 = vadd.xlane.f32.xlu0 %v2333
    %v2371 = vpop.xlane.xlu0 %2370
    %2372 = vadd.xlane.f32.xlu0 %v2334
    %v2373 = vpop.xlane.xlu0 %2372
    %2374 = vadd.xlane.f32.xlu0 %v2335
    %v2375 = vpop.xlane.xlu0 %2374
    %2376 = vadd.xlane.f32.xlu0 %v2336
    %v2377 = vpop.xlane.xlu0 %2376
    %2378 = vadd.xlane.f32.xlu0 %v2337
    %v2379 = vpop.xlane.xlu0 %2378
    %2380 = vadd.xlane.f32.xlu0 %v2338
    %v2381 = vpop.xlane.xlu0 %2380
    %2382 = vadd.xlane.f32.xlu0 %v2339
    %v2383 = vpop.xlane.xlu0 %2382
    %2384 = vadd.xlane.f32.xlu0 %v2340
    %v2385 = vpop.xlane.xlu0 %2384
    %2386 = vadd.xlane.f32.xlu0 %v2341
    %v2387 = vpop.xlane.xlu0 %2386
    %2388 = vadd.xlane.f32.xlu0 %v2342
    %v2389 = vpop.xlane.xlu0 %2388
    %2390 = vadd.xlane.f32.xlu0 %v2343
    %v2391 = vpop.xlane.xlu0 %2390
    %2392 = vadd.xlane.f32.xlu0 %v2344
    %v2393 = vpop.xlane.xlu0 %2392
    %2394 = vadd.xlane.f32.xlu0 %v2345
    %v2395 = vpop.xlane.xlu0 %2394
    %2396 = vadd.xlane.f32.xlu0 %v2346
    %v2397 = vpop.xlane.xlu0 %2396
    %2398 = vadd.xlane.f32.xlu0 %v2347
    %v2399 = vpop.xlane.xlu0 %2398
    %2400 = vadd.xlane.f32.xlu0 %v2348
    %v2401 = vpop.xlane.xlu0 %2400
    %2402 = vadd.xlane.f32.xlu0 %v2349
    %v2403 = vpop.xlane.xlu0 %2402
    %2404 = vadd.xlane.f32.xlu0 %v2350
    %v2405 = vpop.xlane.xlu0 %2404
    %2406 = vadd.xlane.f32.xlu0 %v2351
    %v2407 = vpop.xlane.xlu0 %2406
    %2408 = vadd.xlane.f32.xlu0 %v2352
    %v2409 = vpop.xlane.xlu0 %2408
    %2410 = vadd.xlane.f32.xlu0 %v2353
    %v2411 = vpop.xlane.xlu0 %2410
    %2412 = vadd.xlane.f32.xlu0 %v2354
    %v2413 = vpop.xlane.xlu0 %2412
    %2414 = vadd.xlane.f32.xlu0 %v2355
    %v2415 = vpop.xlane.xlu0 %2414
    %2416 = vadd.xlane.f32.xlu0 %v2356
    %v2417 = vpop.xlane.xlu0 %2416
    %2418 = vadd.xlane.f32.xlu0 %v2357
    %v2419 = vpop.xlane.xlu0 %2418
    %2420 = vadd.xlane.f32.xlu0 %v2358
    %v2421 = vpop.xlane.xlu0 %2420
    %2422 = vadd.xlane.f32.xlu0 %v2359
    %v2423 = vpop.xlane.xlu0 %2422
    %v2424 = vmul.f32 %v2361, %v238
    %v2425 = vmul.f32 %v2363, %v238
    %v2426 = vmul.f32 %v2365, %v238
    %v2427 = vmul.f32 %v2367, %v238
    %v2428 = vmul.f32 %v2369, %v238
    %v2429 = vmul.f32 %v2371, %v238
    %v2430 = vmul.f32 %v2373, %v238
    %v2431 = vmul.f32 %v2375, %v238
    %v2432 = vmul.f32 %v2377, %v238
    %v2433 = vmul.f32 %v2379, %v238
    %v2434 = vmul.f32 %v2381, %v238
    %v2435 = vmul.f32 %v2383, %v238
    %v2436 = vmul.f32 %v2385, %v238
    %v2437 = vmul.f32 %v2387, %v238
    %v2438 = vmul.f32 %v2389, %v238
    %v2439 = vmul.f32 %v2391, %v238
    %v2440 = vmul.f32 %v2393, %v238
    %v2441 = vmul.f32 %v2395, %v238
    %v2442 = vmul.f32 %v2397, %v238
    %v2443 = vmul.f32 %v2399, %v238
    %v2444 = vmul.f32 %v2401, %v238
    %v2445 = vmul.f32 %v2403, %v238
    %v2446 = vmul.f32 %v2405, %v238
    %v2447 = vmul.f32 %v2407, %v238
    %v2448 = vmul.f32 %v2409, %v238
    %v2449 = vmul.f32 %v2411, %v238
    %v2450 = vmul.f32 %v2413, %v238
    %v2451 = vmul.f32 %v2415, %v238
    %v2452 = vmul.f32 %v2417, %v238
    %v2453 = vmul.f32 %v2419, %v238
    %v2454 = vmul.f32 %v2421, %v238
    %v2455 = vmul.f32 %v2423, %v238
    %v2456 = vadd.f32 %v2424, 1e-05
    %v2457 = vadd.f32 %v2425, 1e-05
    %v2458 = vadd.f32 %v2426, 1e-05
    %v2459 = vadd.f32 %v2427, 1e-05
    %v2460 = vadd.f32 %v2428, 1e-05
    %v2461 = vadd.f32 %v2429, 1e-05
    %v2462 = vadd.f32 %v2430, 1e-05
    %v2463 = vadd.f32 %v2431, 1e-05
    %v2464 = vadd.f32 %v2432, 1e-05
    %v2465 = vadd.f32 %v2433, 1e-05
    %v2466 = vadd.f32 %v2434, 1e-05
    %v2467 = vadd.f32 %v2435, 1e-05
    %v2468 = vadd.f32 %v2436, 1e-05
    %v2469 = vadd.f32 %v2437, 1e-05
    %v2470 = vadd.f32 %v2438, 1e-05
    %v2471 = vadd.f32 %v2439, 1e-05
    %v2472 = vadd.f32 %v2440, 1e-05
    %v2473 = vadd.f32 %v2441, 1e-05
    %v2474 = vadd.f32 %v2442, 1e-05
    %v2475 = vadd.f32 %v2443, 1e-05
    %v2476 = vadd.f32 %v2444, 1e-05
    %v2477 = vadd.f32 %v2445, 1e-05
    %v2478 = vadd.f32 %v2446, 1e-05
    %v2479 = vadd.f32 %v2447, 1e-05
    %v2480 = vadd.f32 %v2448, 1e-05
    %v2481 = vadd.f32 %v2449, 1e-05
    %v2482 = vadd.f32 %v2450, 1e-05
    %v2483 = vadd.f32 %v2451, 1e-05
    %v2484 = vadd.f32 %v2452, 1e-05
    %v2485 = vadd.f32 %v2453, 1e-05
    %v2486 = vadd.f32 %v2454, 1e-05
    %v2487 = vadd.f32 %v2455, 1e-05
    %v2488 = vrsqrt.pop %v2456
    %v2489 = vrsqrt.pop %v2457
    %v2490 = vrsqrt.pop %v2458
    %v2491 = vrsqrt.pop %v2459
    %v2492 = vrsqrt.pop %v2460
    %v2493 = vrsqrt.pop %v2461
    %v2494 = vrsqrt.pop %v2462
    %v2495 = vrsqrt.pop %v2463
    %v2496 = vrsqrt.pop %v2464
    %v2497 = vrsqrt.pop %v2465
    %v2498 = vrsqrt.pop %v2466
    %v2499 = vrsqrt.pop %v2467
    %v2500 = vrsqrt.pop %v2468
    %v2501 = vrsqrt.pop %v2469
    %v2502 = vrsqrt.pop %v2470
    %v2503 = vrsqrt.pop %v2471
    %v2504 = vrsqrt.pop %v2472
    %v2505 = vrsqrt.pop %v2473
    %v2506 = vrsqrt.pop %v2474
    %v2507 = vrsqrt.pop %v2475
    %v2508 = vrsqrt.pop %v2476
    %v2509 = vrsqrt.pop %v2477
    %v2510 = vrsqrt.pop %v2478
    %v2511 = vrsqrt.pop %v2479
    %v2512 = vrsqrt.pop %v2480
    %v2513 = vrsqrt.pop %v2481
    %v2514 = vrsqrt.pop %v2482
    %v2515 = vrsqrt.pop %v2483
    %v2516 = vrsqrt.pop %v2484
    %v2517 = vrsqrt.pop %v2485
    %v2518 = vrsqrt.pop %v2486
    %v2519 = vrsqrt.pop %v2487
    %v2520 = vmul.f32 %v2296, %v2488
    %v2521 = vmul.f32 %v2297, %v2489
    %v2522 = vmul.f32 %v2298, %v2490
    %v2523 = vmul.f32 %v2299, %v2491
    %v2524 = vmul.f32 %v2300, %v2492
    %v2525 = vmul.f32 %v2301, %v2493
    %v2526 = vmul.f32 %v2302, %v2494
    %v2527 = vmul.f32 %v2303, %v2495
    %v2528 = vmul.f32 %v2304, %v2496
    %v2529 = vmul.f32 %v2305, %v2497
    %v2530 = vmul.f32 %v2306, %v2498
    %v2531 = vmul.f32 %v2307, %v2499
    %v2532 = vmul.f32 %v2308, %v2500
    %v2533 = vmul.f32 %v2309, %v2501
    %v2534 = vmul.f32 %v2310, %v2502
    %v2535 = vmul.f32 %v2311, %v2503
    %v2536 = vmul.f32 %v2312, %v2504
    %v2537 = vmul.f32 %v2313, %v2505
    %v2538 = vmul.f32 %v2314, %v2506
    %v2539 = vmul.f32 %v2315, %v2507
    %v2540 = vmul.f32 %v2316, %v2508
    %v2541 = vmul.f32 %v2317, %v2509
    %v2542 = vmul.f32 %v2318, %v2510
    %v2543 = vmul.f32 %v2319, %v2511
    %v2544 = vmul.f32 %v2320, %v2512
    %v2545 = vmul.f32 %v2321, %v2513
    %v2546 = vmul.f32 %v2322, %v2514
    %v2547 = vmul.f32 %v2323, %v2515
    %v2548 = vmul.f32 %v2324, %v2516
    %v2549 = vmul.f32 %v2325, %v2517
    %v2550 = vmul.f32 %v2326, %v2518
    %v2551 = vmul.f32 %v2327, %v2519
    %s2552 = scalar_lea.vmem [#allocation7], 128
    %v2553 = vld [vmem:[%s2552] sm:$0xff]
    %v2554 = vld [vmem:[%s2552 + $0x8] sm:$0xff]
    %v2555 = vld [vmem:[%s2552 + $0x10] sm:$0xff]
    %v2556 = vld [vmem:[%s2552 + $0x18] sm:$0xff]
    %v2557 = vld [vmem:[%s2552 + $0x20] sm:$0xff]
    %v2558 = vld [vmem:[%s2552 + $0x28] sm:$0xff]
    %v2559 = vld [vmem:[%s2552 + $0x30] sm:$0xff]
    %v2560 = vld [vmem:[%s2552 + $0x38] sm:$0xff]
    %v2561 = vld [vmem:[%s2552 + $0x40] sm:$0xff]
    %v2562 = vld [vmem:[%s2552 + $0x48] sm:$0xff]
    %v2563 = vld [vmem:[%s2552 + $0x50] sm:$0xff]
    %v2564 = vld [vmem:[%s2552 + $0x58] sm:$0xff]
    %v2565 = vld [vmem:[%s2552 + $0x60] sm:$0xff]
    %v2566 = vld [vmem:[%s2552 + $0x68] sm:$0xff]
    %v2567 = vld [vmem:[%s2552 + $0x70] sm:$0xff]
    %v2568 = vld [vmem:[%s2552 + $0x78] sm:$0xff]
    %s2569 = scalar_lea.vmem %s3, 1
    %v2570 = vld [vmem:[%s2569] sm:$0x1]
    %v2572 = vlaneseq
    %v2573 = vshrl.u32 %v2572, 7
    %v2574 = vsub.s32 0, %v2573
    %v2575 = vrot.slane %v2570, %v2574
    %2577 = vmatprep.subr.mxu0 0.0
    %2578 = vmatpush1.msra.mxu0 %v2553
    %2579 = vmatprep.subr.mxu0 0.0
    %2580 = vmatpush1.msra.mxu0 %v2554
    %2581 = vmatprep.subr.mxu0 0.0
    %2582 = vmatpush1.msra.mxu0 %v2555
    %2583 = vmatprep.subr.mxu0 0.0
    %2584 = vmatpush1.msra.mxu0 %v2556
    %2585 = vmatprep.subr.mxu0 0.0
    %2586 = vmatpush1.msra.mxu0 %v2557
    %2587 = vmatprep.subr.mxu0 0.0
    %2588 = vmatpush1.msra.mxu0 %v2558
    %2589 = vmatprep.subr.mxu0 0.0
    %2590 = vmatpush1.msra.mxu0 %v2559
    %2591 = vmatprep.subr.mxu0 0.0
    %2592 = vmatpush1.msra.mxu0 %v2560
    %2593 = vmatprep.subr.mxu0 0.0
    %2594 = vmatpush1.msra.mxu0 %v2561
    %2595 = vmatprep.subr.mxu0 0.0
    %2596 = vmatpush1.msra.mxu0 %v2562
    %2597 = vmatprep.subr.mxu0 0.0
    %2598 = vmatpush1.msra.mxu0 %v2563
    %2599 = vmatprep.subr.mxu0 0.0
    %2600 = vmatpush1.msra.mxu0 %v2564
    %2601 = vmatprep.subr.mxu0 0.0
    %2602 = vmatpush1.msra.mxu0 %v2565
    %2603 = vmatprep.subr.mxu0 0.0
    %2604 = vmatpush1.msra.mxu0 %v2566
    %2605 = vmatprep.subr.mxu0 0.0
    %2606 = vmatpush1.msra.mxu0 %v2567
    %2607 = vmatprep.subr.mxu0 0.0
    %2608 = vmatpush1.msra.mxu0 %v2568
    %2609 = vmatprep.subr.mxu0 0.0
    %2610 = vmatpush1.msra.mxu0 0.0
    %2611 = vmatprep.subr.mxu0 0.0
    %2612 = vmatpush1.msra.mxu0 0.0
    %2613 = vmatprep.subr.mxu0 0.0
    %2614 = vmatpush1.msra.mxu0 0.0
    %2615 = vmatprep.subr.mxu0 0.0
    %2616 = vmatpush1.msra.mxu0 0.0
    %2617 = vmatprep.subr.mxu0 0.0
    %2618 = vmatpush1.msra.mxu0 0.0
    %2619 = vmatprep.subr.mxu0 0.0
    %2620 = vmatpush1.msra.mxu0 0.0
    %2621 = vmatprep.subr.mxu0 0.0
    %2622 = vmatpush1.msra.mxu0 0.0
    %2623 = vmatprep.subr.mxu0 0.0
    %2624 = vmatpush1.msra.mxu0 0.0
    %2625 = vmatprep.subr.mxu0 0.0
    %2626 = vmatpush1.msra.mxu0 0.0
    %2627 = vmatprep.subr.mxu0 0.0
    %2628 = vmatpush1.msra.mxu0 0.0
    %2629 = vmatprep.subr.mxu0 0.0
    %2630 = vmatpush1.msra.mxu0 0.0
    %2631 = vmatprep.subr.mxu0 0.0
    %2632 = vmatpush1.msra.mxu0 0.0
    %2633 = vmatprep.subr.mxu0 0.0
    %2634 = vmatpush1.msra.mxu0 0.0
    %2635 = vmatprep.subr.mxu0 0.0
    %2636 = vmatpush1.msra.mxu0 0.0
    %2637 = vmatprep.subr.mxu0 0.0
    %2638 = vmatpush1.msra.mxu0 0.0
    %2639 = vmatprep.subr.mxu0 0.0
    %2640 = vmatpush1.msra.mxu0 0.0
    %2641 = vmatprep.mubr.f32.mxu0 0.0
    %2642 = vmatmul.mubr.f32.gmra.mrb[0].mxu0 %v2520
    %v2643 = vpop.f32.mrb[0].mxu0
    %v2644 = vadd.f32 %v2575, %v2643
    %v2645 = vpop.f32.mrb[0].mxu0
    %2646 = vmatprep.mubr.f32.mxu0 0.0
    %2647 = vmatmul.mubr.f32.gmra.mrb[0].mxu0 %v2521
    %v2648 = vpop.f32.mrb[0].mxu0
    %v2649 = vadd.f32 %v2575, %v2648
    %v2650 = vpop.f32.mrb[0].mxu0
    %2651 = vmatprep.mubr.f32.mxu0 0.0
    %2652 = vmatmul.mubr.f32.gmra.mrb[0].mxu0 %v2522
    %v2653 = vpop.f32.mrb[0].mxu0
    %v2654 = vadd.f32 %v2575, %v2653
    %v2655 = vpop.f32.mrb[0].mxu0
    %2656 = vmatprep.mubr.f32.mxu0 0.0
    %2657 = vmatmul.mubr.f32.gmra.mrb[0].mxu0 %v2523
    %v2658 = vpop.f32.mrb[0].mxu0
    %v2659 = vadd.f32 %v2575, %v2658
    %v2660 = vpop.f32.mrb[0].mxu0
    %2661 = vmatprep.mubr.f32.mxu0 0.0
    %2662 = vmatmul.mubr.f32.gmra.mrb[0].mxu0 %v2524
    %v2663 = vpop.f32.mrb[0].mxu0
    %v2664 = vadd.f32 %v2575, %v2663
    %v2665 = vpop.f32.mrb[0].mxu0
    %2666 = vmatprep.mubr.f32.mxu0 0.0
    %2667 = vmatmul.mubr.f32.gmra.mrb[0].mxu0 %v2525
    %v2668 = vpop.f32.mrb[0].mxu0
    %v2669 = vadd.f32 %v2575, %v2668
    %v2670 = vpop.f32.mrb[0].mxu0
    %2671 = vmatprep.mubr.f32.mxu0 0.0
    %2672 = vmatmul.mubr.f32.gmra.mrb[0].mxu0 %v2526
    %v2673 = vpop.f32.mrb[0].mxu0
    %v2674 = vadd.f32 %v2575, %v2673
    %v2675 = vpop.f32.mrb[0].mxu0
    %2676 = vmatprep.mubr.f32.mxu0 0.0
    %2677 = vmatmul.mubr.f32.gmra.mrb[0].mxu0 %v2527
    %v2678 = vpop.f32.mrb[0].mxu0
    %v2679 = vadd.f32 %v2575, %v2678
    %v2680 = vpop.f32.mrb[0].mxu0
    %2681 = vmatprep.mubr.f32.mxu0 0.0
    %2682 = vmatmul.mubr.f32.gmra.mrb[0].mxu0 %v2528
    %v2683 = vpop.f32.mrb[0].mxu0
    %v2684 = vadd.f32 %v2575, %v2683
    %v2685 = vpop.f32.mrb[0].mxu0
    %2686 = vmatprep.mubr.f32.mxu0 0.0
    %2687 = vmatmul.mubr.f32.gmra.mrb[0].mxu0 %v2529
    %v2688 = vpop.f32.mrb[0].mxu0
    %v2689 = vadd.f32 %v2575, %v2688
    %v2690 = vpop.f32.mrb[0].mxu0
    %2691 = vmatprep.mubr.f32.mxu0 0.0
    %2692 = vmatmul.mubr.f32.gmra.mrb[0].mxu0 %v2530
    %v2693 = vpop.f32.mrb[0].mxu0
    %v2694 = vadd.f32 %v2575, %v2693
    %v2695 = vpop.f32.mrb[0].mxu0
    %2696 = vmatprep.mubr.f32.mxu0 0.0
    %2697 = vmatmul.mubr.f32.gmra.mrb[0].mxu0 %v2531
    %v2698 = vpop.f32.mrb[0].mxu0
    %v2699 = vadd.f32 %v2575, %v2698
    %v2700 = vpop.f32.mrb[0].mxu0
    %2701 = vmatprep.mubr.f32.mxu0 0.0
    %2702 = vmatmul.mubr.f32.gmra.mrb[0].mxu0 %v2532
    %v2703 = vpop.f32.mrb[0].mxu0
    %v2704 = vadd.f32 %v2575, %v2703
    %v2705 = vpop.f32.mrb[0].mxu0
    %2706 = vmatprep.mubr.f32.mxu0 0.0
    %2707 = vmatmul.mubr.f32.gmra.mrb[0].mxu0 %v2533
    %v2708 = vpop.f32.mrb[0].mxu0
    %v2709 = vadd.f32 %v2575, %v2708
    %v2710 = vpop.f32.mrb[0].mxu0
    %2711 = vmatprep.mubr.f32.mxu0 0.0
    %2712 = vmatmul.mubr.f32.gmra.mrb[0].mxu0 %v2534
    %v2713 = vpop.f32.mrb[0].mxu0
    %v2714 = vadd.f32 %v2575, %v2713
    %v2715 = vpop.f32.mrb[0].mxu0
    %2716 = vmatprep.mubr.f32.mxu0 0.0
    %2717 = vmatmul.mubr.f32.gmra.mrb[0].mxu0 %v2535
    %v2718 = vpop.f32.mrb[0].mxu0
    %v2719 = vadd.f32 %v2575, %v2718
    %v2720 = vpop.f32.mrb[0].mxu0
    %2721 = vmatprep.mubr.f32.mxu0 0.0
    %2722 = vmatmul.mubr.f32.gmra.mrb[0].mxu0 %v2536
    %v2723 = vpop.f32.mrb[0].mxu0
    %v2724 = vadd.f32 %v2575, %v2723
    %v2725 = vpop.f32.mrb[0].mxu0
    %2726 = vmatprep.mubr.f32.mxu0 0.0
    %2727 = vmatmul.mubr.f32.gmra.mrb[0].mxu0 %v2537
    %v2728 = vpop.f32.mrb[0].mxu0
    %v2729 = vadd.f32 %v2575, %v2728
    %v2730 = vpop.f32.mrb[0].mxu0
    %2731 = vmatprep.mubr.f32.mxu0 0.0
    %2732 = vmatmul.mubr.f32.gmra.mrb[0].mxu0 %v2538
    %v2733 = vpop.f32.mrb[0].mxu0
    %v2734 = vadd.f32 %v2575, %v2733
    %v2735 = vpop.f32.mrb[0].mxu0
    %2736 = vmatprep.mubr.f32.mxu0 0.0
    %2737 = vmatmul.mubr.f32.gmra.mrb[0].mxu0 %v2539
    %v2738 = vpop.f32.mrb[0].mxu0
    %v2739 = vadd.f32 %v2575, %v2738
    %v2740 = vpop.f32.mrb[0].mxu0
    %2741 = vmatprep.mubr.f32.mxu0 0.0
    %2742 = vmatmul.mubr.f32.gmra.mrb[0].mxu0 %v2540
    %v2743 = vpop.f32.mrb[0].mxu0
    %v2744 = vadd.f32 %v2575, %v2743
    %v2745 = vpop.f32.mrb[0].mxu0
    %2746 = vmatprep.mubr.f32.mxu0 0.0
    %2747 = vmatmul.mubr.f32.gmra.mrb[0].mxu0 %v2541
    %v2748 = vpop.f32.mrb[0].mxu0
    %v2749 = vadd.f32 %v2575, %v2748
    %v2750 = vpop.f32.mrb[0].mxu0
    %2751 = vmatprep.mubr.f32.mxu0 0.0
    %2752 = vmatmul.mubr.f32.gmra.mrb[0].mxu0 %v2542
    %v2753 = vpop.f32.mrb[0].mxu0
    %v2754 = vadd.f32 %v2575, %v2753
    %v2755 = vpop.f32.mrb[0].mxu0
    %2756 = vmatprep.mubr.f32.mxu0 0.0
    %2757 = vmatmul.mubr.f32.gmra.mrb[0].mxu0 %v2543
    %v2758 = vpop.f32.mrb[0].mxu0
    %v2759 = vadd.f32 %v2575, %v2758
    %v2760 = vpop.f32.mrb[0].mxu0
    %2761 = vmatprep.mubr.f32.mxu0 0.0
    %2762 = vmatmul.mubr.f32.gmra.mrb[0].mxu0 %v2544
    %v2763 = vpop.f32.mrb[0].mxu0
    %v2764 = vadd.f32 %v2575, %v2763
    %v2765 = vpop.f32.mrb[0].mxu0
    %2766 = vmatprep.mubr.f32.mxu0 0.0
    %2767 = vmatmul.mubr.f32.gmra.mrb[0].mxu0 %v2545
    %v2768 = vpop.f32.mrb[0].mxu0
    %v2769 = vadd.f32 %v2575, %v2768
    %v2770 = vpop.f32.mrb[0].mxu0
    %2771 = vmatprep.mubr.f32.mxu0 0.0
    %2772 = vmatmul.mubr.f32.gmra.mrb[0].mxu0 %v2546
    %v2773 = vpop.f32.mrb[0].mxu0
    %v2774 = vadd.f32 %v2575, %v2773
    %v2775 = vpop.f32.mrb[0].mxu0
    %2776 = vmatprep.mubr.f32.mxu0 0.0
    %2777 = vmatmul.mubr.f32.gmra.mrb[0].mxu0 %v2547
    %v2778 = vpop.f32.mrb[0].mxu0
    %v2779 = vadd.f32 %v2575, %v2778
    %v2780 = vpop.f32.mrb[0].mxu0
    %2781 = vmatprep.mubr.f32.mxu0 0.0
    %2782 = vmatmul.mubr.f32.gmra.mrb[0].mxu0 %v2548
    %v2783 = vpop.f32.mrb[0].mxu0
    %v2784 = vadd.f32 %v2575, %v2783
    %v2785 = vpop.f32.mrb[0].mxu0
    %2786 = vmatprep.mubr.f32.mxu0 0.0
    %2787 = vmatmul.mubr.f32.gmra.mrb[0].mxu0 %v2549
    %v2788 = vpop.f32.mrb[0].mxu0
    %v2789 = vadd.f32 %v2575, %v2788
    %v2790 = vpop.f32.mrb[0].mxu0
    %2791 = vmatprep.mubr.f32.mxu0 0.0
    %2792 = vmatmul.mubr.f32.gmra.mrb[0].mxu0 %v2550
    %v2793 = vpop.f32.mrb[0].mxu0
    %v2794 = vadd.f32 %v2575, %v2793
    %v2795 = vpop.f32.mrb[0].mxu0
    %2796 = vmatprep.mubr.f32.mxu0 0.0
    %2797 = vmatmul.mubr.f32.gmra.mrb[0].mxu0 %v2551
    %v2798 = vpop.f32.mrb[0].mxu0
    %v2799 = vadd.f32 %v2575, %v2798
    %v2800 = vpop.f32.mrb[0].mxu0
    %2801 = vdwg.mxu0
    %2802 = vmatprep.subr.mxu0 0.0
    %2803 = vmatpush1.msra.mxu0 %v2644
    %2804 = vmatprep.subr.mxu0 0.0
    %2805 = vmatpush1.msra.mxu0 %v2649
    %2806 = vmatprep.subr.mxu0 0.0
    %2807 = vmatpush1.msra.mxu0 0.0
    %2808 = vmatprep.subr.mxu0 0.0
    %2809 = vmatpush1.msra.mxu0 0.0
    %2810 = vmatprep.subr.mxu0 0.0
    %2811 = vmatpush1.msra.mxu0 0.0
    %2812 = vmatprep.subr.mxu0 0.0
    %2813 = vmatpush1.msra.mxu0 0.0
    %2814 = vmatprep.subr.mxu0 0.0
    %2815 = vmatpush1.msra.mxu0 0.0
    %2816 = vmatprep.subr.mxu0 0.0
    %2817 = vmatpush1.msra.mxu0 0.0
    %2818 = vmatprep.subr.mxu0 0.0
    %2819 = vmatpush1.msra.mxu0 0.0
    %2820 = vmatprep.subr.mxu0 0.0
    %2821 = vmatpush1.msra.mxu0 0.0
    %2822 = vmatprep.subr.mxu0 0.0
    %2823 = vmatpush1.msra.mxu0 0.0
    %2824 = vmatprep.subr.mxu0 0.0
    %2825 = vmatpush1.msra.mxu0 0.0
    %2826 = vmatprep.subr.mxu0 0.0
    %2827 = vmatpush1.msra.mxu0 0.0
    %2828 = vmatprep.subr.mxu0 0.0
    %2829 = vmatpush1.msra.mxu0 0.0
    %2830 = vmatprep.subr.mxu0 0.0
    %2831 = vmatpush1.msra.mxu0 0.0
    %2832 = vmatprep.subr.mxu0 0.0
    %2833 = vmatpush1.msra.mxu0 0.0
    %2834 = vmatprep.subr.mxu0 0.0
    %2835 = vmatpush1.msra.mxu0 0.0
    %2836 = vmatprep.subr.mxu0 0.0
    %2837 = vmatpush1.msra.mxu0 0.0
    %2838 = vmatprep.subr.mxu0 0.0
    %2839 = vmatpush1.msra.mxu0 0.0
    %2840 = vmatprep.subr.mxu0 0.0
    %2841 = vmatpush1.msra.mxu0 0.0
    %2842 = vmatprep.subr.mxu0 0.0
    %2843 = vmatpush1.msra.mxu0 0.0
    %2844 = vmatprep.subr.mxu0 0.0
    %2845 = vmatpush1.msra.mxu0 0.0
    %2846 = vmatprep.subr.mxu0 0.0
    %2847 = vmatpush1.msra.mxu0 0.0
    %2848 = vmatprep.subr.mxu0 0.0
    %2849 = vmatpush1.msra.mxu0 0.0
    %2850 = vmatprep.subr.mxu0 0.0
    %2851 = vmatpush1.msra.mxu0 0.0
    %2852 = vmatprep.subr.mxu0 0.0
    %2853 = vmatpush1.msra.mxu0 0.0
    %2854 = vmatprep.subr.mxu0 0.0
    %2855 = vmatpush1.msra.mxu0 0.0
    %2856 = vmatprep.subr.mxu0 0.0
    %2857 = vmatpush1.msra.mxu0 0.0
    %2858 = vmatprep.subr.mxu0 0.0
    %2859 = vmatpush1.msra.mxu0 0.0
    %2860 = vmatprep.subr.mxu0 0.0
    %2861 = vmatpush1.msra.mxu0 0.0
    %2862 = vmatprep.subr.mxu0 0.0
    %2863 = vmatpush1.msra.mxu0 0.0
    %2864 = vmatprep.subr.mxu0 0.0
    %2865 = vmatpush1.msra.mxu0 0.0
    %2866 = vmatprep.mubr.f32.mxu0 0.0
    %2867 = vmatmul.mubr.f32.gmra.mrb[0].mxu0 %v777
    %v2868 = vpop.f32.mrb[0].mxu0
    %v2869 = vadd.f32 0.0, %v2868
    %v2870 = vpop.f32.mrb[0].mxu0
    %2871 = vmatprep.mubr.f32.mxu0 0.0
    %2872 = vmatmul.mubr.f32.gmra.mrb[0].mxu0 %v780
    %v2873 = vpop.f32.mrb[0].mxu0
    %v2874 = vadd.f32 0.0, %v2873
    %v2875 = vpop.f32.mrb[0].mxu0
    %2876 = vdwg.mxu0
    %2877 = vmatprep.subr.mxu0 0.0
    %2878 = vmatpush1.msra.mxu0 %v2654
    %2879 = vmatprep.subr.mxu0 0.0
    %2880 = vmatpush1.msra.mxu0 %v2659
    %2881 = vmatprep.subr.mxu0 0.0
    %2882 = vmatpush1.msra.mxu0 0.0
    %2883 = vmatprep.subr.mxu0 0.0
    %2884 = vmatpush1.msra.mxu0 0.0
    %2885 = vmatprep.subr.mxu0 0.0
    %2886 = vmatpush1.msra.mxu0 0.0
    %2887 = vmatprep.subr.mxu0 0.0
    %2888 = vmatpush1.msra.mxu0 0.0
    %2889 = vmatprep.subr.mxu0 0.0
    %2890 = vmatpush1.msra.mxu0 0.0
    %2891 = vmatprep.subr.mxu0 0.0
    %2892 = vmatpush1.msra.mxu0 0.0
    %2893 = vmatprep.subr.mxu0 0.0
    %2894 = vmatpush1.msra.mxu0 0.0
    %2895 = vmatprep.subr.mxu0 0.0
    %2896 = vmatpush1.msra.mxu0 0.0
    %2897 = vmatprep.subr.mxu0 0.0
    %2898 = vmatpush1.msra.mxu0 0.0
    %2899 = vmatprep.subr.mxu0 0.0
    %2900 = vmatpush1.msra.mxu0 0.0
    %2901 = vmatprep.subr.mxu0 0.0
    %2902 = vmatpush1.msra.mxu0 0.0
    %2903 = vmatprep.subr.mxu0 0.0
    %2904 = vmatpush1.msra.mxu0 0.0
    %2905 = vmatprep.subr.mxu0 0.0
    %2906 = vmatpush1.msra.mxu0 0.0
    %2907 = vmatprep.subr.mxu0 0.0
    %2908 = vmatpush1.msra.mxu0 0.0
    %2909 = vmatprep.subr.mxu0 0.0
    %2910 = vmatpush1.msra.mxu0 0.0
    %2911 = vmatprep.subr.mxu0 0.0
    %2912 = vmatpush1.msra.mxu0 0.0
    %2913 = vmatprep.subr.mxu0 0.0
    %2914 = vmatpush1.msra.mxu0 0.0
    %2915 = vmatprep.subr.mxu0 0.0
    %2916 = vmatpush1.msra.mxu0 0.0
    %2917 = vmatprep.subr.mxu0 0.0
    %2918 = vmatpush1.msra.mxu0 0.0
    %2919 = vmatprep.subr.mxu0 0.0
    %2920 = vmatpush1.msra.mxu0 0.0
    %2921 = vmatprep.subr.mxu0 0.0
    %2922 = vmatpush1.msra.mxu0 0.0
    %2923 = vmatprep.subr.mxu0 0.0
    %2924 = vmatpush1.msra.mxu0 0.0
    %2925 = vmatprep.subr.mxu0 0.0
    %2926 = vmatpush1.msra.mxu0 0.0
    %2927 = vmatprep.subr.mxu0 0.0
    %2928 = vmatpush1.msra.mxu0 0.0
    %2929 = vmatprep.subr.mxu0 0.0
    %2930 = vmatpush1.msra.mxu0 0.0
    %2931 = vmatprep.subr.mxu0 0.0
    %2932 = vmatpush1.msra.mxu0 0.0
    %2933 = vmatprep.subr.mxu0 0.0
    %2934 = vmatpush1.msra.mxu0 0.0
    %2935 = vmatprep.subr.mxu0 0.0
    %2936 = vmatpush1.msra.mxu0 0.0
    %2937 = vmatprep.subr.mxu0 0.0
    %2938 = vmatpush1.msra.mxu0 0.0
    %2939 = vmatprep.subr.mxu0 0.0
    %2940 = vmatpush1.msra.mxu0 0.0
    %2941 = vmatprep.mubr.f32.mxu0 0.0
    %2942 = vmatmul.mubr.f32.gmra.mrb[0].mxu0 %v858
    %v2943 = vpop.f32.mrb[0].mxu0
    %v2944 = vadd.f32 0.0, %v2943
    %v2945 = vpop.f32.mrb[0].mxu0
    %2946 = vmatprep.mubr.f32.mxu0 0.0
    %2947 = vmatmul.mubr.f32.gmra.mrb[0].mxu0 %v861
    %v2948 = vpop.f32.mrb[0].mxu0
    %v2949 = vadd.f32 0.0, %v2948
    %v2950 = vpop.f32.mrb[0].mxu0
    %2951 = vdwg.mxu0
    %2952 = vmatprep.subr.mxu0 0.0
    %2953 = vmatpush1.msra.mxu0 %v2664
    %2954 = vmatprep.subr.mxu0 0.0
    %2955 = vmatpush1.msra.mxu0 %v2669
    %2956 = vmatprep.subr.mxu0 0.0
    %2957 = vmatpush1.msra.mxu0 0.0
    %2958 = vmatprep.subr.mxu0 0.0
    %2959 = vmatpush1.msra.mxu0 0.0
    %2960 = vmatprep.subr.mxu0 0.0
    %2961 = vmatpush1.msra.mxu0 0.0
    %2962 = vmatprep.subr.mxu0 0.0
    %2963 = vmatpush1.msra.mxu0 0.0
    %2964 = vmatprep.subr.mxu0 0.0
    %2965 = vmatpush1.msra.mxu0 0.0
    %2966 = vmatprep.subr.mxu0 0.0
    %2967 = vmatpush1.msra.mxu0 0.0
    %2968 = vmatprep.subr.mxu0 0.0
    %2969 = vmatpush1.msra.mxu0 0.0
    %2970 = vmatprep.subr.mxu0 0.0
    %2971 = vmatpush1.msra.mxu0 0.0
    %2972 = vmatprep.subr.mxu0 0.0
    %2973 = vmatpush1.msra.mxu0 0.0
    %2974 = vmatprep.subr.mxu0 0.0
    %2975 = vmatpush1.msra.mxu0 0.0
    %2976 = vmatprep.subr.mxu0 0.0
    %2977 = vmatpush1.msra.mxu0 0.0
    %2978 = vmatprep.subr.mxu0 0.0
    %2979 = vmatpush1.msra.mxu0 0.0
    %2980 = vmatprep.subr.mxu0 0.0
    %2981 = vmatpush1.msra.mxu0 0.0
    %2982 = vmatprep.subr.mxu0 0.0
    %2983 = vmatpush1.msra.mxu0 0.0
    %2984 = vmatprep.subr.mxu0 0.0
    %2985 = vmatpush1.msra.mxu0 0.0
    %2986 = vmatprep.subr.mxu0 0.0
    %2987 = vmatpush1.msra.mxu0 0.0
    %2988 = vmatprep.subr.mxu0 0.0
    %2989 = vmatpush1.msra.mxu0 0.0
    %2990 = vmatprep.subr.mxu0 0.0
    %2991 = vmatpush1.msra.mxu0 0.0
    %2992 = vmatprep.subr.mxu0 0.0
    %2993 = vmatpush1.msra.mxu0 0.0
    %2994 = vmatprep.subr.mxu0 0.0
    %2995 = vmatpush1.msra.mxu0 0.0
    %2996 = vmatprep.subr.mxu0 0.0
    %2997 = vmatpush1.msra.mxu0 0.0
    %2998 = vmatprep.subr.mxu0 0.0
    %2999 = vmatpush1.msra.mxu0 0.0
    %3000 = vmatprep.subr.mxu0 0.0
    %3001 = vmatpush1.msra.mxu0 0.0
    %3002 = vmatprep.subr.mxu0 0.0
    %3003 = vmatpush1.msra.mxu0 0.0
    %3004 = vmatprep.subr.mxu0 0.0
    %3005 = vmatpush1.msra.mxu0 0.0
    %3006 = vmatprep.subr.mxu0 0.0
    %3007 = vmatpush1.msra.mxu0 0.0
    %3008 = vmatprep.subr.mxu0 0.0
    %3009 = vmatpush1.msra.mxu0 0.0
    %3010 = vmatprep.subr.mxu0 0.0
    %3011 = vmatpush1.msra.mxu0 0.0
    %3012 = vmatprep.subr.mxu0 0.0
    %3013 = vmatpush1.msra.mxu0 0.0
    %3014 = vmatprep.subr.mxu0 0.0
    %3015 = vmatpush1.msra.mxu0 0.0
    %3016 = vmatprep.mubr.f32.mxu0 0.0
    %3017 = vmatmul.mubr.f32.gmra.mrb[0].mxu0 %v939
    %v3018 = vpop.f32.mrb[0].mxu0
    %v3019 = vadd.f32 0.0, %v3018
    %v3020 = vpop.f32.mrb[0].mxu0
    %3021 = vmatprep.mubr.f32.mxu0 0.0
    %3022 = vmatmul.mubr.f32.gmra.mrb[0].mxu0 %v942
    %v3023 = vpop.f32.mrb[0].mxu0
    %v3024 = vadd.f32 0.0, %v3023
    %v3025 = vpop.f32.mrb[0].mxu0
    %3026 = vdwg.mxu0
    %3027 = vmatprep.subr.mxu0 0.0
    %3028 = vmatpush1.msra.mxu0 %v2674
    %3029 = vmatprep.subr.mxu0 0.0
    %3030 = vmatpush1.msra.mxu0 %v2679
    %3031 = vmatprep.subr.mxu0 0.0
    %3032 = vmatpush1.msra.mxu0 0.0
    %3033 = vmatprep.subr.mxu0 0.0
    %3034 = vmatpush1.msra.mxu0 0.0
    %3035 = vmatprep.subr.mxu0 0.0
    %3036 = vmatpush1.msra.mxu0 0.0
    %3037 = vmatprep.subr.mxu0 0.0
    %3038 = vmatpush1.msra.mxu0 0.0
    %3039 = vmatprep.subr.mxu0 0.0
    %3040 = vmatpush1.msra.mxu0 0.0
    %3041 = vmatprep.subr.mxu0 0.0
    %3042 = vmatpush1.msra.mxu0 0.0
    %3043 = vmatprep.subr.mxu0 0.0
    %3044 = vmatpush1.msra.mxu0 0.0
    %3045 = vmatprep.subr.mxu0 0.0
    %3046 = vmatpush1.msra.mxu0 0.0
    %3047 = vmatprep.subr.mxu0 0.0
    %3048 = vmatpush1.msra.mxu0 0.0
    %3049 = vmatprep.subr.mxu0 0.0
    %3050 = vmatpush1.msra.mxu0 0.0
    %3051 = vmatprep.subr.mxu0 0.0
    %3052 = vmatpush1.msra.mxu0 0.0
    %3053 = vmatprep.subr.mxu0 0.0
    %3054 = vmatpush1.msra.mxu0 0.0
    %3055 = vmatprep.subr.mxu0 0.0
    %3056 = vmatpush1.msra.mxu0 0.0
    %3057 = vmatprep.subr.mxu0 0.0
    %3058 = vmatpush1.msra.mxu0 0.0
    %3059 = vmatprep.subr.mxu0 0.0
    %3060 = vmatpush1.msra.mxu0 0.0
    %3061 = vmatprep.subr.mxu0 0.0
    %3062 = vmatpush1.msra.mxu0 0.0
    %3063 = vmatprep.subr.mxu0 0.0
    %3064 = vmatpush1.msra.mxu0 0.0
    %3065 = vmatprep.subr.mxu0 0.0
    %3066 = vmatpush1.msra.mxu0 0.0
    %3067 = vmatprep.subr.mxu0 0.0
    %3068 = vmatpush1.msra.mxu0 0.0
    %3069 = vmatprep.subr.mxu0 0.0
    %3070 = vmatpush1.msra.mxu0 0.0
    %3071 = vmatprep.subr.mxu0 0.0
    %3072 = vmatpush1.msra.mxu0 0.0
    %3073 = vmatprep.subr.mxu0 0.0
    %3074 = vmatpush1.msra.mxu0 0.0
    %3075 = vmatprep.subr.mxu0 0.0
    %3076 = vmatpush1.msra.mxu0 0.0
    %3077 = vmatprep.subr.mxu0 0.0
    %3078 = vmatpush1.msra.mxu0 0.0
    %3079 = vmatprep.subr.mxu0 0.0
    %3080 = vmatpush1.msra.mxu0 0.0
    %3081 = vmatprep.subr.mxu0 0.0
    %3082 = vmatpush1.msra.mxu0 0.0
    %3083 = vmatprep.subr.mxu0 0.0
    %3084 = vmatpush1.msra.mxu0 0.0
    %3085 = vmatprep.subr.mxu0 0.0
    %3086 = vmatpush1.msra.mxu0 0.0
    %3087 = vmatprep.subr.mxu0 0.0
    %3088 = vmatpush1.msra.mxu0 0.0
    %3089 = vmatprep.subr.mxu0 0.0
    %3090 = vmatpush1.msra.mxu0 0.0
    %3091 = vmatprep.mubr.f32.mxu0 0.0
    %3092 = vmatmul.mubr.f32.gmra.mrb[0].mxu0 %v1020
    %v3093 = vpop.f32.mrb[0].mxu0
    %v3094 = vadd.f32 0.0, %v3093
    %v3095 = vpop.f32.mrb[0].mxu0
    %3096 = vmatprep.mubr.f32.mxu0 0.0
    %3097 = vmatmul.mubr.f32.gmra.mrb[0].mxu0 %v1023
    %v3098 = vpop.f32.mrb[0].mxu0
    %v3099 = vadd.f32 0.0, %v3098
    %v3100 = vpop.f32.mrb[0].mxu0
    %3101 = vdwg.mxu0
    %3102 = vmatprep.subr.mxu0 0.0
    %3103 = vmatpush1.msra.mxu0 %v2684
    %3104 = vmatprep.subr.mxu0 0.0
    %3105 = vmatpush1.msra.mxu0 %v2689
    %3106 = vmatprep.subr.mxu0 0.0
    %3107 = vmatpush1.msra.mxu0 0.0
    %3108 = vmatprep.subr.mxu0 0.0
    %3109 = vmatpush1.msra.mxu0 0.0
    %3110 = vmatprep.subr.mxu0 0.0
    %3111 = vmatpush1.msra.mxu0 0.0
    %3112 = vmatprep.subr.mxu0 0.0
    %3113 = vmatpush1.msra.mxu0 0.0
    %3114 = vmatprep.subr.mxu0 0.0
    %3115 = vmatpush1.msra.mxu0 0.0
    %3116 = vmatprep.subr.mxu0 0.0
    %3117 = vmatpush1.msra.mxu0 0.0
    %3118 = vmatprep.subr.mxu0 0.0
    %3119 = vmatpush1.msra.mxu0 0.0
    %3120 = vmatprep.subr.mxu0 0.0
    %3121 = vmatpush1.msra.mxu0 0.0
    %3122 = vmatprep.subr.mxu0 0.0
    %3123 = vmatpush1.msra.mxu0 0.0
    %3124 = vmatprep.subr.mxu0 0.0
    %3125 = vmatpush1.msra.mxu0 0.0
    %3126 = vmatprep.subr.mxu0 0.0
    %3127 = vmatpush1.msra.mxu0 0.0
    %3128 = vmatprep.subr.mxu0 0.0
    %3129 = vmatpush1.msra.mxu0 0.0
    %3130 = vmatprep.subr.mxu0 0.0
    %3131 = vmatpush1.msra.mxu0 0.0
    %3132 = vmatprep.subr.mxu0 0.0
    %3133 = vmatpush1.msra.mxu0 0.0
    %3134 = vmatprep.subr.mxu0 0.0
    %3135 = vmatpush1.msra.mxu0 0.0
    %3136 = vmatprep.subr.mxu0 0.0
    %3137 = vmatpush1.msra.mxu0 0.0
    %3138 = vmatprep.subr.mxu0 0.0
    %3139 = vmatpush1.msra.mxu0 0.0
    %3140 = vmatprep.subr.mxu0 0.0
    %3141 = vmatpush1.msra.mxu0 0.0
    %3142 = vmatprep.subr.mxu0 0.0
    %3143 = vmatpush1.msra.mxu0 0.0
    %3144 = vmatprep.subr.mxu0 0.0
    %3145 = vmatpush1.msra.mxu0 0.0
    %3146 = vmatprep.subr.mxu0 0.0
    %3147 = vmatpush1.msra.mxu0 0.0
    %3148 = vmatprep.subr.mxu0 0.0
    %3149 = vmatpush1.msra.mxu0 0.0
    %3150 = vmatprep.subr.mxu0 0.0
    %3151 = vmatpush1.msra.mxu0 0.0
    %3152 = vmatprep.subr.mxu0 0.0
    %3153 = vmatpush1.msra.mxu0 0.0
    %3154 = vmatprep.subr.mxu0 0.0
    %3155 = vmatpush1.msra.mxu0 0.0
    %3156 = vmatprep.subr.mxu0 0.0
    %3157 = vmatpush1.msra.mxu0 0.0
    %3158 = vmatprep.subr.mxu0 0.0
    %3159 = vmatpush1.msra.mxu0 0.0
    %3160 = vmatprep.subr.mxu0 0.0
    %3161 = vmatpush1.msra.mxu0 0.0
    %3162 = vmatprep.subr.mxu0 0.0
    %3163 = vmatpush1.msra.mxu0 0.0
    %3164 = vmatprep.subr.mxu0 0.0
    %3165 = vmatpush1.msra.mxu0 0.0
    %3166 = vmatprep.mubr.f32.mxu0 0.0
    %3167 = vmatmul.mubr.f32.gmra.mrb[0].mxu0 %v1101
    %v3168 = vpop.f32.mrb[0].mxu0
    %v3169 = vadd.f32 0.0, %v3168
    %v3170 = vpop.f32.mrb[0].mxu0
    %3171 = vmatprep.mubr.f32.mxu0 0.0
    %3172 = vmatmul.mubr.f32.gmra.mrb[0].mxu0 %v1104
    %v3173 = vpop.f32.mrb[0].mxu0
    %v3174 = vadd.f32 0.0, %v3173
    %v3175 = vpop.f32.mrb[0].mxu0
    %3176 = vdwg.mxu0
    %3177 = vmatprep.subr.mxu0 0.0
    %3178 = vmatpush1.msra.mxu0 %v2694
    %3179 = vmatprep.subr.mxu0 0.0
    %3180 = vmatpush1.msra.mxu0 %v2699
    %3181 = vmatprep.subr.mxu0 0.0
    %3182 = vmatpush1.msra.mxu0 0.0
    %3183 = vmatprep.subr.mxu0 0.0
    %3184 = vmatpush1.msra.mxu0 0.0
    %3185 = vmatprep.subr.mxu0 0.0
    %3186 = vmatpush1.msra.mxu0 0.0
    %3187 = vmatprep.subr.mxu0 0.0
    %3188 = vmatpush1.msra.mxu0 0.0
    %3189 = vmatprep.subr.mxu0 0.0
    %3190 = vmatpush1.msra.mxu0 0.0
    %3191 = vmatprep.subr.mxu0 0.0
    %3192 = vmatpush1.msra.mxu0 0.0
    %3193 = vmatprep.subr.mxu0 0.0
    %3194 = vmatpush1.msra.mxu0 0.0
    %3195 = vmatprep.subr.mxu0 0.0
    %3196 = vmatpush1.msra.mxu0 0.0
    %3197 = vmatprep.subr.mxu0 0.0
    %3198 = vmatpush1.msra.mxu0 0.0
    %3199 = vmatprep.subr.mxu0 0.0
    %3200 = vmatpush1.msra.mxu0 0.0
    %3201 = vmatprep.subr.mxu0 0.0
    %3202 = vmatpush1.msra.mxu0 0.0
    %3203 = vmatprep.subr.mxu0 0.0
    %3204 = vmatpush1.msra.mxu0 0.0
    %3205 = vmatprep.subr.mxu0 0.0
    %3206 = vmatpush1.msra.mxu0 0.0
    %3207 = vmatprep.subr.mxu0 0.0
    %3208 = vmatpush1.msra.mxu0 0.0
    %3209 = vmatprep.subr.mxu0 0.0
    %3210 = vmatpush1.msra.mxu0 0.0
    %3211 = vmatprep.subr.mxu0 0.0
    %3212 = vmatpush1.msra.mxu0 0.0
    %3213 = vmatprep.subr.mxu0 0.0
    %3214 = vmatpush1.msra.mxu0 0.0
    %3215 = vmatprep.subr.mxu0 0.0
    %3216 = vmatpush1.msra.mxu0 0.0
    %3217 = vmatprep.subr.mxu0 0.0
    %3218 = vmatpush1.msra.mxu0 0.0
    %3219 = vmatprep.subr.mxu0 0.0
    %3220 = vmatpush1.msra.mxu0 0.0
    %3221 = vmatprep.subr.mxu0 0.0
    %3222 = vmatpush1.msra.mxu0 0.0
    %3223 = vmatprep.subr.mxu0 0.0
    %3224 = vmatpush1.msra.mxu0 0.0
    %3225 = vmatprep.subr.mxu0 0.0
    %3226 = vmatpush1.msra.mxu0 0.0
    %3227 = vmatprep.subr.mxu0 0.0
    %3228 = vmatpush1.msra.mxu0 0.0
    %3229 = vmatprep.subr.mxu0 0.0
    %3230 = vmatpush1.msra.mxu0 0.0
    %3231 = vmatprep.subr.mxu0 0.0
    %3232 = vmatpush1.msra.mxu0 0.0
    %3233 = vmatprep.subr.mxu0 0.0
    %3234 = vmatpush1.msra.mxu0 0.0
    %3235 = vmatprep.subr.mxu0 0.0
    %3236 = vmatpush1.msra.mxu0 0.0
    %3237 = vmatprep.subr.mxu0 0.0
    %3238 = vmatpush1.msra.mxu0 0.0
    %3239 = vmatprep.subr.mxu0 0.0
    %3240 = vmatpush1.msra.mxu0 0.0
    %3241 = vmatprep.mubr.f32.mxu0 0.0
    %3242 = vmatmul.mubr.f32.gmra.mrb[0].mxu0 %v1182
    %v3243 = vpop.f32.mrb[0].mxu0
    %v3244 = vadd.f32 0.0, %v3243
    %v3245 = vpop.f32.mrb[0].mxu0
    %3246 = vmatprep.mubr.f32.mxu0 0.0
    %3247 = vmatmul.mubr.f32.gmra.mrb[0].mxu0 %v1185
    %v3248 = vpop.f32.mrb[0].mxu0
    %v3249 = vadd.f32 0.0, %v3248
    %v3250 = vpop.f32.mrb[0].mxu0
    %3251 = vdwg.mxu0
    %3252 = vmatprep.subr.mxu0 0.0
    %3253 = vmatpush1.msra.mxu0 %v2704
    %3254 = vmatprep.subr.mxu0 0.0
    %3255 = vmatpush1.msra.mxu0 %v2709
    %3256 = vmatprep.subr.mxu0 0.0
    %3257 = vmatpush1.msra.mxu0 0.0
    %3258 = vmatprep.subr.mxu0 0.0
    %3259 = vmatpush1.msra.mxu0 0.0
    %3260 = vmatprep.subr.mxu0 0.0
    %3261 = vmatpush1.msra.mxu0 0.0
    %3262 = vmatprep.subr.mxu0 0.0
    %3263 = vmatpush1.msra.mxu0 0.0
    %3264 = vmatprep.subr.mxu0 0.0
    %3265 = vmatpush1.msra.mxu0 0.0
    %3266 = vmatprep.subr.mxu0 0.0
    %3267 = vmatpush1.msra.mxu0 0.0
    %3268 = vmatprep.subr.mxu0 0.0
    %3269 = vmatpush1.msra.mxu0 0.0
    %3270 = vmatprep.subr.mxu0 0.0
    %3271 = vmatpush1.msra.mxu0 0.0
    %3272 = vmatprep.subr.mxu0 0.0
    %3273 = vmatpush1.msra.mxu0 0.0
    %3274 = vmatprep.subr.mxu0 0.0
    %3275 = vmatpush1.msra.mxu0 0.0
    %3276 = vmatprep.subr.mxu0 0.0
    %3277 = vmatpush1.msra.mxu0 0.0
    %3278 = vmatprep.subr.mxu0 0.0
    %3279 = vmatpush1.msra.mxu0 0.0
    %3280 = vmatprep.subr.mxu0 0.0
    %3281 = vmatpush1.msra.mxu0 0.0
    %3282 = vmatprep.subr.mxu0 0.0
    %3283 = vmatpush1.msra.mxu0 0.0
    %3284 = vmatprep.subr.mxu0 0.0
    %3285 = vmatpush1.msra.mxu0 0.0
    %3286 = vmatprep.subr.mxu0 0.0
    %3287 = vmatpush1.msra.mxu0 0.0
    %3288 = vmatprep.subr.mxu0 0.0
    %3289 = vmatpush1.msra.mxu0 0.0
    %3290 = vmatprep.subr.mxu0 0.0
    %3291 = vmatpush1.msra.mxu0 0.0
    %3292 = vmatprep.subr.mxu0 0.0
    %3293 = vmatpush1.msra.mxu0 0.0
    %3294 = vmatprep.subr.mxu0 0.0
    %3295 = vmatpush1.msra.mxu0 0.0
    %3296 = vmatprep.subr.mxu0 0.0
    %3297 = vmatpush1.msra.mxu0 0.0
    %3298 = vmatprep.subr.mxu0 0.0
    %3299 = vmatpush1.msra.mxu0 0.0
    %3300 = vmatprep.subr.mxu0 0.0
    %3301 = vmatpush1.msra.mxu0 0.0
    %3302 = vmatprep.subr.mxu0 0.0
    %3303 = vmatpush1.msra.mxu0 0.0
    %3304 = vmatprep.subr.mxu0 0.0
    %3305 = vmatpush1.msra.mxu0 0.0
    %3306 = vmatprep.subr.mxu0 0.0
    %3307 = vmatpush1.msra.mxu0 0.0
    %3308 = vmatprep.subr.mxu0 0.0
    %3309 = vmatpush1.msra.mxu0 0.0
    %3310 = vmatprep.subr.mxu0 0.0
    %3311 = vmatpush1.msra.mxu0 0.0
    %3312 = vmatprep.subr.mxu0 0.0
    %3313 = vmatpush1.msra.mxu0 0.0
    %3314 = vmatprep.subr.mxu0 0.0
    %3315 = vmatpush1.msra.mxu0 0.0
    %3316 = vmatprep.mubr.f32.mxu0 0.0
    %3317 = vmatmul.mubr.f32.gmra.mrb[0].mxu0 %v1263
    %v3318 = vpop.f32.mrb[0].mxu0
    %v3319 = vadd.f32 0.0, %v3318
    %v3320 = vpop.f32.mrb[0].mxu0
    %3321 = vmatprep.mubr.f32.mxu0 0.0
    %3322 = vmatmul.mubr.f32.gmra.mrb[0].mxu0 %v1266
    %v3323 = vpop.f32.mrb[0].mxu0
    %v3324 = vadd.f32 0.0, %v3323
    %v3325 = vpop.f32.mrb[0].mxu0
    %3326 = vdwg.mxu0
    %3327 = vmatprep.subr.mxu0 0.0
    %3328 = vmatpush1.msra.mxu0 %v2714
    %3329 = vmatprep.subr.mxu0 0.0
    %3330 = vmatpush1.msra.mxu0 %v2719
    %3331 = vmatprep.subr.mxu0 0.0
    %3332 = vmatpush1.msra.mxu0 0.0
    %3333 = vmatprep.subr.mxu0 0.0
    %3334 = vmatpush1.msra.mxu0 0.0
    %3335 = vmatprep.subr.mxu0 0.0
    %3336 = vmatpush1.msra.mxu0 0.0
    %3337 = vmatprep.subr.mxu0 0.0
    %3338 = vmatpush1.msra.mxu0 0.0
    %3339 = vmatprep.subr.mxu0 0.0
    %3340 = vmatpush1.msra.mxu0 0.0
    %3341 = vmatprep.subr.mxu0 0.0
    %3342 = vmatpush1.msra.mxu0 0.0
    %3343 = vmatprep.subr.mxu0 0.0
    %3344 = vmatpush1.msra.mxu0 0.0
    %3345 = vmatprep.subr.mxu0 0.0
    %3346 = vmatpush1.msra.mxu0 0.0
    %3347 = vmatprep.subr.mxu0 0.0
    %3348 = vmatpush1.msra.mxu0 0.0
    %3349 = vmatprep.subr.mxu0 0.0
    %3350 = vmatpush1.msra.mxu0 0.0
    %3351 = vmatprep.subr.mxu0 0.0
    %3352 = vmatpush1.msra.mxu0 0.0
    %3353 = vmatprep.subr.mxu0 0.0
    %3354 = vmatpush1.msra.mxu0 0.0
    %3355 = vmatprep.subr.mxu0 0.0
    %3356 = vmatpush1.msra.mxu0 0.0
    %3357 = vmatprep.subr.mxu0 0.0
    %3358 = vmatpush1.msra.mxu0 0.0
    %3359 = vmatprep.subr.mxu0 0.0
    %3360 = vmatpush1.msra.mxu0 0.0
    %3361 = vmatprep.subr.mxu0 0.0
    %3362 = vmatpush1.msra.mxu0 0.0
    %3363 = vmatprep.subr.mxu0 0.0
    %3364 = vmatpush1.msra.mxu0 0.0
    %3365 = vmatprep.subr.mxu0 0.0
    %3366 = vmatpush1.msra.mxu0 0.0
    %3367 = vmatprep.subr.mxu0 0.0
    %3368 = vmatpush1.msra.mxu0 0.0
    %3369 = vmatprep.subr.mxu0 0.0
    %3370 = vmatpush1.msra.mxu0 0.0
    %3371 = vmatprep.subr.mxu0 0.0
    %3372 = vmatpush1.msra.mxu0 0.0
    %3373 = vmatprep.subr.mxu0 0.0
    %3374 = vmatpush1.msra.mxu0 0.0
    %3375 = vmatprep.subr.mxu0 0.0
    %3376 = vmatpush1.msra.mxu0 0.0
    %3377 = vmatprep.subr.mxu0 0.0
    %3378 = vmatpush1.msra.mxu0 0.0
    %3379 = vmatprep.subr.mxu0 0.0
    %3380 = vmatpush1.msra.mxu0 0.0
    %3381 = vmatprep.subr.mxu0 0.0
    %3382 = vmatpush1.msra.mxu0 0.0
    %3383 = vmatprep.subr.mxu0 0.0
    %3384 = vmatpush1.msra.mxu0 0.0
    %3385 = vmatprep.subr.mxu0 0.0
    %3386 = vmatpush1.msra.mxu0 0.0
    %3387 = vmatprep.subr.mxu0 0.0
    %3388 = vmatpush1.msra.mxu0 0.0
    %3389 = vmatprep.subr.mxu0 0.0
    %3390 = vmatpush1.msra.mxu0 0.0
    %3391 = vmatprep.mubr.f32.mxu0 0.0
    %3392 = vmatmul.mubr.f32.gmra.mrb[0].mxu0 %v1344
    %v3393 = vpop.f32.mrb[0].mxu0
    %v3394 = vadd.f32 0.0, %v3393
    %v3395 = vpop.f32.mrb[0].mxu0
    %3396 = vmatprep.mubr.f32.mxu0 0.0
    %3397 = vmatmul.mubr.f32.gmra.mrb[0].mxu0 %v1347
    %v3398 = vpop.f32.mrb[0].mxu0
    %v3399 = vadd.f32 0.0, %v3398
    %v3400 = vpop.f32.mrb[0].mxu0
    %3401 = vdwg.mxu0
    %3402 = vmatprep.subr.mxu0 0.0
    %3403 = vmatpush1.msra.mxu0 %v2724
    %3404 = vmatprep.subr.mxu0 0.0
    %3405 = vmatpush1.msra.mxu0 %v2729
    %3406 = vmatprep.subr.mxu0 0.0
    %3407 = vmatpush1.msra.mxu0 0.0
    %3408 = vmatprep.subr.mxu0 0.0
    %3409 = vmatpush1.msra.mxu0 0.0
    %3410 = vmatprep.subr.mxu0 0.0
    %3411 = vmatpush1.msra.mxu0 0.0
    %3412 = vmatprep.subr.mxu0 0.0
    %3413 = vmatpush1.msra.mxu0 0.0
    %3414 = vmatprep.subr.mxu0 0.0
    %3415 = vmatpush1.msra.mxu0 0.0
    %3416 = vmatprep.subr.mxu0 0.0
    %3417 = vmatpush1.msra.mxu0 0.0
    %3418 = vmatprep.subr.mxu0 0.0
    %3419 = vmatpush1.msra.mxu0 0.0
    %3420 = vmatprep.subr.mxu0 0.0
    %3421 = vmatpush1.msra.mxu0 0.0
    %3422 = vmatprep.subr.mxu0 0.0
    %3423 = vmatpush1.msra.mxu0 0.0
    %3424 = vmatprep.subr.mxu0 0.0
    %3425 = vmatpush1.msra.mxu0 0.0
    %3426 = vmatprep.subr.mxu0 0.0
    %3427 = vmatpush1.msra.mxu0 0.0
    %3428 = vmatprep.subr.mxu0 0.0
    %3429 = vmatpush1.msra.mxu0 0.0
    %3430 = vmatprep.subr.mxu0 0.0
    %3431 = vmatpush1.msra.mxu0 0.0
    %3432 = vmatprep.subr.mxu0 0.0
    %3433 = vmatpush1.msra.mxu0 0.0
    %3434 = vmatprep.subr.mxu0 0.0
    %3435 = vmatpush1.msra.mxu0 0.0
    %3436 = vmatprep.subr.mxu0 0.0
    %3437 = vmatpush1.msra.mxu0 0.0
    %3438 = vmatprep.subr.mxu0 0.0
    %3439 = vmatpush1.msra.mxu0 0.0
    %3440 = vmatprep.subr.mxu0 0.0
    %3441 = vmatpush1.msra.mxu0 0.0
    %3442 = vmatprep.subr.mxu0 0.0
    %3443 = vmatpush1.msra.mxu0 0.0
    %3444 = vmatprep.subr.mxu0 0.0
    %3445 = vmatpush1.msra.mxu0 0.0
    %3446 = vmatprep.subr.mxu0 0.0
    %3447 = vmatpush1.msra.mxu0 0.0
    %3448 = vmatprep.subr.mxu0 0.0
    %3449 = vmatpush1.msra.mxu0 0.0
    %3450 = vmatprep.subr.mxu0 0.0
    %3451 = vmatpush1.msra.mxu0 0.0
    %3452 = vmatprep.subr.mxu0 0.0
    %3453 = vmatpush1.msra.mxu0 0.0
    %3454 = vmatprep.subr.mxu0 0.0
    %3455 = vmatpush1.msra.mxu0 0.0
    %3456 = vmatprep.subr.mxu0 0.0
    %3457 = vmatpush1.msra.mxu0 0.0
    %3458 = vmatprep.subr.mxu0 0.0
    %3459 = vmatpush1.msra.mxu0 0.0
    %3460 = vmatprep.subr.mxu0 0.0
    %3461 = vmatpush1.msra.mxu0 0.0
    %3462 = vmatprep.subr.mxu0 0.0
    %3463 = vmatpush1.msra.mxu0 0.0
    %3464 = vmatprep.subr.mxu0 0.0
    %3465 = vmatpush1.msra.mxu0 0.0
    %3466 = vmatprep.mubr.f32.mxu0 0.0
    %3467 = vmatmul.mubr.f32.gmra.mrb[0].mxu0 %v1425
    %v3468 = vpop.f32.mrb[0].mxu0
    %v3469 = vadd.f32 0.0, %v3468
    %v3470 = vpop.f32.mrb[0].mxu0
    %3471 = vmatprep.mubr.f32.mxu0 0.0
    %3472 = vmatmul.mubr.f32.gmra.mrb[0].mxu0 %v1428
    %v3473 = vpop.f32.mrb[0].mxu0
    %v3474 = vadd.f32 0.0, %v3473
    %v3475 = vpop.f32.mrb[0].mxu0
    %3476 = vdwg.mxu0
    %3477 = vmatprep.subr.mxu0 0.0
    %3478 = vmatpush1.msra.mxu0 %v2734
    %3479 = vmatprep.subr.mxu0 0.0
    %3480 = vmatpush1.msra.mxu0 %v2739
    %3481 = vmatprep.subr.mxu0 0.0
    %3482 = vmatpush1.msra.mxu0 0.0
    %3483 = vmatprep.subr.mxu0 0.0
    %3484 = vmatpush1.msra.mxu0 0.0
    %3485 = vmatprep.subr.mxu0 0.0
    %3486 = vmatpush1.msra.mxu0 0.0
    %3487 = vmatprep.subr.mxu0 0.0
    %3488 = vmatpush1.msra.mxu0 0.0
    %3489 = vmatprep.subr.mxu0 0.0
    %3490 = vmatpush1.msra.mxu0 0.0
    %3491 = vmatprep.subr.mxu0 0.0
    %3492 = vmatpush1.msra.mxu0 0.0
    %3493 = vmatprep.subr.mxu0 0.0
    %3494 = vmatpush1.msra.mxu0 0.0
    %3495 = vmatprep.subr.mxu0 0.0
    %3496 = vmatpush1.msra.mxu0 0.0
    %3497 = vmatprep.subr.mxu0 0.0
    %3498 = vmatpush1.msra.mxu0 0.0
    %3499 = vmatprep.subr.mxu0 0.0
    %3500 = vmatpush1.msra.mxu0 0.0
    %3501 = vmatprep.subr.mxu0 0.0
    %3502 = vmatpush1.msra.mxu0 0.0
    %3503 = vmatprep.subr.mxu0 0.0
    %3504 = vmatpush1.msra.mxu0 0.0
    %3505 = vmatprep.subr.mxu0 0.0
    %3506 = vmatpush1.msra.mxu0 0.0
    %3507 = vmatprep.subr.mxu0 0.0
    %3508 = vmatpush1.msra.mxu0 0.0
    %3509 = vmatprep.subr.mxu0 0.0
    %3510 = vmatpush1.msra.mxu0 0.0
    %3511 = vmatprep.subr.mxu0 0.0
    %3512 = vmatpush1.msra.mxu0 0.0
    %3513 = vmatprep.subr.mxu0 0.0
    %3514 = vmatpush1.msra.mxu0 0.0
    %3515 = vmatprep.subr.mxu0 0.0
    %3516 = vmatpush1.msra.mxu0 0.0
    %3517 = vmatprep.subr.mxu0 0.0
    %3518 = vmatpush1.msra.mxu0 0.0
    %3519 = vmatprep.subr.mxu0 0.0
    %3520 = vmatpush1.msra.mxu0 0.0
    %3521 = vmatprep.subr.mxu0 0.0
    %3522 = vmatpush1.msra.mxu0 0.0
    %3523 = vmatprep.subr.mxu0 0.0
    %3524 = vmatpush1.msra.mxu0 0.0
    %3525 = vmatprep.subr.mxu0 0.0
    %3526 = vmatpush1.msra.mxu0 0.0
    %3527 = vmatprep.subr.mxu0 0.0
    %3528 = vmatpush1.msra.mxu0 0.0
    %3529 = vmatprep.subr.mxu0 0.0
    %3530 = vmatpush1.msra.mxu0 0.0
    %3531 = vmatprep.subr.mxu0 0.0
    %3532 = vmatpush1.msra.mxu0 0.0
    %3533 = vmatprep.subr.mxu0 0.0
    %3534 = vmatpush1.msra.mxu0 0.0
    %3535 = vmatprep.subr.mxu0 0.0
    %3536 = vmatpush1.msra.mxu0 0.0
    %3537 = vmatprep.subr.mxu0 0.0
    %3538 = vmatpush1.msra.mxu0 0.0
    %3539 = vmatprep.subr.mxu0 0.0
    %3540 = vmatpush1.msra.mxu0 0.0
    %3541 = vmatprep.mubr.f32.mxu0 0.0
    %3542 = vmatmul.mubr.f32.gmra.mrb[0].mxu0 %v1506
    %v3543 = vpop.f32.mrb[0].mxu0
    %v3544 = vadd.f32 0.0, %v3543
    %v3545 = vpop.f32.mrb[0].mxu0
    %3546 = vmatprep.mubr.f32.mxu0 0.0
    %3547 = vmatmul.mubr.f32.gmra.mrb[0].mxu0 %v1509
    %v3548 = vpop.f32.mrb[0].mxu0
    %v3549 = vadd.f32 0.0, %v3548
    %v3550 = vpop.f32.mrb[0].mxu0
    %3551 = vdwg.mxu0
    %3552 = vmatprep.subr.mxu0 0.0
    %3553 = vmatpush1.msra.mxu0 %v2744
    %3554 = vmatprep.subr.mxu0 0.0
    %3555 = vmatpush1.msra.mxu0 %v2749
    %3556 = vmatprep.subr.mxu0 0.0
    %3557 = vmatpush1.msra.mxu0 0.0
    %3558 = vmatprep.subr.mxu0 0.0
    %3559 = vmatpush1.msra.mxu0 0.0
    %3560 = vmatprep.subr.mxu0 0.0
    %3561 = vmatpush1.msra.mxu0 0.0
    %3562 = vmatprep.subr.mxu0 0.0
    %3563 = vmatpush1.msra.mxu0 0.0
    %3564 = vmatprep.subr.mxu0 0.0
    %3565 = vmatpush1.msra.mxu0 0.0
    %3566 = vmatprep.subr.mxu0 0.0
    %3567 = vmatpush1.msra.mxu0 0.0
    %3568 = vmatprep.subr.mxu0 0.0
    %3569 = vmatpush1.msra.mxu0 0.0
    %3570 = vmatprep.subr.mxu0 0.0
    %3571 = vmatpush1.msra.mxu0 0.0
    %3572 = vmatprep.subr.mxu0 0.0
    %3573 = vmatpush1.msra.mxu0 0.0
    %3574 = vmatprep.subr.mxu0 0.0
    %3575 = vmatpush1.msra.mxu0 0.0
    %3576 = vmatprep.subr.mxu0 0.0
    %3577 = vmatpush1.msra.mxu0 0.0
    %3578 = vmatprep.subr.mxu0 0.0
    %3579 = vmatpush1.msra.mxu0 0.0
    %3580 = vmatprep.subr.mxu0 0.0
    %3581 = vmatpush1.msra.mxu0 0.0
    %3582 = vmatprep.subr.mxu0 0.0
    %3583 = vmatpush1.msra.mxu0 0.0
    %3584 = vmatprep.subr.mxu0 0.0
    %3585 = vmatpush1.msra.mxu0 0.0
    %3586 = vmatprep.subr.mxu0 0.0
    %3587 = vmatpush1.msra.mxu0 0.0
    %3588 = vmatprep.subr.mxu0 0.0
    %3589 = vmatpush1.msra.mxu0 0.0
    %3590 = vmatprep.subr.mxu0 0.0
    %3591 = vmatpush1.msra.mxu0 0.0
    %3592 = vmatprep.subr.mxu0 0.0
    %3593 = vmatpush1.msra.mxu0 0.0
    %3594 = vmatprep.subr.mxu0 0.0
    %3595 = vmatpush1.msra.mxu0 0.0
    %3596 = vmatprep.subr.mxu0 0.0
    %3597 = vmatpush1.msra.mxu0 0.0
    %3598 = vmatprep.subr.mxu0 0.0
    %3599 = vmatpush1.msra.mxu0 0.0
    %3600 = vmatprep.subr.mxu0 0.0
    %3601 = vmatpush1.msra.mxu0 0.0
    %3602 = vmatprep.subr.mxu0 0.0
    %3603 = vmatpush1.msra.mxu0 0.0
    %3604 = vmatprep.subr.mxu0 0.0
    %3605 = vmatpush1.msra.mxu0 0.0
    %3606 = vmatprep.subr.mxu0 0.0
    %3607 = vmatpush1.msra.mxu0 0.0
    %3608 = vmatprep.subr.mxu0 0.0
    %3609 = vmatpush1.msra.mxu0 0.0
    %3610 = vmatprep.subr.mxu0 0.0
    %3611 = vmatpush1.msra.mxu0 0.0
    %3612 = vmatprep.subr.mxu0 0.0
    %3613 = vmatpush1.msra.mxu0 0.0
    %3614 = vmatprep.subr.mxu0 0.0
    %3615 = vmatpush1.msra.mxu0 0.0
    %3616 = vmatprep.mubr.f32.mxu0 0.0
    %3617 = vmatmul.mubr.f32.gmra.mrb[0].mxu0 %v1587
    %v3618 = vpop.f32.mrb[0].mxu0
    %v3619 = vadd.f32 0.0, %v3618
    %v3620 = vpop.f32.mrb[0].mxu0
    %3621 = vmatprep.mubr.f32.mxu0 0.0
    %3622 = vmatmul.mubr.f32.gmra.mrb[0].mxu0 %v1590
    %v3623 = vpop.f32.mrb[0].mxu0
    %v3624 = vadd.f32 0.0, %v3623
    %v3625 = vpop.f32.mrb[0].mxu0
    %3626 = vdwg.mxu0
    %3627 = vmatprep.subr.mxu0 0.0
    %3628 = vmatpush1.msra.mxu0 %v2754
    %3629 = vmatprep.subr.mxu0 0.0
    %3630 = vmatpush1.msra.mxu0 %v2759
    %3631 = vmatprep.subr.mxu0 0.0
    %3632 = vmatpush1.msra.mxu0 0.0
    %3633 = vmatprep.subr.mxu0 0.0
    %3634 = vmatpush1.msra.mxu0 0.0
    %3635 = vmatprep.subr.mxu0 0.0
    %3636 = vmatpush1.msra.mxu0 0.0
    %3637 = vmatprep.subr.mxu0 0.0
    %3638 = vmatpush1.msra.mxu0 0.0
    %3639 = vmatprep.subr.mxu0 0.0
    %3640 = vmatpush1.msra.mxu0 0.0
    %3641 = vmatprep.subr.mxu0 0.0
    %3642 = vmatpush1.msra.mxu0 0.0
    %3643 = vmatprep.subr.mxu0 0.0
    %3644 = vmatpush1.msra.mxu0 0.0
    %3645 = vmatprep.subr.mxu0 0.0
    %3646 = vmatpush1.msra.mxu0 0.0
    %3647 = vmatprep.subr.mxu0 0.0
    %3648 = vmatpush1.msra.mxu0 0.0
    %3649 = vmatprep.subr.mxu0 0.0
    %3650 = vmatpush1.msra.mxu0 0.0
    %3651 = vmatprep.subr.mxu0 0.0
    %3652 = vmatpush1.msra.mxu0 0.0
    %3653 = vmatprep.subr.mxu0 0.0
    %3654 = vmatpush1.msra.mxu0 0.0
    %3655 = vmatprep.subr.mxu0 0.0
    %3656 = vmatpush1.msra.mxu0 0.0
    %3657 = vmatprep.subr.mxu0 0.0
    %3658 = vmatpush1.msra.mxu0 0.0
    %3659 = vmatprep.subr.mxu0 0.0
    %3660 = vmatpush1.msra.mxu0 0.0
    %3661 = vmatprep.subr.mxu0 0.0
    %3662 = vmatpush1.msra.mxu0 0.0
    %3663 = vmatprep.subr.mxu0 0.0
    %3664 = vmatpush1.msra.mxu0 0.0
    %3665 = vmatprep.subr.mxu0 0.0
    %3666 = vmatpush1.msra.mxu0 0.0
    %3667 = vmatprep.subr.mxu0 0.0
    %3668 = vmatpush1.msra.mxu0 0.0
    %3669 = vmatprep.subr.mxu0 0.0
    %3670 = vmatpush1.msra.mxu0 0.0
    %3671 = vmatprep.subr.mxu0 0.0
    %3672 = vmatpush1.msra.mxu0 0.0
    %3673 = vmatprep.subr.mxu0 0.0
    %3674 = vmatpush1.msra.mxu0 0.0
    %3675 = vmatprep.subr.mxu0 0.0
    %3676 = vmatpush1.msra.mxu0 0.0
    %3677 = vmatprep.subr.mxu0 0.0
    %3678 = vmatpush1.msra.mxu0 0.0
    %3679 = vmatprep.subr.mxu0 0.0
    %3680 = vmatpush1.msra.mxu0 0.0
    %3681 = vmatprep.subr.mxu0 0.0
    %3682 = vmatpush1.msra.mxu0 0.0
    %3683 = vmatprep.subr.mxu0 0.0
    %3684 = vmatpush1.msra.mxu0 0.0
    %3685 = vmatprep.subr.mxu0 0.0
    %3686 = vmatpush1.msra.mxu0 0.0
    %3687 = vmatprep.subr.mxu0 0.0
    %3688 = vmatpush1.msra.mxu0 0.0
    %3689 = vmatprep.subr.mxu0 0.0
    %3690 = vmatpush1.msra.mxu0 0.0
    %3691 = vmatprep.mubr.f32.mxu0 0.0
    %3692 = vmatmul.mubr.f32.gmra.mrb[0].mxu0 %v1668
    %v3693 = vpop.f32.mrb[0].mxu0
    %v3694 = vadd.f32 0.0, %v3693
    %v3695 = vpop.f32.mrb[0].mxu0
    %3696 = vmatprep.mubr.f32.mxu0 0.0
    %3697 = vmatmul.mubr.f32.gmra.mrb[0].mxu0 %v1671
    %v3698 = vpop.f32.mrb[0].mxu0
    %v3699 = vadd.f32 0.0, %v3698
    %v3700 = vpop.f32.mrb[0].mxu0
    %3701 = vdwg.mxu0
    %3702 = vmatprep.subr.mxu0 0.0
    %3703 = vmatpush1.msra.mxu0 %v2764
    %3704 = vmatprep.subr.mxu0 0.0
    %3705 = vmatpush1.msra.mxu0 %v2769
    %3706 = vmatprep.subr.mxu0 0.0
    %3707 = vmatpush1.msra.mxu0 0.0
    %3708 = vmatprep.subr.mxu0 0.0
    %3709 = vmatpush1.msra.mxu0 0.0
    %3710 = vmatprep.subr.mxu0 0.0
    %3711 = vmatpush1.msra.mxu0 0.0
    %3712 = vmatprep.subr.mxu0 0.0
    %3713 = vmatpush1.msra.mxu0 0.0
    %3714 = vmatprep.subr.mxu0 0.0
    %3715 = vmatpush1.msra.mxu0 0.0
    %3716 = vmatprep.subr.mxu0 0.0
    %3717 = vmatpush1.msra.mxu0 0.0
    %3718 = vmatprep.subr.mxu0 0.0
    %3719 = vmatpush1.msra.mxu0 0.0
    %3720 = vmatprep.subr.mxu0 0.0
    %3721 = vmatpush1.msra.mxu0 0.0
    %3722 = vmatprep.subr.mxu0 0.0
    %3723 = vmatpush1.msra.mxu0 0.0
    %3724 = vmatprep.subr.mxu0 0.0
    %3725 = vmatpush1.msra.mxu0 0.0
    %3726 = vmatprep.subr.mxu0 0.0
    %3727 = vmatpush1.msra.mxu0 0.0
    %3728 = vmatprep.subr.mxu0 0.0
    %3729 = vmatpush1.msra.mxu0 0.0
    %3730 = vmatprep.subr.mxu0 0.0
    %3731 = vmatpush1.msra.mxu0 0.0
    %3732 = vmatprep.subr.mxu0 0.0
    %3733 = vmatpush1.msra.mxu0 0.0
    %3734 = vmatprep.subr.mxu0 0.0
    %3735 = vmatpush1.msra.mxu0 0.0
    %3736 = vmatprep.subr.mxu0 0.0
    %3737 = vmatpush1.msra.mxu0 0.0
    %3738 = vmatprep.subr.mxu0 0.0
    %3739 = vmatpush1.msra.mxu0 0.0
    %3740 = vmatprep.subr.mxu0 0.0
    %3741 = vmatpush1.msra.mxu0 0.0
    %3742 = vmatprep.subr.mxu0 0.0
    %3743 = vmatpush1.msra.mxu0 0.0
    %3744 = vmatprep.subr.mxu0 0.0
    %3745 = vmatpush1.msra.mxu0 0.0
    %3746 = vmatprep.subr.mxu0 0.0
    %3747 = vmatpush1.msra.mxu0 0.0
    %3748 = vmatprep.subr.mxu0 0.0
    %3749 = vmatpush1.msra.mxu0 0.0
    %3750 = vmatprep.subr.mxu0 0.0
    %3751 = vmatpush1.msra.mxu0 0.0
    %3752 = vmatprep.subr.mxu0 0.0
    %3753 = vmatpush1.msra.mxu0 0.0
    %3754 = vmatprep.subr.mxu0 0.0
    %3755 = vmatpush1.msra.mxu0 0.0
    %3756 = vmatprep.subr.mxu0 0.0
    %3757 = vmatpush1.msra.mxu0 0.0
    %3758 = vmatprep.subr.mxu0 0.0
    %3759 = vmatpush1.msra.mxu0 0.0
    %3760 = vmatprep.subr.mxu0 0.0
    %3761 = vmatpush1.msra.mxu0 0.0
    %3762 = vmatprep.subr.mxu0 0.0
    %3763 = vmatpush1.msra.mxu0 0.0
    %3764 = vmatprep.subr.mxu0 0.0
    %3765 = vmatpush1.msra.mxu0 0.0
    %3766 = vmatprep.mubr.f32.mxu0 0.0
    %3767 = vmatmul.mubr.f32.gmra.mrb[0].mxu0 %v1749
    %v3768 = vpop.f32.mrb[0].mxu0
    %v3769 = vadd.f32 0.0, %v3768
    %v3770 = vpop.f32.mrb[0].mxu0
    %3771 = vmatprep.mubr.f32.mxu0 0.0
    %3772 = vmatmul.mubr.f32.gmra.mrb[0].mxu0 %v1752
    %v3773 = vpop.f32.mrb[0].mxu0
    %v3774 = vadd.f32 0.0, %v3773
    %v3775 = vpop.f32.mrb[0].mxu0
    %3776 = vdwg.mxu0
    %3777 = vmatprep.subr.mxu0 0.0
    %3778 = vmatpush1.msra.mxu0 %v2774
    %3779 = vmatprep.subr.mxu0 0.0
    %3780 = vmatpush1.msra.mxu0 %v2779
    %3781 = vmatprep.subr.mxu0 0.0
    %3782 = vmatpush1.msra.mxu0 0.0
    %3783 = vmatprep.subr.mxu0 0.0
    %3784 = vmatpush1.msra.mxu0 0.0
    %3785 = vmatprep.subr.mxu0 0.0
    %3786 = vmatpush1.msra.mxu0 0.0
    %3787 = vmatprep.subr.mxu0 0.0
    %3788 = vmatpush1.msra.mxu0 0.0
    %3789 = vmatprep.subr.mxu0 0.0
    %3790 = vmatpush1.msra.mxu0 0.0
    %3791 = vmatprep.subr.mxu0 0.0
    %3792 = vmatpush1.msra.mxu0 0.0
    %3793 = vmatprep.subr.mxu0 0.0
    %3794 = vmatpush1.msra.mxu0 0.0
    %3795 = vmatprep.subr.mxu0 0.0
    %3796 = vmatpush1.msra.mxu0 0.0
    %3797 = vmatprep.subr.mxu0 0.0
    %3798 = vmatpush1.msra.mxu0 0.0
    %3799 = vmatprep.subr.mxu0 0.0
    %3800 = vmatpush1.msra.mxu0 0.0
    %3801 = vmatprep.subr.mxu0 0.0
    %3802 = vmatpush1.msra.mxu0 0.0
    %3803 = vmatprep.subr.mxu0 0.0
    %3804 = vmatpush1.msra.mxu0 0.0
    %3805 = vmatprep.subr.mxu0 0.0
    %3806 = vmatpush1.msra.mxu0 0.0
    %3807 = vmatprep.subr.mxu0 0.0
    %3808 = vmatpush1.msra.mxu0 0.0
    %3809 = vmatprep.subr.mxu0 0.0
    %3810 = vmatpush1.msra.mxu0 0.0
    %3811 = vmatprep.subr.mxu0 0.0
    %3812 = vmatpush1.msra.mxu0 0.0
    %3813 = vmatprep.subr.mxu0 0.0
    %3814 = vmatpush1.msra.mxu0 0.0
    %3815 = vmatprep.subr.mxu0 0.0
    %3816 = vmatpush1.msra.mxu0 0.0
    %3817 = vmatprep.subr.mxu0 0.0
    %3818 = vmatpush1.msra.mxu0 0.0
    %3819 = vmatprep.subr.mxu0 0.0
    %3820 = vmatpush1.msra.mxu0 0.0
    %3821 = vmatprep.subr.mxu0 0.0
    %3822 = vmatpush1.msra.mxu0 0.0
    %3823 = vmatprep.subr.mxu0 0.0
    %3824 = vmatpush1.msra.mxu0 0.0
    %3825 = vmatprep.subr.mxu0 0.0
    %3826 = vmatpush1.msra.mxu0 0.0
    %3827 = vmatprep.subr.mxu0 0.0
    %3828 = vmatpush1.msra.mxu0 0.0
    %3829 = vmatprep.subr.mxu0 0.0
    %3830 = vmatpush1.msra.mxu0 0.0
    %3831 = vmatprep.subr.mxu0 0.0
    %3832 = vmatpush1.msra.mxu0 0.0
    %3833 = vmatprep.subr.mxu0 0.0
    %3834 = vmatpush1.msra.mxu0 0.0
    %3835 = vmatprep.subr.mxu0 0.0
    %3836 = vmatpush1.msra.mxu0 0.0
    %3837 = vmatprep.subr.mxu0 0.0
    %3838 = vmatpush1.msra.mxu0 0.0
    %3839 = vmatprep.subr.mxu0 0.0
    %3840 = vmatpush1.msra.mxu0 0.0
    %3841 = vmatprep.mubr.f32.mxu0 0.0
    %3842 = vmatmul.mubr.f32.gmra.mrb[0].mxu0 %v1830
    %v3843 = vpop.f32.mrb[0].mxu0
    %v3844 = vadd.f32 0.0, %v3843
    %v3845 = vpop.f32.mrb[0].mxu0
    %3846 = vmatprep.mubr.f32.mxu0 0.0
    %3847 = vmatmul.mubr.f32.gmra.mrb[0].mxu0 %v1833
    %v3848 = vpop.f32.mrb[0].mxu0
    %v3849 = vadd.f32 0.0, %v3848
    %v3850 = vpop.f32.mrb[0].mxu0
    %3851 = vdwg.mxu0
    %3852 = vmatprep.subr.mxu0 0.0
    %3853 = vmatpush1.msra.mxu0 %v2784
    %3854 = vmatprep.subr.mxu0 0.0
    %3855 = vmatpush1.msra.mxu0 %v2789
    %3856 = vmatprep.subr.mxu0 0.0
    %3857 = vmatpush1.msra.mxu0 0.0
    %3858 = vmatprep.subr.mxu0 0.0
    %3859 = vmatpush1.msra.mxu0 0.0
    %3860 = vmatprep.subr.mxu0 0.0
    %3861 = vmatpush1.msra.mxu0 0.0
    %3862 = vmatprep.subr.mxu0 0.0
    %3863 = vmatpush1.msra.mxu0 0.0
    %3864 = vmatprep.subr.mxu0 0.0
    %3865 = vmatpush1.msra.mxu0 0.0
    %3866 = vmatprep.subr.mxu0 0.0
    %3867 = vmatpush1.msra.mxu0 0.0
    %3868 = vmatprep.subr.mxu0 0.0
    %3869 = vmatpush1.msra.mxu0 0.0
    %3870 = vmatprep.subr.mxu0 0.0
    %3871 = vmatpush1.msra.mxu0 0.0
    %3872 = vmatprep.subr.mxu0 0.0
    %3873 = vmatpush1.msra.mxu0 0.0
    %3874 = vmatprep.subr.mxu0 0.0
    %3875 = vmatpush1.msra.mxu0 0.0
    %3876 = vmatprep.subr.mxu0 0.0
    %3877 = vmatpush1.msra.mxu0 0.0
    %3878 = vmatprep.subr.mxu0 0.0
    %3879 = vmatpush1.msra.mxu0 0.0
    %3880 = vmatprep.subr.mxu0 0.0
    %3881 = vmatpush1.msra.mxu0 0.0
    %3882 = vmatprep.subr.mxu0 0.0
    %3883 = vmatpush1.msra.mxu0 0.0
    %3884 = vmatprep.subr.mxu0 0.0
    %3885 = vmatpush1.msra.mxu0 0.0
    %3886 = vmatprep.subr.mxu0 0.0
    %3887 = vmatpush1.msra.mxu0 0.0
    %3888 = vmatprep.subr.mxu0 0.0
    %3889 = vmatpush1.msra.mxu0 0.0
    %3890 = vmatprep.subr.mxu0 0.0
    %3891 = vmatpush1.msra.mxu0 0.0
    %3892 = vmatprep.subr.mxu0 0.0
    %3893 = vmatpush1.msra.mxu0 0.0
    %3894 = vmatprep.subr.mxu0 0.0
    %3895 = vmatpush1.msra.mxu0 0.0
    %3896 = vmatprep.subr.mxu0 0.0
    %3897 = vmatpush1.msra.mxu0 0.0
    %3898 = vmatprep.subr.mxu0 0.0
    %3899 = vmatpush1.msra.mxu0 0.0
    %3900 = vmatprep.subr.mxu0 0.0
    %3901 = vmatpush1.msra.mxu0 0.0
    %3902 = vmatprep.subr.mxu0 0.0
    %3903 = vmatpush1.msra.mxu0 0.0
    %3904 = vmatprep.subr.mxu0 0.0
    %3905 = vmatpush1.msra.mxu0 0.0
    %3906 = vmatprep.subr.mxu0 0.0
    %3907 = vmatpush1.msra.mxu0 0.0
    %3908 = vmatprep.subr.mxu0 0.0
    %3909 = vmatpush1.msra.mxu0 0.0
    %3910 = vmatprep.subr.mxu0 0.0
    %3911 = vmatpush1.msra.mxu0 0.0
    %3912 = vmatprep.subr.mxu0 0.0
    %3913 = vmatpush1.msra.mxu0 0.0
    %3914 = vmatprep.subr.mxu0 0.0
    %3915 = vmatpush1.msra.mxu0 0.0
    %3916 = vmatprep.mubr.f32.mxu0 0.0
    %3917 = vmatmul.mubr.f32.gmra.mrb[0].mxu0 %v1911
    %v3918 = vpop.f32.mrb[0].mxu0
    %v3919 = vadd.f32 0.0, %v3918
    %v3920 = vpop.f32.mrb[0].mxu0
    %3921 = vmatprep.mubr.f32.mxu0 0.0
    %3922 = vmatmul.mubr.f32.gmra.mrb[0].mxu0 %v1914
    %v3923 = vpop.f32.mrb[0].mxu0
    %v3924 = vadd.f32 0.0, %v3923
    %v3925 = vpop.f32.mrb[0].mxu0
    %3926 = vdwg.mxu0
    %3927 = vmatprep.subr.mxu0 0.0
    %3928 = vmatpush1.msra.mxu0 %v2794
    %3929 = vmatprep.subr.mxu0 0.0
    %3930 = vmatpush1.msra.mxu0 %v2799
    %3931 = vmatprep.subr.mxu0 0.0
    %3932 = vmatpush1.msra.mxu0 0.0
    %3933 = vmatprep.subr.mxu0 0.0
    %3934 = vmatpush1.msra.mxu0 0.0
    %3935 = vmatprep.subr.mxu0 0.0
    %3936 = vmatpush1.msra.mxu0 0.0
    %3937 = vmatprep.subr.mxu0 0.0
    %3938 = vmatpush1.msra.mxu0 0.0
    %3939 = vmatprep.subr.mxu0 0.0
    %3940 = vmatpush1.msra.mxu0 0.0
    %3941 = vmatprep.subr.mxu0 0.0
    %3942 = vmatpush1.msra.mxu0 0.0
    %3943 = vmatprep.subr.mxu0 0.0
    %3944 = vmatpush1.msra.mxu0 0.0
    %3945 = vmatprep.subr.mxu0 0.0
    %3946 = vmatpush1.msra.mxu0 0.0
    %3947 = vmatprep.subr.mxu0 0.0
    %3948 = vmatpush1.msra.mxu0 0.0
    %3949 = vmatprep.subr.mxu0 0.0
    %3950 = vmatpush1.msra.mxu0 0.0
    %3951 = vmatprep.subr.mxu0 0.0
    %3952 = vmatpush1.msra.mxu0 0.0
    %3953 = vmatprep.subr.mxu0 0.0
    %3954 = vmatpush1.msra.mxu0 0.0
    %3955 = vmatprep.subr.mxu0 0.0
    %3956 = vmatpush1.msra.mxu0 0.0
    %3957 = vmatprep.subr.mxu0 0.0
    %3958 = vmatpush1.msra.mxu0 0.0
    %3959 = vmatprep.subr.mxu0 0.0
    %3960 = vmatpush1.msra.mxu0 0.0
    %3961 = vmatprep.subr.mxu0 0.0
    %3962 = vmatpush1.msra.mxu0 0.0
    %3963 = vmatprep.subr.mxu0 0.0
    %3964 = vmatpush1.msra.mxu0 0.0
    %3965 = vmatprep.subr.mxu0 0.0
    %3966 = vmatpush1.msra.mxu0 0.0
    %3967 = vmatprep.subr.mxu0 0.0
    %3968 = vmatpush1.msra.mxu0 0.0
    %3969 = vmatprep.subr.mxu0 0.0
    %3970 = vmatpush1.msra.mxu0 0.0
    %3971 = vmatprep.subr.mxu0 0.0
    %3972 = vmatpush1.msra.mxu0 0.0
    %3973 = vmatprep.subr.mxu0 0.0
    %3974 = vmatpush1.msra.mxu0 0.0
    %3975 = vmatprep.subr.mxu0 0.0
    %3976 = vmatpush1.msra.mxu0 0.0
    %3977 = vmatprep.subr.mxu0 0.0
    %3978 = vmatpush1.msra.mxu0 0.0
    %3979 = vmatprep.subr.mxu0 0.0
    %3980 = vmatpush1.msra.mxu0 0.0
    %3981 = vmatprep.subr.mxu0 0.0
    %3982 = vmatpush1.msra.mxu0 0.0
    %3983 = vmatprep.subr.mxu0 0.0
    %3984 = vmatpush1.msra.mxu0 0.0
    %3985 = vmatprep.subr.mxu0 0.0
    %3986 = vmatpush1.msra.mxu0 0.0
    %3987 = vmatprep.subr.mxu0 0.0
    %3988 = vmatpush1.msra.mxu0 0.0
    %3989 = vmatprep.subr.mxu0 0.0
    %3990 = vmatpush1.msra.mxu0 0.0
    %3991 = vmatprep.mubr.f32.mxu0 0.0
    %3992 = vmatmul.mubr.f32.gmra.mrb[0].mxu0 %v1992
    %v3993 = vpop.f32.mrb[0].mxu0
    %v3994 = vadd.f32 0.0, %v3993
    %v3995 = vpop.f32.mrb[0].mxu0
    %3996 = vmatprep.mubr.f32.mxu0 0.0
    %3997 = vmatmul.mubr.f32.gmra.mrb[0].mxu0 %v1995
    %v3998 = vpop.f32.mrb[0].mxu0
    %v3999 = vadd.f32 0.0, %v3998
    %v4000 = vpop.f32.mrb[0].mxu0
    %4001 = vdwg.mxu0
    %vm4002 = vcmp.gt.f32.partialorder %v2869, 0.0
    %vm4003 = vcmp.gt.f32.partialorder %v2874, 0.0
    %vm4004 = vcmp.gt.f32.partialorder %v2944, 0.0
    %vm4005 = vcmp.gt.f32.partialorder %v2949, 0.0
    %vm4006 = vcmp.gt.f32.partialorder %v3019, 0.0
    %vm4007 = vcmp.gt.f32.partialorder %v3024, 0.0
    %vm4008 = vcmp.gt.f32.partialorder %v3094, 0.0
    %vm4009 = vcmp.gt.f32.partialorder %v3099, 0.0
    %vm4010 = vcmp.gt.f32.partialorder %v3169, 0.0
    %vm4011 = vcmp.gt.f32.partialorder %v3174, 0.0
    %vm4012 = vcmp.gt.f32.partialorder %v3244, 0.0
    %vm4013 = vcmp.gt.f32.partialorder %v3249, 0.0
    %vm4014 = vcmp.gt.f32.partialorder %v3319, 0.0
    %vm4015 = vcmp.gt.f32.partialorder %v3324, 0.0
    %vm4016 = vcmp.gt.f32.partialorder %v3394, 0.0
    %vm4017 = vcmp.gt.f32.partialorder %v3399, 0.0
    %vm4018 = vcmp.gt.f32.partialorder %v3469, 0.0
    %vm4019 = vcmp.gt.f32.partialorder %v3474, 0.0
    %vm4020 = vcmp.gt.f32.partialorder %v3544, 0.0
    %vm4021 = vcmp.gt.f32.partialorder %v3549, 0.0
    %vm4022 = vcmp.gt.f32.partialorder %v3619, 0.0
    %vm4023 = vcmp.gt.f32.partialorder %v3624, 0.0
    %vm4024 = vcmp.gt.f32.partialorder %v3694, 0.0
    %vm4025 = vcmp.gt.f32.partialorder %v3699, 0.0
    %vm4026 = vcmp.gt.f32.partialorder %v3769, 0.0
    %vm4027 = vcmp.gt.f32.partialorder %v3774, 0.0
    %vm4028 = vcmp.gt.f32.partialorder %v3844, 0.0
    %vm4029 = vcmp.gt.f32.partialorder %v3849, 0.0
    %vm4030 = vcmp.gt.f32.partialorder %v3919, 0.0
    %vm4031 = vcmp.gt.f32.partialorder %v3924, 0.0
    %vm4032 = vcmp.gt.f32.partialorder %v3994, 0.0
    %vm4033 = vcmp.gt.f32.partialorder %v3999, 0.0
    %v4034 = vmul.f32 %v2869, 0.01
    %v4035 = vmul.f32 %v2874, 0.01
    %v4036 = vmul.f32 %v2944, 0.01
    %v4037 = vmul.f32 %v2949, 0.01
    %v4038 = vmul.f32 %v3019, 0.01
    %v4039 = vmul.f32 %v3024, 0.01
    %v4040 = vmul.f32 %v3094, 0.01
    %v4041 = vmul.f32 %v3099, 0.01
    %v4042 = vmul.f32 %v3169, 0.01
    %v4043 = vmul.f32 %v3174, 0.01
    %v4044 = vmul.f32 %v3244, 0.01
    %v4045 = vmul.f32 %v3249, 0.01
    %v4046 = vmul.f32 %v3319, 0.01
    %v4047 = vmul.f32 %v3324, 0.01
    %v4048 = vmul.f32 %v3394, 0.01
    %v4049 = vmul.f32 %v3399, 0.01
    %v4050 = vmul.f32 %v3469, 0.01
    %v4051 = vmul.f32 %v3474, 0.01
    %v4052 = vmul.f32 %v3544, 0.01
    %v4053 = vmul.f32 %v3549, 0.01
    %v4054 = vmul.f32 %v3619, 0.01
    %v4055 = vmul.f32 %v3624, 0.01
    %v4056 = vmul.f32 %v3694, 0.01
    %v4057 = vmul.f32 %v3699, 0.01
    %v4058 = vmul.f32 %v3769, 0.01
    %v4059 = vmul.f32 %v3774, 0.01
    %v4060 = vmul.f32 %v3844, 0.01
    %v4061 = vmul.f32 %v3849, 0.01
    %v4062 = vmul.f32 %v3919, 0.01
    %v4063 = vmul.f32 %v3924, 0.01
    %v4064 = vmul.f32 %v3994, 0.01
    %v4065 = vmul.f32 %v3999, 0.01
    %v4066 = vsel %vm4002, %v2869, %v4034
    %v4067 = vsel %vm4003, %v2874, %v4035
    %v4068 = vsel %vm4004, %v2944, %v4036
    %v4069 = vsel %vm4005, %v2949, %v4037
    %v4070 = vsel %vm4006, %v3019, %v4038
    %v4071 = vsel %vm4007, %v3024, %v4039
    %v4072 = vsel %vm4008, %v3094, %v4040
    %v4073 = vsel %vm4009, %v3099, %v4041
    %v4074 = vsel %vm4010, %v3169, %v4042
    %v4075 = vsel %vm4011, %v3174, %v4043
    %v4076 = vsel %vm4012, %v3244, %v4044
    %v4077 = vsel %vm4013, %v3249, %v4045
    %v4078 = vsel %vm4014, %v3319, %v4046
    %v4079 = vsel %vm4015, %v3324, %v4047
    %v4080 = vsel %vm4016, %v3394, %v4048
    %v4081 = vsel %vm4017, %v3399, %v4049
    %v4082 = vsel %vm4018, %v3469, %v4050
    %v4083 = vsel %vm4019, %v3474, %v4051
    %v4084 = vsel %vm4020, %v3544, %v4052
    %v4085 = vsel %vm4021, %v3549, %v4053
    %v4086 = vsel %vm4022, %v3619, %v4054
    %v4087 = vsel %vm4023, %v3624, %v4055
    %v4088 = vsel %vm4024, %v3694, %v4056
    %v4089 = vsel %vm4025, %v3699, %v4057
    %v4090 = vsel %vm4026, %v3769, %v4058
    %v4091 = vsel %vm4027, %v3774, %v4059
    %v4092 = vsel %vm4028, %v3844, %v4060
    %v4093 = vsel %vm4029, %v3849, %v4061
    %v4094 = vsel %vm4030, %v3919, %v4062
    %v4095 = vsel %vm4031, %v3924, %v4063
    %v4096 = vsel %vm4032, %v3994, %v4064
    %v4097 = vsel %vm4033, %v3999, %v4065
    %v4098 = vadd.f32 %v4066, %v2168
    %v4099 = vadd.f32 %v4067, %v2169
    %v4100 = vadd.f32 %v4068, %v2170
    %v4101 = vadd.f32 %v4069, %v2171
    %v4102 = vadd.f32 %v4070, %v2172
    %v4103 = vadd.f32 %v4071, %v2173
    %v4104 = vadd.f32 %v4072, %v2174
    %v4105 = vadd.f32 %v4073, %v2175
    %v4106 = vadd.f32 %v4074, %v2176
    %v4107 = vadd.f32 %v4075, %v2177
    %v4108 = vadd.f32 %v4076, %v2178
    %v4109 = vadd.f32 %v4077, %v2179
    %v4110 = vadd.f32 %v4078, %v2180
    %v4111 = vadd.f32 %v4079, %v2181
    %v4112 = vadd.f32 %v4080, %v2182
    %v4113 = vadd.f32 %v4081, %v2183
    %v4114 = vadd.f32 %v4082, %v2184
    %v4115 = vadd.f32 %v4083, %v2185
    %v4116 = vadd.f32 %v4084, %v2186
    %v4117 = vadd.f32 %v4085, %v2187
    %v4118 = vadd.f32 %v4086, %v2188
    %v4119 = vadd.f32 %v4087, %v2189
    %v4120 = vadd.f32 %v4088, %v2190
    %v4121 = vadd.f32 %v4089, %v2191
    %v4122 = vadd.f32 %v4090, %v2192
    %v4123 = vadd.f32 %v4091, %v2193
    %v4124 = vadd.f32 %v4092, %v2194
    %v4125 = vadd.f32 %v4093, %v2195
    %v4126 = vadd.f32 %v4094, %v2196
    %v4127 = vadd.f32 %v4095, %v2197
    %v4128 = vadd.f32 %v4096, %v2198
    %v4129 = vadd.f32 %v4097, %v2199
    %v4130 = vld [vmem:[%s4] sm:$0xff]
    %v4131 = vld [vmem:[%s4 + $0x8] sm:$0xff]
    %v4132 = vld [vmem:[%s4 + $0x10] sm:$0xff]
    %v4133 = vld [vmem:[%s4 + $0x18] sm:$0xff]
    %v4134 = vld [vmem:[%s4 + $0x20] sm:$0xff]
    %v4135 = vld [vmem:[%s4 + $0x28] sm:$0xff]
    %v4136 = vld [vmem:[%s4 + $0x30] sm:$0xff]
    %v4137 = vld [vmem:[%s4 + $0x38] sm:$0xff]
    %v4138 = vld [vmem:[%s4 + $0x40] sm:$0xff]
    %v4139 = vld [vmem:[%s4 + $0x48] sm:$0xff]
    %v4140 = vld [vmem:[%s4 + $0x50] sm:$0xff]
    %v4141 = vld [vmem:[%s4 + $0x58] sm:$0xff]
    %v4142 = vld [vmem:[%s4 + $0x60] sm:$0xff]
    %v4143 = vld [vmem:[%s4 + $0x68] sm:$0xff]
    %v4144 = vld [vmem:[%s4 + $0x70] sm:$0xff]
    %v4145 = vld [vmem:[%s4 + $0x78] sm:$0xff]
    %4146 = vmatprep.subr.mxu0 0.0
    %4147 = vmatpush1.msra.mxu0 %v4130
    %4148 = vmatprep.subr.mxu0 0.0
    %4149 = vmatpush1.msra.mxu0 %v4131
    %4150 = vmatprep.subr.mxu0 0.0
    %4151 = vmatpush1.msra.mxu0 %v4132
    %4152 = vmatprep.subr.mxu0 0.0
    %4153 = vmatpush1.msra.mxu0 %v4133
    %4154 = vmatprep.subr.mxu0 0.0
    %4155 = vmatpush1.msra.mxu0 %v4134
    %4156 = vmatprep.subr.mxu0 0.0
    %4157 = vmatpush1.msra.mxu0 %v4135
    %4158 = vmatprep.subr.mxu0 0.0
    %4159 = vmatpush1.msra.mxu0 %v4136
    %4160 = vmatprep.subr.mxu0 0.0
    %4161 = vmatpush1.msra.mxu0 %v4137
    %4162 = vmatprep.subr.mxu0 0.0
    %4163 = vmatpush1.msra.mxu0 %v4138
    %4164 = vmatprep.subr.mxu0 0.0
    %4165 = vmatpush1.msra.mxu0 %v4139
    %4166 = vmatprep.subr.mxu0 0.0
    %4167 = vmatpush1.msra.mxu0 %v4140
    %4168 = vmatprep.subr.mxu0 0.0
    %4169 = vmatpush1.msra.mxu0 %v4141
    %4170 = vmatprep.subr.mxu0 0.0
    %4171 = vmatpush1.msra.mxu0 %v4142
    %4172 = vmatprep.subr.mxu0 0.0
    %4173 = vmatpush1.msra.mxu0 %v4143
    %4174 = vmatprep.subr.mxu0 0.0
    %4175 = vmatpush1.msra.mxu0 %v4144
    %4176 = vmatprep.subr.mxu0 0.0
    %4177 = vmatpush1.msra.mxu0 %v4145
    %4178 = vmatprep.subr.mxu0 0.0
    %4179 = vmatpush1.msra.mxu0 0.0
    %4180 = vmatprep.subr.mxu0 0.0
    %4181 = vmatpush1.msra.mxu0 0.0
    %4182 = vmatprep.subr.mxu0 0.0
    %4183 = vmatpush1.msra.mxu0 0.0
    %4184 = vmatprep.subr.mxu0 0.0
    %4185 = vmatpush1.msra.mxu0 0.0
    %4186 = vmatprep.subr.mxu0 0.0
    %4187 = vmatpush1.msra.mxu0 0.0
    %4188 = vmatprep.subr.mxu0 0.0
    %4189 = vmatpush1.msra.mxu0 0.0
    %4190 = vmatprep.subr.mxu0 0.0
    %4191 = vmatpush1.msra.mxu0 0.0
    %4192 = vmatprep.subr.mxu0 0.0
    %4193 = vmatpush1.msra.mxu0 0.0
    %4194 = vmatprep.subr.mxu0 0.0
    %4195 = vmatpush1.msra.mxu0 0.0
    %4196 = vmatprep.subr.mxu0 0.0
    %4197 = vmatpush1.msra.mxu0 0.0
    %4198 = vmatprep.subr.mxu0 0.0
    %4199 = vmatpush1.msra.mxu0 0.0
    %4200 = vmatprep.subr.mxu0 0.0
    %4201 = vmatpush1.msra.mxu0 0.0
    %4202 = vmatprep.subr.mxu0 0.0
    %4203 = vmatpush1.msra.mxu0 0.0
    %4204 = vmatprep.subr.mxu0 0.0
    %4205 = vmatpush1.msra.mxu0 0.0
    %4206 = vmatprep.subr.mxu0 0.0
    %4207 = vmatpush1.msra.mxu0 0.0
    %4208 = vmatprep.subr.mxu0 0.0
    %4209 = vmatpush1.msra.mxu0 0.0
    %4210 = vmatprep.mubr.f32.mxu0 0.0
    %4211 = vmatmul.mubr.f32.gmra.mrb[0].mxu0 %v4098
    %v4212 = vpop.f32.mrb[0].mxu0
    %v4213 = vadd.f32 0.0, %v4212
    %v4214 = vpop.f32.mrb[0].mxu0
    %4215 = vmatprep.mubr.f32.mxu0 0.0
    %4216 = vmatmul.mubr.f32.gmra.mrb[0].mxu0 %v4099
    %v4217 = vpop.f32.mrb[0].mxu0
    %v4218 = vadd.f32 0.0, %v4217
    %v4219 = vpop.f32.mrb[0].mxu0
    %4220 = vmatprep.mubr.f32.mxu0 0.0
    %4221 = vmatmul.mubr.f32.gmra.mrb[0].mxu0 %v4100
    %v4222 = vpop.f32.mrb[0].mxu0
    %v4223 = vadd.f32 0.0, %v4222
    %v4224 = vpop.f32.mrb[0].mxu0
    %4225 = vmatprep.mubr.f32.mxu0 0.0
    %4226 = vmatmul.mubr.f32.gmra.mrb[0].mxu0 %v4101
    %v4227 = vpop.f32.mrb[0].mxu0
    %v4228 = vadd.f32 0.0, %v4227
    %v4229 = vpop.f32.mrb[0].mxu0
    %4230 = vmatprep.mubr.f32.mxu0 0.0
    %4231 = vmatmul.mubr.f32.gmra.mrb[0].mxu0 %v4102
    %v4232 = vpop.f32.mrb[0].mxu0
    %v4233 = vadd.f32 0.0, %v4232
    %v4234 = vpop.f32.mrb[0].mxu0
    %4235 = vmatprep.mubr.f32.mxu0 0.0
    %4236 = vmatmul.mubr.f32.gmra.mrb[0].mxu0 %v4103
    %v4237 = vpop.f32.mrb[0].mxu0
    %v4238 = vadd.f32 0.0, %v4237
    %v4239 = vpop.f32.mrb[0].mxu0
    %4240 = vmatprep.mubr.f32.mxu0 0.0
    %4241 = vmatmul.mubr.f32.gmra.mrb[0].mxu0 %v4104
    %v4242 = vpop.f32.mrb[0].mxu0
    %v4243 = vadd.f32 0.0, %v4242
    %v4244 = vpop.f32.mrb[0].mxu0
    %4245 = vmatprep.mubr.f32.mxu0 0.0
    %4246 = vmatmul.mubr.f32.gmra.mrb[0].mxu0 %v4105
    %v4247 = vpop.f32.mrb[0].mxu0
    %v4248 = vadd.f32 0.0, %v4247
    %v4249 = vpop.f32.mrb[0].mxu0
    %4250 = vmatprep.mubr.f32.mxu0 0.0
    %4251 = vmatmul.mubr.f32.gmra.mrb[0].mxu0 %v4106
    %v4252 = vpop.f32.mrb[0].mxu0
    %v4253 = vadd.f32 0.0, %v4252
    %v4254 = vpop.f32.mrb[0].mxu0
    %4255 = vmatprep.mubr.f32.mxu0 0.0
    %4256 = vmatmul.mubr.f32.gmra.mrb[0].mxu0 %v4107
    %v4257 = vpop.f32.mrb[0].mxu0
    %v4258 = vadd.f32 0.0, %v4257
    %v4259 = vpop.f32.mrb[0].mxu0
    %4260 = vmatprep.mubr.f32.mxu0 0.0
    %4261 = vmatmul.mubr.f32.gmra.mrb[0].mxu0 %v4108
    %v4262 = vpop.f32.mrb[0].mxu0
    %v4263 = vadd.f32 0.0, %v4262
    %v4264 = vpop.f32.mrb[0].mxu0
    %4265 = vmatprep.mubr.f32.mxu0 0.0
    %4266 = vmatmul.mubr.f32.gmra.mrb[0].mxu0 %v4109
    %v4267 = vpop.f32.mrb[0].mxu0
    %v4268 = vadd.f32 0.0, %v4267
    %v4269 = vpop.f32.mrb[0].mxu0
    %4270 = vmatprep.mubr.f32.mxu0 0.0
    %4271 = vmatmul.mubr.f32.gmra.mrb[0].mxu0 %v4110
    %v4272 = vpop.f32.mrb[0].mxu0
    %v4273 = vadd.f32 0.0, %v4272
    %v4274 = vpop.f32.mrb[0].mxu0
    %4275 = vmatprep.mubr.f32.mxu0 0.0
    %4276 = vmatmul.mubr.f32.gmra.mrb[0].mxu0 %v4111
    %v4277 = vpop.f32.mrb[0].mxu0
    %v4278 = vadd.f32 0.0, %v4277
    %v4279 = vpop.f32.mrb[0].mxu0
    %4280 = vmatprep.mubr.f32.mxu0 0.0
    %4281 = vmatmul.mubr.f32.gmra.mrb[0].mxu0 %v4112
    %v4282 = vpop.f32.mrb[0].mxu0
    %v4283 = vadd.f32 0.0, %v4282
    %v4284 = vpop.f32.mrb[0].mxu0
    %4285 = vmatprep.mubr.f32.mxu0 0.0
    %4286 = vmatmul.mubr.f32.gmra.mrb[0].mxu0 %v4113
    %v4287 = vpop.f32.mrb[0].mxu0
    %v4288 = vadd.f32 0.0, %v4287
    %v4289 = vpop.f32.mrb[0].mxu0
    %4290 = vmatprep.mubr.f32.mxu0 0.0
    %4291 = vmatmul.mubr.f32.gmra.mrb[0].mxu0 %v4114
    %v4292 = vpop.f32.mrb[0].mxu0
    %v4293 = vadd.f32 0.0, %v4292
    %v4294 = vpop.f32.mrb[0].mxu0
    %4295 = vmatprep.mubr.f32.mxu0 0.0
    %4296 = vmatmul.mubr.f32.gmra.mrb[0].mxu0 %v4115
    %v4297 = vpop.f32.mrb[0].mxu0
    %v4298 = vadd.f32 0.0, %v4297
    %v4299 = vpop.f32.mrb[0].mxu0
    %4300 = vmatprep.mubr.f32.mxu0 0.0
    %4301 = vmatmul.mubr.f32.gmra.mrb[0].mxu0 %v4116
    %v4302 = vpop.f32.mrb[0].mxu0
    %v4303 = vadd.f32 0.0, %v4302
    %v4304 = vpop.f32.mrb[0].mxu0
    %4305 = vmatprep.mubr.f32.mxu0 0.0
    %4306 = vmatmul.mubr.f32.gmra.mrb[0].mxu0 %v4117
    %v4307 = vpop.f32.mrb[0].mxu0
    %v4308 = vadd.f32 0.0, %v4307
    %v4309 = vpop.f32.mrb[0].mxu0
    %4310 = vmatprep.mubr.f32.mxu0 0.0
    %4311 = vmatmul.mubr.f32.gmra.mrb[0].mxu0 %v4118
    %v4312 = vpop.f32.mrb[0].mxu0
    %v4313 = vadd.f32 0.0, %v4312
    %v4314 = vpop.f32.mrb[0].mxu0
    %4315 = vmatprep.mubr.f32.mxu0 0.0
    %4316 = vmatmul.mubr.f32.gmra.mrb[0].mxu0 %v4119
    %v4317 = vpop.f32.mrb[0].mxu0
    %v4318 = vadd.f32 0.0, %v4317
    %v4319 = vpop.f32.mrb[0].mxu0
    %4320 = vmatprep.mubr.f32.mxu0 0.0
    %4321 = vmatmul.mubr.f32.gmra.mrb[0].mxu0 %v4120
    %v4322 = vpop.f32.mrb[0].mxu0
    %v4323 = vadd.f32 0.0, %v4322
    %v4324 = vpop.f32.mrb[0].mxu0
    %4325 = vmatprep.mubr.f32.mxu0 0.0
    %4326 = vmatmul.mubr.f32.gmra.mrb[0].mxu0 %v4121
    %v4327 = vpop.f32.mrb[0].mxu0
    %v4328 = vadd.f32 0.0, %v4327
    %v4329 = vpop.f32.mrb[0].mxu0
    %4330 = vmatprep.mubr.f32.mxu0 0.0
    %4331 = vmatmul.mubr.f32.gmra.mrb[0].mxu0 %v4122
    %v4332 = vpop.f32.mrb[0].mxu0
    %v4333 = vadd.f32 0.0, %v4332
    %v4334 = vpop.f32.mrb[0].mxu0
    %4335 = vmatprep.mubr.f32.mxu0 0.0
    %4336 = vmatmul.mubr.f32.gmra.mrb[0].mxu0 %v4123
    %v4337 = vpop.f32.mrb[0].mxu0
    %v4338 = vadd.f32 0.0, %v4337
    %v4339 = vpop.f32.mrb[0].mxu0
    %4340 = vmatprep.mubr.f32.mxu0 0.0
    %4341 = vmatmul.mubr.f32.gmra.mrb[0].mxu0 %v4124
    %v4342 = vpop.f32.mrb[0].mxu0
    %v4343 = vadd.f32 0.0, %v4342
    %v4344 = vpop.f32.mrb[0].mxu0
    %4345 = vmatprep.mubr.f32.mxu0 0.0
    %4346 = vmatmul.mubr.f32.gmra.mrb[0].mxu0 %v4125
    %v4347 = vpop.f32.mrb[0].mxu0
    %v4348 = vadd.f32 0.0, %v4347
    %v4349 = vpop.f32.mrb[0].mxu0
    %4350 = vmatprep.mubr.f32.mxu0 0.0
    %4351 = vmatmul.mubr.f32.gmra.mrb[0].mxu0 %v4126
    %v4352 = vpop.f32.mrb[0].mxu0
    %v4353 = vadd.f32 0.0, %v4352
    %v4354 = vpop.f32.mrb[0].mxu0
    %4355 = vmatprep.mubr.f32.mxu0 0.0
    %4356 = vmatmul.mubr.f32.gmra.mrb[0].mxu0 %v4127
    %v4357 = vpop.f32.mrb[0].mxu0
    %v4358 = vadd.f32 0.0, %v4357
    %v4359 = vpop.f32.mrb[0].mxu0
    %4360 = vmatprep.mubr.f32.mxu0 0.0
    %4361 = vmatmul.mubr.f32.gmra.mrb[0].mxu0 %v4128
    %v4362 = vpop.f32.mrb[0].mxu0
    %v4363 = vadd.f32 0.0, %v4362
    %v4364 = vpop.f32.mrb[0].mxu0
    %4365 = vmatprep.mubr.f32.mxu0 0.0
    %4366 = vmatmul.mubr.f32.gmra.mrb[0].mxu0 %v4129
    %v4367 = vpop.f32.mrb[0].mxu0
    %v4368 = vadd.f32 0.0, %v4367
    %v4369 = vpop.f32.mrb[0].mxu0
    %4370 = vdwg.mxu0
    %v4371 = vadd.f32 %v4213, %v4218
    %v4372 = vrot.slane %v4371, 4
    %v4373 = vadd.f32 %v4371, %v4372
    %v4374 = vrot.slane %v4373, 2
    %v4375 = vadd.f32 %v4373, %v4374
    %v4376 = vrot.slane %v4375, 1
    %v4377 = vadd.f32 %v4375, %v4376
    %v4378 = vadd.f32 %v4223, %v4228
    %v4379 = vrot.slane %v4378, 4
    %v4380 = vadd.f32 %v4378, %v4379
    %v4381 = vrot.slane %v4380, 2
    %v4382 = vadd.f32 %v4380, %v4381
    %v4383 = vrot.slane %v4382, 1
    %v4384 = vadd.f32 %v4382, %v4383
    %v4385 = vadd.f32 %v4233, %v4238
    %v4386 = vrot.slane %v4385, 4
    %v4387 = vadd.f32 %v4385, %v4386
    %v4388 = vrot.slane %v4387, 2
    %v4389 = vadd.f32 %v4387, %v4388
    %v4390 = vrot.slane %v4389, 1
    %v4391 = vadd.f32 %v4389, %v4390
    %v4392 = vadd.f32 %v4243, %v4248
    %v4393 = vrot.slane %v4392, 4
    %v4394 = vadd.f32 %v4392, %v4393
    %v4395 = vrot.slane %v4394, 2
    %v4396 = vadd.f32 %v4394, %v4395
    %v4397 = vrot.slane %v4396, 1
    %v4398 = vadd.f32 %v4396, %v4397
    %v4399 = vadd.f32 %v4253, %v4258
    %v4400 = vrot.slane %v4399, 4
    %v4401 = vadd.f32 %v4399, %v4400
    %v4402 = vrot.slane %v4401, 2
    %v4403 = vadd.f32 %v4401, %v4402
    %v4404 = vrot.slane %v4403, 1
    %v4405 = vadd.f32 %v4403, %v4404
    %v4406 = vadd.f32 %v4263, %v4268
    %v4407 = vrot.slane %v4406, 4
    %v4408 = vadd.f32 %v4406, %v4407
    %v4409 = vrot.slane %v4408, 2
    %v4410 = vadd.f32 %v4408, %v4409
    %v4411 = vrot.slane %v4410, 1
    %v4412 = vadd.f32 %v4410, %v4411
    %v4413 = vadd.f32 %v4273, %v4278
    %v4414 = vrot.slane %v4413, 4
    %v4415 = vadd.f32 %v4413, %v4414
    %v4416 = vrot.slane %v4415, 2
    %v4417 = vadd.f32 %v4415, %v4416
    %v4418 = vrot.slane %v4417, 1
    %v4419 = vadd.f32 %v4417, %v4418
    %v4420 = vadd.f32 %v4283, %v4288
    %v4421 = vrot.slane %v4420, 4
    %v4422 = vadd.f32 %v4420, %v4421
    %v4423 = vrot.slane %v4422, 2
    %v4424 = vadd.f32 %v4422, %v4423
    %v4425 = vrot.slane %v4424, 1
    %v4426 = vadd.f32 %v4424, %v4425
    %v4427 = vadd.f32 %v4293, %v4298
    %v4428 = vrot.slane %v4427, 4
    %v4429 = vadd.f32 %v4427, %v4428
    %v4430 = vrot.slane %v4429, 2
    %v4431 = vadd.f32 %v4429, %v4430
    %v4432 = vrot.slane %v4431, 1
    %v4433 = vadd.f32 %v4431, %v4432
    %v4434 = vadd.f32 %v4303, %v4308
    %v4435 = vrot.slane %v4434, 4
    %v4436 = vadd.f32 %v4434, %v4435
    %v4437 = vrot.slane %v4436, 2
    %v4438 = vadd.f32 %v4436, %v4437
    %v4439 = vrot.slane %v4438, 1
    %v4440 = vadd.f32 %v4438, %v4439
    %v4441 = vadd.f32 %v4313, %v4318
    %v4442 = vrot.slane %v4441, 4
    %v4443 = vadd.f32 %v4441, %v4442
    %v4444 = vrot.slane %v4443, 2
    %v4445 = vadd.f32 %v4443, %v4444
    %v4446 = vrot.slane %v4445, 1
    %v4447 = vadd.f32 %v4445, %v4446
    %v4448 = vadd.f32 %v4323, %v4328
    %v4449 = vrot.slane %v4448, 4
    %v4450 = vadd.f32 %v4448, %v4449
    %v4451 = vrot.slane %v4450, 2
    %v4452 = vadd.f32 %v4450, %v4451
    %v4453 = vrot.slane %v4452, 1
    %v4454 = vadd.f32 %v4452, %v4453
    %v4455 = vadd.f32 %v4333, %v4338
    %v4456 = vrot.slane %v4455, 4
    %v4457 = vadd.f32 %v4455, %v4456
    %v4458 = vrot.slane %v4457, 2
    %v4459 = vadd.f32 %v4457, %v4458
    %v4460 = vrot.slane %v4459, 1
    %v4461 = vadd.f32 %v4459, %v4460
    %v4462 = vadd.f32 %v4343, %v4348
    %v4463 = vrot.slane %v4462, 4
    %v4464 = vadd.f32 %v4462, %v4463
    %v4465 = vrot.slane %v4464, 2
    %v4466 = vadd.f32 %v4464, %v4465
    %v4467 = vrot.slane %v4466, 1
    %v4468 = vadd.f32 %v4466, %v4467
    %v4469 = vadd.f32 %v4353, %v4358
    %v4470 = vrot.slane %v4469, 4
    %v4471 = vadd.f32 %v4469, %v4470
    %v4472 = vrot.slane %v4471, 2
    %v4473 = vadd.f32 %v4471, %v4472
    %v4474 = vrot.slane %v4473, 1
    %v4475 = vadd.f32 %v4473, %v4474
    %v4476 = vadd.f32 %v4363, %v4368
    %v4477 = vrot.slane %v4476, 4
    %v4478 = vadd.f32 %v4476, %v4477
    %v4479 = vrot.slane %v4478, 2
    %v4480 = vadd.f32 %v4478, %v4479
    %v4481 = vrot.slane %v4480, 1
    %v4482 = vadd.f32 %v4480, %v4481
    %v4483 = vld [vmem:[%s5] sm:$0x1]
    %v4484 = vmul.f32 %v4483, 16.0
    %v4486 = vlaneseq
    %v4487 = vshrl.u32 %v4486, 7
    %v4488 = vsub.s32 0, %v4487
    %v4489 = vrot.slane %v4484, %v4488
    %v4491 = vadd.f32 %v4377, %v4489
    %v4492 = vadd.f32 %v4384, %v4489
    %v4493 = vadd.f32 %v4391, %v4489
    %v4494 = vadd.f32 %v4398, %v4489
    %v4495 = vadd.f32 %v4405, %v4489
    %v4496 = vadd.f32 %v4412, %v4489
    %v4497 = vadd.f32 %v4419, %v4489
    %v4498 = vadd.f32 %v4426, %v4489
    %v4499 = vadd.f32 %v4433, %v4489
    %v4500 = vadd.f32 %v4440, %v4489
    %v4501 = vadd.f32 %v4447, %v4489
    %v4502 = vadd.f32 %v4454, %v4489
    %v4503 = vadd.f32 %v4461, %v4489
    %v4504 = vadd.f32 %v4468, %v4489
    %v4505 = vadd.f32 %v4475, %v4489
    %v4506 = vadd.f32 %v4482, %v4489
    %vm4507 = vcmp.gt.f32.partialorder %v4491, 0.0
    %vm4508 = vcmp.gt.f32.partialorder %v4492, 0.0
    %vm4509 = vcmp.gt.f32.partialorder %v4493, 0.0
    %vm4510 = vcmp.gt.f32.partialorder %v4494, 0.0
    %vm4511 = vcmp.gt.f32.partialorder %v4495, 0.0
    %vm4512 = vcmp.gt.f32.partialorder %v4496, 0.0
    %vm4513 = vcmp.gt.f32.partialorder %v4497, 0.0
    %vm4514 = vcmp.gt.f32.partialorder %v4498, 0.0
    %vm4515 = vcmp.gt.f32.partialorder %v4499, 0.0
    %vm4516 = vcmp.gt.f32.partialorder %v4500, 0.0
    %vm4517 = vcmp.gt.f32.partialorder %v4501, 0.0
    %vm4518 = vcmp.gt.f32.partialorder %v4502, 0.0
    %vm4519 = vcmp.gt.f32.partialorder %v4503, 0.0
    %vm4520 = vcmp.gt.f32.partialorder %v4504, 0.0
    %vm4521 = vcmp.gt.f32.partialorder %v4505, 0.0
    %vm4522 = vcmp.gt.f32.partialorder %v4506, 0.0
    %v4523 = vmul.f32 %v4491, 0.01
    %v4524 = vmul.f32 %v4492, 0.01
    %v4525 = vmul.f32 %v4493, 0.01
    %v4526 = vmul.f32 %v4494, 0.01
    %v4527 = vmul.f32 %v4495, 0.01
    %v4528 = vmul.f32 %v4496, 0.01
    %v4529 = vmul.f32 %v4497, 0.01
    %v4530 = vmul.f32 %v4498, 0.01
    %v4531 = vmul.f32 %v4499, 0.01
    %v4532 = vmul.f32 %v4500, 0.01
    %v4533 = vmul.f32 %v4501, 0.01
    %v4534 = vmul.f32 %v4502, 0.01
    %v4535 = vmul.f32 %v4503, 0.01
    %v4536 = vmul.f32 %v4504, 0.01
    %v4537 = vmul.f32 %v4505, 0.01
    %v4538 = vmul.f32 %v4506, 0.01
    %v4539 = vsel %vm4507, %v4491, %v4523
    %v4540 = vsel %vm4508, %v4492, %v4524
    %v4541 = vsel %vm4509, %v4493, %v4525
    %v4542 = vsel %vm4510, %v4494, %v4526
    %v4543 = vsel %vm4511, %v4495, %v4527
    %v4544 = vsel %vm4512, %v4496, %v4528
    %v4545 = vsel %vm4513, %v4497, %v4529
    %v4546 = vsel %vm4514, %v4498, %v4530
    %v4547 = vsel %vm4515, %v4499, %v4531
    %v4548 = vsel %vm4516, %v4500, %v4532
    %v4549 = vsel %vm4517, %v4501, %v4533
    %v4550 = vsel %vm4518, %v4502, %v4534
    %v4551 = vsel %vm4519, %v4503, %v4535
    %v4552 = vsel %vm4520, %v4504, %v4536
    %v4553 = vsel %vm4521, %v4505, %v4537
    %v4554 = vsel %vm4522, %v4506, %v4538
    %v4555 = vld [vmem:[%s7] sm:$0x1]
    %s4556 = scalar_lea.vmem [#allocation8], 128
    %v4557 = vld [vmem:[%s4556] sm:$0xff]
    %v4558 = vld [vmem:[%s4556 + $0x8] sm:$0xff]
    %v4559 = vld [vmem:[%s4556 + $0x10] sm:$0xff]
    %v4560 = vld [vmem:[%s4556 + $0x18] sm:$0xff]
    %v4561 = vld [vmem:[%s4556 + $0x20] sm:$0xff]
    %v4562 = vld [vmem:[%s4556 + $0x28] sm:$0xff]
    %v4563 = vld [vmem:[%s4556 + $0x30] sm:$0xff]
    %v4564 = vld [vmem:[%s4556 + $0x38] sm:$0xff]
    %v4565 = vld [vmem:[%s4556 + $0x40] sm:$0xff]
    %v4566 = vld [vmem:[%s4556 + $0x48] sm:$0xff]
    %v4567 = vld [vmem:[%s4556 + $0x50] sm:$0xff]
    %v4568 = vld [vmem:[%s4556 + $0x58] sm:$0xff]
    %v4569 = vld [vmem:[%s4556 + $0x60] sm:$0xff]
    %v4570 = vld [vmem:[%s4556 + $0x68] sm:$0xff]
    %v4571 = vld [vmem:[%s4556 + $0x70] sm:$0xff]
    %v4572 = vld [vmem:[%s4556 + $0x78] sm:$0xff]
    %v4575 = vrot.slane %v4547, 7
    %vm4576 = vcmask 1041409
    %v4577 = vsel %vm4576, %v4575, %v4539
    %4579 = vmatprep.subr.mxu0 0.0
    %4580 = vmatpush1.msra.mxu0 %v4557
    %4581 = vmatprep.subr.mxu0 0.0
    %4582 = vmatpush1.msra.mxu0 %v4558
    %4583 = vmatprep.subr.mxu0 0.0
    %4584 = vmatpush1.msra.mxu0 %v4559
    %4585 = vmatprep.subr.mxu0 0.0
    %4586 = vmatpush1.msra.mxu0 %v4560
    %4587 = vmatprep.subr.mxu0 0.0
    %4588 = vmatpush1.msra.mxu0 %v4561
    %4589 = vmatprep.subr.mxu0 0.0
    %4590 = vmatpush1.msra.mxu0 %v4562
    %4591 = vmatprep.subr.mxu0 0.0
    %4592 = vmatpush1.msra.mxu0 %v4563
    %4593 = vmatprep.subr.mxu0 0.0
    %4594 = vmatpush1.msra.mxu0 %v4564
    %4595 = vmatprep.subr.mxu0 0.0
    %4596 = vmatpush1.msra.mxu0 %v4565
    %4597 = vmatprep.subr.mxu0 0.0
    %4598 = vmatpush1.msra.mxu0 %v4566
    %4599 = vmatprep.subr.mxu0 0.0
    %4600 = vmatpush1.msra.mxu0 %v4567
    %4601 = vmatprep.subr.mxu0 0.0
    %4602 = vmatpush1.msra.mxu0 %v4568
    %4603 = vmatprep.subr.mxu0 0.0
    %4604 = vmatpush1.msra.mxu0 %v4569
    %4605 = vmatprep.subr.mxu0 0.0
    %4606 = vmatpush1.msra.mxu0 %v4570
    %4607 = vmatprep.subr.mxu0 0.0
    %4608 = vmatpush1.msra.mxu0 %v4571
    %4609 = vmatprep.subr.mxu0 0.0
    %4610 = vmatpush1.msra.mxu0 %v4572
    %4611 = vmatprep.subr.mxu0 0.0
    %4612 = vmatpush1.msra.mxu0 0.0
    %4613 = vmatprep.subr.mxu0 0.0
    %4614 = vmatpush1.msra.mxu0 0.0
    %4615 = vmatprep.subr.mxu0 0.0
    %4616 = vmatpush1.msra.mxu0 0.0
    %4617 = vmatprep.subr.mxu0 0.0
    %4618 = vmatpush1.msra.mxu0 0.0
    %4619 = vmatprep.subr.mxu0 0.0
    %4620 = vmatpush1.msra.mxu0 0.0
    %4621 = vmatprep.subr.mxu0 0.0
    %4622 = vmatpush1.msra.mxu0 0.0
    %4623 = vmatprep.subr.mxu0 0.0
    %4624 = vmatpush1.msra.mxu0 0.0
    %4625 = vmatprep.subr.mxu0 0.0
    %4626 = vmatpush1.msra.mxu0 0.0
    %4627 = vmatprep.subr.mxu0 0.0
    %4628 = vmatpush1.msra.mxu0 0.0
    %4629 = vmatprep.subr.mxu0 0.0
    %4630 = vmatpush1.msra.mxu0 0.0
    %4631 = vmatprep.subr.mxu0 0.0
    %4632 = vmatpush1.msra.mxu0 0.0
    %4633 = vmatprep.subr.mxu0 0.0
    %4634 = vmatpush1.msra.mxu0 0.0
    %4635 = vmatprep.subr.mxu0 0.0
    %4636 = vmatpush1.msra.mxu0 0.0
    %4637 = vmatprep.subr.mxu0 0.0
    %4638 = vmatpush1.msra.mxu0 0.0
    %4639 = vmatprep.subr.mxu0 0.0
    %4640 = vmatpush1.msra.mxu0 0.0
    %4641 = vmatprep.subr.mxu0 0.0
    %4642 = vmatpush1.msra.mxu0 0.0
    %4643 = vmatprep.mubr.f32.mxu0 0.0
    %4644 = vmatmul.mubr.f32.gmra.mrb[0].mxu0 %v4577
    %v4645 = vpop.f32.mrb[0].mxu0
    %v4646 = vadd.f32 0.0, %v4645
    %v4647 = vpop.f32.mrb[0].mxu0
    %4648 = vdwg.mxu0
    %v4650 = vlaneseq
    %v4651 = vshrl.u32 %v4650, 7
    %v4652 = vsub.s32 0, %v4651
    %v4653 = vrot.slane %v4555, %v4652
    %v4655 = vadd.f32 %v4653, %v4646
    %s4656 = scalar_lea.vmem [#allocation8], 256
    %v4657 = vld [vmem:[%s4656] sm:$0xff]
    %v4658 = vld [vmem:[%s4656 + $0x8] sm:$0xff]
    %v4659 = vld [vmem:[%s4656 + $0x10] sm:$0xff]
    %v4660 = vld [vmem:[%s4656 + $0x18] sm:$0xff]
    %v4661 = vld [vmem:[%s4656 + $0x20] sm:$0xff]
    %v4662 = vld [vmem:[%s4656 + $0x28] sm:$0xff]
    %v4663 = vld [vmem:[%s4656 + $0x30] sm:$0xff]
    %v4664 = vld [vmem:[%s4656 + $0x38] sm:$0xff]
    %v4665 = vld [vmem:[%s4656 + $0x40] sm:$0xff]
    %v4666 = vld [vmem:[%s4656 + $0x48] sm:$0xff]
    %v4667 = vld [vmem:[%s4656 + $0x50] sm:$0xff]
    %v4668 = vld [vmem:[%s4656 + $0x58] sm:$0xff]
    %v4669 = vld [vmem:[%s4656 + $0x60] sm:$0xff]
    %v4670 = vld [vmem:[%s4656 + $0x68] sm:$0xff]
    %v4671 = vld [vmem:[%s4656 + $0x70] sm:$0xff]
    %v4672 = vld [vmem:[%s4656 + $0x78] sm:$0xff]
    %v4675 = vrot.slane %v4548, 7
    %v4676 = vsel %vm4576, %v4675, %v4540
    %4678 = vmatprep.subr.mxu0 0.0
    %4679 = vmatpush1.msra.mxu0 %v4657
    %4680 = vmatprep.subr.mxu0 0.0
    %4681 = vmatpush1.msra.mxu0 %v4658
    %4682 = vmatprep.subr.mxu0 0.0
    %4683 = vmatpush1.msra.mxu0 %v4659
    %4684 = vmatprep.subr.mxu0 0.0
    %4685 = vmatpush1.msra.mxu0 %v4660
    %4686 = vmatprep.subr.mxu0 0.0
    %4687 = vmatpush1.msra.mxu0 %v4661
    %4688 = vmatprep.subr.mxu0 0.0
    %4689 = vmatpush1.msra.mxu0 %v4662
    %4690 = vmatprep.subr.mxu0 0.0
    %4691 = vmatpush1.msra.mxu0 %v4663
    %4692 = vmatprep.subr.mxu0 0.0
    %4693 = vmatpush1.msra.mxu0 %v4664
    %4694 = vmatprep.subr.mxu0 0.0
    %4695 = vmatpush1.msra.mxu0 %v4665
    %4696 = vmatprep.subr.mxu0 0.0
    %4697 = vmatpush1.msra.mxu0 %v4666
    %4698 = vmatprep.subr.mxu0 0.0
    %4699 = vmatpush1.msra.mxu0 %v4667
    %4700 = vmatprep.subr.mxu0 0.0
    %4701 = vmatpush1.msra.mxu0 %v4668
    %4702 = vmatprep.subr.mxu0 0.0
    %4703 = vmatpush1.msra.mxu0 %v4669
    %4704 = vmatprep.subr.mxu0 0.0
    %4705 = vmatpush1.msra.mxu0 %v4670
    %4706 = vmatprep.subr.mxu0 0.0
    %4707 = vmatpush1.msra.mxu0 %v4671
    %4708 = vmatprep.subr.mxu0 0.0
    %4709 = vmatpush1.msra.mxu0 %v4672
    %4710 = vmatprep.subr.mxu0 0.0
    %4711 = vmatpush1.msra.mxu0 0.0
    %4712 = vmatprep.subr.mxu0 0.0
    %4713 = vmatpush1.msra.mxu0 0.0
    %4714 = vmatprep.subr.mxu0 0.0
    %4715 = vmatpush1.msra.mxu0 0.0
    %4716 = vmatprep.subr.mxu0 0.0
    %4717 = vmatpush1.msra.mxu0 0.0
    %4718 = vmatprep.subr.mxu0 0.0
    %4719 = vmatpush1.msra.mxu0 0.0
    %4720 = vmatprep.subr.mxu0 0.0
    %4721 = vmatpush1.msra.mxu0 0.0
    %4722 = vmatprep.subr.mxu0 0.0
    %4723 = vmatpush1.msra.mxu0 0.0
    %4724 = vmatprep.subr.mxu0 0.0
    %4725 = vmatpush1.msra.mxu0 0.0
    %4726 = vmatprep.subr.mxu0 0.0
    %4727 = vmatpush1.msra.mxu0 0.0
    %4728 = vmatprep.subr.mxu0 0.0
    %4729 = vmatpush1.msra.mxu0 0.0
    %4730 = vmatprep.subr.mxu0 0.0
    %4731 = vmatpush1.msra.mxu0 0.0
    %4732 = vmatprep.subr.mxu0 0.0
    %4733 = vmatpush1.msra.mxu0 0.0
    %4734 = vmatprep.subr.mxu0 0.0
    %4735 = vmatpush1.msra.mxu0 0.0
    %4736 = vmatprep.subr.mxu0 0.0
    %4737 = vmatpush1.msra.mxu0 0.0
    %4738 = vmatprep.subr.mxu0 0.0
    %4739 = vmatpush1.msra.mxu0 0.0
    %4740 = vmatprep.subr.mxu0 0.0
    %4741 = vmatpush1.msra.mxu0 0.0
    %4742 = vmatprep.mubr.f32.mxu0 0.0
    %4743 = vmatmul.mubr.f32.gmra.mrb[0].mxu0 %v4676
    %v4744 = vpop.f32.mrb[0].mxu0
    %v4745 = vadd.f32 0.0, %v4744
    %v4746 = vpop.f32.mrb[0].mxu0
    %4747 = vdwg.mxu0
    %v4748 = vadd.f32 %v4655, %v4745
    %v4751 = vunpack.c.l.s4 1966171168
    %v4752 = vunpack.c.0.s8 %v4751
    %v4753 = vlaneseq
    %v4754 = vshrl.u32 %v4753, 7
    %v4755 = vsub.s32 %v4752, %v4754
    %v4756 = vrot.slane %v4748, %v4755
    %v4757 = vcombine.high %v4756, %v4756
    %v4759 = vunpack.c.l.s4 1966171168
    %v4760 = vunpack.c.0.s8 %v4759
    %v4761 = vlaneseq
    %v4762 = vshrl.u32 %v4761, 7
    %v4763 = vsub.s32 %v4760, %v4762
    %v4764 = vrot.slane %v4756, %v4763
    %v4766 = vunpack.c.l.s4 1966171168
    %v4767 = vunpack.c.0.s8 %v4766
    %v4768 = vlaneseq
    %v4769 = vshrl.u32 %v4768, 7
    %v4770 = vsub.s32 %v4767, %v4769
    %v4771 = vrot.slane %v4757, %v4770
    %v4774 = vld [vmem:[#allocation8] sm:$0xff]
    %v4775 = vld [vmem:[#allocation8 + $0x8] sm:$0xff]
    %v4776 = vld [vmem:[#allocation8 + $0x10] sm:$0xff]
    %v4777 = vld [vmem:[#allocation8 + $0x18] sm:$0xff]
    %v4778 = vld [vmem:[#allocation8 + $0x20] sm:$0xff]
    %v4779 = vld [vmem:[#allocation8 + $0x28] sm:$0xff]
    %v4780 = vld [vmem:[#allocation8 + $0x30] sm:$0xff]
    %v4781 = vld [vmem:[#allocation8 + $0x38] sm:$0xff]
    %v4782 = vld [vmem:[#allocation8 + $0x40] sm:$0xff]
    %v4783 = vld [vmem:[#allocation8 + $0x48] sm:$0xff]
    %v4784 = vld [vmem:[#allocation8 + $0x50] sm:$0xff]
    %v4785 = vld [vmem:[#allocation8 + $0x58] sm:$0xff]
    %v4786 = vld [vmem:[#allocation8 + $0x60] sm:$0xff]
    %v4787 = vld [vmem:[#allocation8 + $0x68] sm:$0xff]
    %v4788 = vld [vmem:[#allocation8 + $0x70] sm:$0xff]
    %v4789 = vld [vmem:[#allocation8 + $0x78] sm:$0xff]
    %4790 = vmatprep.subr.mxu0 0.0
    %4791 = vmatpush1.msra.mxu0 %v4774
    %4792 = vmatprep.subr.mxu0 0.0
    %4793 = vmatpush1.msra.mxu0 %v4775
    %4794 = vmatprep.subr.mxu0 0.0
    %4795 = vmatpush1.msra.mxu0 %v4776
    %4796 = vmatprep.subr.mxu0 0.0
    %4797 = vmatpush1.msra.mxu0 %v4777
    %4798 = vmatprep.subr.mxu0 0.0
    %4799 = vmatpush1.msra.mxu0 %v4778
    %4800 = vmatprep.subr.mxu0 0.0
    %4801 = vmatpush1.msra.mxu0 %v4779
    %4802 = vmatprep.subr.mxu0 0.0
    %4803 = vmatpush1.msra.mxu0 %v4780
    %4804 = vmatprep.subr.mxu0 0.0
    %4805 = vmatpush1.msra.mxu0 %v4781
    %4806 = vmatprep.subr.mxu0 0.0
    %4807 = vmatpush1.msra.mxu0 %v4782
    %4808 = vmatprep.subr.mxu0 0.0
    %4809 = vmatpush1.msra.mxu0 %v4783
    %4810 = vmatprep.subr.mxu0 0.0
    %4811 = vmatpush1.msra.mxu0 %v4784
    %4812 = vmatprep.subr.mxu0 0.0
    %4813 = vmatpush1.msra.mxu0 %v4785
    %4814 = vmatprep.subr.mxu0 0.0
    %4815 = vmatpush1.msra.mxu0 %v4786
    %4816 = vmatprep.subr.mxu0 0.0
    %4817 = vmatpush1.msra.mxu0 %v4787
    %4818 = vmatprep.subr.mxu0 0.0
    %4819 = vmatpush1.msra.mxu0 %v4788
    %4820 = vmatprep.subr.mxu0 0.0
    %4821 = vmatpush1.msra.mxu0 %v4789
    %4822 = vmatprep.subr.mxu0 0.0
    %4823 = vmatpush1.msra.mxu0 0.0
    %4824 = vmatprep.subr.mxu0 0.0
    %4825 = vmatpush1.msra.mxu0 0.0
    %4826 = vmatprep.subr.mxu0 0.0
    %4827 = vmatpush1.msra.mxu0 0.0
    %4828 = vmatprep.subr.mxu0 0.0
    %4829 = vmatpush1.msra.mxu0 0.0
    %4830 = vmatprep.subr.mxu0 0.0
    %4831 = vmatpush1.msra.mxu0 0.0
    %4832 = vmatprep.subr.mxu0 0.0
    %4833 = vmatpush1.msra.mxu0 0.0
    %4834 = vmatprep.subr.mxu0 0.0
    %4835 = vmatpush1.msra.mxu0 0.0
    %4836 = vmatprep.subr.mxu0 0.0
    %4837 = vmatpush1.msra.mxu0 0.0
    %4838 = vmatprep.subr.mxu0 0.0
    %4839 = vmatpush1.msra.mxu0 0.0
    %4840 = vmatprep.subr.mxu0 0.0
    %4841 = vmatpush1.msra.mxu0 0.0
    %4842 = vmatprep.subr.mxu0 0.0
    %4843 = vmatpush1.msra.mxu0 0.0
    %4844 = vmatprep.subr.mxu0 0.0
    %4845 = vmatpush1.msra.mxu0 0.0
    %4846 = vmatprep.subr.mxu0 0.0
    %4847 = vmatpush1.msra.mxu0 0.0
    %4848 = vmatprep.subr.mxu0 0.0
    %4849 = vmatpush1.msra.mxu0 0.0
    %4850 = vmatprep.subr.mxu0 0.0
    %4851 = vmatpush1.msra.mxu0 0.0
    %4852 = vmatprep.subr.mxu0 0.0
    %4853 = vmatpush1.msra.mxu0 0.0
    %4854 = vmatprep.mubr.f32.mxu0 0.0
    %4855 = vmatmul.mubr.f32.gmra.mrb[0].mxu0 %v4676
    %v4856 = vpop.f32.mrb[0].mxu0
    %v4857 = vadd.f32 0.0, %v4856
    %v4858 = vpop.f32.mrb[0].mxu0
    %4859 = vdwg.mxu0
    %v4860 = vadd.f32 %v4653, %v4857
    %v4863 = vrot.slane %v4549, 7
    %v4864 = vsel %vm4576, %v4863, %v4541
    %4866 = vmatprep.subr.mxu0 0.0
    %4867 = vmatpush1.msra.mxu0 %v4557
    %4868 = vmatprep.subr.mxu0 0.0
    %4869 = vmatpush1.msra.mxu0 %v4558
    %4870 = vmatprep.subr.mxu0 0.0
    %4871 = vmatpush1.msra.mxu0 %v4559
    %4872 = vmatprep.subr.mxu0 0.0
    %4873 = vmatpush1.msra.mxu0 %v4560
    %4874 = vmatprep.subr.mxu0 0.0
    %4875 = vmatpush1.msra.mxu0 %v4561
    %4876 = vmatprep.subr.mxu0 0.0
    %4877 = vmatpush1.msra.mxu0 %v4562
    %4878 = vmatprep.subr.mxu0 0.0
    %4879 = vmatpush1.msra.mxu0 %v4563
    %4880 = vmatprep.subr.mxu0 0.0
    %4881 = vmatpush1.msra.mxu0 %v4564
    %4882 = vmatprep.subr.mxu0 0.0
    %4883 = vmatpush1.msra.mxu0 %v4565
    %4884 = vmatprep.subr.mxu0 0.0
    %4885 = vmatpush1.msra.mxu0 %v4566
    %4886 = vmatprep.subr.mxu0 0.0
    %4887 = vmatpush1.msra.mxu0 %v4567
    %4888 = vmatprep.subr.mxu0 0.0
    %4889 = vmatpush1.msra.mxu0 %v4568
    %4890 = vmatprep.subr.mxu0 0.0
    %4891 = vmatpush1.msra.mxu0 %v4569
    %4892 = vmatprep.subr.mxu0 0.0
    %4893 = vmatpush1.msra.mxu0 %v4570
    %4894 = vmatprep.subr.mxu0 0.0
    %4895 = vmatpush1.msra.mxu0 %v4571
    %4896 = vmatprep.subr.mxu0 0.0
    %4897 = vmatpush1.msra.mxu0 %v4572
    %4898 = vmatprep.subr.mxu0 0.0
    %4899 = vmatpush1.msra.mxu0 0.0
    %4900 = vmatprep.subr.mxu0 0.0
    %4901 = vmatpush1.msra.mxu0 0.0
    %4902 = vmatprep.subr.mxu0 0.0
    %4903 = vmatpush1.msra.mxu0 0.0
    %4904 = vmatprep.subr.mxu0 0.0
    %4905 = vmatpush1.msra.mxu0 0.0
    %4906 = vmatprep.subr.mxu0 0.0
    %4907 = vmatpush1.msra.mxu0 0.0
    %4908 = vmatprep.subr.mxu0 0.0
    %4909 = vmatpush1.msra.mxu0 0.0
    %4910 = vmatprep.subr.mxu0 0.0
    %4911 = vmatpush1.msra.mxu0 0.0
    %4912 = vmatprep.subr.mxu0 0.0
    %4913 = vmatpush1.msra.mxu0 0.0
    %4914 = vmatprep.subr.mxu0 0.0
    %4915 = vmatpush1.msra.mxu0 0.0
    %4916 = vmatprep.subr.mxu0 0.0
    %4917 = vmatpush1.msra.mxu0 0.0
    %4918 = vmatprep.subr.mxu0 0.0
    %4919 = vmatpush1.msra.mxu0 0.0
    %4920 = vmatprep.subr.mxu0 0.0
    %4921 = vmatpush1.msra.mxu0 0.0
    %4922 = vmatprep.subr.mxu0 0.0
    %4923 = vmatpush1.msra.mxu0 0.0
    %4924 = vmatprep.subr.mxu0 0.0
    %4925 = vmatpush1.msra.mxu0 0.0
    %4926 = vmatprep.subr.mxu0 0.0
    %4927 = vmatpush1.msra.mxu0 0.0
    %4928 = vmatprep.subr.mxu0 0.0
    %4929 = vmatpush1.msra.mxu0 0.0
    %4930 = vmatprep.mubr.f32.mxu0 0.0
    %4931 = vmatmul.mubr.f32.gmra.mrb[0].mxu0 %v4864
    %v4932 = vpop.f32.mrb[0].mxu0
    %v4933 = vadd.f32 0.0, %v4932
    %v4934 = vpop.f32.mrb[0].mxu0
    %4935 = vdwg.mxu0
    %v4936 = vadd.f32 %v4860, %v4933
    %v4939 = vrot.slane %v4550, 7
    %v4940 = vsel %vm4576, %v4939, %v4542
    %4942 = vmatprep.subr.mxu0 0.0
    %4943 = vmatpush1.msra.mxu0 %v4657
    %4944 = vmatprep.subr.mxu0 0.0
    %4945 = vmatpush1.msra.mxu0 %v4658
    %4946 = vmatprep.subr.mxu0 0.0
    %4947 = vmatpush1.msra.mxu0 %v4659
    %4948 = vmatprep.subr.mxu0 0.0
    %4949 = vmatpush1.msra.mxu0 %v4660
    %4950 = vmatprep.subr.mxu0 0.0
    %4951 = vmatpush1.msra.mxu0 %v4661
    %4952 = vmatprep.subr.mxu0 0.0
    %4953 = vmatpush1.msra.mxu0 %v4662
    %4954 = vmatprep.subr.mxu0 0.0
    %4955 = vmatpush1.msra.mxu0 %v4663
    %4956 = vmatprep.subr.mxu0 0.0
    %4957 = vmatpush1.msra.mxu0 %v4664
    %4958 = vmatprep.subr.mxu0 0.0
    %4959 = vmatpush1.msra.mxu0 %v4665
    %4960 = vmatprep.subr.mxu0 0.0
    %4961 = vmatpush1.msra.mxu0 %v4666
    %4962 = vmatprep.subr.mxu0 0.0
    %4963 = vmatpush1.msra.mxu0 %v4667
    %4964 = vmatprep.subr.mxu0 0.0
    %4965 = vmatpush1.msra.mxu0 %v4668
    %4966 = vmatprep.subr.mxu0 0.0
    %4967 = vmatpush1.msra.mxu0 %v4669
    %4968 = vmatprep.subr.mxu0 0.0
    %4969 = vmatpush1.msra.mxu0 %v4670
    %4970 = vmatprep.subr.mxu0 0.0
    %4971 = vmatpush1.msra.mxu0 %v4671
    %4972 = vmatprep.subr.mxu0 0.0
    %4973 = vmatpush1.msra.mxu0 %v4672
    %4974 = vmatprep.subr.mxu0 0.0
    %4975 = vmatpush1.msra.mxu0 0.0
    %4976 = vmatprep.subr.mxu0 0.0
    %4977 = vmatpush1.msra.mxu0 0.0
    %4978 = vmatprep.subr.mxu0 0.0
    %4979 = vmatpush1.msra.mxu0 0.0
    %4980 = vmatprep.subr.mxu0 0.0
    %4981 = vmatpush1.msra.mxu0 0.0
    %4982 = vmatprep.subr.mxu0 0.0
    %4983 = vmatpush1.msra.mxu0 0.0
    %4984 = vmatprep.subr.mxu0 0.0
    %4985 = vmatpush1.msra.mxu0 0.0
    %4986 = vmatprep.subr.mxu0 0.0
    %4987 = vmatpush1.msra.mxu0 0.0
    %4988 = vmatprep.subr.mxu0 0.0
    %4989 = vmatpush1.msra.mxu0 0.0
    %4990 = vmatprep.subr.mxu0 0.0
    %4991 = vmatpush1.msra.mxu0 0.0
    %4992 = vmatprep.subr.mxu0 0.0
    %4993 = vmatpush1.msra.mxu0 0.0
    %4994 = vmatprep.subr.mxu0 0.0
    %4995 = vmatpush1.msra.mxu0 0.0
    %4996 = vmatprep.subr.mxu0 0.0
    %4997 = vmatpush1.msra.mxu0 0.0
    %4998 = vmatprep.subr.mxu0 0.0
    %4999 = vmatpush1.msra.mxu0 0.0
    %5000 = vmatprep.subr.mxu0 0.0
    %5001 = vmatpush1.msra.mxu0 0.0
    %5002 = vmatprep.subr.mxu0 0.0
    %5003 = vmatpush1.msra.mxu0 0.0
    %5004 = vmatprep.subr.mxu0 0.0
    %5005 = vmatpush1.msra.mxu0 0.0
    %5006 = vmatprep.mubr.f32.mxu0 0.0
    %5007 = vmatmul.mubr.f32.gmra.mrb[0].mxu0 %v4940
    %v5008 = vpop.f32.mrb[0].mxu0
    %v5009 = vadd.f32 0.0, %v5008
    %v5010 = vpop.f32.mrb[0].mxu0
    %5011 = vdwg.mxu0
    %v5012 = vadd.f32 %v4936, %v5009
    %v5015 = vunpack.c.l.s4 1966171168
    %v5016 = vunpack.c.0.s8 %v5015
    %v5017 = vlaneseq
    %v5018 = vshrl.u32 %v5017, 7
    %v5019 = vsub.s32 %v5016, %v5018
    %v5020 = vrot.slane %v5012, %v5019
    %v5021 = vcombine.high %v5020, %v5020
    %v5023 = vunpack.c.l.s4 1966171168
    %v5024 = vunpack.c.0.s8 %v5023
    %v5025 = vlaneseq
    %v5026 = vshrl.u32 %v5025, 7
    %v5027 = vsub.s32 %v5024, %v5026
    %v5028 = vrot.slane %v5020, %v5027
    %v5030 = vunpack.c.l.s4 1966171168
    %v5031 = vunpack.c.0.s8 %v5030
    %v5032 = vlaneseq
    %v5033 = vshrl.u32 %v5032, 7
    %v5034 = vsub.s32 %v5031, %v5033
    %v5035 = vrot.slane %v5021, %v5034
    %5036 = vmatprep.subr.mxu0 0.0
    %5037 = vmatpush1.msra.mxu0 %v4774
    %5038 = vmatprep.subr.mxu0 0.0
    %5039 = vmatpush1.msra.mxu0 %v4775
    %5040 = vmatprep.subr.mxu0 0.0
    %5041 = vmatpush1.msra.mxu0 %v4776
    %5042 = vmatprep.subr.mxu0 0.0
    %5043 = vmatpush1.msra.mxu0 %v4777
    %5044 = vmatprep.subr.mxu0 0.0
    %5045 = vmatpush1.msra.mxu0 %v4778
    %5046 = vmatprep.subr.mxu0 0.0
    %5047 = vmatpush1.msra.mxu0 %v4779
    %5048 = vmatprep.subr.mxu0 0.0
    %5049 = vmatpush1.msra.mxu0 %v4780
    %5050 = vmatprep.subr.mxu0 0.0
    %5051 = vmatpush1.msra.mxu0 %v4781
    %5052 = vmatprep.subr.mxu0 0.0
    %5053 = vmatpush1.msra.mxu0 %v4782
    %5054 = vmatprep.subr.mxu0 0.0
    %5055 = vmatpush1.msra.mxu0 %v4783
    %5056 = vmatprep.subr.mxu0 0.0
    %5057 = vmatpush1.msra.mxu0 %v4784
    %5058 = vmatprep.subr.mxu0 0.0
    %5059 = vmatpush1.msra.mxu0 %v4785
    %5060 = vmatprep.subr.mxu0 0.0
    %5061 = vmatpush1.msra.mxu0 %v4786
    %5062 = vmatprep.subr.mxu0 0.0
    %5063 = vmatpush1.msra.mxu0 %v4787
    %5064 = vmatprep.subr.mxu0 0.0
    %5065 = vmatpush1.msra.mxu0 %v4788
    %5066 = vmatprep.subr.mxu0 0.0
    %5067 = vmatpush1.msra.mxu0 %v4789
    %5068 = vmatprep.subr.mxu0 0.0
    %5069 = vmatpush1.msra.mxu0 0.0
    %5070 = vmatprep.subr.mxu0 0.0
    %5071 = vmatpush1.msra.mxu0 0.0
    %5072 = vmatprep.subr.mxu0 0.0
    %5073 = vmatpush1.msra.mxu0 0.0
    %5074 = vmatprep.subr.mxu0 0.0
    %5075 = vmatpush1.msra.mxu0 0.0
    %5076 = vmatprep.subr.mxu0 0.0
    %5077 = vmatpush1.msra.mxu0 0.0
    %5078 = vmatprep.subr.mxu0 0.0
    %5079 = vmatpush1.msra.mxu0 0.0
    %5080 = vmatprep.subr.mxu0 0.0
    %5081 = vmatpush1.msra.mxu0 0.0
    %5082 = vmatprep.subr.mxu0 0.0
    %5083 = vmatpush1.msra.mxu0 0.0
    %5084 = vmatprep.subr.mxu0 0.0
    %5085 = vmatpush1.msra.mxu0 0.0
    %5086 = vmatprep.subr.mxu0 0.0
    %5087 = vmatpush1.msra.mxu0 0.0
    %5088 = vmatprep.subr.mxu0 0.0
    %5089 = vmatpush1.msra.mxu0 0.0
    %5090 = vmatprep.subr.mxu0 0.0
    %5091 = vmatpush1.msra.mxu0 0.0
    %5092 = vmatprep.subr.mxu0 0.0
    %5093 = vmatpush1.msra.mxu0 0.0
    %5094 = vmatprep.subr.mxu0 0.0
    %5095 = vmatpush1.msra.mxu0 0.0
    %5096 = vmatprep.subr.mxu0 0.0
    %5097 = vmatpush1.msra.mxu0 0.0
    %5098 = vmatprep.subr.mxu0 0.0
    %5099 = vmatpush1.msra.mxu0 0.0
    %5100 = vmatprep.mubr.f32.mxu0 0.0
    %5101 = vmatmul.mubr.f32.gmra.mrb[0].mxu0 %v4940
    %v5102 = vpop.f32.mrb[0].mxu0
    %v5103 = vadd.f32 0.0, %v5102
    %v5104 = vpop.f32.mrb[0].mxu0
    %5105 = vdwg.mxu0
    %v5106 = vadd.f32 %v4653, %v5103
    %v5109 = vrot.slane %v4551, 7
    %v5110 = vsel %vm4576, %v5109, %v4543
    %5112 = vmatprep.subr.mxu0 0.0
    %5113 = vmatpush1.msra.mxu0 %v4557
    %5114 = vmatprep.subr.mxu0 0.0
    %5115 = vmatpush1.msra.mxu0 %v4558
    %5116 = vmatprep.subr.mxu0 0.0
    %5117 = vmatpush1.msra.mxu0 %v4559
    %5118 = vmatprep.subr.mxu0 0.0
    %5119 = vmatpush1.msra.mxu0 %v4560
    %5120 = vmatprep.subr.mxu0 0.0
    %5121 = vmatpush1.msra.mxu0 %v4561
    %5122 = vmatprep.subr.mxu0 0.0
    %5123 = vmatpush1.msra.mxu0 %v4562
    %5124 = vmatprep.subr.mxu0 0.0
    %5125 = vmatpush1.msra.mxu0 %v4563
    %5126 = vmatprep.subr.mxu0 0.0
    %5127 = vmatpush1.msra.mxu0 %v4564
    %5128 = vmatprep.subr.mxu0 0.0
    %5129 = vmatpush1.msra.mxu0 %v4565
    %5130 = vmatprep.subr.mxu0 0.0
    %5131 = vmatpush1.msra.mxu0 %v4566
    %5132 = vmatprep.subr.mxu0 0.0
    %5133 = vmatpush1.msra.mxu0 %v4567
    %5134 = vmatprep.subr.mxu0 0.0
    %5135 = vmatpush1.msra.mxu0 %v4568
    %5136 = vmatprep.subr.mxu0 0.0
    %5137 = vmatpush1.msra.mxu0 %v4569
    %5138 = vmatprep.subr.mxu0 0.0
    %5139 = vmatpush1.msra.mxu0 %v4570
    %5140 = vmatprep.subr.mxu0 0.0
    %5141 = vmatpush1.msra.mxu0 %v4571
    %5142 = vmatprep.subr.mxu0 0.0
    %5143 = vmatpush1.msra.mxu0 %v4572
    %5144 = vmatprep.subr.mxu0 0.0
    %5145 = vmatpush1.msra.mxu0 0.0
    %5146 = vmatprep.subr.mxu0 0.0
    %5147 = vmatpush1.msra.mxu0 0.0
    %5148 = vmatprep.subr.mxu0 0.0
    %5149 = vmatpush1.msra.mxu0 0.0
    %5150 = vmatprep.subr.mxu0 0.0
    %5151 = vmatpush1.msra.mxu0 0.0
    %5152 = vmatprep.subr.mxu0 0.0
    %5153 = vmatpush1.msra.mxu0 0.0
    %5154 = vmatprep.subr.mxu0 0.0
    %5155 = vmatpush1.msra.mxu0 0.0
    %5156 = vmatprep.subr.mxu0 0.0
    %5157 = vmatpush1.msra.mxu0 0.0
    %5158 = vmatprep.subr.mxu0 0.0
    %5159 = vmatpush1.msra.mxu0 0.0
    %5160 = vmatprep.subr.mxu0 0.0
    %5161 = vmatpush1.msra.mxu0 0.0
    %5162 = vmatprep.subr.mxu0 0.0
    %5163 = vmatpush1.msra.mxu0 0.0
    %5164 = vmatprep.subr.mxu0 0.0
    %5165 = vmatpush1.msra.mxu0 0.0
    %5166 = vmatprep.subr.mxu0 0.0
    %5167 = vmatpush1.msra.mxu0 0.0
    %5168 = vmatprep.subr.mxu0 0.0
    %5169 = vmatpush1.msra.mxu0 0.0
    %5170 = vmatprep.subr.mxu0 0.0
    %5171 = vmatpush1.msra.mxu0 0.0
    %5172 = vmatprep.subr.mxu0 0.0
    %5173 = vmatpush1.msra.mxu0 0.0
    %5174 = vmatprep.subr.mxu0 0.0
    %5175 = vmatpush1.msra.mxu0 0.0
    %5176 = vmatprep.mubr.f32.mxu0 0.0
    %5177 = vmatmul.mubr.f32.gmra.mrb[0].mxu0 %v5110
    %v5178 = vpop.f32.mrb[0].mxu0
    %v5179 = vadd.f32 0.0, %v5178
    %v5180 = vpop.f32.mrb[0].mxu0
    %5181 = vdwg.mxu0
    %v5182 = vadd.f32 %v5106, %v5179
    %v5185 = vrot.slane %v4552, 7
    %v5186 = vsel %vm4576, %v5185, %v4544
    %5188 = vmatprep.subr.mxu0 0.0
    %5189 = vmatpush1.msra.mxu0 %v4657
    %5190 = vmatprep.subr.mxu0 0.0
    %5191 = vmatpush1.msra.mxu0 %v4658
    %5192 = vmatprep.subr.mxu0 0.0
    %5193 = vmatpush1.msra.mxu0 %v4659
    %5194 = vmatprep.subr.mxu0 0.0
    %5195 = vmatpush1.msra.mxu0 %v4660
    %5196 = vmatprep.subr.mxu0 0.0
    %5197 = vmatpush1.msra.mxu0 %v4661
    %5198 = vmatprep.subr.mxu0 0.0
    %5199 = vmatpush1.msra.mxu0 %v4662
    %5200 = vmatprep.subr.mxu0 0.0
    %5201 = vmatpush1.msra.mxu0 %v4663
    %5202 = vmatprep.subr.mxu0 0.0
    %5203 = vmatpush1.msra.mxu0 %v4664
    %5204 = vmatprep.subr.mxu0 0.0
    %5205 = vmatpush1.msra.mxu0 %v4665
    %5206 = vmatprep.subr.mxu0 0.0
    %5207 = vmatpush1.msra.mxu0 %v4666
    %5208 = vmatprep.subr.mxu0 0.0
    %5209 = vmatpush1.msra.mxu0 %v4667
    %5210 = vmatprep.subr.mxu0 0.0
    %5211 = vmatpush1.msra.mxu0 %v4668
    %5212 = vmatprep.subr.mxu0 0.0
    %5213 = vmatpush1.msra.mxu0 %v4669
    %5214 = vmatprep.subr.mxu0 0.0
    %5215 = vmatpush1.msra.mxu0 %v4670
    %5216 = vmatprep.subr.mxu0 0.0
    %5217 = vmatpush1.msra.mxu0 %v4671
    %5218 = vmatprep.subr.mxu0 0.0
    %5219 = vmatpush1.msra.mxu0 %v4672
    %5220 = vmatprep.subr.mxu0 0.0
    %5221 = vmatpush1.msra.mxu0 0.0
    %5222 = vmatprep.subr.mxu0 0.0
    %5223 = vmatpush1.msra.mxu0 0.0
    %5224 = vmatprep.subr.mxu0 0.0
    %5225 = vmatpush1.msra.mxu0 0.0
    %5226 = vmatprep.subr.mxu0 0.0
    %5227 = vmatpush1.msra.mxu0 0.0
    %5228 = vmatprep.subr.mxu0 0.0
    %5229 = vmatpush1.msra.mxu0 0.0
    %5230 = vmatprep.subr.mxu0 0.0
    %5231 = vmatpush1.msra.mxu0 0.0
    %5232 = vmatprep.subr.mxu0 0.0
    %5233 = vmatpush1.msra.mxu0 0.0
    %5234 = vmatprep.subr.mxu0 0.0
    %5235 = vmatpush1.msra.mxu0 0.0
    %5236 = vmatprep.subr.mxu0 0.0
    %5237 = vmatpush1.msra.mxu0 0.0
    %5238 = vmatprep.subr.mxu0 0.0
    %5239 = vmatpush1.msra.mxu0 0.0
    %5240 = vmatprep.subr.mxu0 0.0
    %5241 = vmatpush1.msra.mxu0 0.0
    %5242 = vmatprep.subr.mxu0 0.0
    %5243 = vmatpush1.msra.mxu0 0.0
    %5244 = vmatprep.subr.mxu0 0.0
    %5245 = vmatpush1.msra.mxu0 0.0
    %5246 = vmatprep.subr.mxu0 0.0
    %5247 = vmatpush1.msra.mxu0 0.0
    %5248 = vmatprep.subr.mxu0 0.0
    %5249 = vmatpush1.msra.mxu0 0.0
    %5250 = vmatprep.subr.mxu0 0.0
    %5251 = vmatpush1.msra.mxu0 0.0
    %5252 = vmatprep.mubr.f32.mxu0 0.0
    %5253 = vmatmul.mubr.f32.gmra.mrb[0].mxu0 %v5186
    %v5254 = vpop.f32.mrb[0].mxu0
    %v5255 = vadd.f32 0.0, %v5254
    %v5256 = vpop.f32.mrb[0].mxu0
    %5257 = vdwg.mxu0
    %v5258 = vadd.f32 %v5182, %v5255
    %v5261 = vunpack.c.l.s4 1966171168
    %v5262 = vunpack.c.0.s8 %v5261
    %v5263 = vlaneseq
    %v5264 = vshrl.u32 %v5263, 7
    %v5265 = vsub.s32 %v5262, %v5264
    %v5266 = vrot.slane %v5258, %v5265
    %v5267 = vcombine.high %v5266, %v5266
    %v5269 = vunpack.c.l.s4 1966171168
    %v5270 = vunpack.c.0.s8 %v5269
    %v5271 = vlaneseq
    %v5272 = vshrl.u32 %v5271, 7
    %v5273 = vsub.s32 %v5270, %v5272
    %v5274 = vrot.slane %v5266, %v5273
    %v5276 = vunpack.c.l.s4 1966171168
    %v5277 = vunpack.c.0.s8 %v5276
    %v5278 = vlaneseq
    %v5279 = vshrl.u32 %v5278, 7
    %v5280 = vsub.s32 %v5277, %v5279
    %v5281 = vrot.slane %v5267, %v5280
    %5282 = vmatprep.subr.mxu0 0.0
    %5283 = vmatpush1.msra.mxu0 %v4774
    %5284 = vmatprep.subr.mxu0 0.0
    %5285 = vmatpush1.msra.mxu0 %v4775
    %5286 = vmatprep.subr.mxu0 0.0
    %5287 = vmatpush1.msra.mxu0 %v4776
    %5288 = vmatprep.subr.mxu0 0.0
    %5289 = vmatpush1.msra.mxu0 %v4777
    %5290 = vmatprep.subr.mxu0 0.0
    %5291 = vmatpush1.msra.mxu0 %v4778
    %5292 = vmatprep.subr.mxu0 0.0
    %5293 = vmatpush1.msra.mxu0 %v4779
    %5294 = vmatprep.subr.mxu0 0.0
    %5295 = vmatpush1.msra.mxu0 %v4780
    %5296 = vmatprep.subr.mxu0 0.0
    %5297 = vmatpush1.msra.mxu0 %v4781
    %5298 = vmatprep.subr.mxu0 0.0
    %5299 = vmatpush1.msra.mxu0 %v4782
    %5300 = vmatprep.subr.mxu0 0.0
    %5301 = vmatpush1.msra.mxu0 %v4783
    %5302 = vmatprep.subr.mxu0 0.0
    %5303 = vmatpush1.msra.mxu0 %v4784
    %5304 = vmatprep.subr.mxu0 0.0
    %5305 = vmatpush1.msra.mxu0 %v4785
    %5306 = vmatprep.subr.mxu0 0.0
    %5307 = vmatpush1.msra.mxu0 %v4786
    %5308 = vmatprep.subr.mxu0 0.0
    %5309 = vmatpush1.msra.mxu0 %v4787
    %5310 = vmatprep.subr.mxu0 0.0
    %5311 = vmatpush1.msra.mxu0 %v4788
    %5312 = vmatprep.subr.mxu0 0.0
    %5313 = vmatpush1.msra.mxu0 %v4789
    %5314 = vmatprep.subr.mxu0 0.0
    %5315 = vmatpush1.msra.mxu0 0.0
    %5316 = vmatprep.subr.mxu0 0.0
    %5317 = vmatpush1.msra.mxu0 0.0
    %5318 = vmatprep.subr.mxu0 0.0
    %5319 = vmatpush1.msra.mxu0 0.0
    %5320 = vmatprep.subr.mxu0 0.0
    %5321 = vmatpush1.msra.mxu0 0.0
    %5322 = vmatprep.subr.mxu0 0.0
    %5323 = vmatpush1.msra.mxu0 0.0
    %5324 = vmatprep.subr.mxu0 0.0
    %5325 = vmatpush1.msra.mxu0 0.0
    %5326 = vmatprep.subr.mxu0 0.0
    %5327 = vmatpush1.msra.mxu0 0.0
    %5328 = vmatprep.subr.mxu0 0.0
    %5329 = vmatpush1.msra.mxu0 0.0
    %5330 = vmatprep.subr.mxu0 0.0
    %5331 = vmatpush1.msra.mxu0 0.0
    %5332 = vmatprep.subr.mxu0 0.0
    %5333 = vmatpush1.msra.mxu0 0.0
    %5334 = vmatprep.subr.mxu0 0.0
    %5335 = vmatpush1.msra.mxu0 0.0
    %5336 = vmatprep.subr.mxu0 0.0
    %5337 = vmatpush1.msra.mxu0 0.0
    %5338 = vmatprep.subr.mxu0 0.0
    %5339 = vmatpush1.msra.mxu0 0.0
    %5340 = vmatprep.subr.mxu0 0.0
    %5341 = vmatpush1.msra.mxu0 0.0
    %5342 = vmatprep.subr.mxu0 0.0
    %5343 = vmatpush1.msra.mxu0 0.0
    %5344 = vmatprep.subr.mxu0 0.0
    %5345 = vmatpush1.msra.mxu0 0.0
    %5346 = vmatprep.mubr.f32.mxu0 0.0
    %5347 = vmatmul.mubr.f32.gmra.mrb[0].mxu0 %v5186
    %v5348 = vpop.f32.mrb[0].mxu0
    %v5349 = vadd.f32 0.0, %v5348
    %v5350 = vpop.f32.mrb[0].mxu0
    %5351 = vdwg.mxu0
    %v5352 = vadd.f32 %v4653, %v5349
    %v5355 = vrot.slane %v4553, 7
    %v5356 = vsel %vm4576, %v5355, %v4545
    %5358 = vmatprep.subr.mxu0 0.0
    %5359 = vmatpush1.msra.mxu0 %v4557
    %5360 = vmatprep.subr.mxu0 0.0
    %5361 = vmatpush1.msra.mxu0 %v4558
    %5362 = vmatprep.subr.mxu0 0.0
    %5363 = vmatpush1.msra.mxu0 %v4559
    %5364 = vmatprep.subr.mxu0 0.0
    %5365 = vmatpush1.msra.mxu0 %v4560
    %5366 = vmatprep.subr.mxu0 0.0
    %5367 = vmatpush1.msra.mxu0 %v4561
    %5368 = vmatprep.subr.mxu0 0.0
    %5369 = vmatpush1.msra.mxu0 %v4562
    %5370 = vmatprep.subr.mxu0 0.0
    %5371 = vmatpush1.msra.mxu0 %v4563
    %5372 = vmatprep.subr.mxu0 0.0
    %5373 = vmatpush1.msra.mxu0 %v4564
    %5374 = vmatprep.subr.mxu0 0.0
    %5375 = vmatpush1.msra.mxu0 %v4565
    %5376 = vmatprep.subr.mxu0 0.0
    %5377 = vmatpush1.msra.mxu0 %v4566
    %5378 = vmatprep.subr.mxu0 0.0
    %5379 = vmatpush1.msra.mxu0 %v4567
    %5380 = vmatprep.subr.mxu0 0.0
    %5381 = vmatpush1.msra.mxu0 %v4568
    %5382 = vmatprep.subr.mxu0 0.0
    %5383 = vmatpush1.msra.mxu0 %v4569
    %5384 = vmatprep.subr.mxu0 0.0
    %5385 = vmatpush1.msra.mxu0 %v4570
    %5386 = vmatprep.subr.mxu0 0.0
    %5387 = vmatpush1.msra.mxu0 %v4571
    %5388 = vmatprep.subr.mxu0 0.0
    %5389 = vmatpush1.msra.mxu0 %v4572
    %5390 = vmatprep.subr.mxu0 0.0
    %5391 = vmatpush1.msra.mxu0 0.0
    %5392 = vmatprep.subr.mxu0 0.0
    %5393 = vmatpush1.msra.mxu0 0.0
    %5394 = vmatprep.subr.mxu0 0.0
    %5395 = vmatpush1.msra.mxu0 0.0
    %5396 = vmatprep.subr.mxu0 0.0
    %5397 = vmatpush1.msra.mxu0 0.0
    %5398 = vmatprep.subr.mxu0 0.0
    %5399 = vmatpush1.msra.mxu0 0.0
    %5400 = vmatprep.subr.mxu0 0.0
    %5401 = vmatpush1.msra.mxu0 0.0
    %5402 = vmatprep.subr.mxu0 0.0
    %5403 = vmatpush1.msra.mxu0 0.0
    %5404 = vmatprep.subr.mxu0 0.0
    %5405 = vmatpush1.msra.mxu0 0.0
    %5406 = vmatprep.subr.mxu0 0.0
    %5407 = vmatpush1.msra.mxu0 0.0
    %5408 = vmatprep.subr.mxu0 0.0
    %5409 = vmatpush1.msra.mxu0 0.0
    %5410 = vmatprep.subr.mxu0 0.0
    %5411 = vmatpush1.msra.mxu0 0.0
    %5412 = vmatprep.subr.mxu0 0.0
    %5413 = vmatpush1.msra.mxu0 0.0
    %5414 = vmatprep.subr.mxu0 0.0
    %5415 = vmatpush1.msra.mxu0 0.0
    %5416 = vmatprep.subr.mxu0 0.0
    %5417 = vmatpush1.msra.mxu0 0.0
    %5418 = vmatprep.subr.mxu0 0.0
    %5419 = vmatpush1.msra.mxu0 0.0
    %5420 = vmatprep.subr.mxu0 0.0
    %5421 = vmatpush1.msra.mxu0 0.0
    %5422 = vmatprep.mubr.f32.mxu0 0.0
    %5423 = vmatmul.mubr.f32.gmra.mrb[0].mxu0 %v5356
    %v5424 = vpop.f32.mrb[0].mxu0
    %v5425 = vadd.f32 0.0, %v5424
    %v5426 = vpop.f32.mrb[0].mxu0
    %5427 = vdwg.mxu0
    %v5428 = vadd.f32 %v5352, %v5425
    %v5431 = vrot.slane %v4554, 7
    %v5432 = vsel %vm4576, %v5431, %v4546
    %5434 = vmatprep.subr.mxu0 0.0
    %5435 = vmatpush1.msra.mxu0 %v4657
    %5436 = vmatprep.subr.mxu0 0.0
    %5437 = vmatpush1.msra.mxu0 %v4658
    %5438 = vmatprep.subr.mxu0 0.0
    %5439 = vmatpush1.msra.mxu0 %v4659
    %5440 = vmatprep.subr.mxu0 0.0
    %5441 = vmatpush1.msra.mxu0 %v4660
    %5442 = vmatprep.subr.mxu0 0.0
    %5443 = vmatpush1.msra.mxu0 %v4661
    %5444 = vmatprep.subr.mxu0 0.0
    %5445 = vmatpush1.msra.mxu0 %v4662
    %5446 = vmatprep.subr.mxu0 0.0
    %5447 = vmatpush1.msra.mxu0 %v4663
    %5448 = vmatprep.subr.mxu0 0.0
    %5449 = vmatpush1.msra.mxu0 %v4664
    %5450 = vmatprep.subr.mxu0 0.0
    %5451 = vmatpush1.msra.mxu0 %v4665
    %5452 = vmatprep.subr.mxu0 0.0
    %5453 = vmatpush1.msra.mxu0 %v4666
    %5454 = vmatprep.subr.mxu0 0.0
    %5455 = vmatpush1.msra.mxu0 %v4667
    %5456 = vmatprep.subr.mxu0 0.0
    %5457 = vmatpush1.msra.mxu0 %v4668
    %5458 = vmatprep.subr.mxu0 0.0
    %5459 = vmatpush1.msra.mxu0 %v4669
    %5460 = vmatprep.subr.mxu0 0.0
    %5461 = vmatpush1.msra.mxu0 %v4670
    %5462 = vmatprep.subr.mxu0 0.0
    %5463 = vmatpush1.msra.mxu0 %v4671
    %5464 = vmatprep.subr.mxu0 0.0
    %5465 = vmatpush1.msra.mxu0 %v4672
    %5466 = vmatprep.subr.mxu0 0.0
    %5467 = vmatpush1.msra.mxu0 0.0
    %5468 = vmatprep.subr.mxu0 0.0
    %5469 = vmatpush1.msra.mxu0 0.0
    %5470 = vmatprep.subr.mxu0 0.0
    %5471 = vmatpush1.msra.mxu0 0.0
    %5472 = vmatprep.subr.mxu0 0.0
    %5473 = vmatpush1.msra.mxu0 0.0
    %5474 = vmatprep.subr.mxu0 0.0
    %5475 = vmatpush1.msra.mxu0 0.0
    %5476 = vmatprep.subr.mxu0 0.0
    %5477 = vmatpush1.msra.mxu0 0.0
    %5478 = vmatprep.subr.mxu0 0.0
    %5479 = vmatpush1.msra.mxu0 0.0
    %5480 = vmatprep.subr.mxu0 0.0
    %5481 = vmatpush1.msra.mxu0 0.0
    %5482 = vmatprep.subr.mxu0 0.0
    %5483 = vmatpush1.msra.mxu0 0.0
    %5484 = vmatprep.subr.mxu0 0.0
    %5485 = vmatpush1.msra.mxu0 0.0
    %5486 = vmatprep.subr.mxu0 0.0
    %5487 = vmatpush1.msra.mxu0 0.0
    %5488 = vmatprep.subr.mxu0 0.0
    %5489 = vmatpush1.msra.mxu0 0.0
    %5490 = vmatprep.subr.mxu0 0.0
    %5491 = vmatpush1.msra.mxu0 0.0
    %5492 = vmatprep.subr.mxu0 0.0
    %5493 = vmatpush1.msra.mxu0 0.0
    %5494 = vmatprep.subr.mxu0 0.0
    %5495 = vmatpush1.msra.mxu0 0.0
    %5496 = vmatprep.subr.mxu0 0.0
    %5497 = vmatpush1.msra.mxu0 0.0
    %5498 = vmatprep.mubr.f32.mxu0 0.0
    %5499 = vmatmul.mubr.f32.gmra.mrb[0].mxu0 %v5432
    %v5500 = vpop.f32.mrb[0].mxu0
    %v5501 = vadd.f32 0.0, %v5500
    %v5502 = vpop.f32.mrb[0].mxu0
    %5503 = vdwg.mxu0
    %v5504 = vadd.f32 %v5428, %v5501
    %v5507 = vunpack.c.l.s4 1966171168
    %v5508 = vunpack.c.0.s8 %v5507
    %v5509 = vlaneseq
    %v5510 = vshrl.u32 %v5509, 7
    %v5511 = vsub.s32 %v5508, %v5510
    %v5512 = vrot.slane %v5504, %v5511
    %v5513 = vcombine.high %v5512, %v5512
    %v5515 = vunpack.c.l.s4 1966171168
    %v5516 = vunpack.c.0.s8 %v5515
    %v5517 = vlaneseq
    %v5518 = vshrl.u32 %v5517, 7
    %v5519 = vsub.s32 %v5516, %v5518
    %v5520 = vrot.slane %v5512, %v5519
    %v5522 = vunpack.c.l.s4 1966171168
    %v5523 = vunpack.c.0.s8 %v5522
    %v5524 = vlaneseq
    %v5525 = vshrl.u32 %v5524, 7
    %v5526 = vsub.s32 %v5523, %v5525
    %v5527 = vrot.slane %v5513, %v5526
    %v5528 = vlaneseq
    %v5529 = vshrl.u32 %v5528, 7
    %v5530 = vsub.s32 0, %v5529
    %v5531 = vrot.slane %v5028, %v5530
    %v5532 = vlaneseq
    %v5533 = vshrl.u32 %v5532, 7
    %v5534 = vsub.s32 0, %v5533
    %v5535 = vrot.slane %v5035, %v5534
    %v5538 = vlaneseq
    %v5539 = vshrl.u32 %v5538, 7
    %v5540 = vsub.s32 0, %v5539
    %v5541 = vrot.slane %v5274, %v5540
    %v5542 = vlaneseq
    %v5543 = vshrl.u32 %v5542, 7
    %v5544 = vsub.s32 0, %v5543
    %v5545 = vrot.slane %v5281, %v5544
    %v5548 = vlaneseq
    %v5549 = vshrl.u32 %v5548, 7
    %v5550 = vsub.s32 0, %v5549
    %v5551 = vrot.slane %v5520, %v5550
    %v5552 = vlaneseq
    %v5553 = vshrl.u32 %v5552, 7
    %v5554 = vsub.s32 0, %v5553
    %v5555 = vrot.slane %v5527, %v5554
    %vm5558 = vcmask 1040384
    %v5559 = vsel %vm5558, %v4764, %v5531
    %v5560 = vsel %vm5558, %v4771, %v5535
    %vm5561 = vcmask 1041408
    %v5562 = vsel %vm5561, %v5559, %v5541
    %v5563 = vsel %vm5561, %v5560, %v5545
    %vm5564 = vcmask 1042432
    %v5565 = vsel %vm5564, %v5562, %v5551
    %v5566 = vsel %vm5564, %v5563, %v5555
    %vm5567 = vcmp.gt.f32.partialorder %v5565, 0.0
    %vm5568 = vcmp.gt.f32.partialorder %v5566, 0.0
    %v5569 = vmul.f32 %v5565, 0.01
    %v5570 = vmul.f32 %v5566, 0.01
    %v5571 = vsel %vm5567, %v5565, %v5569
    %v5572 = vsel %vm5568, %v5566, %v5570
    %v5573 = vld [vmem:[%s9] sm:$0x1]
    %s5574 = scalar_lea.vmem [#allocation10], 128
    %v5575 = vld [vmem:[%s5574] sm:$0xff]
    %v5576 = vld [vmem:[%s5574 + $0x8] sm:$0xff]
    %v5577 = vld [vmem:[%s5574 + $0x10] sm:$0xff]
    %v5578 = vld [vmem:[%s5574 + $0x18] sm:$0xff]
    %v5579 = vld [vmem:[%s5574 + $0x20] sm:$0xff]
    %v5580 = vld [vmem:[%s5574 + $0x28] sm:$0xff]
    %v5581 = vld [vmem:[%s5574 + $0x30] sm:$0xff]
    %v5582 = vld [vmem:[%s5574 + $0x38] sm:$0xff]
    %v5583 = vld [vmem:[%s5574 + $0x40] sm:$0xff]
    %v5584 = vld [vmem:[%s5574 + $0x48] sm:$0xff]
    %v5585 = vld [vmem:[%s5574 + $0x50] sm:$0xff]
    %v5586 = vld [vmem:[%s5574 + $0x58] sm:$0xff]
    %v5587 = vld [vmem:[%s5574 + $0x60] sm:$0xff]
    %v5588 = vld [vmem:[%s5574 + $0x68] sm:$0xff]
    %v5589 = vld [vmem:[%s5574 + $0x70] sm:$0xff]
    %v5590 = vld [vmem:[%s5574 + $0x78] sm:$0xff]
    %v5593 = vrot.slane %v5572, 7
    %v5594 = vsel %vm4576, %v5593, %v5571
    %5596 = vmatprep.subr.mxu0 0.0
    %5597 = vmatpush1.msra.mxu0 %v5575
    %5598 = vmatprep.subr.mxu0 0.0
    %5599 = vmatpush1.msra.mxu0 %v5576
    %5600 = vmatprep.subr.mxu0 0.0
    %5601 = vmatpush1.msra.mxu0 %v5577
    %5602 = vmatprep.subr.mxu0 0.0
    %5603 = vmatpush1.msra.mxu0 %v5578
    %5604 = vmatprep.subr.mxu0 0.0
    %5605 = vmatpush1.msra.mxu0 %v5579
    %5606 = vmatprep.subr.mxu0 0.0
    %5607 = vmatpush1.msra.mxu0 %v5580
    %5608 = vmatprep.subr.mxu0 0.0
    %5609 = vmatpush1.msra.mxu0 %v5581
    %5610 = vmatprep.subr.mxu0 0.0
    %5611 = vmatpush1.msra.mxu0 %v5582
    %5612 = vmatprep.subr.mxu0 0.0
    %5613 = vmatpush1.msra.mxu0 %v5583
    %5614 = vmatprep.subr.mxu0 0.0
    %5615 = vmatpush1.msra.mxu0 %v5584
    %5616 = vmatprep.subr.mxu0 0.0
    %5617 = vmatpush1.msra.mxu0 %v5585
    %5618 = vmatprep.subr.mxu0 0.0
    %5619 = vmatpush1.msra.mxu0 %v5586
    %5620 = vmatprep.subr.mxu0 0.0
    %5621 = vmatpush1.msra.mxu0 %v5587
    %5622 = vmatprep.subr.mxu0 0.0
    %5623 = vmatpush1.msra.mxu0 %v5588
    %5624 = vmatprep.subr.mxu0 0.0
    %5625 = vmatpush1.msra.mxu0 %v5589
    %5626 = vmatprep.subr.mxu0 0.0
    %5627 = vmatpush1.msra.mxu0 %v5590
    %5628 = vmatprep.subr.mxu0 0.0
    %5629 = vmatpush1.msra.mxu0 0.0
    %5630 = vmatprep.subr.mxu0 0.0
    %5631 = vmatpush1.msra.mxu0 0.0
    %5632 = vmatprep.subr.mxu0 0.0
    %5633 = vmatpush1.msra.mxu0 0.0
    %5634 = vmatprep.subr.mxu0 0.0
    %5635 = vmatpush1.msra.mxu0 0.0
    %5636 = vmatprep.subr.mxu0 0.0
    %5637 = vmatpush1.msra.mxu0 0.0
    %5638 = vmatprep.subr.mxu0 0.0
    %5639 = vmatpush1.msra.mxu0 0.0
    %5640 = vmatprep.subr.mxu0 0.0
    %5641 = vmatpush1.msra.mxu0 0.0
    %5642 = vmatprep.subr.mxu0 0.0
    %5643 = vmatpush1.msra.mxu0 0.0
    %5644 = vmatprep.subr.mxu0 0.0
    %5645 = vmatpush1.msra.mxu0 0.0
    %5646 = vmatprep.subr.mxu0 0.0
    %5647 = vmatpush1.msra.mxu0 0.0
    %5648 = vmatprep.subr.mxu0 0.0
    %5649 = vmatpush1.msra.mxu0 0.0
    %5650 = vmatprep.subr.mxu0 0.0
    %5651 = vmatpush1.msra.mxu0 0.0
    %5652 = vmatprep.subr.mxu0 0.0
    %5653 = vmatpush1.msra.mxu0 0.0
    %5654 = vmatprep.subr.mxu0 0.0
    %5655 = vmatpush1.msra.mxu0 0.0
    %5656 = vmatprep.subr.mxu0 0.0
    %5657 = vmatpush1.msra.mxu0 0.0
    %5658 = vmatprep.subr.mxu0 0.0
    %5659 = vmatpush1.msra.mxu0 0.0
    %5660 = vmatprep.mubr.f32.mxu0 0.0
    %5661 = vmatmul.mubr.f32.gmra.mrb[0].mxu0 %v5594
    %v5662 = vpop.f32.mrb[0].mxu0
    %v5663 = vadd.f32 0.0, %v5662
    %v5664 = vpop.f32.mrb[0].mxu0
    %5665 = vdwg.mxu0
    %v5667 = vlaneseq
    %v5668 = vshrl.u32 %v5667, 7
    %v5669 = vsub.s32 0, %v5668
    %v5670 = vrot.slane %v5573, %v5669
    %v5672 = vadd.f32 %v5670, %v5663
    %s5673 = scalar_lea.vmem [#allocation10], 256
    %v5674 = vld [vmem:[%s5673] sm:$0xff]
    %v5675 = vld [vmem:[%s5673 + $0x8] sm:$0xff]
    %v5676 = vld [vmem:[%s5673 + $0x10] sm:$0xff]
    %v5677 = vld [vmem:[%s5673 + $0x18] sm:$0xff]
    %v5678 = vld [vmem:[%s5673 + $0x20] sm:$0xff]
    %v5679 = vld [vmem:[%s5673 + $0x28] sm:$0xff]
    %v5680 = vld [vmem:[%s5673 + $0x30] sm:$0xff]
    %v5681 = vld [vmem:[%s5673 + $0x38] sm:$0xff]
    %v5682 = vld [vmem:[%s5673 + $0x40] sm:$0xff]
    %v5683 = vld [vmem:[%s5673 + $0x48] sm:$0xff]
    %v5684 = vld [vmem:[%s5673 + $0x50] sm:$0xff]
    %v5685 = vld [vmem:[%s5673 + $0x58] sm:$0xff]
    %v5686 = vld [vmem:[%s5673 + $0x60] sm:$0xff]
    %v5687 = vld [vmem:[%s5673 + $0x68] sm:$0xff]
    %v5688 = vld [vmem:[%s5673 + $0x70] sm:$0xff]
    %v5689 = vld [vmem:[%s5673 + $0x78] sm:$0xff]
    %v5690 = vrot.slane %v5571, 1
    %v5691 = vsel %vm4576, %v5572, %v5690
    %5693 = vmatprep.subr.mxu0 0.0
    %5694 = vmatpush1.msra.mxu0 %v5674
    %5695 = vmatprep.subr.mxu0 0.0
    %5696 = vmatpush1.msra.mxu0 %v5675
    %5697 = vmatprep.subr.mxu0 0.0
    %5698 = vmatpush1.msra.mxu0 %v5676
    %5699 = vmatprep.subr.mxu0 0.0
    %5700 = vmatpush1.msra.mxu0 %v5677
    %5701 = vmatprep.subr.mxu0 0.0
    %5702 = vmatpush1.msra.mxu0 %v5678
    %5703 = vmatprep.subr.mxu0 0.0
    %5704 = vmatpush1.msra.mxu0 %v5679
    %5705 = vmatprep.subr.mxu0 0.0
    %5706 = vmatpush1.msra.mxu0 %v5680
    %5707 = vmatprep.subr.mxu0 0.0
    %5708 = vmatpush1.msra.mxu0 %v5681
    %5709 = vmatprep.subr.mxu0 0.0
    %5710 = vmatpush1.msra.mxu0 %v5682
    %5711 = vmatprep.subr.mxu0 0.0
    %5712 = vmatpush1.msra.mxu0 %v5683
    %5713 = vmatprep.subr.mxu0 0.0
    %5714 = vmatpush1.msra.mxu0 %v5684
    %5715 = vmatprep.subr.mxu0 0.0
    %5716 = vmatpush1.msra.mxu0 %v5685
    %5717 = vmatprep.subr.mxu0 0.0
    %5718 = vmatpush1.msra.mxu0 %v5686
    %5719 = vmatprep.subr.mxu0 0.0
    %5720 = vmatpush1.msra.mxu0 %v5687
    %5721 = vmatprep.subr.mxu0 0.0
    %5722 = vmatpush1.msra.mxu0 %v5688
    %5723 = vmatprep.subr.mxu0 0.0
    %5724 = vmatpush1.msra.mxu0 %v5689
    %5725 = vmatprep.subr.mxu0 0.0
    %5726 = vmatpush1.msra.mxu0 0.0
    %5727 = vmatprep.subr.mxu0 0.0
    %5728 = vmatpush1.msra.mxu0 0.0
    %5729 = vmatprep.subr.mxu0 0.0
    %5730 = vmatpush1.msra.mxu0 0.0
    %5731 = vmatprep.subr.mxu0 0.0
    %5732 = vmatpush1.msra.mxu0 0.0
    %5733 = vmatprep.subr.mxu0 0.0
    %5734 = vmatpush1.msra.mxu0 0.0
    %5735 = vmatprep.subr.mxu0 0.0
    %5736 = vmatpush1.msra.mxu0 0.0
    %5737 = vmatprep.subr.mxu0 0.0
    %5738 = vmatpush1.msra.mxu0 0.0
    %5739 = vmatprep.subr.mxu0 0.0
    %5740 = vmatpush1.msra.mxu0 0.0
    %5741 = vmatprep.subr.mxu0 0.0
    %5742 = vmatpush1.msra.mxu0 0.0
    %5743 = vmatprep.subr.mxu0 0.0
    %5744 = vmatpush1.msra.mxu0 0.0
    %5745 = vmatprep.subr.mxu0 0.0
    %5746 = vmatpush1.msra.mxu0 0.0
    %5747 = vmatprep.subr.mxu0 0.0
    %5748 = vmatpush1.msra.mxu0 0.0
    %5749 = vmatprep.subr.mxu0 0.0
    %5750 = vmatpush1.msra.mxu0 0.0
    %5751 = vmatprep.subr.mxu0 0.0
    %5752 = vmatpush1.msra.mxu0 0.0
    %5753 = vmatprep.subr.mxu0 0.0
    %5754 = vmatpush1.msra.mxu0 0.0
    %5755 = vmatprep.subr.mxu0 0.0
    %5756 = vmatpush1.msra.mxu0 0.0
    %5757 = vmatprep.mubr.f32.mxu0 0.0
    %5758 = vmatmul.mubr.f32.gmra.mrb[0].mxu0 %v5691
    %v5759 = vpop.f32.mrb[0].mxu0
    %v5760 = vadd.f32 0.0, %v5759
    %v5761 = vpop.f32.mrb[0].mxu0
    %5762 = vdwg.mxu0
    %v5763 = vadd.f32 %v5672, %v5760
    %v5766 = vunpack.c.l.s4 1966171168
    %v5767 = vunpack.c.0.s8 %v5766
    %v5768 = vlaneseq
    %v5769 = vshrl.u32 %v5768, 7
    %v5770 = vsub.s32 %v5767, %v5769
    %v5771 = vrot.slane %v5763, %v5770
    %v5772 = vcombine.high %v5771, %v5771
    %v5774 = vunpack.c.l.s4 1966171168
    %v5775 = vunpack.c.0.s8 %v5774
    %v5776 = vlaneseq
    %v5777 = vshrl.u32 %v5776, 7
    %v5778 = vsub.s32 %v5775, %v5777
    %v5779 = vrot.slane %v5771, %v5778
    %v5781 = vunpack.c.l.s4 1966171168
    %v5782 = vunpack.c.0.s8 %v5781
    %v5783 = vlaneseq
    %v5784 = vshrl.u32 %v5783, 7
    %v5785 = vsub.s32 %v5782, %v5784
    %v5786 = vrot.slane %v5772, %v5785
    %v5789 = vld [vmem:[#allocation10] sm:$0xff]
    %v5790 = vld [vmem:[#allocation10 + $0x8] sm:$0xff]
    %v5791 = vld [vmem:[#allocation10 + $0x10] sm:$0xff]
    %v5792 = vld [vmem:[#allocation10 + $0x18] sm:$0xff]
    %v5793 = vld [vmem:[#allocation10 + $0x20] sm:$0xff]
    %v5794 = vld [vmem:[#allocation10 + $0x28] sm:$0xff]
    %v5795 = vld [vmem:[#allocation10 + $0x30] sm:$0xff]
    %v5796 = vld [vmem:[#allocation10 + $0x38] sm:$0xff]
    %v5797 = vld [vmem:[#allocation10 + $0x40] sm:$0xff]
    %v5798 = vld [vmem:[#allocation10 + $0x48] sm:$0xff]
    %v5799 = vld [vmem:[#allocation10 + $0x50] sm:$0xff]
    %v5800 = vld [vmem:[#allocation10 + $0x58] sm:$0xff]
    %v5801 = vld [vmem:[#allocation10 + $0x60] sm:$0xff]
    %v5802 = vld [vmem:[#allocation10 + $0x68] sm:$0xff]
    %v5803 = vld [vmem:[#allocation10 + $0x70] sm:$0xff]
    %v5804 = vld [vmem:[#allocation10 + $0x78] sm:$0xff]
    %5805 = vmatprep.subr.mxu0 0.0
    %5806 = vmatpush1.msra.mxu0 %v5789
    %5807 = vmatprep.subr.mxu0 0.0
    %5808 = vmatpush1.msra.mxu0 %v5790
    %5809 = vmatprep.subr.mxu0 0.0
    %5810 = vmatpush1.msra.mxu0 %v5791
    %5811 = vmatprep.subr.mxu0 0.0
    %5812 = vmatpush1.msra.mxu0 %v5792
    %5813 = vmatprep.subr.mxu0 0.0
    %5814 = vmatpush1.msra.mxu0 %v5793
    %5815 = vmatprep.subr.mxu0 0.0
    %5816 = vmatpush1.msra.mxu0 %v5794
    %5817 = vmatprep.subr.mxu0 0.0
    %5818 = vmatpush1.msra.mxu0 %v5795
    %5819 = vmatprep.subr.mxu0 0.0
    %5820 = vmatpush1.msra.mxu0 %v5796
    %5821 = vmatprep.subr.mxu0 0.0
    %5822 = vmatpush1.msra.mxu0 %v5797
    %5823 = vmatprep.subr.mxu0 0.0
    %5824 = vmatpush1.msra.mxu0 %v5798
    %5825 = vmatprep.subr.mxu0 0.0
    %5826 = vmatpush1.msra.mxu0 %v5799
    %5827 = vmatprep.subr.mxu0 0.0
    %5828 = vmatpush1.msra.mxu0 %v5800
    %5829 = vmatprep.subr.mxu0 0.0
    %5830 = vmatpush1.msra.mxu0 %v5801
    %5831 = vmatprep.subr.mxu0 0.0
    %5832 = vmatpush1.msra.mxu0 %v5802
    %5833 = vmatprep.subr.mxu0 0.0
    %5834 = vmatpush1.msra.mxu0 %v5803
    %5835 = vmatprep.subr.mxu0 0.0
    %5836 = vmatpush1.msra.mxu0 %v5804
    %5837 = vmatprep.subr.mxu0 0.0
    %5838 = vmatpush1.msra.mxu0 0.0
    %5839 = vmatprep.subr.mxu0 0.0
    %5840 = vmatpush1.msra.mxu0 0.0
    %5841 = vmatprep.subr.mxu0 0.0
    %5842 = vmatpush1.msra.mxu0 0.0
    %5843 = vmatprep.subr.mxu0 0.0
    %5844 = vmatpush1.msra.mxu0 0.0
    %5845 = vmatprep.subr.mxu0 0.0
    %5846 = vmatpush1.msra.mxu0 0.0
    %5847 = vmatprep.subr.mxu0 0.0
    %5848 = vmatpush1.msra.mxu0 0.0
    %5849 = vmatprep.subr.mxu0 0.0
    %5850 = vmatpush1.msra.mxu0 0.0
    %5851 = vmatprep.subr.mxu0 0.0
    %5852 = vmatpush1.msra.mxu0 0.0
    %5853 = vmatprep.subr.mxu0 0.0
    %5854 = vmatpush1.msra.mxu0 0.0
    %5855 = vmatprep.subr.mxu0 0.0
    %5856 = vmatpush1.msra.mxu0 0.0
    %5857 = vmatprep.subr.mxu0 0.0
    %5858 = vmatpush1.msra.mxu0 0.0
    %5859 = vmatprep.subr.mxu0 0.0
    %5860 = vmatpush1.msra.mxu0 0.0
    %5861 = vmatprep.subr.mxu0 0.0
    %5862 = vmatpush1.msra.mxu0 0.0
    %5863 = vmatprep.subr.mxu0 0.0
    %5864 = vmatpush1.msra.mxu0 0.0
    %5865 = vmatprep.subr.mxu0 0.0
    %5866 = vmatpush1.msra.mxu0 0.0
    %5867 = vmatprep.subr.mxu0 0.0
    %5868 = vmatpush1.msra.mxu0 0.0
    %5869 = vmatprep.mubr.f32.mxu0 0.0
    %5870 = vmatmul.mubr.f32.gmra.mrb[0].mxu0 %v5691
    %v5871 = vpop.f32.mrb[0].mxu0
    %v5872 = vadd.f32 0.0, %v5871
    %v5873 = vpop.f32.mrb[0].mxu0
    %5874 = vdwg.mxu0
    %v5875 = vadd.f32 %v5670, %v5872
    %v5876 = vrot.slane %v5571, 2
    %v5877 = vrot.slane %v5572, 1
    %v5878 = vsel %vm4576, %v5877, %v5876
    %5880 = vmatprep.subr.mxu0 0.0
    %5881 = vmatpush1.msra.mxu0 %v5575
    %5882 = vmatprep.subr.mxu0 0.0
    %5883 = vmatpush1.msra.mxu0 %v5576
    %5884 = vmatprep.subr.mxu0 0.0
    %5885 = vmatpush1.msra.mxu0 %v5577
    %5886 = vmatprep.subr.mxu0 0.0
    %5887 = vmatpush1.msra.mxu0 %v5578
    %5888 = vmatprep.subr.mxu0 0.0
    %5889 = vmatpush1.msra.mxu0 %v5579
    %5890 = vmatprep.subr.mxu0 0.0
    %5891 = vmatpush1.msra.mxu0 %v5580
    %5892 = vmatprep.subr.mxu0 0.0
    %5893 = vmatpush1.msra.mxu0 %v5581
    %5894 = vmatprep.subr.mxu0 0.0
    %5895 = vmatpush1.msra.mxu0 %v5582
    %5896 = vmatprep.subr.mxu0 0.0
    %5897 = vmatpush1.msra.mxu0 %v5583
    %5898 = vmatprep.subr.mxu0 0.0
    %5899 = vmatpush1.msra.mxu0 %v5584
    %5900 = vmatprep.subr.mxu0 0.0
    %5901 = vmatpush1.msra.mxu0 %v5585
    %5902 = vmatprep.subr.mxu0 0.0
    %5903 = vmatpush1.msra.mxu0 %v5586
    %5904 = vmatprep.subr.mxu0 0.0
    %5905 = vmatpush1.msra.mxu0 %v5587
    %5906 = vmatprep.subr.mxu0 0.0
    %5907 = vmatpush1.msra.mxu0 %v5588
    %5908 = vmatprep.subr.mxu0 0.0
    %5909 = vmatpush1.msra.mxu0 %v5589
    %5910 = vmatprep.subr.mxu0 0.0
    %5911 = vmatpush1.msra.mxu0 %v5590
    %5912 = vmatprep.subr.mxu0 0.0
    %5913 = vmatpush1.msra.mxu0 0.0
    %5914 = vmatprep.subr.mxu0 0.0
    %5915 = vmatpush1.msra.mxu0 0.0
    %5916 = vmatprep.subr.mxu0 0.0
    %5917 = vmatpush1.msra.mxu0 0.0
    %5918 = vmatprep.subr.mxu0 0.0
    %5919 = vmatpush1.msra.mxu0 0.0
    %5920 = vmatprep.subr.mxu0 0.0
    %5921 = vmatpush1.msra.mxu0 0.0
    %5922 = vmatprep.subr.mxu0 0.0
    %5923 = vmatpush1.msra.mxu0 0.0
    %5924 = vmatprep.subr.mxu0 0.0
    %5925 = vmatpush1.msra.mxu0 0.0
    %5926 = vmatprep.subr.mxu0 0.0
    %5927 = vmatpush1.msra.mxu0 0.0
    %5928 = vmatprep.subr.mxu0 0.0
    %5929 = vmatpush1.msra.mxu0 0.0
    %5930 = vmatprep.subr.mxu0 0.0
    %5931 = vmatpush1.msra.mxu0 0.0
    %5932 = vmatprep.subr.mxu0 0.0
    %5933 = vmatpush1.msra.mxu0 0.0
    %5934 = vmatprep.subr.mxu0 0.0
    %5935 = vmatpush1.msra.mxu0 0.0
    %5936 = vmatprep.subr.mxu0 0.0
    %5937 = vmatpush1.msra.mxu0 0.0
    %5938 = vmatprep.subr.mxu0 0.0
    %5939 = vmatpush1.msra.mxu0 0.0
    %5940 = vmatprep.subr.mxu0 0.0
    %5941 = vmatpush1.msra.mxu0 0.0
    %5942 = vmatprep.subr.mxu0 0.0
    %5943 = vmatpush1.msra.mxu0 0.0
    %5944 = vmatprep.mubr.f32.mxu0 0.0
    %5945 = vmatmul.mubr.f32.gmra.mrb[0].mxu0 %v5878
    %v5946 = vpop.f32.mrb[0].mxu0
    %v5947 = vadd.f32 0.0, %v5946
    %v5948 = vpop.f32.mrb[0].mxu0
    %5949 = vdwg.mxu0
    %v5950 = vadd.f32 %v5875, %v5947
    %v5951 = vrot.slane %v5571, 3
    %v5952 = vrot.slane %v5572, 2
    %v5953 = vsel %vm4576, %v5952, %v5951
    %5955 = vmatprep.subr.mxu0 0.0
    %5956 = vmatpush1.msra.mxu0 %v5674
    %5957 = vmatprep.subr.mxu0 0.0
    %5958 = vmatpush1.msra.mxu0 %v5675
    %5959 = vmatprep.subr.mxu0 0.0
    %5960 = vmatpush1.msra.mxu0 %v5676
    %5961 = vmatprep.subr.mxu0 0.0
    %5962 = vmatpush1.msra.mxu0 %v5677
    %5963 = vmatprep.subr.mxu0 0.0
    %5964 = vmatpush1.msra.mxu0 %v5678
    %5965 = vmatprep.subr.mxu0 0.0
    %5966 = vmatpush1.msra.mxu0 %v5679
    %5967 = vmatprep.subr.mxu0 0.0
    %5968 = vmatpush1.msra.mxu0 %v5680
    %5969 = vmatprep.subr.mxu0 0.0
    %5970 = vmatpush1.msra.mxu0 %v5681
    %5971 = vmatprep.subr.mxu0 0.0
    %5972 = vmatpush1.msra.mxu0 %v5682
    %5973 = vmatprep.subr.mxu0 0.0
    %5974 = vmatpush1.msra.mxu0 %v5683
    %5975 = vmatprep.subr.mxu0 0.0
    %5976 = vmatpush1.msra.mxu0 %v5684
    %5977 = vmatprep.subr.mxu0 0.0
    %5978 = vmatpush1.msra.mxu0 %v5685
    %5979 = vmatprep.subr.mxu0 0.0
    %5980 = vmatpush1.msra.mxu0 %v5686
    %5981 = vmatprep.subr.mxu0 0.0
    %5982 = vmatpush1.msra.mxu0 %v5687
    %5983 = vmatprep.subr.mxu0 0.0
    %5984 = vmatpush1.msra.mxu0 %v5688
    %5985 = vmatprep.subr.mxu0 0.0
    %5986 = vmatpush1.msra.mxu0 %v5689
    %5987 = vmatprep.subr.mxu0 0.0
    %5988 = vmatpush1.msra.mxu0 0.0
    %5989 = vmatprep.subr.mxu0 0.0
    %5990 = vmatpush1.msra.mxu0 0.0
    %5991 = vmatprep.subr.mxu0 0.0
    %5992 = vmatpush1.msra.mxu0 0.0
    %5993 = vmatprep.subr.mxu0 0.0
    %5994 = vmatpush1.msra.mxu0 0.0
    %5995 = vmatprep.subr.mxu0 0.0
    %5996 = vmatpush1.msra.mxu0 0.0
    %5997 = vmatprep.subr.mxu0 0.0
    %5998 = vmatpush1.msra.mxu0 0.0
    %5999 = vmatprep.subr.mxu0 0.0
    %6000 = vmatpush1.msra.mxu0 0.0
    %6001 = vmatprep.subr.mxu0 0.0
    %6002 = vmatpush1.msra.mxu0 0.0
    %6003 = vmatprep.subr.mxu0 0.0
    %6004 = vmatpush1.msra.mxu0 0.0
    %6005 = vmatprep.subr.mxu0 0.0
    %6006 = vmatpush1.msra.mxu0 0.0
    %6007 = vmatprep.subr.mxu0 0.0
    %6008 = vmatpush1.msra.mxu0 0.0
    %6009 = vmatprep.subr.mxu0 0.0
    %6010 = vmatpush1.msra.mxu0 0.0
    %6011 = vmatprep.subr.mxu0 0.0
    %6012 = vmatpush1.msra.mxu0 0.0
    %6013 = vmatprep.subr.mxu0 0.0
    %6014 = vmatpush1.msra.mxu0 0.0
    %6015 = vmatprep.subr.mxu0 0.0
    %6016 = vmatpush1.msra.mxu0 0.0
    %6017 = vmatprep.subr.mxu0 0.0
    %6018 = vmatpush1.msra.mxu0 0.0
    %6019 = vmatprep.mubr.f32.mxu0 0.0
    %6020 = vmatmul.mubr.f32.gmra.mrb[0].mxu0 %v5953
    %v6021 = vpop.f32.mrb[0].mxu0
    %v6022 = vadd.f32 0.0, %v6021
    %v6023 = vpop.f32.mrb[0].mxu0
    %6024 = vdwg.mxu0
    %v6025 = vadd.f32 %v5950, %v6022
    %v6028 = vunpack.c.l.s4 1966171168
    %v6029 = vunpack.c.0.s8 %v6028
    %v6030 = vlaneseq
    %v6031 = vshrl.u32 %v6030, 7
    %v6032 = vsub.s32 %v6029, %v6031
    %v6033 = vrot.slane %v6025, %v6032
    %v6034 = vcombine.high %v6033, %v6033
    %v6036 = vunpack.c.l.s4 1966171168
    %v6037 = vunpack.c.0.s8 %v6036
    %v6038 = vlaneseq
    %v6039 = vshrl.u32 %v6038, 7
    %v6040 = vsub.s32 %v6037, %v6039
    %v6041 = vrot.slane %v6033, %v6040
    %v6043 = vunpack.c.l.s4 1966171168
    %v6044 = vunpack.c.0.s8 %v6043
    %v6045 = vlaneseq
    %v6046 = vshrl.u32 %v6045, 7
    %v6047 = vsub.s32 %v6044, %v6046
    %v6048 = vrot.slane %v6034, %v6047
    %v6049 = vlaneseq
    %v6050 = vshrl.u32 %v6049, 7
    %v6051 = vsub.s32 0, %v6050
    %v6052 = vrot.slane %v6041, %v6051
    %v6053 = vlaneseq
    %v6054 = vshrl.u32 %v6053, 7
    %v6055 = vsub.s32 0, %v6054
    %v6056 = vrot.slane %v6048, %v6055
    %v6059 = vsel %vm5558, %v5779, %v6052
    %v6060 = vsel %vm5558, %v5786, %v6056
    %vm6061 = vcmp.gt.f32.partialorder %v6059, 0.0
    %vm6062 = vcmp.gt.f32.partialorder %v6060, 0.0
    %v6063 = vmul.f32 %v6059, 0.01
    %v6064 = vmul.f32 %v6060, 0.01
    %v6065 = vsel %vm6061, %v6059, %v6063
    %v6066 = vsel %vm6062, %v6060, %v6064
    %v6067 = vld [vmem:[%s10] sm:$0xff]
    %v6068 = vld [vmem:[%s10 + $0x8] sm:$0xff]
    %v6069 = vld [vmem:[%s10 + $0x10] sm:$0xff]
    %v6070 = vld [vmem:[%s10 + $0x18] sm:$0xff]
    %v6071 = vld [vmem:[%s10 + $0x20] sm:$0xff]
    %v6072 = vld [vmem:[%s10 + $0x28] sm:$0xff]
    %v6073 = vld [vmem:[%s10 + $0x30] sm:$0xff]
    %v6074 = vld [vmem:[%s10 + $0x38] sm:$0xff]
    %v6075 = vld [vmem:[%s10 + $0x40] sm:$0xff]
    %v6076 = vld [vmem:[%s10 + $0x48] sm:$0xff]
    %v6077 = vld [vmem:[%s10 + $0x50] sm:$0xff]
    %v6078 = vld [vmem:[%s10 + $0x58] sm:$0xff]
    %v6079 = vld [vmem:[%s10 + $0x60] sm:$0xff]
    %v6080 = vld [vmem:[%s10 + $0x68] sm:$0xff]
    %v6081 = vld [vmem:[%s10 + $0x70] sm:$0xff]
    %v6082 = vld [vmem:[%s10 + $0x78] sm:$0xff]
    %v6083 = vld [vmem:[%s11] sm:$0x1]
    %v6085 = vlaneseq
    %v6086 = vshrl.u32 %v6085, 7
    %v6087 = vsub.s32 0, %v6086
    %v6088 = vrot.slane %v6083, %v6087
    %v6092 = vcombine.low %v6065, %v6066
    %v6094 = vunpack.c.l.s4 1983009808
    %v6095 = vunpack.c.0.s8 %v6094
    %v6096 = vlaneseq
    %v6097 = vshrl.u32 %v6096, 7
    %v6098 = vsub.s32 %v6095, %v6097
    %v6099 = vrot.slane %v6092, %v6098
    %6101 = vmatprep.subr.mxu0 0.0
    %6102 = vmatpush1.msra.mxu0 %v6067
    %6103 = vmatprep.subr.mxu0 0.0
    %6104 = vmatpush1.msra.mxu0 %v6068
    %6105 = vmatprep.subr.mxu0 0.0
    %6106 = vmatpush1.msra.mxu0 %v6069
    %6107 = vmatprep.subr.mxu0 0.0
    %6108 = vmatpush1.msra.mxu0 %v6070
    %6109 = vmatprep.subr.mxu0 0.0
    %6110 = vmatpush1.msra.mxu0 %v6071
    %6111 = vmatprep.subr.mxu0 0.0
    %6112 = vmatpush1.msra.mxu0 %v6072
    %6113 = vmatprep.subr.mxu0 0.0
    %6114 = vmatpush1.msra.mxu0 %v6073
    %6115 = vmatprep.subr.mxu0 0.0
    %6116 = vmatpush1.msra.mxu0 %v6074
    %6117 = vmatprep.subr.mxu0 0.0
    %6118 = vmatpush1.msra.mxu0 %v6075
    %6119 = vmatprep.subr.mxu0 0.0
    %6120 = vmatpush1.msra.mxu0 %v6076
    %6121 = vmatprep.subr.mxu0 0.0
    %6122 = vmatpush1.msra.mxu0 %v6077
    %6123 = vmatprep.subr.mxu0 0.0
    %6124 = vmatpush1.msra.mxu0 %v6078
    %6125 = vmatprep.subr.mxu0 0.0
    %6126 = vmatpush1.msra.mxu0 %v6079
    %6127 = vmatprep.subr.mxu0 0.0
    %6128 = vmatpush1.msra.mxu0 %v6080
    %6129 = vmatprep.subr.mxu0 0.0
    %6130 = vmatpush1.msra.mxu0 %v6081
    %6131 = vmatprep.subr.mxu0 0.0
    %6132 = vmatpush1.msra.mxu0 %v6082
    %6133 = vmatprep.subr.mxu0 0.0
    %6134 = vmatpush1.msra.mxu0 0.0
    %6135 = vmatprep.subr.mxu0 0.0
    %6136 = vmatpush1.msra.mxu0 0.0
    %6137 = vmatprep.subr.mxu0 0.0
    %6138 = vmatpush1.msra.mxu0 0.0
    %6139 = vmatprep.subr.mxu0 0.0
    %6140 = vmatpush1.msra.mxu0 0.0
    %6141 = vmatprep.subr.mxu0 0.0
    %6142 = vmatpush1.msra.mxu0 0.0
    %6143 = vmatprep.subr.mxu0 0.0
    %6144 = vmatpush1.msra.mxu0 0.0
    %6145 = vmatprep.subr.mxu0 0.0
    %6146 = vmatpush1.msra.mxu0 0.0
    %6147 = vmatprep.subr.mxu0 0.0
    %6148 = vmatpush1.msra.mxu0 0.0
    %6149 = vmatprep.subr.mxu0 0.0
    %6150 = vmatpush1.msra.mxu0 0.0
    %6151 = vmatprep.subr.mxu0 0.0
    %6152 = vmatpush1.msra.mxu0 0.0
    %6153 = vmatprep.subr.mxu0 0.0
    %6154 = vmatpush1.msra.mxu0 0.0
    %6155 = vmatprep.subr.mxu0 0.0
    %6156 = vmatpush1.msra.mxu0 0.0
    %6157 = vmatprep.subr.mxu0 0.0
    %6158 = vmatpush1.msra.mxu0 0.0
    %6159 = vmatprep.subr.mxu0 0.0
    %6160 = vmatpush1.msra.mxu0 0.0
    %6161 = vmatprep.subr.mxu0 0.0
    %6162 = vmatpush1.msra.mxu0 0.0
    %6163 = vmatprep.subr.mxu0 0.0
    %6164 = vmatpush1.msra.mxu0 0.0
    %6165 = vmatprep.mubr.f32.mxu0 0.0
    %6166 = vmatmul.mubr.f32.gmra.mrb[0].mxu0 %v6099
    %v6167 = vpop.f32.mrb[0].mxu0
    %v6168 = vadd.f32 %v6088, %v6167
    %v6169 = vpop.f32.mrb[0].mxu0
    %6170 = vdwg.mxu0
    %vm6171 = vcmp.gt.f32.partialorder %v6168, 0.0
    %v6172 = vmul.f32 %v6168, 0.01
    %v6173 = vsel %vm6171, %v6168, %v6172
    %vm6174 = vcmask 125952
    %v6175 = vsel %vm6174, %v6173, -inf
    %6176 = vmax.xlane.f32.xlu0 %v6175
    %v6177 = vpop.xlane.xlu0 %6176
    %v6178 = vsub.f32 %v6173, %v6177
    %v6179 = vmul.f32 %v6178, 1.442695
    %v6180 = vpow.pop %v6179
    %v6181 = vsel %vm6174, %v6180, 0.0
    %6182 = vadd.xlane.f32.xlu0 %v6181
    %v6183 = vpop.xlane.xlu0 %6182
    %v6184 = vlog2.pop %v6183
    %v6185 = vmul.f32 %v6184, 0.6931472
    %v6186 = vadd.f32 %v6177, %v6185
    %v6187 = vsub.f32 %v6173, %v6186
    %v6190 = vunpack.c.l.s4 1983009808
    %v6191 = vunpack.c.0.s8 %v6190
    %v6192 = vlaneseq
    %v6193 = vshrl.u32 %v6192, 7
    %v6194 = vsub.s32 %v6191, %v6193
    %v6195 = vrot.slane %v6187, %v6194
    %v6196 = vcombine.high %v6195, %v6195
    %vm6199 = vcmask 123904
    %6200 = vst.msk [vmem:[#allocation11] sm:$0x3] %vm6199, %v6195
    %6201 = vst.msk [vmem:[#allocation11 + $0x2] sm:$0x3] %vm6199, %v6196
    // Predicated region
    $region70: #{gcn_net_cnn.1} parent=1 // pred_check
      _
    $region71: #{gcn_net_cnn.1} parent=1 // pred_check_branch
      %6203 = sbr.rel (0) target = $region73
    $region72: #{gcn_net_cnn.1} parent=1 // pred_region
      %s6205 = ssub.s32 64, 64
      %6206 = vsyncadd [#allocation4], %s6205
      %s6207 = sshll.u32 [#allocation11], 4
      %s6208 = int_to_ptr.vmem [resolvable:$true] %s6207
      %6213 = dma.vmem_to_hbm [thread:$0]  %s6208, 64, %s12, [#allocation4], 32, 32, 2
    $region73: #{gcn_net_cnn.1} parent=1 // pred_fallthru
      _
    // Predicated region
    $region74: #{gcn_net_cnn.1} parent=1 // pred_check
      _
    $region75: #{gcn_net_cnn.1} parent=1 // pred_check_branch
      %6215 = sbr.rel (0) target = $region77
    $region76: #{gcn_net_cnn.1} parent=1 // pred_region
      %6216 = dma.done [#allocation4], 64
    $region77: #{gcn_net_cnn.1} parent=1 // pred_fallthru
      _
    %6217 = vsyncpa [#allocation3], 1
    %6218 = vsyncpa [#allocation6], 1
    %6219 = vsyncpa [#allocation9], 1
    %6220 = vsyncpa [#allocation4], 1

</llo_original>
